<compile_context>
chip_gen: v6e
topology: v6e:2x2x1
jax: 0.10.0
libtpu: 0.0.40
codegen_flags: <defaults>
</compile_context>

<pallas_src>
import functools

import jax
import jax.numpy as jnp
from jax import lax
from jax.experimental import pallas as pl
from jax.experimental.pallas import tpu as pltpu


def _round_up(x, m):
    return ((x + m - 1) // m) * m


# ---------------------------------------------------------------------------
# Pallas kernel: fused MLP chain (Conv1x1+BN+ReLU stack) + max over nsample
# ---------------------------------------------------------------------------
def _affine_relu(h, w, s, t):
    """relu((h @ w) * s + t).

    The contraction is split into an MXU dot over the largest multiple-of-8 prefix plus
    <=7 broadcast-multiply terms, so activations never need HBM-side channel padding
    (covers C_in = 3 / 323 / 643 without padding traffic)."""
    c_in = w.shape[0]
    c_main = (c_in // 8) * 8
    if c_main == c_in:                       # fully 8-aligned contraction -> pure MXU dot
        y = jnp.dot(h.astype(jnp.bfloat16), w.astype(jnp.bfloat16),
                    preferred_element_type=jnp.float32)
    else:
        y = None
        if c_main > 0:
            y = jnp.dot(h[:, :c_main].astype(jnp.bfloat16),
                        w[:c_main, :].astype(jnp.bfloat16),
                        preferred_element_type=jnp.float32)
        hf = h[:, c_main:].astype(jnp.float32)      # (rows, <=7)
        wf = w[c_main:, :].astype(jnp.float32)      # (<=7, c_out)
        rem = hf[:, 0:1] * wf[0:1, :]
        for ci in range(1, c_in - c_main):
            rem = rem + hf[:, ci:ci + 1] * wf[ci:ci + 1, :]
        y = rem if y is None else y + rem
    return jnp.maximum(y * s + t, 0.0)


def _mlp_pool_kernel(*refs, n_layers, nsample, groups):
    # refs = (x_ref, [w, scale, shift] * n_layers, out_ref)
    x_ref, o_ref = refs[0], refs[-1]
    prm = refs[1:-1]
    h = x_ref[...]                                      # (groups*nsample, C_in), bf16
    for li in range(n_layers):
        w = prm[3 * li][...]
        s = prm[3 * li + 1][...]                        # (1, c_out) f32
        t = prm[3 * li + 2][...]                        # (1, c_out) f32 (bias folded in)
        h = _affine_relu(h, w, s, t)                    # f32
    if nsample > 1:                                     # max over the neighbour axis
        h = jnp.max(h.reshape(groups, nsample, h.shape[-1]), axis=1)
    o_ref[...] = h.astype(o_ref.dtype)


def fused_mlp_pool(x, layers, nsample, *, out_f32=False, use_pallas=True):
    """x: (R*nsample, C_in); layers: [(w, b, bn_scale, bn_shift), ...].

    Returns (R, C_last) = max over each group of `nsample` consecutive rows of the
    chained relu(bn(conv(.))) MLP.  nsample == 1 -> no pooling (plain fused MLP)."""
    R = x.shape[0] // nsample
    c_last = layers[-1][0].shape[1]
    # Fold conv bias into the BN shift:  (xW + b)*scale + shift == (xW)*scale + (b*scale+shift)
    folded = [(w, scale, b * scale + shift) for (w, b, scale, shift) in layers]

    if not use_pallas:                                  # pure-JAX f32 reference path
        h = x.astype(jnp.float32)
        for (w, s, t) in folded:
            h = jnp.maximum(
                jnp.dot(h, w, precision=lax.Precision.HIGHEST) * s + t, 0.0)
        if nsample > 1:
            h = jnp.max(h.reshape(R, nsample, c_last), axis=1)
        return h

    xb = x.astype(jnp.bfloat16)
    c_in = xb.shape[1]

    # Row-tile selection: ~2048 rows per grid step (>=1 MB blocks, amortizes the ~0.35us
    # per-step overhead) while keeping per-step VMEM use ~10 MB (safe on v7x's 64 MiB).
    target_rows = 2048
    if R * nsample <= target_rows or R <= 8:
        G = R                                           # single step; blocks = full dims
    else:
        G = max(8, (min(R, target_rows // max(1, nsample)) // 8) * 8)
    R_pad = _round_up(R, G)
    if R_pad != R:
        xb = jnp.pad(xb, ((0, (R_pad - R) * nsample), (0, 0)))

    in_specs = [pl.BlockSpec((G * nsample, c_in), lambda i: (i, 0))]
    operands = [xb]
    for (w, scale, shift) in folded:
        ci, co = w.shape
        # Weights/scale/shift use constant index_maps -> loaded into VMEM once, resident.
        in_specs += [pl.BlockSpec((ci, co), lambda i: (0, 0)),
                     pl.BlockSpec((1, co), lambda i: (0, 0)),
                     pl.BlockSpec((1, co), lambda i: (0, 0))]
        operands += [w.astype(jnp.bfloat16),
                     scale.astype(jnp.float32).reshape(1, co),
                     shift.astype(jnp.float32).reshape(1, co)]

    out = pl.pallas_call(
        functools.partial(_mlp_pool_kernel, n_layers=len(folded),
                          nsample=nsample, groups=G),
        out_shape=jax.ShapeDtypeStruct(
            (R_pad, c_last), jnp.float32 if out_f32 else jnp.bfloat16),
        grid_spec=pltpu.PrefetchScalarGridSpec(
            num_scalar_prefetch=0,
            grid=(R_pad // G,),
            in_specs=in_specs,
            out_specs=pl.BlockSpec((G, c_last), lambda i: (i, 0)),
        ),
        compiler_params=pltpu.CompilerParams(
            dimension_semantics=("parallel",),
            vmem_limit_bytes=32 * 1024 * 1024,
        ),
    )(*operands)
    return out[:R] if R_pad != R else out


# ---------------------------------------------------------------------------
# PointNet++ building blocks (irregular index ops stay in plain JAX)
# ---------------------------------------------------------------------------
def square_distance(src, dst):
    s2 = jnp.sum(src * src, axis=-1)[:, :, None]
    d2 = jnp.sum(dst * dst, axis=-1)[:, None, :]
    return s2 + d2 - 2.0 * jnp.einsum('bnc,bmc->bnm', src, dst)


def farthest_point_sample(xyz, npoint):
    # TODO(synk): PyTorch seeds FPS with a random first point; we use point 0 (deterministic).
    B, N, _ = xyz.shape

    def body(i, carry):
        centroids, distance, farthest = carry
        centroids = centroids.at[:, i].set(farthest)
        centroid = xyz[jnp.arange(B), farthest][:, None, :]
        dist = jnp.sum((xyz - centroid) ** 2, axis=-1)
        distance = jnp.minimum(distance, dist)
        farthest = jnp.argmax(distance, axis=-1).astype(jnp.int32)
        return centroids, distance, farthest

    init = (jnp.zeros((B, npoint), jnp.int32),
            jnp.full((B, N), 1e10, jnp.float32),
            jnp.zeros((B,), jnp.int32))
    centroids, _, _ = lax.fori_loop(0, npoint, body, init)
    return centroids


def index_points(points, idx):
    B = points.shape[0]
    batch = jnp.arange(B).reshape((B,) + (1,) * (idx.ndim - 1))
    return points[batch, idx]


def query_ball_point(radius, nsample, xyz, new_xyz):
    B, N, _ = xyz.shape
    S = new_xyz.shape[1]
    sqrdists = square_distance(new_xyz, xyz)
    group_idx = jnp.broadcast_to(jnp.arange(N, dtype=jnp.int32), (B, S, N))
    group_idx = jnp.where(sqrdists > radius ** 2, N, group_idx)
    group_idx = jnp.sort(group_idx, axis=-1)[:, :, :nsample]
    group_first = jnp.broadcast_to(group_idx[:, :, :1], group_idx.shape)
    return jnp.where(group_idx == N, group_first, group_idx)


def set_abstraction_msg(xyz, points, npoint, radius_list, nsample_list,
                        branch_params, *, use_pallas=True):
    # xyz:(B,3,N), points:(B,D,N) or None -> new_xyz:(B,3,S), new_points:(B,sumC,S)
    B = xyz.shape[0]
    feat_dtype = jnp.bfloat16 if use_pallas else jnp.float32
    xyz_t = jnp.transpose(xyz, (0, 2, 1)).astype(jnp.float32)   # coords stay f32 (FPS/ball query)
    points_t = None if points is None else jnp.transpose(points, (0, 2, 1))
    S = npoint
    new_xyz = index_points(xyz_t, farthest_point_sample(xyz_t, S))      # (B,S,3) f32

    outs = []
    for radius, K, layers in zip(radius_list, nsample_list, branch_params):
        group_idx = query_ball_point(radius, K, xyz_t, new_xyz)          # (B,S,K)
        grouped_xyz = (index_points(xyz_t, group_idx)
                       - new_xyz[:, :, None, :]).astype(feat_dtype)
        if points_t is not None:
            feat = jnp.concatenate(
                [index_points(points_t, group_idx).astype(feat_dtype), grouped_xyz],
                axis=-1)
        else:
            feat = grouped_xyz
        feat = feat.reshape(B * S * K, feat.shape[-1])
        # fused Conv1x1+BN+ReLU x3  +  max over the nsample neighbours
        pooled = fused_mlp_pool(feat, layers, K, use_pallas=use_pallas)  # (B*S, c_out)
        outs.append(pooled.reshape(B, S, -1))

    new_points = jnp.concatenate(outs, axis=-1)
    return jnp.transpose(new_xyz, (0, 2, 1)), jnp.transpose(new_points, (0, 2, 1))


def set_abstraction_all(xyz, points, layers, *, use_pallas=True):
    # group_all=True variant (sa3): xyz:(B,3,N), points:(B,D,N) -> (B,3,1),(B,C,1)
    B, _, N = xyz.shape
    feat_dtype = jnp.bfloat16 if use_pallas else jnp.float32
    feat = jnp.concatenate(
        [jnp.transpose(xyz, (0, 2, 1)).astype(feat_dtype),
         jnp.transpose(points, (0, 2, 1)).astype(feat_dtype)], axis=-1)  # (B,N,3+D)
    pooled = fused_mlp_pool(feat.reshape(B * N, feat.shape[-1]), layers, N,
                            use_pallas=use_pallas)                       # (B, c_out)
    return jnp.zeros((B, 3, 1), jnp.float32), pooled[:, :, None]


def get_model_forward(params, xyz, *, use_pallas=True):
    """Forward of pointnet2_cls_msg.get_model — returns the (B,256) feature, as in the spec."""
    B = xyz.shape[0]
    l1_xyz, l1_points = set_abstraction_msg(
        xyz, None, 512, [0.1, 0.2, 0.4], [16, 32, 128], params['sa1'],
        use_pallas=use_pallas)
    l2_xyz, l2_points = set_abstraction_msg(
        l1_xyz, l1_points, 128, [0.2, 0.4, 0.8], [32, 64, 128], params['sa2'],
        use_pallas=use_pallas)
    _, l3_points = set_abstraction_all(l2_xyz, l2_points, params['sa3'],
                                       use_pallas=use_pallas)

    x = l3_points.reshape(B, 1024)
    # fc1/bn1/relu + fc2/bn2/relu as a single fused kernel; drop1/drop2 are identity (eval).
    # TODO(synk): train-mode Dropout / BatchNorm batch statistics are not modeled.
    x = fused_mlp_pool(x, [params['fc1'], params['fc2']], 1,
                       out_f32=True, use_pallas=use_pallas)
    return x.astype(jnp.float32)


# ---------------------------------------------------------------------------
# Parameters (deterministic random init; BN folded to eval-mode scale/shift)
# ---------------------------------------------------------------------------
def _make_layer(key, c_in, c_out):
    kw, kb, kg, kbeta = jax.random.split(key, 4)
    w = jax.random.normal(kw, (c_in, c_out), jnp.float32) * (c_in ** -0.5)
    b = 0.01 * jax.random.normal(kb, (c_out,), jnp.float32)
    gamma = 1.0 + 0.1 * jax.random.normal(kg, (c_out,), jnp.float32)
    beta = 0.1 * jax.random.normal(kbeta, (c_out,), jnp.float32)
    eps = 1e-5
    running_mean = jnp.zeros((c_out,), jnp.float32)
    running_var = jnp.ones((c_out,), jnp.float32)
    scale = gamma / jnp.sqrt(running_var + eps)
    shift = beta - running_mean * scale
    return (w, b, scale, shift)


def init_params(key):
    keys = iter(jax.random.split(key, 32))

    def mlp(c_in, widths):
        layers, last = [], c_in
        for c in widths:
            layers.append(_make_layer(next(keys), last, c))
            last = c
        return layers

    p = {}
    p['sa1'] = [mlp(0 + 3, m) for m in ([32, 32, 64], [64, 64, 128], [64, 96, 128])]
    p['sa2'] = [mlp(320 + 3, m) for m in ([64, 64, 128], [128, 128, 256], [128, 128, 256])]
    p['sa3'] = mlp(640 + 3, [256, 512, 1024])
    p['fc1'] = _make_layer(next(keys), 1024, 512)
    p['fc2'] = _make_layer(next(keys), 512, 256)
    return p


if __name__ == "__main__":
    root = jax.random.PRNGKey(0)
    k_params, k_points = jax.random.split(root)

    B, N = 2, 512                 # smallest point count consistent with npoint=512 in sa1
    xyz = jax.random.normal(k_points, (B, 3, N), jnp.float32)
    params = init_params(k_params)

    # --- unit checks of the fused MLP+pool kernel against pure JAX ----------------
    # (a) tiny C_in (broadcast path), multi-step grid with group padding
    R1, K1 = 200, 16
    x1 = jax.random.normal(jax.random.PRNGKey(1), (R1 * K1, 3), jnp.float32)
    l1 = [_make_layer(jax.random.PRNGKey(2), 3, 32),
          _make_layer(jax.random.PRNGKey(3), 32, 32),
          _make_layer(jax.random.PRNGKey(4), 32, 64)]
    yp = fused_mlp_pool(x1, l1, K1, use_pallas=True).astype(jnp.float32)
    yr = fused_mlp_pool(x1, l1, K1, use_pallas=False)
    e1 = float(jnp.max(jnp.abs(yp - yr)) / (jnp.max(jnp.abs(yr)) + 1e-6))
    assert e1 < 3e-2, f"fused kernel (small C_in) mismatch: rel err {e1}"

    # (b) non-multiple-of-8 contraction dim (split dot + broadcast remainder), single step
    R2, K2 = 20, 32
    x2 = jax.random.normal(jax.random.PRNGKey(5), (R2 * K2, 83), jnp.float32)
    l2 = [_make_layer(jax.random.PRNGKey(6), 83, 40),
          _make_layer(jax.random.PRNGKey(7), 40, 56)]
    yp2 = fused_mlp_pool(x2, l2, K2, use_pallas=True).astype(jnp.float32)
    yr2 = fused_mlp_pool(x2, l2, K2, use_pallas=False)
    e2 = float(jnp.max(jnp.abs(yp2 - yr2)) / (jnp.max(jnp.abs(yr2)) + 1e-6))
    assert e2 < 3e-2, f"fused kernel (split dot) mismatch: rel err {e2}"

    # --- full get_model forward: Pallas (bf16 matmuls) vs pure-JAX f32 reference ---
    fwd_pallas = jax.jit(functools.partial(get_model_forward, use_pallas=True))
    fwd_ref = jax.jit(functools.partial(get_model_forward, use_pallas=False))

    out = jax.block_until_ready(fwd_pallas(params, xyz))
    ref = jax.block_until_ready(fwd_ref(params, xyz))

    assert out.shape == (B, 256), out.shape
    assert bool(jnp.all(jnp.isfinite(out)))
    rel = float(jnp.max(jnp.abs(out - ref)) / (jnp.max(jnp.abs(ref)) + 1e-6))
    assert rel < 6e-2, f"forward mismatch: rel err {rel}"

    print("KERNEL_OK")
</pallas_src>

<mosaic_0001>
module attributes {stable_mosaic.version = 11 : i64} {
  func.func @_mlp_pool_kernel(%arg0: i32, %arg1: memref<2048x3xbf16, #tpu.memory_space<vmem>>, %arg2: memref<3x32xbf16, #tpu.memory_space<vmem>>, %arg3: memref<1x32xf32, #tpu.memory_space<vmem>>, %arg4: memref<1x32xf32, #tpu.memory_space<vmem>>, %arg5: memref<32x32xbf16, #tpu.memory_space<vmem>>, %arg6: memref<1x32xf32, #tpu.memory_space<vmem>>, %arg7: memref<1x32xf32, #tpu.memory_space<vmem>>, %arg8: memref<32x64xbf16, #tpu.memory_space<vmem>>, %arg9: memref<1x64xf32, #tpu.memory_space<vmem>>, %arg10: memref<1x64xf32, #tpu.memory_space<vmem>>, %arg11: memref<128x64xbf16, #tpu.memory_space<vmem>>) attributes {dimension_semantics = [#tpu.dimension_semantics<parallel>], iteration_bounds = array<i64: 2>, scalar_prefetch = 0 : i64, scratch_operands = 0 : i64, tpu.core_type = #tpu.core_type<tc>, window_params = [{transform_indices = @transform_0, window_bounds = array<i64: 2048, 3>}, {pipeline_mode = #tpu.pipeline_mode<synchronous>, transform_indices = @transform_1, window_bounds = array<i64: 3, 32>}, {pipeline_mode = #tpu.pipeline_mode<synchronous>, transform_indices = @transform_2, window_bounds = array<i64: 1, 32>}, {pipeline_mode = #tpu.pipeline_mode<synchronous>, transform_indices = @transform_3, window_bounds = array<i64: 1, 32>}, {pipeline_mode = #tpu.pipeline_mode<synchronous>, transform_indices = @transform_4, window_bounds = array<i64: 32, 32>}, {pipeline_mode = #tpu.pipeline_mode<synchronous>, transform_indices = @transform_5, window_bounds = array<i64: 1, 32>}, {pipeline_mode = #tpu.pipeline_mode<synchronous>, transform_indices = @transform_6, window_bounds = array<i64: 1, 32>}, {pipeline_mode = #tpu.pipeline_mode<synchronous>, transform_indices = @transform_7, window_bounds = array<i64: 32, 64>}, {pipeline_mode = #tpu.pipeline_mode<synchronous>, transform_indices = @transform_8, window_bounds = array<i64: 1, 64>}, {pipeline_mode = #tpu.pipeline_mode<synchronous>, transform_indices = @transform_9, window_bounds = array<i64: 1, 64>}, {transform_indices = @transform_10, window_bounds = array<i64: 128, 64>}]} {
    %c0 = arith.constant 0 : index
    %c0_0 = arith.constant 0 : index
    %0 = vector.load %arg1[%c0, %c0_0] : memref<2048x3xbf16, #tpu.memory_space<vmem>>, vector<2048x3xbf16>
    %c0_1 = arith.constant 0 : index
    %c0_2 = arith.constant 0 : index
    %1 = vector.load %arg2[%c0_1, %c0_2] : memref<3x32xbf16, #tpu.memory_space<vmem>>, vector<3x32xbf16>
    %c0_3 = arith.constant 0 : index
    %c0_4 = arith.constant 0 : index
    %2 = vector.load %arg3[%c0_3, %c0_4] : memref<1x32xf32, #tpu.memory_space<vmem>>, vector<1x32xf32>
    %c0_5 = arith.constant 0 : index
    %c0_6 = arith.constant 0 : index
    %3 = vector.load %arg4[%c0_5, %c0_6] : memref<1x32xf32, #tpu.memory_space<vmem>>, vector<1x32xf32>
    %4 = arith.extf %0 : vector<2048x3xbf16> to vector<2048x3xf32>
    %5 = arith.extf %1 : vector<3x32xbf16> to vector<3x32xf32>
    %6 = vector.extract_strided_slice %4 {offsets = [0, 0], sizes = [2048, 1], strides = [1, 1]} : vector<2048x3xf32> to vector<2048x1xf32>
    %7 = vector.extract_strided_slice %5 {offsets = [0, 0], sizes = [1, 32], strides = [1, 1]} : vector<3x32xf32> to vector<1x32xf32>
    %8 = vector.broadcast %6 : vector<2048x1xf32> to vector<2048x32xf32>
    %9 = vector.broadcast %7 : vector<1x32xf32> to vector<2048x32xf32>
    %10 = arith.mulf %8, %9 : vector<2048x32xf32>
    %11 = vector.extract_strided_slice %4 {offsets = [0, 1], sizes = [2048, 1], strides = [1, 1]} : vector<2048x3xf32> to vector<2048x1xf32>
    %12 = vector.extract_strided_slice %5 {offsets = [1, 0], sizes = [1, 32], strides = [1, 1]} : vector<3x32xf32> to vector<1x32xf32>
    %13 = vector.broadcast %11 : vector<2048x1xf32> to vector<2048x32xf32>
    %14 = vector.broadcast %12 : vector<1x32xf32> to vector<2048x32xf32>
    %15 = arith.mulf %13, %14 : vector<2048x32xf32>
    %16 = arith.addf %10, %15 : vector<2048x32xf32>
    %17 = vector.extract_strided_slice %4 {offsets = [0, 2], sizes = [2048, 1], strides = [1, 1]} : vector<2048x3xf32> to vector<2048x1xf32>
    %18 = vector.extract_strided_slice %5 {offsets = [2, 0], sizes = [1, 32], strides = [1, 1]} : vector<3x32xf32> to vector<1x32xf32>
    %19 = vector.broadcast %17 : vector<2048x1xf32> to vector<2048x32xf32>
    %20 = vector.broadcast %18 : vector<1x32xf32> to vector<2048x32xf32>
    %21 = arith.mulf %19, %20 : vector<2048x32xf32>
    %22 = arith.addf %16, %21 : vector<2048x32xf32>
    %23 = vector.broadcast %2 : vector<1x32xf32> to vector<2048x32xf32>
    %24 = arith.mulf %22, %23 : vector<2048x32xf32>
    %25 = vector.broadcast %3 : vector<1x32xf32> to vector<2048x32xf32>
    %26 = arith.addf %24, %25 : vector<2048x32xf32>
    %cst = arith.constant 0.000000e+00 : f32
    %27 = vector.broadcast %cst : f32 to vector<2048x32xf32>
    %28 = arith.maximumf %26, %27 : vector<2048x32xf32>
    %c0_7 = arith.constant 0 : index
    %c0_8 = arith.constant 0 : index
    %29 = vector.load %arg5[%c0_7, %c0_8] : memref<32x32xbf16, #tpu.memory_space<vmem>>, vector<32x32xbf16>
    %c0_9 = arith.constant 0 : index
    %c0_10 = arith.constant 0 : index
    %30 = vector.load %arg6[%c0_9, %c0_10] : memref<1x32xf32, #tpu.memory_space<vmem>>, vector<1x32xf32>
    %c0_11 = arith.constant 0 : index
    %c0_12 = arith.constant 0 : index
    %31 = vector.load %arg7[%c0_11, %c0_12] : memref<1x32xf32, #tpu.memory_space<vmem>>, vector<1x32xf32>
    %32 = arith.truncf %28 : vector<2048x32xf32> to vector<2048x32xbf16>
    %cst_13 = arith.constant dense<0.000000e+00> : vector<2048x32xf32>
    %33 = tpu.matmul %32, %29, %cst_13 {dimension_numbers = #tpu.dot_dimension_numbers<[1], [0], [0], [1], [0, 0, 1, 1], [], []>} : vector<2048x32xbf16>, vector<32x32xbf16>, vector<2048x32xf32> -> vector<2048x32xf32>
    %34 = vector.broadcast %30 : vector<1x32xf32> to vector<2048x32xf32>
    %35 = arith.mulf %33, %34 : vector<2048x32xf32>
    %36 = vector.broadcast %31 : vector<1x32xf32> to vector<2048x32xf32>
    %37 = arith.addf %35, %36 : vector<2048x32xf32>
    %cst_14 = arith.constant 0.000000e+00 : f32
    %38 = vector.broadcast %cst_14 : f32 to vector<2048x32xf32>
    %39 = arith.maximumf %37, %38 : vector<2048x32xf32>
    %c0_15 = arith.constant 0 : index
    %c0_16 = arith.constant 0 : index
    %40 = vector.load %arg8[%c0_15, %c0_16] : memref<32x64xbf16, #tpu.memory_space<vmem>>, vector<32x64xbf16>
    %c0_17 = arith.constant 0 : index
    %c0_18 = arith.constant 0 : index
    %41 = vector.load %arg9[%c0_17, %c0_18] : memref<1x64xf32, #tpu.memory_space<vmem>>, vector<1x64xf32>
    %c0_19 = arith.constant 0 : index
    %c0_20 = arith.constant 0 : index
    %42 = vector.load %arg10[%c0_19, %c0_20] : memref<1x64xf32, #tpu.memory_space<vmem>>, vector<1x64xf32>
    %43 = arith.truncf %39 : vector<2048x32xf32> to vector<2048x32xbf16>
    %cst_21 = arith.constant dense<0.000000e+00> : vector<2048x64xf32>
    %44 = tpu.matmul %43, %40, %cst_21 {dimension_numbers = #tpu.dot_dimension_numbers<[1], [0], [0], [1], [0, 0, 1, 1], [], []>} : vector<2048x32xbf16>, vector<32x64xbf16>, vector<2048x64xf32> -> vector<2048x64xf32>
    %45 = vector.broadcast %41 : vector<1x64xf32> to vector<2048x64xf32>
    %46 = arith.mulf %44, %45 : vector<2048x64xf32>
    %47 = vector.broadcast %42 : vector<1x64xf32> to vector<2048x64xf32>
    %48 = arith.addf %46, %47 : vector<2048x64xf32>
    %cst_22 = arith.constant 0.000000e+00 : f32
    %49 = vector.broadcast %cst_22 : f32 to vector<2048x64xf32>
    %50 = arith.maximumf %48, %49 : vector<2048x64xf32>
    %51 = vector.shape_cast %50 : vector<2048x64xf32> to vector<128x16x64xf32>
    %cst_23 = arith.constant dense<0xFF800000> : vector<128x64xf32>
    %52 = vector.multi_reduction <maximumf>, %51, %cst_23 [1] : vector<128x16x64xf32> to vector<128x64xf32>
    %53 = arith.truncf %52 : vector<128x64xf32> to vector<128x64xbf16>
    %c0_24 = arith.constant 0 : index
    %c0_25 = arith.constant 0 : index
    %54 = vector.load %arg11[%c0_24, %c0_25] : memref<128x64xbf16, #tpu.memory_space<vmem>>, vector<128x64xbf16>
    tpu.vector_store %arg11[%c0_24, %c0_25], %53 {strides = array<i32>} : memref<128x64xbf16, #tpu.memory_space<vmem>>, vector<128x64xbf16>,
    return
  }
  func.func @transform_0(%arg0: i32) -> (i32, i32) {
    %c0_i32 = arith.constant 0 : i32
    %c0_i32_0 = arith.constant 0 : i32
    return %arg0, %c0_i32 : i32, i32
  }
  func.func @transform_1(%arg0: i32) -> (i32, i32) {
    %c0_i32 = arith.constant 0 : i32
    %c0_i32_0 = arith.constant 0 : i32
    %c0_i32_1 = arith.constant 0 : i32
    return %c0_i32, %c0_i32_0 : i32, i32
  }
  func.func @transform_2(%arg0: i32) -> (i32, i32) {
    %c0_i32 = arith.constant 0 : i32
    %c0_i32_0 = arith.constant 0 : i32
    %c0_i32_1 = arith.constant 0 : i32
    return %c0_i32, %c0_i32_0 : i32, i32
  }
  func.func @transform_3(%arg0: i32) -> (i32, i32) {
    %c0_i32 = arith.constant 0 : i32
    %c0_i32_0 = arith.constant 0 : i32
    %c0_i32_1 = arith.constant 0 : i32
    return %c0_i32, %c0_i32_0 : i32, i32
  }
  func.func @transform_4(%arg0: i32) -> (i32, i32) {
    %c0_i32 = arith.constant 0 : i32
    %c0_i32_0 = arith.constant 0 : i32
    %c0_i32_1 = arith.constant 0 : i32
    return %c0_i32, %c0_i32_0 : i32, i32
  }
  func.func @transform_5(%arg0: i32) -> (i32, i32) {
    %c0_i32 = arith.constant 0 : i32
    %c0_i32_0 = arith.constant 0 : i32
    %c0_i32_1 = arith.constant 0 : i32
    return %c0_i32, %c0_i32_0 : i32, i32
  }
  func.func @transform_6(%arg0: i32) -> (i32, i32) {
    %c0_i32 = arith.constant 0 : i32
    %c0_i32_0 = arith.constant 0 : i32
    %c0_i32_1 = arith.constant 0 : i32
    return %c0_i32, %c0_i32_0 : i32, i32
  }
  func.func @transform_7(%arg0: i32) -> (i32, i32) {
    %c0_i32 = arith.constant 0 : i32
    %c0_i32_0 = arith.constant 0 : i32
    %c0_i32_1 = arith.constant 0 : i32
    return %c0_i32, %c0_i32_0 : i32, i32
  }
  func.func @transform_8(%arg0: i32) -> (i32, i32) {
    %c0_i32 = arith.constant 0 : i32
    %c0_i32_0 = arith.constant 0 : i32
    %c0_i32_1 = arith.constant 0 : i32
    return %c0_i32, %c0_i32_0 : i32, i32
  }
  func.func @transform_9(%arg0: i32) -> (i32, i32) {
    %c0_i32 = arith.constant 0 : i32
    %c0_i32_0 = arith.constant 0 : i32
    %c0_i32_1 = arith.constant 0 : i32
    return %c0_i32, %c0_i32_0 : i32, i32
  }
  func.func @transform_10(%arg0: i32) -> (i32, i32) {
    %c0_i32 = arith.constant 0 : i32
    %c0_i32_0 = arith.constant 0 : i32
    return %arg0, %c0_i32 : i32, i32
  }
}

</mosaic_0001>

<llo_original>
// kernel: tpu_custom_call.1
$region0: #{tpu_custom_call.1}
  #allocation0 [shape = 'u32[]', space=smem, size = 0x4, offset = 0x4, fixed_abs, tag = 'smem constant byte address 0x4 - core index']
  #allocation1 [shape = 'u32[144,128]{1,0:T(1,128)}', space=vmem, size = 0x12000, scoped, tag = 'internal scratch']
  %s0 = inlined_call_operand.vmem [shape: bf16[4096,3], index: 0, kind: input, shape index: {}]
  %s1 = inlined_call_operand.vmem [shape: bf16[3,32], index: 1, kind: input, shape index: {}]
  %s2 = inlined_call_operand.vmem [shape: f32[1,32], index: 2, kind: input, shape index: {}]
  %s3 = inlined_call_operand.vmem [shape: f32[1,32], index: 3, kind: input, shape index: {}]
  %s4 = inlined_call_operand.vmem [shape: bf16[32,32], index: 4, kind: input, shape index: {}]
  %s5 = inlined_call_operand.vmem [shape: f32[1,32], index: 5, kind: input, shape index: {}]
  %s6 = inlined_call_operand.vmem [shape: f32[1,32], index: 6, kind: input, shape index: {}]
  %s7 = inlined_call_operand.vmem [shape: bf16[32,64], index: 7, kind: input, shape index: {}]
  %s8 = inlined_call_operand.vmem [shape: f32[1,64], index: 8, kind: input, shape index: {}]
  %s9 = inlined_call_operand.vmem [shape: f32[1,64], index: 9, kind: input, shape index: {}]
  %s10 = inlined_call_operand.vmem [shape: bf16[256,64], index: 10, kind: output, shape index: {}]
  %s11 = sld [smem:[#allocation0]]
  $region73: #{tpu_custom_call.1} parent=0
    _
  %s13 = ssub.s32 1, %s11
  %s14 = scalar_select 0, %s13, %s11
  loop: start=0, step=1, limit=4
  $region2: #{tpu_custom_call.1} parent=0 // loop_pre_header
    _
  $region3: #{tpu_custom_call.1} parent=0 // loop_header
    %s16 = sphi 0, %s20
    %p17 = scmp.ge.s32.totalorder %s16, 4
    %s26 = sphi 0, %s28
    %s29 = sphi 0, %s26
    %s30 = sphi 0, %s29
    %s46 = sphi 0, %s30
    %s50 = sphi 0, %s50
    %s52 = sphi 0, %s50
    %s53 = sphi 0, %s52
    %s67 = sphi 0, %s53
    %s71 = sphi 0, %s71
    %s73 = sphi 0, %s71
    %s74 = sphi 0, %s73
    %s88 = sphi 0, %s74
    %s92 = sphi 0, %s92
    %s94 = sphi 0, %s92
    %s95 = sphi 0, %s94
    %s109 = sphi 0, %s95
    %s113 = sphi 0, %s113
    %s115 = sphi 0, %s113
    %s116 = sphi 0, %s115
    %s130 = sphi 0, %s116
    %s134 = sphi 0, %s134
    %s136 = sphi 0, %s134
    %s137 = sphi 0, %s136
    %s151 = sphi 0, %s137
    %s155 = sphi 0, %s155
    %s157 = sphi 0, %s155
    %s158 = sphi 0, %s157
    %s172 = sphi 0, %s158
    %s176 = sphi 0, %s176
    %s178 = sphi 0, %s176
    %s179 = sphi 0, %s178
    %s193 = sphi 0, %s179
    %s197 = sphi 0, %s197
    %s199 = sphi 0, %s197
    %s200 = sphi 0, %s199
    %s214 = sphi 0, %s200
    %s218 = sphi 0, %s218
    %s220 = sphi 0, %s218
    %s221 = sphi 0, %s220
    %s235 = sphi 0, %s221
    %s241 = sphi 0, %s243
    %s244 = sphi 0, %s241
    %s245 = sphi 0, %s244
    %s261 = sphi 0, %s245
  $region4: #{tpu_custom_call.1} parent=0 // loop_header_branch
    %19 = sbr.rel (%p17) target = $region8
  $region5: #{tpu_custom_call.1} parent=0 // loop_body
    %s21 = ssub.s32 %s16, 1
    %s22 = ssub.s32 %s16, 2
    %s23 = sadd.s32 %s16, 1
    %s24 = ssub.s32 %s16, %s23
    %p25 = scmp.eq.s32.totalorder %s24, 0
    %s27 = sadd.s32 %s26, 1
    %s28 = scalar_select %p25, %s26, %s27
    %p31 = pneg %p25
    %p32 = scmp.eq.s32.totalorder %s16, 1
    %p33 = por %p31, %p32
    %p34 = scmp.ne.s32.totalorder %s26, %s29
    %p35 = scmp.eq.s32.totalorder %s16, 0
    %p36 = por %p34, %p35
    %p37 = scmp.ne.s32.totalorder %s26, %s29
    %p38 = scmp.eq.s32.totalorder %s21, 1
    %p39 = por %p37, %p38
    %p40 = scmp.ne.s32.totalorder %s29, %s30
    %p41 = scmp.eq.s32.totalorder %s21, 0
    %p42 = por %p40, %p41
    %p43 = scmp.ne.s32.totalorder %s29, %s30
    %p44 = scmp.eq.s32.totalorder %s22, 1
    %p45 = por %p43, %p44
    %p47 = scmp.ne.s32.totalorder %s30, %s46
    %p48 = scmp.eq.s32.totalorder %s22, 0
    %p49 = por %p47, %p48
    %s51 = sadd.s32 %s50, 1
    %p54 = scmp.eq.s32.totalorder %s16, 1
    %p55 = scmp.ne.s32.totalorder %s50, %s52
    %p56 = scmp.eq.s32.totalorder %s16, 0
    %p57 = por %p55, %p56
    %p58 = scmp.ne.s32.totalorder %s50, %s52
    %p59 = scmp.eq.s32.totalorder %s21, 1
    %p60 = por %p58, %p59
    %p61 = scmp.ne.s32.totalorder %s52, %s53
    %p62 = scmp.eq.s32.totalorder %s21, 0
    %p63 = por %p61, %p62
    %p64 = scmp.ne.s32.totalorder %s52, %s53
    %p65 = scmp.eq.s32.totalorder %s22, 1
    %p66 = por %p64, %p65
    %p68 = scmp.ne.s32.totalorder %s53, %s67
    %p69 = scmp.eq.s32.totalorder %s22, 0
    %p70 = por %p68, %p69
    %s72 = sadd.s32 %s71, 1
    %p75 = scmp.eq.s32.totalorder %s16, 1
    %p76 = scmp.ne.s32.totalorder %s71, %s73
    %p77 = scmp.eq.s32.totalorder %s16, 0
    %p78 = por %p76, %p77
    %p79 = scmp.ne.s32.totalorder %s71, %s73
    %p80 = scmp.eq.s32.totalorder %s21, 1
    %p81 = por %p79, %p80
    %p82 = scmp.ne.s32.totalorder %s73, %s74
    %p83 = scmp.eq.s32.totalorder %s21, 0
    %p84 = por %p82, %p83
    %p85 = scmp.ne.s32.totalorder %s73, %s74
    %p86 = scmp.eq.s32.totalorder %s22, 1
    %p87 = por %p85, %p86
    %p89 = scmp.ne.s32.totalorder %s74, %s88
    %p90 = scmp.eq.s32.totalorder %s22, 0
    %p91 = por %p89, %p90
    %s93 = sadd.s32 %s92, 1
    %p96 = scmp.eq.s32.totalorder %s16, 1
    %p97 = scmp.ne.s32.totalorder %s92, %s94
    %p98 = scmp.eq.s32.totalorder %s16, 0
    %p99 = por %p97, %p98
    %p100 = scmp.ne.s32.totalorder %s92, %s94
    %p101 = scmp.eq.s32.totalorder %s21, 1
    %p102 = por %p100, %p101
    %p103 = scmp.ne.s32.totalorder %s94, %s95
    %p104 = scmp.eq.s32.totalorder %s21, 0
    %p105 = por %p103, %p104
    %p106 = scmp.ne.s32.totalorder %s94, %s95
    %p107 = scmp.eq.s32.totalorder %s22, 1
    %p108 = por %p106, %p107
    %p110 = scmp.ne.s32.totalorder %s95, %s109
    %p111 = scmp.eq.s32.totalorder %s22, 0
    %p112 = por %p110, %p111
    %s114 = sadd.s32 %s113, 1
    %p117 = scmp.eq.s32.totalorder %s16, 1
    %p118 = scmp.ne.s32.totalorder %s113, %s115
    %p119 = scmp.eq.s32.totalorder %s16, 0
    %p120 = por %p118, %p119
    %p121 = scmp.ne.s32.totalorder %s113, %s115
    %p122 = scmp.eq.s32.totalorder %s21, 1
    %p123 = por %p121, %p122
    %p124 = scmp.ne.s32.totalorder %s115, %s116
    %p125 = scmp.eq.s32.totalorder %s21, 0
    %p126 = por %p124, %p125
    %p127 = scmp.ne.s32.totalorder %s115, %s116
    %p128 = scmp.eq.s32.totalorder %s22, 1
    %p129 = por %p127, %p128
    %p131 = scmp.ne.s32.totalorder %s116, %s130
    %p132 = scmp.eq.s32.totalorder %s22, 0
    %p133 = por %p131, %p132
    %s135 = sadd.s32 %s134, 1
    %p138 = scmp.eq.s32.totalorder %s16, 1
    %p139 = scmp.ne.s32.totalorder %s134, %s136
    %p140 = scmp.eq.s32.totalorder %s16, 0
    %p141 = por %p139, %p140
    %p142 = scmp.ne.s32.totalorder %s134, %s136
    %p143 = scmp.eq.s32.totalorder %s21, 1
    %p144 = por %p142, %p143
    %p145 = scmp.ne.s32.totalorder %s136, %s137
    %p146 = scmp.eq.s32.totalorder %s21, 0
    %p147 = por %p145, %p146
    %p148 = scmp.ne.s32.totalorder %s136, %s137
    %p149 = scmp.eq.s32.totalorder %s22, 1
    %p150 = por %p148, %p149
    %p152 = scmp.ne.s32.totalorder %s137, %s151
    %p153 = scmp.eq.s32.totalorder %s22, 0
    %p154 = por %p152, %p153
    %s156 = sadd.s32 %s155, 1
    %p159 = scmp.eq.s32.totalorder %s16, 1
    %p160 = scmp.ne.s32.totalorder %s155, %s157
    %p161 = scmp.eq.s32.totalorder %s16, 0
    %p162 = por %p160, %p161
    %p163 = scmp.ne.s32.totalorder %s155, %s157
    %p164 = scmp.eq.s32.totalorder %s21, 1
    %p165 = por %p163, %p164
    %p166 = scmp.ne.s32.totalorder %s157, %s158
    %p167 = scmp.eq.s32.totalorder %s21, 0
    %p168 = por %p166, %p167
    %p169 = scmp.ne.s32.totalorder %s157, %s158
    %p170 = scmp.eq.s32.totalorder %s22, 1
    %p171 = por %p169, %p170
    %p173 = scmp.ne.s32.totalorder %s158, %s172
    %p174 = scmp.eq.s32.totalorder %s22, 0
    %p175 = por %p173, %p174
    %s177 = sadd.s32 %s176, 1
    %p180 = scmp.eq.s32.totalorder %s16, 1
    %p181 = scmp.ne.s32.totalorder %s176, %s178
    %p182 = scmp.eq.s32.totalorder %s16, 0
    %p183 = por %p181, %p182
    %p184 = scmp.ne.s32.totalorder %s176, %s178
    %p185 = scmp.eq.s32.totalorder %s21, 1
    %p186 = por %p184, %p185
    %p187 = scmp.ne.s32.totalorder %s178, %s179
    %p188 = scmp.eq.s32.totalorder %s21, 0
    %p189 = por %p187, %p188
    %p190 = scmp.ne.s32.totalorder %s178, %s179
    %p191 = scmp.eq.s32.totalorder %s22, 1
    %p192 = por %p190, %p191
    %p194 = scmp.ne.s32.totalorder %s179, %s193
    %p195 = scmp.eq.s32.totalorder %s22, 0
    %p196 = por %p194, %p195
    %s198 = sadd.s32 %s197, 1
    %p201 = scmp.eq.s32.totalorder %s16, 1
    %p202 = scmp.ne.s32.totalorder %s197, %s199
    %p203 = scmp.eq.s32.totalorder %s16, 0
    %p204 = por %p202, %p203
    %p205 = scmp.ne.s32.totalorder %s197, %s199
    %p206 = scmp.eq.s32.totalorder %s21, 1
    %p207 = por %p205, %p206
    %p208 = scmp.ne.s32.totalorder %s199, %s200
    %p209 = scmp.eq.s32.totalorder %s21, 0
    %p210 = por %p208, %p209
    %p211 = scmp.ne.s32.totalorder %s199, %s200
    %p212 = scmp.eq.s32.totalorder %s22, 1
    %p213 = por %p211, %p212
    %p215 = scmp.ne.s32.totalorder %s200, %s214
    %p216 = scmp.eq.s32.totalorder %s22, 0
    %p217 = por %p215, %p216
    %s219 = sadd.s32 %s218, 1
    %p222 = scmp.eq.s32.totalorder %s16, 1
    %p223 = scmp.ne.s32.totalorder %s218, %s220
    %p224 = scmp.eq.s32.totalorder %s16, 0
    %p225 = por %p223, %p224
    %p226 = scmp.ne.s32.totalorder %s218, %s220
    %p227 = scmp.eq.s32.totalorder %s21, 1
    %p228 = por %p226, %p227
    %p229 = scmp.ne.s32.totalorder %s220, %s221
    %p230 = scmp.eq.s32.totalorder %s21, 0
    %p231 = por %p229, %p230
    %p232 = scmp.ne.s32.totalorder %s220, %s221
    %p233 = scmp.eq.s32.totalorder %s22, 1
    %p234 = por %p232, %p233
    %p236 = scmp.ne.s32.totalorder %s221, %s235
    %p237 = scmp.eq.s32.totalorder %s22, 0
    %p238 = por %p236, %p237
    %s239 = ssub.s32 %s16, %s23
    %p240 = scmp.eq.s32.totalorder %s239, 0
    %s242 = sadd.s32 %s241, 1
    %s243 = scalar_select %p240, %s241, %s242
    %p246 = pneg %p240
    %p247 = scmp.eq.s32.totalorder %s16, 1
    %p248 = por %p246, %p247
    %p249 = scmp.ne.s32.totalorder %s241, %s244
    %p250 = scmp.eq.s32.totalorder %s16, 0
    %p251 = por %p249, %p250
    %p252 = scmp.ne.s32.totalorder %s241, %s244
    %p253 = scmp.eq.s32.totalorder %s21, 1
    %p254 = por %p252, %p253
    %p255 = scmp.ne.s32.totalorder %s244, %s245
    %p256 = scmp.eq.s32.totalorder %s21, 0
    %p257 = por %p255, %p256
    %p258 = scmp.ne.s32.totalorder %s244, %s245
    %p259 = scmp.eq.s32.totalorder %s22, 1
    %p260 = por %p258, %p259
    %p262 = scmp.ne.s32.totalorder %s245, %s261
    %p263 = scmp.eq.s32.totalorder %s22, 0
    %p264 = por %p262, %p263
    %p265 = scmp.le.s32.totalorder 1, %s16
    %p266 = scmp.lt.s32.totalorder %s16, 3
    %p267 = pnand %p265, %p266
    %p268 = pneg %p267
    // Predicated region
    $region9: #{tpu_custom_call.1} parent=5 // pred_check
      _
    $region10: #{tpu_custom_call.1} parent=5 // pred_check_branch
      %270 = sbr.rel (%p267) target = $region12
    $region11: #{tpu_custom_call.1} parent=5 // pred_region
      %s271 = ssub.s32 %s16, 1
      // Predicated region
      $region13: #{tpu_custom_call.1} parent=11 // pred_check
        %p272 = pneg %p63
      $region14: #{tpu_custom_call.1} parent=11 // pred_check_branch
        %274 = sbr.rel (%p272) target = $region16
      $region15: #{tpu_custom_call.1} parent=11 // pred_region
        _
      $region16: #{tpu_custom_call.1} parent=11 // pred_fallthru
        _
      // Predicated region
      $region17: #{tpu_custom_call.1} parent=11 // pred_check
        %p275 = pneg %p84
      $region18: #{tpu_custom_call.1} parent=11 // pred_check_branch
        %277 = sbr.rel (%p275) target = $region20
      $region19: #{tpu_custom_call.1} parent=11 // pred_region
        _
      $region20: #{tpu_custom_call.1} parent=11 // pred_fallthru
        _
      // Predicated region
      $region21: #{tpu_custom_call.1} parent=11 // pred_check
        %p278 = pneg %p105
      $region22: #{tpu_custom_call.1} parent=11 // pred_check_branch
        %280 = sbr.rel (%p278) target = $region24
      $region23: #{tpu_custom_call.1} parent=11 // pred_region
        _
      $region24: #{tpu_custom_call.1} parent=11 // pred_fallthru
        _
      // Predicated region
      $region25: #{tpu_custom_call.1} parent=11 // pred_check
        %p281 = pneg %p126
      $region26: #{tpu_custom_call.1} parent=11 // pred_check_branch
        %283 = sbr.rel (%p281) target = $region28
      $region27: #{tpu_custom_call.1} parent=11 // pred_region
        _
      $region28: #{tpu_custom_call.1} parent=11 // pred_fallthru
        _
      // Predicated region
      $region29: #{tpu_custom_call.1} parent=11 // pred_check
        %p284 = pneg %p147
      $region30: #{tpu_custom_call.1} parent=11 // pred_check_branch
        %286 = sbr.rel (%p284) target = $region32
      $region31: #{tpu_custom_call.1} parent=11 // pred_region
        _
      $region32: #{tpu_custom_call.1} parent=11 // pred_fallthru
        _
      // Predicated region
      $region33: #{tpu_custom_call.1} parent=11 // pred_check
        %p287 = pneg %p168
      $region34: #{tpu_custom_call.1} parent=11 // pred_check_branch
        %289 = sbr.rel (%p287) target = $region36
      $region35: #{tpu_custom_call.1} parent=11 // pred_region
        _
      $region36: #{tpu_custom_call.1} parent=11 // pred_fallthru
        _
      // Predicated region
      $region37: #{tpu_custom_call.1} parent=11 // pred_check
        %p290 = pneg %p189
      $region38: #{tpu_custom_call.1} parent=11 // pred_check_branch
        %292 = sbr.rel (%p290) target = $region40
      $region39: #{tpu_custom_call.1} parent=11 // pred_region
        _
      $region40: #{tpu_custom_call.1} parent=11 // pred_fallthru
        _
      // Predicated region
      $region41: #{tpu_custom_call.1} parent=11 // pred_check
        %p293 = pneg %p210
      $region42: #{tpu_custom_call.1} parent=11 // pred_check_branch
        %295 = sbr.rel (%p293) target = $region44
      $region43: #{tpu_custom_call.1} parent=11 // pred_region
        _
      $region44: #{tpu_custom_call.1} parent=11 // pred_fallthru
        _
      // Predicated region
      $region45: #{tpu_custom_call.1} parent=11 // pred_check
        %p296 = pneg %p231
      $region46: #{tpu_custom_call.1} parent=11 // pred_check_branch
        %298 = sbr.rel (%p296) target = $region48
      $region47: #{tpu_custom_call.1} parent=11 // pred_region
        _
      $region48: #{tpu_custom_call.1} parent=11 // pred_fallthru
        _
    $region12: #{tpu_custom_call.1} parent=5 // pred_fallthru
      _
    %p299 = scmp.lt.s32.totalorder %s16, 2
    // Predicated region
    $region49: #{tpu_custom_call.1} parent=5 // pred_check
      %p300 = pneg %p299
    $region50: #{tpu_custom_call.1} parent=5 // pred_check_branch
      %302 = sbr.rel (%p300) target = $region52
    $region51: #{tpu_custom_call.1} parent=5 // pred_region
      // Predicated region
      $region53: #{tpu_custom_call.1} parent=51 // pred_check
        %p303 = pneg %p36
      $region54: #{tpu_custom_call.1} parent=51 // pred_check_branch
        %305 = sbr.rel (%p303) target = $region56
      $region55: #{tpu_custom_call.1} parent=51 // pred_region
        %s306 = smul.u32 256, %s16
        %p307 = scmp.lt.s32.totalorder %s306, 511
        %s308 = scalar_select %p307, %s306, 511
        %s309 = smul.addr %s308, 4
        %s310 = scalar_lea.vmem %s0, %s309
        %s311 = smul.u32 256, %s16
      $region56: #{tpu_custom_call.1} parent=51 // pred_fallthru
        _
    $region52: #{tpu_custom_call.1} parent=5 // pred_fallthru
      _
    %p312 = scmp.le.s32.totalorder 1, %s16
    %p313 = scmp.lt.s32.totalorder %s16, 3
    %p314 = pnand %p312, %p313
    %p315 = pneg %p314
    // Predicated region
    $region57: #{tpu_custom_call.1} parent=5 // pred_check
      _
    $region58: #{tpu_custom_call.1} parent=5 // pred_check_branch
      %317 = sbr.rel (%p314) target = $region60
    $region59: #{tpu_custom_call.1} parent=5 // pred_region
      %s318 = ssub.s32 %s16, 1
      %s319 = smul.u32 256, %s21
      %p320 = scmp.lt.s32.totalorder %s319, 511
      %s321 = scalar_select %p320, %s319, 511
      %s322 = smul.addr %s321, 4
      %s323 = scalar_lea.vmem %s0, %s322
      %p324 = pneg %p42
      %p325 = pneg %p39
      %p326 = pneg %p63
      %p327 = pneg %p60
      %p328 = pneg %p84
      %p329 = pneg %p81
      %p330 = pneg %p105
      %p331 = pneg %p102
      %p332 = pneg %p126
      %p333 = pneg %p123
      %p334 = pneg %p147
      %p335 = pneg %p144
      %p336 = pneg %p168
      %p337 = pneg %p165
      %p338 = pneg %p189
      %p339 = pneg %p186
      %p340 = pneg %p210
      %p341 = pneg %p207
      %p342 = pneg %p231
      %p343 = pneg %p228
      %p344 = pneg %p257
      %p345 = pneg %p254
      %s346 = smul.u32 16, %s21
      %p347 = scmp.lt.s32.totalorder %s346, 31
      %s348 = scalar_select %p347, %s346, 31
      %s349 = smul.addr %s348, 4
      %s350 = scalar_lea.vmem %s10, %s349
      %s351 = smul.u32 256, %s21
      %p352 = scmp.lt.s32.totalorder %s351, 511
      %s353 = scalar_select %p352, %s351, 511
      %s354 = smul.addr %s353, 4
      %s355 = scalar_lea.vmem %s0, %s354
      %s356 = smul.u32 256, %s21
      %s357 = smul.u32 16, %s21
      %p358 = scmp.lt.s32.totalorder %s357, 31
      %s359 = scalar_select %p358, %s357, 31
      %s360 = smul.addr %s359, 4
      %s361 = scalar_lea.vmem %s10, %s360
      %s362 = smul.u32 16, %s21
      %v364 = vld [vmem:[%s355] sm:$0xf]
      %v365 = vld [vmem:[%s355 + $0x4] sm:$0xf]
      %v366 = vld [vmem:[%s355 + $0x8] sm:$0xf]
      %v367 = vld [vmem:[%s355 + $0xc] sm:$0xf]
      %v368 = vld [vmem:[%s355 + $0x10] sm:$0xf]
      %v369 = vld [vmem:[%s355 + $0x14] sm:$0xf]
      %v370 = vld [vmem:[%s355 + $0x18] sm:$0xf]
      %v371 = vld [vmem:[%s355 + $0x1c] sm:$0xf]
      %v372 = vld [vmem:[%s355 + $0x20] sm:$0xf]
      %v373 = vld [vmem:[%s355 + $0x24] sm:$0xf]
      %v374 = vld [vmem:[%s355 + $0x28] sm:$0xf]
      %v375 = vld [vmem:[%s355 + $0x2c] sm:$0xf]
      %v376 = vld [vmem:[%s355 + $0x30] sm:$0xf]
      %v377 = vld [vmem:[%s355 + $0x34] sm:$0xf]
      %v378 = vld [vmem:[%s355 + $0x38] sm:$0xf]
      %v379 = vld [vmem:[%s355 + $0x3c] sm:$0xf]
      %v380 = vld [vmem:[%s355 + $0x40] sm:$0xf]
      %v381 = vld [vmem:[%s355 + $0x44] sm:$0xf]
      %v382 = vld [vmem:[%s355 + $0x48] sm:$0xf]
      %v383 = vld [vmem:[%s355 + $0x4c] sm:$0xf]
      %v384 = vld [vmem:[%s355 + $0x50] sm:$0xf]
      %v385 = vld [vmem:[%s355 + $0x54] sm:$0xf]
      %v386 = vld [vmem:[%s355 + $0x58] sm:$0xf]
      %v387 = vld [vmem:[%s355 + $0x5c] sm:$0xf]
      %v388 = vld [vmem:[%s355 + $0x60] sm:$0xf]
      %v389 = vld [vmem:[%s355 + $0x64] sm:$0xf]
      %v390 = vld [vmem:[%s355 + $0x68] sm:$0xf]
      %v391 = vld [vmem:[%s355 + $0x6c] sm:$0xf]
      %v392 = vld [vmem:[%s355 + $0x70] sm:$0xf]
      %v393 = vld [vmem:[%s355 + $0x74] sm:$0xf]
      %v394 = vld [vmem:[%s355 + $0x78] sm:$0xf]
      %v395 = vld [vmem:[%s355 + $0x7c] sm:$0xf]
      %v396 = vld [vmem:[%s355 + $0x80] sm:$0xf]
      %v397 = vld [vmem:[%s355 + $0x84] sm:$0xf]
      %v398 = vld [vmem:[%s355 + $0x88] sm:$0xf]
      %v399 = vld [vmem:[%s355 + $0x8c] sm:$0xf]
      %v400 = vld [vmem:[%s355 + $0x90] sm:$0xf]
      %v401 = vld [vmem:[%s355 + $0x94] sm:$0xf]
      %v402 = vld [vmem:[%s355 + $0x98] sm:$0xf]
      %v403 = vld [vmem:[%s355 + $0x9c] sm:$0xf]
      %v404 = vld [vmem:[%s355 + $0xa0] sm:$0xf]
      %v405 = vld [vmem:[%s355 + $0xa4] sm:$0xf]
      %v406 = vld [vmem:[%s355 + $0xa8] sm:$0xf]
      %v407 = vld [vmem:[%s355 + $0xac] sm:$0xf]
      %v408 = vld [vmem:[%s355 + $0xb0] sm:$0xf]
      %v409 = vld [vmem:[%s355 + $0xb4] sm:$0xf]
      %v410 = vld [vmem:[%s355 + $0xb8] sm:$0xf]
      %v411 = vld [vmem:[%s355 + $0xbc] sm:$0xf]
      %v412 = vld [vmem:[%s355 + $0xc0] sm:$0xf]
      %v413 = vld [vmem:[%s355 + $0xc4] sm:$0xf]
      %v414 = vld [vmem:[%s355 + $0xc8] sm:$0xf]
      %v415 = vld [vmem:[%s355 + $0xcc] sm:$0xf]
      %v416 = vld [vmem:[%s355 + $0xd0] sm:$0xf]
      %v417 = vld [vmem:[%s355 + $0xd4] sm:$0xf]
      %v418 = vld [vmem:[%s355 + $0xd8] sm:$0xf]
      %v419 = vld [vmem:[%s355 + $0xdc] sm:$0xf]
      %v420 = vld [vmem:[%s355 + $0xe0] sm:$0xf]
      %v421 = vld [vmem:[%s355 + $0xe4] sm:$0xf]
      %v422 = vld [vmem:[%s355 + $0xe8] sm:$0xf]
      %v423 = vld [vmem:[%s355 + $0xec] sm:$0xf]
      %v424 = vld [vmem:[%s355 + $0xf0] sm:$0xf]
      %v425 = vld [vmem:[%s355 + $0xf4] sm:$0xf]
      %v426 = vld [vmem:[%s355 + $0xf8] sm:$0xf]
      %v427 = vld [vmem:[%s355 + $0xfc] sm:$0xf]
      %v428 = vld [vmem:[%s355 + $0x100] sm:$0xf]
      %v429 = vld [vmem:[%s355 + $0x104] sm:$0xf]
      %v430 = vld [vmem:[%s355 + $0x108] sm:$0xf]
      %v431 = vld [vmem:[%s355 + $0x10c] sm:$0xf]
      %v432 = vld [vmem:[%s355 + $0x110] sm:$0xf]
      %v433 = vld [vmem:[%s355 + $0x114] sm:$0xf]
      %v434 = vld [vmem:[%s355 + $0x118] sm:$0xf]
      %v435 = vld [vmem:[%s355 + $0x11c] sm:$0xf]
      %v436 = vld [vmem:[%s355 + $0x120] sm:$0xf]
      %v437 = vld [vmem:[%s355 + $0x124] sm:$0xf]
      %v438 = vld [vmem:[%s355 + $0x128] sm:$0xf]
      %v439 = vld [vmem:[%s355 + $0x12c] sm:$0xf]
      %v440 = vld [vmem:[%s355 + $0x130] sm:$0xf]
      %v441 = vld [vmem:[%s355 + $0x134] sm:$0xf]
      %v442 = vld [vmem:[%s355 + $0x138] sm:$0xf]
      %v443 = vld [vmem:[%s355 + $0x13c] sm:$0xf]
      %v444 = vld [vmem:[%s355 + $0x140] sm:$0xf]
      %v445 = vld [vmem:[%s355 + $0x144] sm:$0xf]
      %v446 = vld [vmem:[%s355 + $0x148] sm:$0xf]
      %v447 = vld [vmem:[%s355 + $0x14c] sm:$0xf]
      %v448 = vld [vmem:[%s355 + $0x150] sm:$0xf]
      %v449 = vld [vmem:[%s355 + $0x154] sm:$0xf]
      %v450 = vld [vmem:[%s355 + $0x158] sm:$0xf]
      %v451 = vld [vmem:[%s355 + $0x15c] sm:$0xf]
      %v452 = vld [vmem:[%s355 + $0x160] sm:$0xf]
      %v453 = vld [vmem:[%s355 + $0x164] sm:$0xf]
      %v454 = vld [vmem:[%s355 + $0x168] sm:$0xf]
      %v455 = vld [vmem:[%s355 + $0x16c] sm:$0xf]
      %v456 = vld [vmem:[%s355 + $0x170] sm:$0xf]
      %v457 = vld [vmem:[%s355 + $0x174] sm:$0xf]
      %v458 = vld [vmem:[%s355 + $0x178] sm:$0xf]
      %v459 = vld [vmem:[%s355 + $0x17c] sm:$0xf]
      %v460 = vld [vmem:[%s355 + $0x180] sm:$0xf]
      %v461 = vld [vmem:[%s355 + $0x184] sm:$0xf]
      %v462 = vld [vmem:[%s355 + $0x188] sm:$0xf]
      %v463 = vld [vmem:[%s355 + $0x18c] sm:$0xf]
      %v464 = vld [vmem:[%s355 + $0x190] sm:$0xf]
      %v465 = vld [vmem:[%s355 + $0x194] sm:$0xf]
      %v466 = vld [vmem:[%s355 + $0x198] sm:$0xf]
      %v467 = vld [vmem:[%s355 + $0x19c] sm:$0xf]
      %v468 = vld [vmem:[%s355 + $0x1a0] sm:$0xf]
      %v469 = vld [vmem:[%s355 + $0x1a4] sm:$0xf]
      %v470 = vld [vmem:[%s355 + $0x1a8] sm:$0xf]
      %v471 = vld [vmem:[%s355 + $0x1ac] sm:$0xf]
      %v472 = vld [vmem:[%s355 + $0x1b0] sm:$0xf]
      %v473 = vld [vmem:[%s355 + $0x1b4] sm:$0xf]
      %v474 = vld [vmem:[%s355 + $0x1b8] sm:$0xf]
      %v475 = vld [vmem:[%s355 + $0x1bc] sm:$0xf]
      %v476 = vld [vmem:[%s355 + $0x1c0] sm:$0xf]
      %v477 = vld [vmem:[%s355 + $0x1c4] sm:$0xf]
      %v478 = vld [vmem:[%s355 + $0x1c8] sm:$0xf]
      %v479 = vld [vmem:[%s355 + $0x1cc] sm:$0xf]
      %v480 = vld [vmem:[%s355 + $0x1d0] sm:$0xf]
      %v481 = vld [vmem:[%s355 + $0x1d4] sm:$0xf]
      %v482 = vld [vmem:[%s355 + $0x1d8] sm:$0xf]
      %v483 = vld [vmem:[%s355 + $0x1dc] sm:$0xf]
      %v484 = vld [vmem:[%s355 + $0x1e0] sm:$0xf]
      %v485 = vld [vmem:[%s355 + $0x1e4] sm:$0xf]
      %v486 = vld [vmem:[%s355 + $0x1e8] sm:$0xf]
      %v487 = vld [vmem:[%s355 + $0x1ec] sm:$0xf]
      %v488 = vld [vmem:[%s355 + $0x1f0] sm:$0xf]
      %v489 = vld [vmem:[%s355 + $0x1f4] sm:$0xf]
      %v490 = vld [vmem:[%s355 + $0x1f8] sm:$0xf]
      %v491 = vld [vmem:[%s355 + $0x1fc] sm:$0xf]
      %v492 = vld [vmem:[%s355 + $0x200] sm:$0xf]
      %v493 = vld [vmem:[%s355 + $0x204] sm:$0xf]
      %v494 = vld [vmem:[%s355 + $0x208] sm:$0xf]
      %v495 = vld [vmem:[%s355 + $0x20c] sm:$0xf]
      %v496 = vld [vmem:[%s355 + $0x210] sm:$0xf]
      %v497 = vld [vmem:[%s355 + $0x214] sm:$0xf]
      %v498 = vld [vmem:[%s355 + $0x218] sm:$0xf]
      %v499 = vld [vmem:[%s355 + $0x21c] sm:$0xf]
      %v500 = vld [vmem:[%s355 + $0x220] sm:$0xf]
      %v501 = vld [vmem:[%s355 + $0x224] sm:$0xf]
      %v502 = vld [vmem:[%s355 + $0x228] sm:$0xf]
      %v503 = vld [vmem:[%s355 + $0x22c] sm:$0xf]
      %v504 = vld [vmem:[%s355 + $0x230] sm:$0xf]
      %v505 = vld [vmem:[%s355 + $0x234] sm:$0xf]
      %v506 = vld [vmem:[%s355 + $0x238] sm:$0xf]
      %v507 = vld [vmem:[%s355 + $0x23c] sm:$0xf]
      %v508 = vld [vmem:[%s355 + $0x240] sm:$0xf]
      %v509 = vld [vmem:[%s355 + $0x244] sm:$0xf]
      %v510 = vld [vmem:[%s355 + $0x248] sm:$0xf]
      %v511 = vld [vmem:[%s355 + $0x24c] sm:$0xf]
      %v512 = vld [vmem:[%s355 + $0x250] sm:$0xf]
      %v513 = vld [vmem:[%s355 + $0x254] sm:$0xf]
      %v514 = vld [vmem:[%s355 + $0x258] sm:$0xf]
      %v515 = vld [vmem:[%s355 + $0x25c] sm:$0xf]
      %v516 = vld [vmem:[%s355 + $0x260] sm:$0xf]
      %v517 = vld [vmem:[%s355 + $0x264] sm:$0xf]
      %v518 = vld [vmem:[%s355 + $0x268] sm:$0xf]
      %v519 = vld [vmem:[%s355 + $0x26c] sm:$0xf]
      %v520 = vld [vmem:[%s355 + $0x270] sm:$0xf]
      %v521 = vld [vmem:[%s355 + $0x274] sm:$0xf]
      %v522 = vld [vmem:[%s355 + $0x278] sm:$0xf]
      %v523 = vld [vmem:[%s355 + $0x27c] sm:$0xf]
      %v524 = vld [vmem:[%s355 + $0x280] sm:$0xf]
      %v525 = vld [vmem:[%s355 + $0x284] sm:$0xf]
      %v526 = vld [vmem:[%s355 + $0x288] sm:$0xf]
      %v527 = vld [vmem:[%s355 + $0x28c] sm:$0xf]
      %v528 = vld [vmem:[%s355 + $0x290] sm:$0xf]
      %v529 = vld [vmem:[%s355 + $0x294] sm:$0xf]
      %v530 = vld [vmem:[%s355 + $0x298] sm:$0xf]
      %v531 = vld [vmem:[%s355 + $0x29c] sm:$0xf]
      %v532 = vld [vmem:[%s355 + $0x2a0] sm:$0xf]
      %v533 = vld [vmem:[%s355 + $0x2a4] sm:$0xf]
      %v534 = vld [vmem:[%s355 + $0x2a8] sm:$0xf]
      %v535 = vld [vmem:[%s355 + $0x2ac] sm:$0xf]
      %v536 = vld [vmem:[%s355 + $0x2b0] sm:$0xf]
      %v537 = vld [vmem:[%s355 + $0x2b4] sm:$0xf]
      %v538 = vld [vmem:[%s355 + $0x2b8] sm:$0xf]
      %v539 = vld [vmem:[%s355 + $0x2bc] sm:$0xf]
      %v540 = vld [vmem:[%s355 + $0x2c0] sm:$0xf]
      %v541 = vld [vmem:[%s355 + $0x2c4] sm:$0xf]
      %v542 = vld [vmem:[%s355 + $0x2c8] sm:$0xf]
      %v543 = vld [vmem:[%s355 + $0x2cc] sm:$0xf]
      %v544 = vld [vmem:[%s355 + $0x2d0] sm:$0xf]
      %v545 = vld [vmem:[%s355 + $0x2d4] sm:$0xf]
      %v546 = vld [vmem:[%s355 + $0x2d8] sm:$0xf]
      %v547 = vld [vmem:[%s355 + $0x2dc] sm:$0xf]
      %v548 = vld [vmem:[%s355 + $0x2e0] sm:$0xf]
      %v549 = vld [vmem:[%s355 + $0x2e4] sm:$0xf]
      %v550 = vld [vmem:[%s355 + $0x2e8] sm:$0xf]
      %v551 = vld [vmem:[%s355 + $0x2ec] sm:$0xf]
      %v552 = vld [vmem:[%s355 + $0x2f0] sm:$0xf]
      %v553 = vld [vmem:[%s355 + $0x2f4] sm:$0xf]
      %v554 = vld [vmem:[%s355 + $0x2f8] sm:$0xf]
      %v555 = vld [vmem:[%s355 + $0x2fc] sm:$0xf]
      %v556 = vld [vmem:[%s355 + $0x300] sm:$0xf]
      %v557 = vld [vmem:[%s355 + $0x304] sm:$0xf]
      %v558 = vld [vmem:[%s355 + $0x308] sm:$0xf]
      %v559 = vld [vmem:[%s355 + $0x30c] sm:$0xf]
      %v560 = vld [vmem:[%s355 + $0x310] sm:$0xf]
      %v561 = vld [vmem:[%s355 + $0x314] sm:$0xf]
      %v562 = vld [vmem:[%s355 + $0x318] sm:$0xf]
      %v563 = vld [vmem:[%s355 + $0x31c] sm:$0xf]
      %v564 = vld [vmem:[%s355 + $0x320] sm:$0xf]
      %v565 = vld [vmem:[%s355 + $0x324] sm:$0xf]
      %v566 = vld [vmem:[%s355 + $0x328] sm:$0xf]
      %v567 = vld [vmem:[%s355 + $0x32c] sm:$0xf]
      %v568 = vld [vmem:[%s355 + $0x330] sm:$0xf]
      %v569 = vld [vmem:[%s355 + $0x334] sm:$0xf]
      %v570 = vld [vmem:[%s355 + $0x338] sm:$0xf]
      %v571 = vld [vmem:[%s355 + $0x33c] sm:$0xf]
      %v572 = vld [vmem:[%s355 + $0x340] sm:$0xf]
      %v573 = vld [vmem:[%s355 + $0x344] sm:$0xf]
      %v574 = vld [vmem:[%s355 + $0x348] sm:$0xf]
      %v575 = vld [vmem:[%s355 + $0x34c] sm:$0xf]
      %v576 = vld [vmem:[%s355 + $0x350] sm:$0xf]
      %v577 = vld [vmem:[%s355 + $0x354] sm:$0xf]
      %v578 = vld [vmem:[%s355 + $0x358] sm:$0xf]
      %v579 = vld [vmem:[%s355 + $0x35c] sm:$0xf]
      %v580 = vld [vmem:[%s355 + $0x360] sm:$0xf]
      %v581 = vld [vmem:[%s355 + $0x364] sm:$0xf]
      %v582 = vld [vmem:[%s355 + $0x368] sm:$0xf]
      %v583 = vld [vmem:[%s355 + $0x36c] sm:$0xf]
      %v584 = vld [vmem:[%s355 + $0x370] sm:$0xf]
      %v585 = vld [vmem:[%s355 + $0x374] sm:$0xf]
      %v586 = vld [vmem:[%s355 + $0x378] sm:$0xf]
      %v587 = vld [vmem:[%s355 + $0x37c] sm:$0xf]
      %v588 = vld [vmem:[%s355 + $0x380] sm:$0xf]
      %v589 = vld [vmem:[%s355 + $0x384] sm:$0xf]
      %v590 = vld [vmem:[%s355 + $0x388] sm:$0xf]
      %v591 = vld [vmem:[%s355 + $0x38c] sm:$0xf]
      %v592 = vld [vmem:[%s355 + $0x390] sm:$0xf]
      %v593 = vld [vmem:[%s355 + $0x394] sm:$0xf]
      %v594 = vld [vmem:[%s355 + $0x398] sm:$0xf]
      %v595 = vld [vmem:[%s355 + $0x39c] sm:$0xf]
      %v596 = vld [vmem:[%s355 + $0x3a0] sm:$0xf]
      %v597 = vld [vmem:[%s355 + $0x3a4] sm:$0xf]
      %v598 = vld [vmem:[%s355 + $0x3a8] sm:$0xf]
      %v599 = vld [vmem:[%s355 + $0x3ac] sm:$0xf]
      %v600 = vld [vmem:[%s355 + $0x3b0] sm:$0xf]
      %v601 = vld [vmem:[%s355 + $0x3b4] sm:$0xf]
      %v602 = vld [vmem:[%s355 + $0x3b8] sm:$0xf]
      %v603 = vld [vmem:[%s355 + $0x3bc] sm:$0xf]
      %v604 = vld [vmem:[%s355 + $0x3c0] sm:$0xf]
      %v605 = vld [vmem:[%s355 + $0x3c4] sm:$0xf]
      %v606 = vld [vmem:[%s355 + $0x3c8] sm:$0xf]
      %v607 = vld [vmem:[%s355 + $0x3cc] sm:$0xf]
      %v608 = vld [vmem:[%s355 + $0x3d0] sm:$0xf]
      %v609 = vld [vmem:[%s355 + $0x3d4] sm:$0xf]
      %v610 = vld [vmem:[%s355 + $0x3d8] sm:$0xf]
      %v611 = vld [vmem:[%s355 + $0x3dc] sm:$0xf]
      %v612 = vld [vmem:[%s355 + $0x3e0] sm:$0xf]
      %v613 = vld [vmem:[%s355 + $0x3e4] sm:$0xf]
      %v614 = vld [vmem:[%s355 + $0x3e8] sm:$0xf]
      %v615 = vld [vmem:[%s355 + $0x3ec] sm:$0xf]
      %v616 = vld [vmem:[%s355 + $0x3f0] sm:$0xf]
      %v617 = vld [vmem:[%s355 + $0x3f4] sm:$0xf]
      %v618 = vld [vmem:[%s355 + $0x3f8] sm:$0xf]
      %v619 = vld [vmem:[%s355 + $0x3fc] sm:$0xf]
      %v620 = vld [vmem:[%s1] sm:$0x3]
      %v621 = vld [vmem:[%s2] sm:$0x1]
      %v622 = vld [vmem:[%s3] sm:$0x1]
      %v623 = vunpack.c.l.bf16 %v364
      %v624 = vunpack.c.l.bf16 %v365
      %v625 = vunpack.c.l.bf16 %v366
      %v626 = vunpack.c.l.bf16 %v367
      %v627 = vunpack.c.l.bf16 %v368
      %v628 = vunpack.c.l.bf16 %v369
      %v629 = vunpack.c.l.bf16 %v370
      %v630 = vunpack.c.l.bf16 %v371
      %v631 = vunpack.c.l.bf16 %v372
      %v632 = vunpack.c.l.bf16 %v373
      %v633 = vunpack.c.l.bf16 %v374
      %v634 = vunpack.c.l.bf16 %v375
      %v635 = vunpack.c.l.bf16 %v376
      %v636 = vunpack.c.l.bf16 %v377
      %v637 = vunpack.c.l.bf16 %v378
      %v638 = vunpack.c.l.bf16 %v379
      %v639 = vunpack.c.l.bf16 %v380
      %v640 = vunpack.c.l.bf16 %v381
      %v641 = vunpack.c.l.bf16 %v382
      %v642 = vunpack.c.l.bf16 %v383
      %v643 = vunpack.c.l.bf16 %v384
      %v644 = vunpack.c.l.bf16 %v385
      %v645 = vunpack.c.l.bf16 %v386
      %v646 = vunpack.c.l.bf16 %v387
      %v647 = vunpack.c.l.bf16 %v388
      %v648 = vunpack.c.l.bf16 %v389
      %v649 = vunpack.c.l.bf16 %v390
      %v650 = vunpack.c.l.bf16 %v391
      %v651 = vunpack.c.l.bf16 %v392
      %v652 = vunpack.c.l.bf16 %v393
      %v653 = vunpack.c.l.bf16 %v394
      %v654 = vunpack.c.l.bf16 %v395
      %v655 = vunpack.c.l.bf16 %v396
      %v656 = vunpack.c.l.bf16 %v397
      %v657 = vunpack.c.l.bf16 %v398
      %v658 = vunpack.c.l.bf16 %v399
      %v659 = vunpack.c.l.bf16 %v400
      %v660 = vunpack.c.l.bf16 %v401
      %v661 = vunpack.c.l.bf16 %v402
      %v662 = vunpack.c.l.bf16 %v403
      %v663 = vunpack.c.l.bf16 %v404
      %v664 = vunpack.c.l.bf16 %v405
      %v665 = vunpack.c.l.bf16 %v406
      %v666 = vunpack.c.l.bf16 %v407
      %v667 = vunpack.c.l.bf16 %v408
      %v668 = vunpack.c.l.bf16 %v409
      %v669 = vunpack.c.l.bf16 %v410
      %v670 = vunpack.c.l.bf16 %v411
      %v671 = vunpack.c.l.bf16 %v412
      %v672 = vunpack.c.l.bf16 %v413
      %v673 = vunpack.c.l.bf16 %v414
      %v674 = vunpack.c.l.bf16 %v415
      %v675 = vunpack.c.l.bf16 %v416
      %v676 = vunpack.c.l.bf16 %v417
      %v677 = vunpack.c.l.bf16 %v418
      %v678 = vunpack.c.l.bf16 %v419
      %v679 = vunpack.c.l.bf16 %v420
      %v680 = vunpack.c.l.bf16 %v421
      %v681 = vunpack.c.l.bf16 %v422
      %v682 = vunpack.c.l.bf16 %v423
      %v683 = vunpack.c.l.bf16 %v424
      %v684 = vunpack.c.l.bf16 %v425
      %v685 = vunpack.c.l.bf16 %v426
      %v686 = vunpack.c.l.bf16 %v427
      %v687 = vunpack.c.l.bf16 %v428
      %v688 = vunpack.c.l.bf16 %v429
      %v689 = vunpack.c.l.bf16 %v430
      %v690 = vunpack.c.l.bf16 %v431
      %v691 = vunpack.c.l.bf16 %v432
      %v692 = vunpack.c.l.bf16 %v433
      %v693 = vunpack.c.l.bf16 %v434
      %v694 = vunpack.c.l.bf16 %v435
      %v695 = vunpack.c.l.bf16 %v436
      %v696 = vunpack.c.l.bf16 %v437
      %v697 = vunpack.c.l.bf16 %v438
      %v698 = vunpack.c.l.bf16 %v439
      %v699 = vunpack.c.l.bf16 %v440
      %v700 = vunpack.c.l.bf16 %v441
      %v701 = vunpack.c.l.bf16 %v442
      %v702 = vunpack.c.l.bf16 %v443
      %v703 = vunpack.c.l.bf16 %v444
      %v704 = vunpack.c.l.bf16 %v445
      %v705 = vunpack.c.l.bf16 %v446
      %v706 = vunpack.c.l.bf16 %v447
      %v707 = vunpack.c.l.bf16 %v448
      %v708 = vunpack.c.l.bf16 %v449
      %v709 = vunpack.c.l.bf16 %v450
      %v710 = vunpack.c.l.bf16 %v451
      %v711 = vunpack.c.l.bf16 %v452
      %v712 = vunpack.c.l.bf16 %v453
      %v713 = vunpack.c.l.bf16 %v454
      %v714 = vunpack.c.l.bf16 %v455
      %v715 = vunpack.c.l.bf16 %v456
      %v716 = vunpack.c.l.bf16 %v457
      %v717 = vunpack.c.l.bf16 %v458
      %v718 = vunpack.c.l.bf16 %v459
      %v719 = vunpack.c.l.bf16 %v460
      %v720 = vunpack.c.l.bf16 %v461
      %v721 = vunpack.c.l.bf16 %v462
      %v722 = vunpack.c.l.bf16 %v463
      %v723 = vunpack.c.l.bf16 %v464
      %v724 = vunpack.c.l.bf16 %v465
      %v725 = vunpack.c.l.bf16 %v466
      %v726 = vunpack.c.l.bf16 %v467
      %v727 = vunpack.c.l.bf16 %v468
      %v728 = vunpack.c.l.bf16 %v469
      %v729 = vunpack.c.l.bf16 %v470
      %v730 = vunpack.c.l.bf16 %v471
      %v731 = vunpack.c.l.bf16 %v472
      %v732 = vunpack.c.l.bf16 %v473
      %v733 = vunpack.c.l.bf16 %v474
      %v734 = vunpack.c.l.bf16 %v475
      %v735 = vunpack.c.l.bf16 %v476
      %v736 = vunpack.c.l.bf16 %v477
      %v737 = vunpack.c.l.bf16 %v478
      %v738 = vunpack.c.l.bf16 %v479
      %v739 = vunpack.c.l.bf16 %v480
      %v740 = vunpack.c.l.bf16 %v481
      %v741 = vunpack.c.l.bf16 %v482
      %v742 = vunpack.c.l.bf16 %v483
      %v743 = vunpack.c.l.bf16 %v484
      %v744 = vunpack.c.l.bf16 %v485
      %v745 = vunpack.c.l.bf16 %v486
      %v746 = vunpack.c.l.bf16 %v487
      %v747 = vunpack.c.l.bf16 %v488
      %v748 = vunpack.c.l.bf16 %v489
      %v749 = vunpack.c.l.bf16 %v490
      %v750 = vunpack.c.l.bf16 %v491
      %v751 = vunpack.c.l.bf16 %v492
      %v752 = vunpack.c.l.bf16 %v493
      %v753 = vunpack.c.l.bf16 %v494
      %v754 = vunpack.c.l.bf16 %v495
      %v755 = vunpack.c.l.bf16 %v496
      %v756 = vunpack.c.l.bf16 %v497
      %v757 = vunpack.c.l.bf16 %v498
      %v758 = vunpack.c.l.bf16 %v499
      %v759 = vunpack.c.l.bf16 %v500
      %v760 = vunpack.c.l.bf16 %v501
      %v761 = vunpack.c.l.bf16 %v502
      %v762 = vunpack.c.l.bf16 %v503
      %v763 = vunpack.c.l.bf16 %v504
      %v764 = vunpack.c.l.bf16 %v505
      %v765 = vunpack.c.l.bf16 %v506
      %v766 = vunpack.c.l.bf16 %v507
      %v767 = vunpack.c.l.bf16 %v508
      %v768 = vunpack.c.l.bf16 %v509
      %v769 = vunpack.c.l.bf16 %v510
      %v770 = vunpack.c.l.bf16 %v511
      %v771 = vunpack.c.l.bf16 %v512
      %v772 = vunpack.c.l.bf16 %v513
      %v773 = vunpack.c.l.bf16 %v514
      %v774 = vunpack.c.l.bf16 %v515
      %v775 = vunpack.c.l.bf16 %v516
      %v776 = vunpack.c.l.bf16 %v517
      %v777 = vunpack.c.l.bf16 %v518
      %v778 = vunpack.c.l.bf16 %v519
      %v779 = vunpack.c.l.bf16 %v520
      %v780 = vunpack.c.l.bf16 %v521
      %v781 = vunpack.c.l.bf16 %v522
      %v782 = vunpack.c.l.bf16 %v523
      %v783 = vunpack.c.l.bf16 %v524
      %v784 = vunpack.c.l.bf16 %v525
      %v785 = vunpack.c.l.bf16 %v526
      %v786 = vunpack.c.l.bf16 %v527
      %v787 = vunpack.c.l.bf16 %v528
      %v788 = vunpack.c.l.bf16 %v529
      %v789 = vunpack.c.l.bf16 %v530
      %v790 = vunpack.c.l.bf16 %v531
      %v791 = vunpack.c.l.bf16 %v532
      %v792 = vunpack.c.l.bf16 %v533
      %v793 = vunpack.c.l.bf16 %v534
      %v794 = vunpack.c.l.bf16 %v535
      %v795 = vunpack.c.l.bf16 %v536
      %v796 = vunpack.c.l.bf16 %v537
      %v797 = vunpack.c.l.bf16 %v538
      %v798 = vunpack.c.l.bf16 %v539
      %v799 = vunpack.c.l.bf16 %v540
      %v800 = vunpack.c.l.bf16 %v541
      %v801 = vunpack.c.l.bf16 %v542
      %v802 = vunpack.c.l.bf16 %v543
      %v803 = vunpack.c.l.bf16 %v544
      %v804 = vunpack.c.l.bf16 %v545
      %v805 = vunpack.c.l.bf16 %v546
      %v806 = vunpack.c.l.bf16 %v547
      %v807 = vunpack.c.l.bf16 %v548
      %v808 = vunpack.c.l.bf16 %v549
      %v809 = vunpack.c.l.bf16 %v550
      %v810 = vunpack.c.l.bf16 %v551
      %v811 = vunpack.c.l.bf16 %v552
      %v812 = vunpack.c.l.bf16 %v553
      %v813 = vunpack.c.l.bf16 %v554
      %v814 = vunpack.c.l.bf16 %v555
      %v815 = vunpack.c.l.bf16 %v556
      %v816 = vunpack.c.l.bf16 %v557
      %v817 = vunpack.c.l.bf16 %v558
      %v818 = vunpack.c.l.bf16 %v559
      %v819 = vunpack.c.l.bf16 %v560
      %v820 = vunpack.c.l.bf16 %v561
      %v821 = vunpack.c.l.bf16 %v562
      %v822 = vunpack.c.l.bf16 %v563
      %v823 = vunpack.c.l.bf16 %v564
      %v824 = vunpack.c.l.bf16 %v565
      %v825 = vunpack.c.l.bf16 %v566
      %v826 = vunpack.c.l.bf16 %v567
      %v827 = vunpack.c.l.bf16 %v568
      %v828 = vunpack.c.l.bf16 %v569
      %v829 = vunpack.c.l.bf16 %v570
      %v830 = vunpack.c.l.bf16 %v571
      %v831 = vunpack.c.l.bf16 %v572
      %v832 = vunpack.c.l.bf16 %v573
      %v833 = vunpack.c.l.bf16 %v574
      %v834 = vunpack.c.l.bf16 %v575
      %v835 = vunpack.c.l.bf16 %v576
      %v836 = vunpack.c.l.bf16 %v577
      %v837 = vunpack.c.l.bf16 %v578
      %v838 = vunpack.c.l.bf16 %v579
      %v839 = vunpack.c.l.bf16 %v580
      %v840 = vunpack.c.l.bf16 %v581
      %v841 = vunpack.c.l.bf16 %v582
      %v842 = vunpack.c.l.bf16 %v583
      %v843 = vunpack.c.l.bf16 %v584
      %v844 = vunpack.c.l.bf16 %v585
      %v845 = vunpack.c.l.bf16 %v586
      %v846 = vunpack.c.l.bf16 %v587
      %v847 = vunpack.c.l.bf16 %v588
      %v848 = vunpack.c.l.bf16 %v589
      %v849 = vunpack.c.l.bf16 %v590
      %v850 = vunpack.c.l.bf16 %v591
      %v851 = vunpack.c.l.bf16 %v592
      %v852 = vunpack.c.l.bf16 %v593
      %v853 = vunpack.c.l.bf16 %v594
      %v854 = vunpack.c.l.bf16 %v595
      %v855 = vunpack.c.l.bf16 %v596
      %v856 = vunpack.c.l.bf16 %v597
      %v857 = vunpack.c.l.bf16 %v598
      %v858 = vunpack.c.l.bf16 %v599
      %v859 = vunpack.c.l.bf16 %v600
      %v860 = vunpack.c.l.bf16 %v601
      %v861 = vunpack.c.l.bf16 %v602
      %v862 = vunpack.c.l.bf16 %v603
      %v863 = vunpack.c.l.bf16 %v604
      %v864 = vunpack.c.l.bf16 %v605
      %v865 = vunpack.c.l.bf16 %v606
      %v866 = vunpack.c.l.bf16 %v607
      %v867 = vunpack.c.l.bf16 %v608
      %v868 = vunpack.c.l.bf16 %v609
      %v869 = vunpack.c.l.bf16 %v610
      %v870 = vunpack.c.l.bf16 %v611
      %v871 = vunpack.c.l.bf16 %v612
      %v872 = vunpack.c.l.bf16 %v613
      %v873 = vunpack.c.l.bf16 %v614
      %v874 = vunpack.c.l.bf16 %v615
      %v875 = vunpack.c.l.bf16 %v616
      %v876 = vunpack.c.l.bf16 %v617
      %v877 = vunpack.c.l.bf16 %v618
      %v878 = vunpack.c.l.bf16 %v619
      %v879 = vunpack.c.l.bf16 %v620
      %881 = vset.pattern.permute.xlu0 0
      %882 = vperm.xlu0 %881, %v623
      %v883 = vpop.permute.xlu0 %882
      %886 = vset.pattern.permute.xlu0 0
      %887 = vperm.xlu0 %886, %v624
      %v888 = vpop.permute.xlu0 %887
      %891 = vset.pattern.permute.xlu0 0
      %892 = vperm.xlu0 %891, %v625
      %v893 = vpop.permute.xlu0 %892
      %896 = vset.pattern.permute.xlu0 0
      %897 = vperm.xlu0 %896, %v626
      %v898 = vpop.permute.xlu0 %897
      %901 = vset.pattern.permute.xlu0 0
      %902 = vperm.xlu0 %901, %v627
      %v903 = vpop.permute.xlu0 %902
      %906 = vset.pattern.permute.xlu0 0
      %907 = vperm.xlu0 %906, %v628
      %v908 = vpop.permute.xlu0 %907
      %911 = vset.pattern.permute.xlu0 0
      %912 = vperm.xlu0 %911, %v629
      %v913 = vpop.permute.xlu0 %912
      %916 = vset.pattern.permute.xlu0 0
      %917 = vperm.xlu0 %916, %v630
      %v918 = vpop.permute.xlu0 %917
      %921 = vset.pattern.permute.xlu0 0
      %922 = vperm.xlu0 %921, %v631
      %v923 = vpop.permute.xlu0 %922
      %926 = vset.pattern.permute.xlu0 0
      %927 = vperm.xlu0 %926, %v632
      %v928 = vpop.permute.xlu0 %927
      %931 = vset.pattern.permute.xlu0 0
      %932 = vperm.xlu0 %931, %v633
      %v933 = vpop.permute.xlu0 %932
      %936 = vset.pattern.permute.xlu0 0
      %937 = vperm.xlu0 %936, %v634
      %v938 = vpop.permute.xlu0 %937
      %941 = vset.pattern.permute.xlu0 0
      %942 = vperm.xlu0 %941, %v635
      %v943 = vpop.permute.xlu0 %942
      %946 = vset.pattern.permute.xlu0 0
      %947 = vperm.xlu0 %946, %v636
      %v948 = vpop.permute.xlu0 %947
      %951 = vset.pattern.permute.xlu0 0
      %952 = vperm.xlu0 %951, %v637
      %v953 = vpop.permute.xlu0 %952
      %956 = vset.pattern.permute.xlu0 0
      %957 = vperm.xlu0 %956, %v638
      %v958 = vpop.permute.xlu0 %957
      %961 = vset.pattern.permute.xlu0 0
      %962 = vperm.xlu0 %961, %v639
      %v963 = vpop.permute.xlu0 %962
      %966 = vset.pattern.permute.xlu0 0
      %967 = vperm.xlu0 %966, %v640
      %v968 = vpop.permute.xlu0 %967
      %971 = vset.pattern.permute.xlu0 0
      %972 = vperm.xlu0 %971, %v641
      %v973 = vpop.permute.xlu0 %972
      %976 = vset.pattern.permute.xlu0 0
      %977 = vperm.xlu0 %976, %v642
      %v978 = vpop.permute.xlu0 %977
      %981 = vset.pattern.permute.xlu0 0
      %982 = vperm.xlu0 %981, %v643
      %v983 = vpop.permute.xlu0 %982
      %986 = vset.pattern.permute.xlu0 0
      %987 = vperm.xlu0 %986, %v644
      %v988 = vpop.permute.xlu0 %987
      %991 = vset.pattern.permute.xlu0 0
      %992 = vperm.xlu0 %991, %v645
      %v993 = vpop.permute.xlu0 %992
      %996 = vset.pattern.permute.xlu0 0
      %997 = vperm.xlu0 %996, %v646
      %v998 = vpop.permute.xlu0 %997
      %1001 = vset.pattern.permute.xlu0 0
      %1002 = vperm.xlu0 %1001, %v647
      %v1003 = vpop.permute.xlu0 %1002
      %1006 = vset.pattern.permute.xlu0 0
      %1007 = vperm.xlu0 %1006, %v648
      %v1008 = vpop.permute.xlu0 %1007
      %1011 = vset.pattern.permute.xlu0 0
      %1012 = vperm.xlu0 %1011, %v649
      %v1013 = vpop.permute.xlu0 %1012
      %1016 = vset.pattern.permute.xlu0 0
      %1017 = vperm.xlu0 %1016, %v650
      %v1018 = vpop.permute.xlu0 %1017
      %1021 = vset.pattern.permute.xlu0 0
      %1022 = vperm.xlu0 %1021, %v651
      %v1023 = vpop.permute.xlu0 %1022
      %1026 = vset.pattern.permute.xlu0 0
      %1027 = vperm.xlu0 %1026, %v652
      %v1028 = vpop.permute.xlu0 %1027
      %1031 = vset.pattern.permute.xlu0 0
      %1032 = vperm.xlu0 %1031, %v653
      %v1033 = vpop.permute.xlu0 %1032
      %1036 = vset.pattern.permute.xlu0 0
      %1037 = vperm.xlu0 %1036, %v654
      %v1038 = vpop.permute.xlu0 %1037
      %1041 = vset.pattern.permute.xlu0 0
      %1042 = vperm.xlu0 %1041, %v655
      %v1043 = vpop.permute.xlu0 %1042
      %1046 = vset.pattern.permute.xlu0 0
      %1047 = vperm.xlu0 %1046, %v656
      %v1048 = vpop.permute.xlu0 %1047
      %1051 = vset.pattern.permute.xlu0 0
      %1052 = vperm.xlu0 %1051, %v657
      %v1053 = vpop.permute.xlu0 %1052
      %1056 = vset.pattern.permute.xlu0 0
      %1057 = vperm.xlu0 %1056, %v658
      %v1058 = vpop.permute.xlu0 %1057
      %1061 = vset.pattern.permute.xlu0 0
      %1062 = vperm.xlu0 %1061, %v659
      %v1063 = vpop.permute.xlu0 %1062
      %1066 = vset.pattern.permute.xlu0 0
      %1067 = vperm.xlu0 %1066, %v660
      %v1068 = vpop.permute.xlu0 %1067
      %1071 = vset.pattern.permute.xlu0 0
      %1072 = vperm.xlu0 %1071, %v661
      %v1073 = vpop.permute.xlu0 %1072
      %1076 = vset.pattern.permute.xlu0 0
      %1077 = vperm.xlu0 %1076, %v662
      %v1078 = vpop.permute.xlu0 %1077
      %1081 = vset.pattern.permute.xlu0 0
      %1082 = vperm.xlu0 %1081, %v663
      %v1083 = vpop.permute.xlu0 %1082
      %1086 = vset.pattern.permute.xlu0 0
      %1087 = vperm.xlu0 %1086, %v664
      %v1088 = vpop.permute.xlu0 %1087
      %1091 = vset.pattern.permute.xlu0 0
      %1092 = vperm.xlu0 %1091, %v665
      %v1093 = vpop.permute.xlu0 %1092
      %1096 = vset.pattern.permute.xlu0 0
      %1097 = vperm.xlu0 %1096, %v666
      %v1098 = vpop.permute.xlu0 %1097
      %1101 = vset.pattern.permute.xlu0 0
      %1102 = vperm.xlu0 %1101, %v667
      %v1103 = vpop.permute.xlu0 %1102
      %1106 = vset.pattern.permute.xlu0 0
      %1107 = vperm.xlu0 %1106, %v668
      %v1108 = vpop.permute.xlu0 %1107
      %1111 = vset.pattern.permute.xlu0 0
      %1112 = vperm.xlu0 %1111, %v669
      %v1113 = vpop.permute.xlu0 %1112
      %1116 = vset.pattern.permute.xlu0 0
      %1117 = vperm.xlu0 %1116, %v670
      %v1118 = vpop.permute.xlu0 %1117
      %1121 = vset.pattern.permute.xlu0 0
      %1122 = vperm.xlu0 %1121, %v671
      %v1123 = vpop.permute.xlu0 %1122
      %1126 = vset.pattern.permute.xlu0 0
      %1127 = vperm.xlu0 %1126, %v672
      %v1128 = vpop.permute.xlu0 %1127
      %1131 = vset.pattern.permute.xlu0 0
      %1132 = vperm.xlu0 %1131, %v673
      %v1133 = vpop.permute.xlu0 %1132
      %1136 = vset.pattern.permute.xlu0 0
      %1137 = vperm.xlu0 %1136, %v674
      %v1138 = vpop.permute.xlu0 %1137
      %1141 = vset.pattern.permute.xlu0 0
      %1142 = vperm.xlu0 %1141, %v675
      %v1143 = vpop.permute.xlu0 %1142
      %1146 = vset.pattern.permute.xlu0 0
      %1147 = vperm.xlu0 %1146, %v676
      %v1148 = vpop.permute.xlu0 %1147
      %1151 = vset.pattern.permute.xlu0 0
      %1152 = vperm.xlu0 %1151, %v677
      %v1153 = vpop.permute.xlu0 %1152
      %1156 = vset.pattern.permute.xlu0 0
      %1157 = vperm.xlu0 %1156, %v678
      %v1158 = vpop.permute.xlu0 %1157
      %1161 = vset.pattern.permute.xlu0 0
      %1162 = vperm.xlu0 %1161, %v679
      %v1163 = vpop.permute.xlu0 %1162
      %1166 = vset.pattern.permute.xlu0 0
      %1167 = vperm.xlu0 %1166, %v680
      %v1168 = vpop.permute.xlu0 %1167
      %1171 = vset.pattern.permute.xlu0 0
      %1172 = vperm.xlu0 %1171, %v681
      %v1173 = vpop.permute.xlu0 %1172
      %1176 = vset.pattern.permute.xlu0 0
      %1177 = vperm.xlu0 %1176, %v682
      %v1178 = vpop.permute.xlu0 %1177
      %1181 = vset.pattern.permute.xlu0 0
      %1182 = vperm.xlu0 %1181, %v683
      %v1183 = vpop.permute.xlu0 %1182
      %1186 = vset.pattern.permute.xlu0 0
      %1187 = vperm.xlu0 %1186, %v684
      %v1188 = vpop.permute.xlu0 %1187
      %1191 = vset.pattern.permute.xlu0 0
      %1192 = vperm.xlu0 %1191, %v685
      %v1193 = vpop.permute.xlu0 %1192
      %1196 = vset.pattern.permute.xlu0 0
      %1197 = vperm.xlu0 %1196, %v686
      %v1198 = vpop.permute.xlu0 %1197
      %1201 = vset.pattern.permute.xlu0 0
      %1202 = vperm.xlu0 %1201, %v687
      %v1203 = vpop.permute.xlu0 %1202
      %1206 = vset.pattern.permute.xlu0 0
      %1207 = vperm.xlu0 %1206, %v688
      %v1208 = vpop.permute.xlu0 %1207
      %1211 = vset.pattern.permute.xlu0 0
      %1212 = vperm.xlu0 %1211, %v689
      %v1213 = vpop.permute.xlu0 %1212
      %1216 = vset.pattern.permute.xlu0 0
      %1217 = vperm.xlu0 %1216, %v690
      %v1218 = vpop.permute.xlu0 %1217
      %1221 = vset.pattern.permute.xlu0 0
      %1222 = vperm.xlu0 %1221, %v691
      %v1223 = vpop.permute.xlu0 %1222
      %1226 = vset.pattern.permute.xlu0 0
      %1227 = vperm.xlu0 %1226, %v692
      %v1228 = vpop.permute.xlu0 %1227
      %1231 = vset.pattern.permute.xlu0 0
      %1232 = vperm.xlu0 %1231, %v693
      %v1233 = vpop.permute.xlu0 %1232
      %1236 = vset.pattern.permute.xlu0 0
      %1237 = vperm.xlu0 %1236, %v694
      %v1238 = vpop.permute.xlu0 %1237
      %1241 = vset.pattern.permute.xlu0 0
      %1242 = vperm.xlu0 %1241, %v695
      %v1243 = vpop.permute.xlu0 %1242
      %1246 = vset.pattern.permute.xlu0 0
      %1247 = vperm.xlu0 %1246, %v696
      %v1248 = vpop.permute.xlu0 %1247
      %1251 = vset.pattern.permute.xlu0 0
      %1252 = vperm.xlu0 %1251, %v697
      %v1253 = vpop.permute.xlu0 %1252
      %1256 = vset.pattern.permute.xlu0 0
      %1257 = vperm.xlu0 %1256, %v698
      %v1258 = vpop.permute.xlu0 %1257
      %1261 = vset.pattern.permute.xlu0 0
      %1262 = vperm.xlu0 %1261, %v699
      %v1263 = vpop.permute.xlu0 %1262
      %1266 = vset.pattern.permute.xlu0 0
      %1267 = vperm.xlu0 %1266, %v700
      %v1268 = vpop.permute.xlu0 %1267
      %1271 = vset.pattern.permute.xlu0 0
      %1272 = vperm.xlu0 %1271, %v701
      %v1273 = vpop.permute.xlu0 %1272
      %1276 = vset.pattern.permute.xlu0 0
      %1277 = vperm.xlu0 %1276, %v702
      %v1278 = vpop.permute.xlu0 %1277
      %1281 = vset.pattern.permute.xlu0 0
      %1282 = vperm.xlu0 %1281, %v703
      %v1283 = vpop.permute.xlu0 %1282
      %1286 = vset.pattern.permute.xlu0 0
      %1287 = vperm.xlu0 %1286, %v704
      %v1288 = vpop.permute.xlu0 %1287
      %1291 = vset.pattern.permute.xlu0 0
      %1292 = vperm.xlu0 %1291, %v705
      %v1293 = vpop.permute.xlu0 %1292
      %1296 = vset.pattern.permute.xlu0 0
      %1297 = vperm.xlu0 %1296, %v706
      %v1298 = vpop.permute.xlu0 %1297
      %1301 = vset.pattern.permute.xlu0 0
      %1302 = vperm.xlu0 %1301, %v707
      %v1303 = vpop.permute.xlu0 %1302
      %1306 = vset.pattern.permute.xlu0 0
      %1307 = vperm.xlu0 %1306, %v708
      %v1308 = vpop.permute.xlu0 %1307
      %1311 = vset.pattern.permute.xlu0 0
      %1312 = vperm.xlu0 %1311, %v709
      %v1313 = vpop.permute.xlu0 %1312
      %1316 = vset.pattern.permute.xlu0 0
      %1317 = vperm.xlu0 %1316, %v710
      %v1318 = vpop.permute.xlu0 %1317
      %1321 = vset.pattern.permute.xlu0 0
      %1322 = vperm.xlu0 %1321, %v711
      %v1323 = vpop.permute.xlu0 %1322
      %1326 = vset.pattern.permute.xlu0 0
      %1327 = vperm.xlu0 %1326, %v712
      %v1328 = vpop.permute.xlu0 %1327
      %1331 = vset.pattern.permute.xlu0 0
      %1332 = vperm.xlu0 %1331, %v713
      %v1333 = vpop.permute.xlu0 %1332
      %1336 = vset.pattern.permute.xlu0 0
      %1337 = vperm.xlu0 %1336, %v714
      %v1338 = vpop.permute.xlu0 %1337
      %1341 = vset.pattern.permute.xlu0 0
      %1342 = vperm.xlu0 %1341, %v715
      %v1343 = vpop.permute.xlu0 %1342
      %1346 = vset.pattern.permute.xlu0 0
      %1347 = vperm.xlu0 %1346, %v716
      %v1348 = vpop.permute.xlu0 %1347
      %1351 = vset.pattern.permute.xlu0 0
      %1352 = vperm.xlu0 %1351, %v717
      %v1353 = vpop.permute.xlu0 %1352
      %1356 = vset.pattern.permute.xlu0 0
      %1357 = vperm.xlu0 %1356, %v718
      %v1358 = vpop.permute.xlu0 %1357
      %1361 = vset.pattern.permute.xlu0 0
      %1362 = vperm.xlu0 %1361, %v719
      %v1363 = vpop.permute.xlu0 %1362
      %1366 = vset.pattern.permute.xlu0 0
      %1367 = vperm.xlu0 %1366, %v720
      %v1368 = vpop.permute.xlu0 %1367
      %1371 = vset.pattern.permute.xlu0 0
      %1372 = vperm.xlu0 %1371, %v721
      %v1373 = vpop.permute.xlu0 %1372
      %1376 = vset.pattern.permute.xlu0 0
      %1377 = vperm.xlu0 %1376, %v722
      %v1378 = vpop.permute.xlu0 %1377
      %1381 = vset.pattern.permute.xlu0 0
      %1382 = vperm.xlu0 %1381, %v723
      %v1383 = vpop.permute.xlu0 %1382
      %1386 = vset.pattern.permute.xlu0 0
      %1387 = vperm.xlu0 %1386, %v724
      %v1388 = vpop.permute.xlu0 %1387
      %1391 = vset.pattern.permute.xlu0 0
      %1392 = vperm.xlu0 %1391, %v725
      %v1393 = vpop.permute.xlu0 %1392
      %1396 = vset.pattern.permute.xlu0 0
      %1397 = vperm.xlu0 %1396, %v726
      %v1398 = vpop.permute.xlu0 %1397
      %1401 = vset.pattern.permute.xlu0 0
      %1402 = vperm.xlu0 %1401, %v727
      %v1403 = vpop.permute.xlu0 %1402
      %1406 = vset.pattern.permute.xlu0 0
      %1407 = vperm.xlu0 %1406, %v728
      %v1408 = vpop.permute.xlu0 %1407
      %1411 = vset.pattern.permute.xlu0 0
      %1412 = vperm.xlu0 %1411, %v729
      %v1413 = vpop.permute.xlu0 %1412
      %1416 = vset.pattern.permute.xlu0 0
      %1417 = vperm.xlu0 %1416, %v730
      %v1418 = vpop.permute.xlu0 %1417
      %1421 = vset.pattern.permute.xlu0 0
      %1422 = vperm.xlu0 %1421, %v731
      %v1423 = vpop.permute.xlu0 %1422
      %1426 = vset.pattern.permute.xlu0 0
      %1427 = vperm.xlu0 %1426, %v732
      %v1428 = vpop.permute.xlu0 %1427
      %1431 = vset.pattern.permute.xlu0 0
      %1432 = vperm.xlu0 %1431, %v733
      %v1433 = vpop.permute.xlu0 %1432
      %1436 = vset.pattern.permute.xlu0 0
      %1437 = vperm.xlu0 %1436, %v734
      %v1438 = vpop.permute.xlu0 %1437
      %1441 = vset.pattern.permute.xlu0 0
      %1442 = vperm.xlu0 %1441, %v735
      %v1443 = vpop.permute.xlu0 %1442
      %1446 = vset.pattern.permute.xlu0 0
      %1447 = vperm.xlu0 %1446, %v736
      %v1448 = vpop.permute.xlu0 %1447
      %1451 = vset.pattern.permute.xlu0 0
      %1452 = vperm.xlu0 %1451, %v737
      %v1453 = vpop.permute.xlu0 %1452
      %1456 = vset.pattern.permute.xlu0 0
      %1457 = vperm.xlu0 %1456, %v738
      %v1458 = vpop.permute.xlu0 %1457
      %1461 = vset.pattern.permute.xlu0 0
      %1462 = vperm.xlu0 %1461, %v739
      %v1463 = vpop.permute.xlu0 %1462
      %1466 = vset.pattern.permute.xlu0 0
      %1467 = vperm.xlu0 %1466, %v740
      %v1468 = vpop.permute.xlu0 %1467
      %1471 = vset.pattern.permute.xlu0 0
      %1472 = vperm.xlu0 %1471, %v741
      %v1473 = vpop.permute.xlu0 %1472
      %1476 = vset.pattern.permute.xlu0 0
      %1477 = vperm.xlu0 %1476, %v742
      %v1478 = vpop.permute.xlu0 %1477
      %1481 = vset.pattern.permute.xlu0 0
      %1482 = vperm.xlu0 %1481, %v743
      %v1483 = vpop.permute.xlu0 %1482
      %1486 = vset.pattern.permute.xlu0 0
      %1487 = vperm.xlu0 %1486, %v744
      %v1488 = vpop.permute.xlu0 %1487
      %1491 = vset.pattern.permute.xlu0 0
      %1492 = vperm.xlu0 %1491, %v745
      %v1493 = vpop.permute.xlu0 %1492
      %1496 = vset.pattern.permute.xlu0 0
      %1497 = vperm.xlu0 %1496, %v746
      %v1498 = vpop.permute.xlu0 %1497
      %1501 = vset.pattern.permute.xlu0 0
      %1502 = vperm.xlu0 %1501, %v747
      %v1503 = vpop.permute.xlu0 %1502
      %1506 = vset.pattern.permute.xlu0 0
      %1507 = vperm.xlu0 %1506, %v748
      %v1508 = vpop.permute.xlu0 %1507
      %1511 = vset.pattern.permute.xlu0 0
      %1512 = vperm.xlu0 %1511, %v749
      %v1513 = vpop.permute.xlu0 %1512
      %1516 = vset.pattern.permute.xlu0 0
      %1517 = vperm.xlu0 %1516, %v750
      %v1518 = vpop.permute.xlu0 %1517
      %1521 = vset.pattern.permute.xlu0 0
      %1522 = vperm.xlu0 %1521, %v751
      %v1523 = vpop.permute.xlu0 %1522
      %1526 = vset.pattern.permute.xlu0 0
      %1527 = vperm.xlu0 %1526, %v752
      %v1528 = vpop.permute.xlu0 %1527
      %1531 = vset.pattern.permute.xlu0 0
      %1532 = vperm.xlu0 %1531, %v753
      %v1533 = vpop.permute.xlu0 %1532
      %1536 = vset.pattern.permute.xlu0 0
      %1537 = vperm.xlu0 %1536, %v754
      %v1538 = vpop.permute.xlu0 %1537
      %1541 = vset.pattern.permute.xlu0 0
      %1542 = vperm.xlu0 %1541, %v755
      %v1543 = vpop.permute.xlu0 %1542
      %1546 = vset.pattern.permute.xlu0 0
      %1547 = vperm.xlu0 %1546, %v756
      %v1548 = vpop.permute.xlu0 %1547
      %1551 = vset.pattern.permute.xlu0 0
      %1552 = vperm.xlu0 %1551, %v757
      %v1553 = vpop.permute.xlu0 %1552
      %1556 = vset.pattern.permute.xlu0 0
      %1557 = vperm.xlu0 %1556, %v758
      %v1558 = vpop.permute.xlu0 %1557
      %1561 = vset.pattern.permute.xlu0 0
      %1562 = vperm.xlu0 %1561, %v759
      %v1563 = vpop.permute.xlu0 %1562
      %1566 = vset.pattern.permute.xlu0 0
      %1567 = vperm.xlu0 %1566, %v760
      %v1568 = vpop.permute.xlu0 %1567
      %1571 = vset.pattern.permute.xlu0 0
      %1572 = vperm.xlu0 %1571, %v761
      %v1573 = vpop.permute.xlu0 %1572
      %1576 = vset.pattern.permute.xlu0 0
      %1577 = vperm.xlu0 %1576, %v762
      %v1578 = vpop.permute.xlu0 %1577
      %1581 = vset.pattern.permute.xlu0 0
      %1582 = vperm.xlu0 %1581, %v763
      %v1583 = vpop.permute.xlu0 %1582
      %1586 = vset.pattern.permute.xlu0 0
      %1587 = vperm.xlu0 %1586, %v764
      %v1588 = vpop.permute.xlu0 %1587
      %1591 = vset.pattern.permute.xlu0 0
      %1592 = vperm.xlu0 %1591, %v765
      %v1593 = vpop.permute.xlu0 %1592
      %1596 = vset.pattern.permute.xlu0 0
      %1597 = vperm.xlu0 %1596, %v766
      %v1598 = vpop.permute.xlu0 %1597
      %1601 = vset.pattern.permute.xlu0 0
      %1602 = vperm.xlu0 %1601, %v767
      %v1603 = vpop.permute.xlu0 %1602
      %1606 = vset.pattern.permute.xlu0 0
      %1607 = vperm.xlu0 %1606, %v768
      %v1608 = vpop.permute.xlu0 %1607
      %1611 = vset.pattern.permute.xlu0 0
      %1612 = vperm.xlu0 %1611, %v769
      %v1613 = vpop.permute.xlu0 %1612
      %1616 = vset.pattern.permute.xlu0 0
      %1617 = vperm.xlu0 %1616, %v770
      %v1618 = vpop.permute.xlu0 %1617
      %1621 = vset.pattern.permute.xlu0 0
      %1622 = vperm.xlu0 %1621, %v771
      %v1623 = vpop.permute.xlu0 %1622
      %1626 = vset.pattern.permute.xlu0 0
      %1627 = vperm.xlu0 %1626, %v772
      %v1628 = vpop.permute.xlu0 %1627
      %1631 = vset.pattern.permute.xlu0 0
      %1632 = vperm.xlu0 %1631, %v773
      %v1633 = vpop.permute.xlu0 %1632
      %1636 = vset.pattern.permute.xlu0 0
      %1637 = vperm.xlu0 %1636, %v774
      %v1638 = vpop.permute.xlu0 %1637
      %1641 = vset.pattern.permute.xlu0 0
      %1642 = vperm.xlu0 %1641, %v775
      %v1643 = vpop.permute.xlu0 %1642
      %1646 = vset.pattern.permute.xlu0 0
      %1647 = vperm.xlu0 %1646, %v776
      %v1648 = vpop.permute.xlu0 %1647
      %1651 = vset.pattern.permute.xlu0 0
      %1652 = vperm.xlu0 %1651, %v777
      %v1653 = vpop.permute.xlu0 %1652
      %1656 = vset.pattern.permute.xlu0 0
      %1657 = vperm.xlu0 %1656, %v778
      %v1658 = vpop.permute.xlu0 %1657
      %1661 = vset.pattern.permute.xlu0 0
      %1662 = vperm.xlu0 %1661, %v779
      %v1663 = vpop.permute.xlu0 %1662
      %1666 = vset.pattern.permute.xlu0 0
      %1667 = vperm.xlu0 %1666, %v780
      %v1668 = vpop.permute.xlu0 %1667
      %1671 = vset.pattern.permute.xlu0 0
      %1672 = vperm.xlu0 %1671, %v781
      %v1673 = vpop.permute.xlu0 %1672
      %1676 = vset.pattern.permute.xlu0 0
      %1677 = vperm.xlu0 %1676, %v782
      %v1678 = vpop.permute.xlu0 %1677
      %1681 = vset.pattern.permute.xlu0 0
      %1682 = vperm.xlu0 %1681, %v783
      %v1683 = vpop.permute.xlu0 %1682
      %1686 = vset.pattern.permute.xlu0 0
      %1687 = vperm.xlu0 %1686, %v784
      %v1688 = vpop.permute.xlu0 %1687
      %1691 = vset.pattern.permute.xlu0 0
      %1692 = vperm.xlu0 %1691, %v785
      %v1693 = vpop.permute.xlu0 %1692
      %1696 = vset.pattern.permute.xlu0 0
      %1697 = vperm.xlu0 %1696, %v786
      %v1698 = vpop.permute.xlu0 %1697
      %1701 = vset.pattern.permute.xlu0 0
      %1702 = vperm.xlu0 %1701, %v787
      %v1703 = vpop.permute.xlu0 %1702
      %1706 = vset.pattern.permute.xlu0 0
      %1707 = vperm.xlu0 %1706, %v788
      %v1708 = vpop.permute.xlu0 %1707
      %1711 = vset.pattern.permute.xlu0 0
      %1712 = vperm.xlu0 %1711, %v789
      %v1713 = vpop.permute.xlu0 %1712
      %1716 = vset.pattern.permute.xlu0 0
      %1717 = vperm.xlu0 %1716, %v790
      %v1718 = vpop.permute.xlu0 %1717
      %1721 = vset.pattern.permute.xlu0 0
      %1722 = vperm.xlu0 %1721, %v791
      %v1723 = vpop.permute.xlu0 %1722
      %1726 = vset.pattern.permute.xlu0 0
      %1727 = vperm.xlu0 %1726, %v792
      %v1728 = vpop.permute.xlu0 %1727
      %1731 = vset.pattern.permute.xlu0 0
      %1732 = vperm.xlu0 %1731, %v793
      %v1733 = vpop.permute.xlu0 %1732
      %1736 = vset.pattern.permute.xlu0 0
      %1737 = vperm.xlu0 %1736, %v794
      %v1738 = vpop.permute.xlu0 %1737
      %1741 = vset.pattern.permute.xlu0 0
      %1742 = vperm.xlu0 %1741, %v795
      %v1743 = vpop.permute.xlu0 %1742
      %1746 = vset.pattern.permute.xlu0 0
      %1747 = vperm.xlu0 %1746, %v796
      %v1748 = vpop.permute.xlu0 %1747
      %1751 = vset.pattern.permute.xlu0 0
      %1752 = vperm.xlu0 %1751, %v797
      %v1753 = vpop.permute.xlu0 %1752
      %1756 = vset.pattern.permute.xlu0 0
      %1757 = vperm.xlu0 %1756, %v798
      %v1758 = vpop.permute.xlu0 %1757
      %1761 = vset.pattern.permute.xlu0 0
      %1762 = vperm.xlu0 %1761, %v799
      %v1763 = vpop.permute.xlu0 %1762
      %1766 = vset.pattern.permute.xlu0 0
      %1767 = vperm.xlu0 %1766, %v800
      %v1768 = vpop.permute.xlu0 %1767
      %1771 = vset.pattern.permute.xlu0 0
      %1772 = vperm.xlu0 %1771, %v801
      %v1773 = vpop.permute.xlu0 %1772
      %1776 = vset.pattern.permute.xlu0 0
      %1777 = vperm.xlu0 %1776, %v802
      %v1778 = vpop.permute.xlu0 %1777
      %1781 = vset.pattern.permute.xlu0 0
      %1782 = vperm.xlu0 %1781, %v803
      %v1783 = vpop.permute.xlu0 %1782
      %1786 = vset.pattern.permute.xlu0 0
      %1787 = vperm.xlu0 %1786, %v804
      %v1788 = vpop.permute.xlu0 %1787
      %1791 = vset.pattern.permute.xlu0 0
      %1792 = vperm.xlu0 %1791, %v805
      %v1793 = vpop.permute.xlu0 %1792
      %1796 = vset.pattern.permute.xlu0 0
      %1797 = vperm.xlu0 %1796, %v806
      %v1798 = vpop.permute.xlu0 %1797
      %1801 = vset.pattern.permute.xlu0 0
      %1802 = vperm.xlu0 %1801, %v807
      %v1803 = vpop.permute.xlu0 %1802
      %1806 = vset.pattern.permute.xlu0 0
      %1807 = vperm.xlu0 %1806, %v808
      %v1808 = vpop.permute.xlu0 %1807
      %1811 = vset.pattern.permute.xlu0 0
      %1812 = vperm.xlu0 %1811, %v809
      %v1813 = vpop.permute.xlu0 %1812
      %1816 = vset.pattern.permute.xlu0 0
      %1817 = vperm.xlu0 %1816, %v810
      %v1818 = vpop.permute.xlu0 %1817
      %1821 = vset.pattern.permute.xlu0 0
      %1822 = vperm.xlu0 %1821, %v811
      %v1823 = vpop.permute.xlu0 %1822
      %1826 = vset.pattern.permute.xlu0 0
      %1827 = vperm.xlu0 %1826, %v812
      %v1828 = vpop.permute.xlu0 %1827
      %1831 = vset.pattern.permute.xlu0 0
      %1832 = vperm.xlu0 %1831, %v813
      %v1833 = vpop.permute.xlu0 %1832
      %1836 = vset.pattern.permute.xlu0 0
      %1837 = vperm.xlu0 %1836, %v814
      %v1838 = vpop.permute.xlu0 %1837
      %1841 = vset.pattern.permute.xlu0 0
      %1842 = vperm.xlu0 %1841, %v815
      %v1843 = vpop.permute.xlu0 %1842
      %1846 = vset.pattern.permute.xlu0 0
      %1847 = vperm.xlu0 %1846, %v816
      %v1848 = vpop.permute.xlu0 %1847
      %1851 = vset.pattern.permute.xlu0 0
      %1852 = vperm.xlu0 %1851, %v817
      %v1853 = vpop.permute.xlu0 %1852
      %1856 = vset.pattern.permute.xlu0 0
      %1857 = vperm.xlu0 %1856, %v818
      %v1858 = vpop.permute.xlu0 %1857
      %1861 = vset.pattern.permute.xlu0 0
      %1862 = vperm.xlu0 %1861, %v819
      %v1863 = vpop.permute.xlu0 %1862
      %1866 = vset.pattern.permute.xlu0 0
      %1867 = vperm.xlu0 %1866, %v820
      %v1868 = vpop.permute.xlu0 %1867
      %1871 = vset.pattern.permute.xlu0 0
      %1872 = vperm.xlu0 %1871, %v821
      %v1873 = vpop.permute.xlu0 %1872
      %1876 = vset.pattern.permute.xlu0 0
      %1877 = vperm.xlu0 %1876, %v822
      %v1878 = vpop.permute.xlu0 %1877
      %1881 = vset.pattern.permute.xlu0 0
      %1882 = vperm.xlu0 %1881, %v823
      %v1883 = vpop.permute.xlu0 %1882
      %1886 = vset.pattern.permute.xlu0 0
      %1887 = vperm.xlu0 %1886, %v824
      %v1888 = vpop.permute.xlu0 %1887
      %1891 = vset.pattern.permute.xlu0 0
      %1892 = vperm.xlu0 %1891, %v825
      %v1893 = vpop.permute.xlu0 %1892
      %1896 = vset.pattern.permute.xlu0 0
      %1897 = vperm.xlu0 %1896, %v826
      %v1898 = vpop.permute.xlu0 %1897
      %1901 = vset.pattern.permute.xlu0 0
      %1902 = vperm.xlu0 %1901, %v827
      %v1903 = vpop.permute.xlu0 %1902
      %1906 = vset.pattern.permute.xlu0 0
      %1907 = vperm.xlu0 %1906, %v828
      %v1908 = vpop.permute.xlu0 %1907
      %1911 = vset.pattern.permute.xlu0 0
      %1912 = vperm.xlu0 %1911, %v829
      %v1913 = vpop.permute.xlu0 %1912
      %1916 = vset.pattern.permute.xlu0 0
      %1917 = vperm.xlu0 %1916, %v830
      %v1918 = vpop.permute.xlu0 %1917
      %1921 = vset.pattern.permute.xlu0 0
      %1922 = vperm.xlu0 %1921, %v831
      %v1923 = vpop.permute.xlu0 %1922
      %1926 = vset.pattern.permute.xlu0 0
      %1927 = vperm.xlu0 %1926, %v832
      %v1928 = vpop.permute.xlu0 %1927
      %1931 = vset.pattern.permute.xlu0 0
      %1932 = vperm.xlu0 %1931, %v833
      %v1933 = vpop.permute.xlu0 %1932
      %1936 = vset.pattern.permute.xlu0 0
      %1937 = vperm.xlu0 %1936, %v834
      %v1938 = vpop.permute.xlu0 %1937
      %1941 = vset.pattern.permute.xlu0 0
      %1942 = vperm.xlu0 %1941, %v835
      %v1943 = vpop.permute.xlu0 %1942
      %1946 = vset.pattern.permute.xlu0 0
      %1947 = vperm.xlu0 %1946, %v836
      %v1948 = vpop.permute.xlu0 %1947
      %1951 = vset.pattern.permute.xlu0 0
      %1952 = vperm.xlu0 %1951, %v837
      %v1953 = vpop.permute.xlu0 %1952
      %1956 = vset.pattern.permute.xlu0 0
      %1957 = vperm.xlu0 %1956, %v838
      %v1958 = vpop.permute.xlu0 %1957
      %1961 = vset.pattern.permute.xlu0 0
      %1962 = vperm.xlu0 %1961, %v839
      %v1963 = vpop.permute.xlu0 %1962
      %1966 = vset.pattern.permute.xlu0 0
      %1967 = vperm.xlu0 %1966, %v840
      %v1968 = vpop.permute.xlu0 %1967
      %1971 = vset.pattern.permute.xlu0 0
      %1972 = vperm.xlu0 %1971, %v841
      %v1973 = vpop.permute.xlu0 %1972
      %1976 = vset.pattern.permute.xlu0 0
      %1977 = vperm.xlu0 %1976, %v842
      %v1978 = vpop.permute.xlu0 %1977
      %1981 = vset.pattern.permute.xlu0 0
      %1982 = vperm.xlu0 %1981, %v843
      %v1983 = vpop.permute.xlu0 %1982
      %1986 = vset.pattern.permute.xlu0 0
      %1987 = vperm.xlu0 %1986, %v844
      %v1988 = vpop.permute.xlu0 %1987
      %1991 = vset.pattern.permute.xlu0 0
      %1992 = vperm.xlu0 %1991, %v845
      %v1993 = vpop.permute.xlu0 %1992
      %1996 = vset.pattern.permute.xlu0 0
      %1997 = vperm.xlu0 %1996, %v846
      %v1998 = vpop.permute.xlu0 %1997
      %2001 = vset.pattern.permute.xlu0 0
      %2002 = vperm.xlu0 %2001, %v847
      %v2003 = vpop.permute.xlu0 %2002
      %2006 = vset.pattern.permute.xlu0 0
      %2007 = vperm.xlu0 %2006, %v848
      %v2008 = vpop.permute.xlu0 %2007
      %2011 = vset.pattern.permute.xlu0 0
      %2012 = vperm.xlu0 %2011, %v849
      %v2013 = vpop.permute.xlu0 %2012
      %2016 = vset.pattern.permute.xlu0 0
      %2017 = vperm.xlu0 %2016, %v850
      %v2018 = vpop.permute.xlu0 %2017
      %2021 = vset.pattern.permute.xlu0 0
      %2022 = vperm.xlu0 %2021, %v851
      %v2023 = vpop.permute.xlu0 %2022
      %2026 = vset.pattern.permute.xlu0 0
      %2027 = vperm.xlu0 %2026, %v852
      %v2028 = vpop.permute.xlu0 %2027
      %2031 = vset.pattern.permute.xlu0 0
      %2032 = vperm.xlu0 %2031, %v853
      %v2033 = vpop.permute.xlu0 %2032
      %2036 = vset.pattern.permute.xlu0 0
      %2037 = vperm.xlu0 %2036, %v854
      %v2038 = vpop.permute.xlu0 %2037
      %2041 = vset.pattern.permute.xlu0 0
      %2042 = vperm.xlu0 %2041, %v855
      %v2043 = vpop.permute.xlu0 %2042
      %2046 = vset.pattern.permute.xlu0 0
      %2047 = vperm.xlu0 %2046, %v856
      %v2048 = vpop.permute.xlu0 %2047
      %2051 = vset.pattern.permute.xlu0 0
      %2052 = vperm.xlu0 %2051, %v857
      %v2053 = vpop.permute.xlu0 %2052
      %2056 = vset.pattern.permute.xlu0 0
      %2057 = vperm.xlu0 %2056, %v858
      %v2058 = vpop.permute.xlu0 %2057
      %2061 = vset.pattern.permute.xlu0 0
      %2062 = vperm.xlu0 %2061, %v859
      %v2063 = vpop.permute.xlu0 %2062
      %2066 = vset.pattern.permute.xlu0 0
      %2067 = vperm.xlu0 %2066, %v860
      %v2068 = vpop.permute.xlu0 %2067
      %2071 = vset.pattern.permute.xlu0 0
      %2072 = vperm.xlu0 %2071, %v861
      %v2073 = vpop.permute.xlu0 %2072
      %2076 = vset.pattern.permute.xlu0 0
      %2077 = vperm.xlu0 %2076, %v862
      %v2078 = vpop.permute.xlu0 %2077
      %2081 = vset.pattern.permute.xlu0 0
      %2082 = vperm.xlu0 %2081, %v863
      %v2083 = vpop.permute.xlu0 %2082
      %2086 = vset.pattern.permute.xlu0 0
      %2087 = vperm.xlu0 %2086, %v864
      %v2088 = vpop.permute.xlu0 %2087
      %2091 = vset.pattern.permute.xlu0 0
      %2092 = vperm.xlu0 %2091, %v865
      %v2093 = vpop.permute.xlu0 %2092
      %2096 = vset.pattern.permute.xlu0 0
      %2097 = vperm.xlu0 %2096, %v866
      %v2098 = vpop.permute.xlu0 %2097
      %2101 = vset.pattern.permute.xlu0 0
      %2102 = vperm.xlu0 %2101, %v867
      %v2103 = vpop.permute.xlu0 %2102
      %2106 = vset.pattern.permute.xlu0 0
      %2107 = vperm.xlu0 %2106, %v868
      %v2108 = vpop.permute.xlu0 %2107
      %2111 = vset.pattern.permute.xlu0 0
      %2112 = vperm.xlu0 %2111, %v869
      %v2113 = vpop.permute.xlu0 %2112
      %2116 = vset.pattern.permute.xlu0 0
      %2117 = vperm.xlu0 %2116, %v870
      %v2118 = vpop.permute.xlu0 %2117
      %2121 = vset.pattern.permute.xlu0 0
      %2122 = vperm.xlu0 %2121, %v871
      %v2123 = vpop.permute.xlu0 %2122
      %2126 = vset.pattern.permute.xlu0 0
      %2127 = vperm.xlu0 %2126, %v872
      %v2128 = vpop.permute.xlu0 %2127
      %2131 = vset.pattern.permute.xlu0 0
      %2132 = vperm.xlu0 %2131, %v873
      %v2133 = vpop.permute.xlu0 %2132
      %2136 = vset.pattern.permute.xlu0 0
      %2137 = vperm.xlu0 %2136, %v874
      %v2138 = vpop.permute.xlu0 %2137
      %2141 = vset.pattern.permute.xlu0 0
      %2142 = vperm.xlu0 %2141, %v875
      %v2143 = vpop.permute.xlu0 %2142
      %2146 = vset.pattern.permute.xlu0 0
      %2147 = vperm.xlu0 %2146, %v876
      %v2148 = vpop.permute.xlu0 %2147
      %2151 = vset.pattern.permute.xlu0 0
      %2152 = vperm.xlu0 %2151, %v877
      %v2153 = vpop.permute.xlu0 %2152
      %2156 = vset.pattern.permute.xlu0 0
      %2157 = vperm.xlu0 %2156, %v878
      %v2158 = vpop.permute.xlu0 %2157
      %v2160 = vlaneseq
      %v2161 = vshrl.u32 %v2160, 7
      %v2162 = vsub.s32 0, %v2161
      %v2163 = vrot.slane %v879, %v2162
      %v2164 = vmul.f32 %v883, %v2163
      %v2165 = vmul.f32 %v888, %v2163
      %v2166 = vmul.f32 %v893, %v2163
      %v2167 = vmul.f32 %v898, %v2163
      %v2168 = vmul.f32 %v903, %v2163
      %v2169 = vmul.f32 %v908, %v2163
      %v2170 = vmul.f32 %v913, %v2163
      %v2171 = vmul.f32 %v918, %v2163
      %v2172 = vmul.f32 %v923, %v2163
      %v2173 = vmul.f32 %v928, %v2163
      %v2174 = vmul.f32 %v933, %v2163
      %v2175 = vmul.f32 %v938, %v2163
      %v2176 = vmul.f32 %v943, %v2163
      %v2177 = vmul.f32 %v948, %v2163
      %v2178 = vmul.f32 %v953, %v2163
      %v2179 = vmul.f32 %v958, %v2163
      %v2180 = vmul.f32 %v963, %v2163
      %v2181 = vmul.f32 %v968, %v2163
      %v2182 = vmul.f32 %v973, %v2163
      %v2183 = vmul.f32 %v978, %v2163
      %v2184 = vmul.f32 %v983, %v2163
      %v2185 = vmul.f32 %v988, %v2163
      %v2186 = vmul.f32 %v993, %v2163
      %v2187 = vmul.f32 %v998, %v2163
      %v2188 = vmul.f32 %v1003, %v2163
      %v2189 = vmul.f32 %v1008, %v2163
      %v2190 = vmul.f32 %v1013, %v2163
      %v2191 = vmul.f32 %v1018, %v2163
      %v2192 = vmul.f32 %v1023, %v2163
      %v2193 = vmul.f32 %v1028, %v2163
      %v2194 = vmul.f32 %v1033, %v2163
      %v2195 = vmul.f32 %v1038, %v2163
      %v2196 = vmul.f32 %v1043, %v2163
      %v2197 = vmul.f32 %v1048, %v2163
      %v2198 = vmul.f32 %v1053, %v2163
      %v2199 = vmul.f32 %v1058, %v2163
      %v2200 = vmul.f32 %v1063, %v2163
      %v2201 = vmul.f32 %v1068, %v2163
      %v2202 = vmul.f32 %v1073, %v2163
      %v2203 = vmul.f32 %v1078, %v2163
      %v2204 = vmul.f32 %v1083, %v2163
      %v2205 = vmul.f32 %v1088, %v2163
      %v2206 = vmul.f32 %v1093, %v2163
      %v2207 = vmul.f32 %v1098, %v2163
      %v2208 = vmul.f32 %v1103, %v2163
      %v2209 = vmul.f32 %v1108, %v2163
      %v2210 = vmul.f32 %v1113, %v2163
      %v2211 = vmul.f32 %v1118, %v2163
      %v2212 = vmul.f32 %v1123, %v2163
      %v2213 = vmul.f32 %v1128, %v2163
      %v2214 = vmul.f32 %v1133, %v2163
      %v2215 = vmul.f32 %v1138, %v2163
      %v2216 = vmul.f32 %v1143, %v2163
      %v2217 = vmul.f32 %v1148, %v2163
      %v2218 = vmul.f32 %v1153, %v2163
      %v2219 = vmul.f32 %v1158, %v2163
      %v2220 = vmul.f32 %v1163, %v2163
      %v2221 = vmul.f32 %v1168, %v2163
      %v2222 = vmul.f32 %v1173, %v2163
      %v2223 = vmul.f32 %v1178, %v2163
      %v2224 = vmul.f32 %v1183, %v2163
      %v2225 = vmul.f32 %v1188, %v2163
      %v2226 = vmul.f32 %v1193, %v2163
      %v2227 = vmul.f32 %v1198, %v2163
      %v2228 = vmul.f32 %v1203, %v2163
      %v2229 = vmul.f32 %v1208, %v2163
      %v2230 = vmul.f32 %v1213, %v2163
      %v2231 = vmul.f32 %v1218, %v2163
      %v2232 = vmul.f32 %v1223, %v2163
      %v2233 = vmul.f32 %v1228, %v2163
      %v2234 = vmul.f32 %v1233, %v2163
      %v2235 = vmul.f32 %v1238, %v2163
      %v2236 = vmul.f32 %v1243, %v2163
      %v2237 = vmul.f32 %v1248, %v2163
      %v2238 = vmul.f32 %v1253, %v2163
      %v2239 = vmul.f32 %v1258, %v2163
      %v2240 = vmul.f32 %v1263, %v2163
      %v2241 = vmul.f32 %v1268, %v2163
      %v2242 = vmul.f32 %v1273, %v2163
      %v2243 = vmul.f32 %v1278, %v2163
      %v2244 = vmul.f32 %v1283, %v2163
      %v2245 = vmul.f32 %v1288, %v2163
      %v2246 = vmul.f32 %v1293, %v2163
      %v2247 = vmul.f32 %v1298, %v2163
      %v2248 = vmul.f32 %v1303, %v2163
      %v2249 = vmul.f32 %v1308, %v2163
      %v2250 = vmul.f32 %v1313, %v2163
      %v2251 = vmul.f32 %v1318, %v2163
      %v2252 = vmul.f32 %v1323, %v2163
      %v2253 = vmul.f32 %v1328, %v2163
      %v2254 = vmul.f32 %v1333, %v2163
      %v2255 = vmul.f32 %v1338, %v2163
      %v2256 = vmul.f32 %v1343, %v2163
      %v2257 = vmul.f32 %v1348, %v2163
      %v2258 = vmul.f32 %v1353, %v2163
      %v2259 = vmul.f32 %v1358, %v2163
      %v2260 = vmul.f32 %v1363, %v2163
      %v2261 = vmul.f32 %v1368, %v2163
      %v2262 = vmul.f32 %v1373, %v2163
      %v2263 = vmul.f32 %v1378, %v2163
      %v2264 = vmul.f32 %v1383, %v2163
      %v2265 = vmul.f32 %v1388, %v2163
      %v2266 = vmul.f32 %v1393, %v2163
      %v2267 = vmul.f32 %v1398, %v2163
      %v2268 = vmul.f32 %v1403, %v2163
      %v2269 = vmul.f32 %v1408, %v2163
      %v2270 = vmul.f32 %v1413, %v2163
      %v2271 = vmul.f32 %v1418, %v2163
      %v2272 = vmul.f32 %v1423, %v2163
      %v2273 = vmul.f32 %v1428, %v2163
      %v2274 = vmul.f32 %v1433, %v2163
      %v2275 = vmul.f32 %v1438, %v2163
      %v2276 = vmul.f32 %v1443, %v2163
      %v2277 = vmul.f32 %v1448, %v2163
      %v2278 = vmul.f32 %v1453, %v2163
      %v2279 = vmul.f32 %v1458, %v2163
      %v2280 = vmul.f32 %v1463, %v2163
      %v2281 = vmul.f32 %v1468, %v2163
      %v2282 = vmul.f32 %v1473, %v2163
      %v2283 = vmul.f32 %v1478, %v2163
      %v2284 = vmul.f32 %v1483, %v2163
      %v2285 = vmul.f32 %v1488, %v2163
      %v2286 = vmul.f32 %v1493, %v2163
      %v2287 = vmul.f32 %v1498, %v2163
      %v2288 = vmul.f32 %v1503, %v2163
      %v2289 = vmul.f32 %v1508, %v2163
      %v2290 = vmul.f32 %v1513, %v2163
      %v2291 = vmul.f32 %v1518, %v2163
      %v2292 = vmul.f32 %v1523, %v2163
      %v2293 = vmul.f32 %v1528, %v2163
      %v2294 = vmul.f32 %v1533, %v2163
      %v2295 = vmul.f32 %v1538, %v2163
      %v2296 = vmul.f32 %v1543, %v2163
      %v2297 = vmul.f32 %v1548, %v2163
      %v2298 = vmul.f32 %v1553, %v2163
      %v2299 = vmul.f32 %v1558, %v2163
      %v2300 = vmul.f32 %v1563, %v2163
      %v2301 = vmul.f32 %v1568, %v2163
      %v2302 = vmul.f32 %v1573, %v2163
      %v2303 = vmul.f32 %v1578, %v2163
      %v2304 = vmul.f32 %v1583, %v2163
      %v2305 = vmul.f32 %v1588, %v2163
      %v2306 = vmul.f32 %v1593, %v2163
      %v2307 = vmul.f32 %v1598, %v2163
      %v2308 = vmul.f32 %v1603, %v2163
      %v2309 = vmul.f32 %v1608, %v2163
      %v2310 = vmul.f32 %v1613, %v2163
      %v2311 = vmul.f32 %v1618, %v2163
      %v2312 = vmul.f32 %v1623, %v2163
      %v2313 = vmul.f32 %v1628, %v2163
      %v2314 = vmul.f32 %v1633, %v2163
      %v2315 = vmul.f32 %v1638, %v2163
      %v2316 = vmul.f32 %v1643, %v2163
      %v2317 = vmul.f32 %v1648, %v2163
      %v2318 = vmul.f32 %v1653, %v2163
      %v2319 = vmul.f32 %v1658, %v2163
      %v2320 = vmul.f32 %v1663, %v2163
      %v2321 = vmul.f32 %v1668, %v2163
      %v2322 = vmul.f32 %v1673, %v2163
      %v2323 = vmul.f32 %v1678, %v2163
      %v2324 = vmul.f32 %v1683, %v2163
      %v2325 = vmul.f32 %v1688, %v2163
      %v2326 = vmul.f32 %v1693, %v2163
      %v2327 = vmul.f32 %v1698, %v2163
      %v2328 = vmul.f32 %v1703, %v2163
      %v2329 = vmul.f32 %v1708, %v2163
      %v2330 = vmul.f32 %v1713, %v2163
      %v2331 = vmul.f32 %v1718, %v2163
      %v2332 = vmul.f32 %v1723, %v2163
      %v2333 = vmul.f32 %v1728, %v2163
      %v2334 = vmul.f32 %v1733, %v2163
      %v2335 = vmul.f32 %v1738, %v2163
      %v2336 = vmul.f32 %v1743, %v2163
      %v2337 = vmul.f32 %v1748, %v2163
      %v2338 = vmul.f32 %v1753, %v2163
      %v2339 = vmul.f32 %v1758, %v2163
      %v2340 = vmul.f32 %v1763, %v2163
      %v2341 = vmul.f32 %v1768, %v2163
      %v2342 = vmul.f32 %v1773, %v2163
      %v2343 = vmul.f32 %v1778, %v2163
      %v2344 = vmul.f32 %v1783, %v2163
      %v2345 = vmul.f32 %v1788, %v2163
      %v2346 = vmul.f32 %v1793, %v2163
      %v2347 = vmul.f32 %v1798, %v2163
      %v2348 = vmul.f32 %v1803, %v2163
      %v2349 = vmul.f32 %v1808, %v2163
      %v2350 = vmul.f32 %v1813, %v2163
      %v2351 = vmul.f32 %v1818, %v2163
      %v2352 = vmul.f32 %v1823, %v2163
      %v2353 = vmul.f32 %v1828, %v2163
      %v2354 = vmul.f32 %v1833, %v2163
      %v2355 = vmul.f32 %v1838, %v2163
      %v2356 = vmul.f32 %v1843, %v2163
      %v2357 = vmul.f32 %v1848, %v2163
      %v2358 = vmul.f32 %v1853, %v2163
      %v2359 = vmul.f32 %v1858, %v2163
      %v2360 = vmul.f32 %v1863, %v2163
      %v2361 = vmul.f32 %v1868, %v2163
      %v2362 = vmul.f32 %v1873, %v2163
      %v2363 = vmul.f32 %v1878, %v2163
      %v2364 = vmul.f32 %v1883, %v2163
      %v2365 = vmul.f32 %v1888, %v2163
      %v2366 = vmul.f32 %v1893, %v2163
      %v2367 = vmul.f32 %v1898, %v2163
      %v2368 = vmul.f32 %v1903, %v2163
      %v2369 = vmul.f32 %v1908, %v2163
      %v2370 = vmul.f32 %v1913, %v2163
      %v2371 = vmul.f32 %v1918, %v2163
      %v2372 = vmul.f32 %v1923, %v2163
      %v2373 = vmul.f32 %v1928, %v2163
      %v2374 = vmul.f32 %v1933, %v2163
      %v2375 = vmul.f32 %v1938, %v2163
      %v2376 = vmul.f32 %v1943, %v2163
      %v2377 = vmul.f32 %v1948, %v2163
      %v2378 = vmul.f32 %v1953, %v2163
      %v2379 = vmul.f32 %v1958, %v2163
      %v2380 = vmul.f32 %v1963, %v2163
      %v2381 = vmul.f32 %v1968, %v2163
      %v2382 = vmul.f32 %v1973, %v2163
      %v2383 = vmul.f32 %v1978, %v2163
      %v2384 = vmul.f32 %v1983, %v2163
      %v2385 = vmul.f32 %v1988, %v2163
      %v2386 = vmul.f32 %v1993, %v2163
      %v2387 = vmul.f32 %v1998, %v2163
      %v2388 = vmul.f32 %v2003, %v2163
      %v2389 = vmul.f32 %v2008, %v2163
      %v2390 = vmul.f32 %v2013, %v2163
      %v2391 = vmul.f32 %v2018, %v2163
      %v2392 = vmul.f32 %v2023, %v2163
      %v2393 = vmul.f32 %v2028, %v2163
      %v2394 = vmul.f32 %v2033, %v2163
      %v2395 = vmul.f32 %v2038, %v2163
      %v2396 = vmul.f32 %v2043, %v2163
      %v2397 = vmul.f32 %v2048, %v2163
      %v2398 = vmul.f32 %v2053, %v2163
      %v2399 = vmul.f32 %v2058, %v2163
      %v2400 = vmul.f32 %v2063, %v2163
      %v2401 = vmul.f32 %v2068, %v2163
      %v2402 = vmul.f32 %v2073, %v2163
      %v2403 = vmul.f32 %v2078, %v2163
      %v2404 = vmul.f32 %v2083, %v2163
      %v2405 = vmul.f32 %v2088, %v2163
      %v2406 = vmul.f32 %v2093, %v2163
      %v2407 = vmul.f32 %v2098, %v2163
      %v2408 = vmul.f32 %v2103, %v2163
      %v2409 = vmul.f32 %v2108, %v2163
      %v2410 = vmul.f32 %v2113, %v2163
      %v2411 = vmul.f32 %v2118, %v2163
      %v2412 = vmul.f32 %v2123, %v2163
      %v2413 = vmul.f32 %v2128, %v2163
      %v2414 = vmul.f32 %v2133, %v2163
      %v2415 = vmul.f32 %v2138, %v2163
      %v2416 = vmul.f32 %v2143, %v2163
      %v2417 = vmul.f32 %v2148, %v2163
      %v2418 = vmul.f32 %v2153, %v2163
      %v2419 = vmul.f32 %v2158, %v2163
      %2420 = vset.pattern.permute.xlu0 1
      %2421 = vperm.xlu0 %2420, %v623
      %v2422 = vpop.permute.xlu0 %2421
      %2424 = vset.pattern.permute.xlu0 1
      %2425 = vperm.xlu0 %2424, %v624
      %v2426 = vpop.permute.xlu0 %2425
      %2428 = vset.pattern.permute.xlu0 1
      %2429 = vperm.xlu0 %2428, %v625
      %v2430 = vpop.permute.xlu0 %2429
      %2432 = vset.pattern.permute.xlu0 1
      %2433 = vperm.xlu0 %2432, %v626
      %v2434 = vpop.permute.xlu0 %2433
      %2436 = vset.pattern.permute.xlu0 1
      %2437 = vperm.xlu0 %2436, %v627
      %v2438 = vpop.permute.xlu0 %2437
      %2440 = vset.pattern.permute.xlu0 1
      %2441 = vperm.xlu0 %2440, %v628
      %v2442 = vpop.permute.xlu0 %2441
      %2444 = vset.pattern.permute.xlu0 1
      %2445 = vperm.xlu0 %2444, %v629
      %v2446 = vpop.permute.xlu0 %2445
      %2448 = vset.pattern.permute.xlu0 1
      %2449 = vperm.xlu0 %2448, %v630
      %v2450 = vpop.permute.xlu0 %2449
      %2452 = vset.pattern.permute.xlu0 1
      %2453 = vperm.xlu0 %2452, %v631
      %v2454 = vpop.permute.xlu0 %2453
      %2456 = vset.pattern.permute.xlu0 1
      %2457 = vperm.xlu0 %2456, %v632
      %v2458 = vpop.permute.xlu0 %2457
      %2460 = vset.pattern.permute.xlu0 1
      %2461 = vperm.xlu0 %2460, %v633
      %v2462 = vpop.permute.xlu0 %2461
      %2464 = vset.pattern.permute.xlu0 1
      %2465 = vperm.xlu0 %2464, %v634
      %v2466 = vpop.permute.xlu0 %2465
      %2468 = vset.pattern.permute.xlu0 1
      %2469 = vperm.xlu0 %2468, %v635
      %v2470 = vpop.permute.xlu0 %2469
      %2472 = vset.pattern.permute.xlu0 1
      %2473 = vperm.xlu0 %2472, %v636
      %v2474 = vpop.permute.xlu0 %2473
      %2476 = vset.pattern.permute.xlu0 1
      %2477 = vperm.xlu0 %2476, %v637
      %v2478 = vpop.permute.xlu0 %2477
      %2480 = vset.pattern.permute.xlu0 1
      %2481 = vperm.xlu0 %2480, %v638
      %v2482 = vpop.permute.xlu0 %2481
      %2484 = vset.pattern.permute.xlu0 1
      %2485 = vperm.xlu0 %2484, %v639
      %v2486 = vpop.permute.xlu0 %2485
      %2488 = vset.pattern.permute.xlu0 1
      %2489 = vperm.xlu0 %2488, %v640
      %v2490 = vpop.permute.xlu0 %2489
      %2492 = vset.pattern.permute.xlu0 1
      %2493 = vperm.xlu0 %2492, %v641
      %v2494 = vpop.permute.xlu0 %2493
      %2496 = vset.pattern.permute.xlu0 1
      %2497 = vperm.xlu0 %2496, %v642
      %v2498 = vpop.permute.xlu0 %2497
      %2500 = vset.pattern.permute.xlu0 1
      %2501 = vperm.xlu0 %2500, %v643
      %v2502 = vpop.permute.xlu0 %2501
      %2504 = vset.pattern.permute.xlu0 1
      %2505 = vperm.xlu0 %2504, %v644
      %v2506 = vpop.permute.xlu0 %2505
      %2508 = vset.pattern.permute.xlu0 1
      %2509 = vperm.xlu0 %2508, %v645
      %v2510 = vpop.permute.xlu0 %2509
      %2512 = vset.pattern.permute.xlu0 1
      %2513 = vperm.xlu0 %2512, %v646
      %v2514 = vpop.permute.xlu0 %2513
      %2516 = vset.pattern.permute.xlu0 1
      %2517 = vperm.xlu0 %2516, %v647
      %v2518 = vpop.permute.xlu0 %2517
      %2520 = vset.pattern.permute.xlu0 1
      %2521 = vperm.xlu0 %2520, %v648
      %v2522 = vpop.permute.xlu0 %2521
      %2524 = vset.pattern.permute.xlu0 1
      %2525 = vperm.xlu0 %2524, %v649
      %v2526 = vpop.permute.xlu0 %2525
      %2528 = vset.pattern.permute.xlu0 1
      %2529 = vperm.xlu0 %2528, %v650
      %v2530 = vpop.permute.xlu0 %2529
      %2532 = vset.pattern.permute.xlu0 1
      %2533 = vperm.xlu0 %2532, %v651
      %v2534 = vpop.permute.xlu0 %2533
      %2536 = vset.pattern.permute.xlu0 1
      %2537 = vperm.xlu0 %2536, %v652
      %v2538 = vpop.permute.xlu0 %2537
      %2540 = vset.pattern.permute.xlu0 1
      %2541 = vperm.xlu0 %2540, %v653
      %v2542 = vpop.permute.xlu0 %2541
      %2544 = vset.pattern.permute.xlu0 1
      %2545 = vperm.xlu0 %2544, %v654
      %v2546 = vpop.permute.xlu0 %2545
      %2548 = vset.pattern.permute.xlu0 1
      %2549 = vperm.xlu0 %2548, %v655
      %v2550 = vpop.permute.xlu0 %2549
      %2552 = vset.pattern.permute.xlu0 1
      %2553 = vperm.xlu0 %2552, %v656
      %v2554 = vpop.permute.xlu0 %2553
      %2556 = vset.pattern.permute.xlu0 1
      %2557 = vperm.xlu0 %2556, %v657
      %v2558 = vpop.permute.xlu0 %2557
      %2560 = vset.pattern.permute.xlu0 1
      %2561 = vperm.xlu0 %2560, %v658
      %v2562 = vpop.permute.xlu0 %2561
      %2564 = vset.pattern.permute.xlu0 1
      %2565 = vperm.xlu0 %2564, %v659
      %v2566 = vpop.permute.xlu0 %2565
      %2568 = vset.pattern.permute.xlu0 1
      %2569 = vperm.xlu0 %2568, %v660
      %v2570 = vpop.permute.xlu0 %2569
      %2572 = vset.pattern.permute.xlu0 1
      %2573 = vperm.xlu0 %2572, %v661
      %v2574 = vpop.permute.xlu0 %2573
      %2576 = vset.pattern.permute.xlu0 1
      %2577 = vperm.xlu0 %2576, %v662
      %v2578 = vpop.permute.xlu0 %2577
      %2580 = vset.pattern.permute.xlu0 1
      %2581 = vperm.xlu0 %2580, %v663
      %v2582 = vpop.permute.xlu0 %2581
      %2584 = vset.pattern.permute.xlu0 1
      %2585 = vperm.xlu0 %2584, %v664
      %v2586 = vpop.permute.xlu0 %2585
      %2588 = vset.pattern.permute.xlu0 1
      %2589 = vperm.xlu0 %2588, %v665
      %v2590 = vpop.permute.xlu0 %2589
      %2592 = vset.pattern.permute.xlu0 1
      %2593 = vperm.xlu0 %2592, %v666
      %v2594 = vpop.permute.xlu0 %2593
      %2596 = vset.pattern.permute.xlu0 1
      %2597 = vperm.xlu0 %2596, %v667
      %v2598 = vpop.permute.xlu0 %2597
      %2600 = vset.pattern.permute.xlu0 1
      %2601 = vperm.xlu0 %2600, %v668
      %v2602 = vpop.permute.xlu0 %2601
      %2604 = vset.pattern.permute.xlu0 1
      %2605 = vperm.xlu0 %2604, %v669
      %v2606 = vpop.permute.xlu0 %2605
      %2608 = vset.pattern.permute.xlu0 1
      %2609 = vperm.xlu0 %2608, %v670
      %v2610 = vpop.permute.xlu0 %2609
      %2612 = vset.pattern.permute.xlu0 1
      %2613 = vperm.xlu0 %2612, %v671
      %v2614 = vpop.permute.xlu0 %2613
      %2616 = vset.pattern.permute.xlu0 1
      %2617 = vperm.xlu0 %2616, %v672
      %v2618 = vpop.permute.xlu0 %2617
      %2620 = vset.pattern.permute.xlu0 1
      %2621 = vperm.xlu0 %2620, %v673
      %v2622 = vpop.permute.xlu0 %2621
      %2624 = vset.pattern.permute.xlu0 1
      %2625 = vperm.xlu0 %2624, %v674
      %v2626 = vpop.permute.xlu0 %2625
      %2628 = vset.pattern.permute.xlu0 1
      %2629 = vperm.xlu0 %2628, %v675
      %v2630 = vpop.permute.xlu0 %2629
      %2632 = vset.pattern.permute.xlu0 1
      %2633 = vperm.xlu0 %2632, %v676
      %v2634 = vpop.permute.xlu0 %2633
      %2636 = vset.pattern.permute.xlu0 1
      %2637 = vperm.xlu0 %2636, %v677
      %v2638 = vpop.permute.xlu0 %2637
      %2640 = vset.pattern.permute.xlu0 1
      %2641 = vperm.xlu0 %2640, %v678
      %v2642 = vpop.permute.xlu0 %2641
      %2644 = vset.pattern.permute.xlu0 1
      %2645 = vperm.xlu0 %2644, %v679
      %v2646 = vpop.permute.xlu0 %2645
      %2648 = vset.pattern.permute.xlu0 1
      %2649 = vperm.xlu0 %2648, %v680
      %v2650 = vpop.permute.xlu0 %2649
      %2652 = vset.pattern.permute.xlu0 1
      %2653 = vperm.xlu0 %2652, %v681
      %v2654 = vpop.permute.xlu0 %2653
      %2656 = vset.pattern.permute.xlu0 1
      %2657 = vperm.xlu0 %2656, %v682
      %v2658 = vpop.permute.xlu0 %2657
      %2660 = vset.pattern.permute.xlu0 1
      %2661 = vperm.xlu0 %2660, %v683
      %v2662 = vpop.permute.xlu0 %2661
      %2664 = vset.pattern.permute.xlu0 1
      %2665 = vperm.xlu0 %2664, %v684
      %v2666 = vpop.permute.xlu0 %2665
      %2668 = vset.pattern.permute.xlu0 1
      %2669 = vperm.xlu0 %2668, %v685
      %v2670 = vpop.permute.xlu0 %2669
      %2672 = vset.pattern.permute.xlu0 1
      %2673 = vperm.xlu0 %2672, %v686
      %v2674 = vpop.permute.xlu0 %2673
      %2676 = vset.pattern.permute.xlu0 1
      %2677 = vperm.xlu0 %2676, %v687
      %v2678 = vpop.permute.xlu0 %2677
      %2680 = vset.pattern.permute.xlu0 1
      %2681 = vperm.xlu0 %2680, %v688
      %v2682 = vpop.permute.xlu0 %2681
      %2684 = vset.pattern.permute.xlu0 1
      %2685 = vperm.xlu0 %2684, %v689
      %v2686 = vpop.permute.xlu0 %2685
      %2688 = vset.pattern.permute.xlu0 1
      %2689 = vperm.xlu0 %2688, %v690
      %v2690 = vpop.permute.xlu0 %2689
      %2692 = vset.pattern.permute.xlu0 1
      %2693 = vperm.xlu0 %2692, %v691
      %v2694 = vpop.permute.xlu0 %2693
      %2696 = vset.pattern.permute.xlu0 1
      %2697 = vperm.xlu0 %2696, %v692
      %v2698 = vpop.permute.xlu0 %2697
      %2700 = vset.pattern.permute.xlu0 1
      %2701 = vperm.xlu0 %2700, %v693
      %v2702 = vpop.permute.xlu0 %2701
      %2704 = vset.pattern.permute.xlu0 1
      %2705 = vperm.xlu0 %2704, %v694
      %v2706 = vpop.permute.xlu0 %2705
      %2708 = vset.pattern.permute.xlu0 1
      %2709 = vperm.xlu0 %2708, %v695
      %v2710 = vpop.permute.xlu0 %2709
      %2712 = vset.pattern.permute.xlu0 1
      %2713 = vperm.xlu0 %2712, %v696
      %v2714 = vpop.permute.xlu0 %2713
      %2716 = vset.pattern.permute.xlu0 1
      %2717 = vperm.xlu0 %2716, %v697
      %v2718 = vpop.permute.xlu0 %2717
      %2720 = vset.pattern.permute.xlu0 1
      %2721 = vperm.xlu0 %2720, %v698
      %v2722 = vpop.permute.xlu0 %2721
      %2724 = vset.pattern.permute.xlu0 1
      %2725 = vperm.xlu0 %2724, %v699
      %v2726 = vpop.permute.xlu0 %2725
      %2728 = vset.pattern.permute.xlu0 1
      %2729 = vperm.xlu0 %2728, %v700
      %v2730 = vpop.permute.xlu0 %2729
      %2732 = vset.pattern.permute.xlu0 1
      %2733 = vperm.xlu0 %2732, %v701
      %v2734 = vpop.permute.xlu0 %2733
      %2736 = vset.pattern.permute.xlu0 1
      %2737 = vperm.xlu0 %2736, %v702
      %v2738 = vpop.permute.xlu0 %2737
      %2740 = vset.pattern.permute.xlu0 1
      %2741 = vperm.xlu0 %2740, %v703
      %v2742 = vpop.permute.xlu0 %2741
      %2744 = vset.pattern.permute.xlu0 1
      %2745 = vperm.xlu0 %2744, %v704
      %v2746 = vpop.permute.xlu0 %2745
      %2748 = vset.pattern.permute.xlu0 1
      %2749 = vperm.xlu0 %2748, %v705
      %v2750 = vpop.permute.xlu0 %2749
      %2752 = vset.pattern.permute.xlu0 1
      %2753 = vperm.xlu0 %2752, %v706
      %v2754 = vpop.permute.xlu0 %2753
      %2756 = vset.pattern.permute.xlu0 1
      %2757 = vperm.xlu0 %2756, %v707
      %v2758 = vpop.permute.xlu0 %2757
      %2760 = vset.pattern.permute.xlu0 1
      %2761 = vperm.xlu0 %2760, %v708
      %v2762 = vpop.permute.xlu0 %2761
      %2764 = vset.pattern.permute.xlu0 1
      %2765 = vperm.xlu0 %2764, %v709
      %v2766 = vpop.permute.xlu0 %2765
      %2768 = vset.pattern.permute.xlu0 1
      %2769 = vperm.xlu0 %2768, %v710
      %v2770 = vpop.permute.xlu0 %2769
      %2772 = vset.pattern.permute.xlu0 1
      %2773 = vperm.xlu0 %2772, %v711
      %v2774 = vpop.permute.xlu0 %2773
      %2776 = vset.pattern.permute.xlu0 1
      %2777 = vperm.xlu0 %2776, %v712
      %v2778 = vpop.permute.xlu0 %2777
      %2780 = vset.pattern.permute.xlu0 1
      %2781 = vperm.xlu0 %2780, %v713
      %v2782 = vpop.permute.xlu0 %2781
      %2784 = vset.pattern.permute.xlu0 1
      %2785 = vperm.xlu0 %2784, %v714
      %v2786 = vpop.permute.xlu0 %2785
      %2788 = vset.pattern.permute.xlu0 1
      %2789 = vperm.xlu0 %2788, %v715
      %v2790 = vpop.permute.xlu0 %2789
      %2792 = vset.pattern.permute.xlu0 1
      %2793 = vperm.xlu0 %2792, %v716
      %v2794 = vpop.permute.xlu0 %2793
      %2796 = vset.pattern.permute.xlu0 1
      %2797 = vperm.xlu0 %2796, %v717
      %v2798 = vpop.permute.xlu0 %2797
      %2800 = vset.pattern.permute.xlu0 1
      %2801 = vperm.xlu0 %2800, %v718
      %v2802 = vpop.permute.xlu0 %2801
      %2804 = vset.pattern.permute.xlu0 1
      %2805 = vperm.xlu0 %2804, %v719
      %v2806 = vpop.permute.xlu0 %2805
      %2808 = vset.pattern.permute.xlu0 1
      %2809 = vperm.xlu0 %2808, %v720
      %v2810 = vpop.permute.xlu0 %2809
      %2812 = vset.pattern.permute.xlu0 1
      %2813 = vperm.xlu0 %2812, %v721
      %v2814 = vpop.permute.xlu0 %2813
      %2816 = vset.pattern.permute.xlu0 1
      %2817 = vperm.xlu0 %2816, %v722
      %v2818 = vpop.permute.xlu0 %2817
      %2820 = vset.pattern.permute.xlu0 1
      %2821 = vperm.xlu0 %2820, %v723
      %v2822 = vpop.permute.xlu0 %2821
      %2824 = vset.pattern.permute.xlu0 1
      %2825 = vperm.xlu0 %2824, %v724
      %v2826 = vpop.permute.xlu0 %2825
      %2828 = vset.pattern.permute.xlu0 1
      %2829 = vperm.xlu0 %2828, %v725
      %v2830 = vpop.permute.xlu0 %2829
      %2832 = vset.pattern.permute.xlu0 1
      %2833 = vperm.xlu0 %2832, %v726
      %v2834 = vpop.permute.xlu0 %2833
      %2836 = vset.pattern.permute.xlu0 1
      %2837 = vperm.xlu0 %2836, %v727
      %v2838 = vpop.permute.xlu0 %2837
      %2840 = vset.pattern.permute.xlu0 1
      %2841 = vperm.xlu0 %2840, %v728
      %v2842 = vpop.permute.xlu0 %2841
      %2844 = vset.pattern.permute.xlu0 1
      %2845 = vperm.xlu0 %2844, %v729
      %v2846 = vpop.permute.xlu0 %2845
      %2848 = vset.pattern.permute.xlu0 1
      %2849 = vperm.xlu0 %2848, %v730
      %v2850 = vpop.permute.xlu0 %2849
      %2852 = vset.pattern.permute.xlu0 1
      %2853 = vperm.xlu0 %2852, %v731
      %v2854 = vpop.permute.xlu0 %2853
      %2856 = vset.pattern.permute.xlu0 1
      %2857 = vperm.xlu0 %2856, %v732
      %v2858 = vpop.permute.xlu0 %2857
      %2860 = vset.pattern.permute.xlu0 1
      %2861 = vperm.xlu0 %2860, %v733
      %v2862 = vpop.permute.xlu0 %2861
      %2864 = vset.pattern.permute.xlu0 1
      %2865 = vperm.xlu0 %2864, %v734
      %v2866 = vpop.permute.xlu0 %2865
      %2868 = vset.pattern.permute.xlu0 1
      %2869 = vperm.xlu0 %2868, %v735
      %v2870 = vpop.permute.xlu0 %2869
      %2872 = vset.pattern.permute.xlu0 1
      %2873 = vperm.xlu0 %2872, %v736
      %v2874 = vpop.permute.xlu0 %2873
      %2876 = vset.pattern.permute.xlu0 1
      %2877 = vperm.xlu0 %2876, %v737
      %v2878 = vpop.permute.xlu0 %2877
      %2880 = vset.pattern.permute.xlu0 1
      %2881 = vperm.xlu0 %2880, %v738
      %v2882 = vpop.permute.xlu0 %2881
      %2884 = vset.pattern.permute.xlu0 1
      %2885 = vperm.xlu0 %2884, %v739
      %v2886 = vpop.permute.xlu0 %2885
      %2888 = vset.pattern.permute.xlu0 1
      %2889 = vperm.xlu0 %2888, %v740
      %v2890 = vpop.permute.xlu0 %2889
      %2892 = vset.pattern.permute.xlu0 1
      %2893 = vperm.xlu0 %2892, %v741
      %v2894 = vpop.permute.xlu0 %2893
      %2896 = vset.pattern.permute.xlu0 1
      %2897 = vperm.xlu0 %2896, %v742
      %v2898 = vpop.permute.xlu0 %2897
      %2900 = vset.pattern.permute.xlu0 1
      %2901 = vperm.xlu0 %2900, %v743
      %v2902 = vpop.permute.xlu0 %2901
      %2904 = vset.pattern.permute.xlu0 1
      %2905 = vperm.xlu0 %2904, %v744
      %v2906 = vpop.permute.xlu0 %2905
      %2908 = vset.pattern.permute.xlu0 1
      %2909 = vperm.xlu0 %2908, %v745
      %v2910 = vpop.permute.xlu0 %2909
      %2912 = vset.pattern.permute.xlu0 1
      %2913 = vperm.xlu0 %2912, %v746
      %v2914 = vpop.permute.xlu0 %2913
      %2916 = vset.pattern.permute.xlu0 1
      %2917 = vperm.xlu0 %2916, %v747
      %v2918 = vpop.permute.xlu0 %2917
      %2920 = vset.pattern.permute.xlu0 1
      %2921 = vperm.xlu0 %2920, %v748
      %v2922 = vpop.permute.xlu0 %2921
      %2924 = vset.pattern.permute.xlu0 1
      %2925 = vperm.xlu0 %2924, %v749
      %v2926 = vpop.permute.xlu0 %2925
      %2928 = vset.pattern.permute.xlu0 1
      %2929 = vperm.xlu0 %2928, %v750
      %v2930 = vpop.permute.xlu0 %2929
      %2932 = vset.pattern.permute.xlu0 1
      %2933 = vperm.xlu0 %2932, %v751
      %v2934 = vpop.permute.xlu0 %2933
      %2936 = vset.pattern.permute.xlu0 1
      %2937 = vperm.xlu0 %2936, %v752
      %v2938 = vpop.permute.xlu0 %2937
      %2940 = vset.pattern.permute.xlu0 1
      %2941 = vperm.xlu0 %2940, %v753
      %v2942 = vpop.permute.xlu0 %2941
      %2944 = vset.pattern.permute.xlu0 1
      %2945 = vperm.xlu0 %2944, %v754
      %v2946 = vpop.permute.xlu0 %2945
      %2948 = vset.pattern.permute.xlu0 1
      %2949 = vperm.xlu0 %2948, %v755
      %v2950 = vpop.permute.xlu0 %2949
      %2952 = vset.pattern.permute.xlu0 1
      %2953 = vperm.xlu0 %2952, %v756
      %v2954 = vpop.permute.xlu0 %2953
      %2956 = vset.pattern.permute.xlu0 1
      %2957 = vperm.xlu0 %2956, %v757
      %v2958 = vpop.permute.xlu0 %2957
      %2960 = vset.pattern.permute.xlu0 1
      %2961 = vperm.xlu0 %2960, %v758
      %v2962 = vpop.permute.xlu0 %2961
      %2964 = vset.pattern.permute.xlu0 1
      %2965 = vperm.xlu0 %2964, %v759
      %v2966 = vpop.permute.xlu0 %2965
      %2968 = vset.pattern.permute.xlu0 1
      %2969 = vperm.xlu0 %2968, %v760
      %v2970 = vpop.permute.xlu0 %2969
      %2972 = vset.pattern.permute.xlu0 1
      %2973 = vperm.xlu0 %2972, %v761
      %v2974 = vpop.permute.xlu0 %2973
      %2976 = vset.pattern.permute.xlu0 1
      %2977 = vperm.xlu0 %2976, %v762
      %v2978 = vpop.permute.xlu0 %2977
      %2980 = vset.pattern.permute.xlu0 1
      %2981 = vperm.xlu0 %2980, %v763
      %v2982 = vpop.permute.xlu0 %2981
      %2984 = vset.pattern.permute.xlu0 1
      %2985 = vperm.xlu0 %2984, %v764
      %v2986 = vpop.permute.xlu0 %2985
      %2988 = vset.pattern.permute.xlu0 1
      %2989 = vperm.xlu0 %2988, %v765
      %v2990 = vpop.permute.xlu0 %2989
      %2992 = vset.pattern.permute.xlu0 1
      %2993 = vperm.xlu0 %2992, %v766
      %v2994 = vpop.permute.xlu0 %2993
      %2996 = vset.pattern.permute.xlu0 1
      %2997 = vperm.xlu0 %2996, %v767
      %v2998 = vpop.permute.xlu0 %2997
      %3000 = vset.pattern.permute.xlu0 1
      %3001 = vperm.xlu0 %3000, %v768
      %v3002 = vpop.permute.xlu0 %3001
      %3004 = vset.pattern.permute.xlu0 1
      %3005 = vperm.xlu0 %3004, %v769
      %v3006 = vpop.permute.xlu0 %3005
      %3008 = vset.pattern.permute.xlu0 1
      %3009 = vperm.xlu0 %3008, %v770
      %v3010 = vpop.permute.xlu0 %3009
      %3012 = vset.pattern.permute.xlu0 1
      %3013 = vperm.xlu0 %3012, %v771
      %v3014 = vpop.permute.xlu0 %3013
      %3016 = vset.pattern.permute.xlu0 1
      %3017 = vperm.xlu0 %3016, %v772
      %v3018 = vpop.permute.xlu0 %3017
      %3020 = vset.pattern.permute.xlu0 1
      %3021 = vperm.xlu0 %3020, %v773
      %v3022 = vpop.permute.xlu0 %3021
      %3024 = vset.pattern.permute.xlu0 1
      %3025 = vperm.xlu0 %3024, %v774
      %v3026 = vpop.permute.xlu0 %3025
      %3028 = vset.pattern.permute.xlu0 1
      %3029 = vperm.xlu0 %3028, %v775
      %v3030 = vpop.permute.xlu0 %3029
      %3032 = vset.pattern.permute.xlu0 1
      %3033 = vperm.xlu0 %3032, %v776
      %v3034 = vpop.permute.xlu0 %3033
      %3036 = vset.pattern.permute.xlu0 1
      %3037 = vperm.xlu0 %3036, %v777
      %v3038 = vpop.permute.xlu0 %3037
      %3040 = vset.pattern.permute.xlu0 1
      %3041 = vperm.xlu0 %3040, %v778
      %v3042 = vpop.permute.xlu0 %3041
      %3044 = vset.pattern.permute.xlu0 1
      %3045 = vperm.xlu0 %3044, %v779
      %v3046 = vpop.permute.xlu0 %3045
      %3048 = vset.pattern.permute.xlu0 1
      %3049 = vperm.xlu0 %3048, %v780
      %v3050 = vpop.permute.xlu0 %3049
      %3052 = vset.pattern.permute.xlu0 1
      %3053 = vperm.xlu0 %3052, %v781
      %v3054 = vpop.permute.xlu0 %3053
      %3056 = vset.pattern.permute.xlu0 1
      %3057 = vperm.xlu0 %3056, %v782
      %v3058 = vpop.permute.xlu0 %3057
      %3060 = vset.pattern.permute.xlu0 1
      %3061 = vperm.xlu0 %3060, %v783
      %v3062 = vpop.permute.xlu0 %3061
      %3064 = vset.pattern.permute.xlu0 1
      %3065 = vperm.xlu0 %3064, %v784
      %v3066 = vpop.permute.xlu0 %3065
      %3068 = vset.pattern.permute.xlu0 1
      %3069 = vperm.xlu0 %3068, %v785
      %v3070 = vpop.permute.xlu0 %3069
      %3072 = vset.pattern.permute.xlu0 1
      %3073 = vperm.xlu0 %3072, %v786
      %v3074 = vpop.permute.xlu0 %3073
      %3076 = vset.pattern.permute.xlu0 1
      %3077 = vperm.xlu0 %3076, %v787
      %v3078 = vpop.permute.xlu0 %3077
      %3080 = vset.pattern.permute.xlu0 1
      %3081 = vperm.xlu0 %3080, %v788
      %v3082 = vpop.permute.xlu0 %3081
      %3084 = vset.pattern.permute.xlu0 1
      %3085 = vperm.xlu0 %3084, %v789
      %v3086 = vpop.permute.xlu0 %3085
      %3088 = vset.pattern.permute.xlu0 1
      %3089 = vperm.xlu0 %3088, %v790
      %v3090 = vpop.permute.xlu0 %3089
      %3092 = vset.pattern.permute.xlu0 1
      %3093 = vperm.xlu0 %3092, %v791
      %v3094 = vpop.permute.xlu0 %3093
      %3096 = vset.pattern.permute.xlu0 1
      %3097 = vperm.xlu0 %3096, %v792
      %v3098 = vpop.permute.xlu0 %3097
      %3100 = vset.pattern.permute.xlu0 1
      %3101 = vperm.xlu0 %3100, %v793
      %v3102 = vpop.permute.xlu0 %3101
      %3104 = vset.pattern.permute.xlu0 1
      %3105 = vperm.xlu0 %3104, %v794
      %v3106 = vpop.permute.xlu0 %3105
      %3108 = vset.pattern.permute.xlu0 1
      %3109 = vperm.xlu0 %3108, %v795
      %v3110 = vpop.permute.xlu0 %3109
      %3112 = vset.pattern.permute.xlu0 1
      %3113 = vperm.xlu0 %3112, %v796
      %v3114 = vpop.permute.xlu0 %3113
      %3116 = vset.pattern.permute.xlu0 1
      %3117 = vperm.xlu0 %3116, %v797
      %v3118 = vpop.permute.xlu0 %3117
      %3120 = vset.pattern.permute.xlu0 1
      %3121 = vperm.xlu0 %3120, %v798
      %v3122 = vpop.permute.xlu0 %3121
      %3124 = vset.pattern.permute.xlu0 1
      %3125 = vperm.xlu0 %3124, %v799
      %v3126 = vpop.permute.xlu0 %3125
      %3128 = vset.pattern.permute.xlu0 1
      %3129 = vperm.xlu0 %3128, %v800
      %v3130 = vpop.permute.xlu0 %3129
      %3132 = vset.pattern.permute.xlu0 1
      %3133 = vperm.xlu0 %3132, %v801
      %v3134 = vpop.permute.xlu0 %3133
      %3136 = vset.pattern.permute.xlu0 1
      %3137 = vperm.xlu0 %3136, %v802
      %v3138 = vpop.permute.xlu0 %3137
      %3140 = vset.pattern.permute.xlu0 1
      %3141 = vperm.xlu0 %3140, %v803
      %v3142 = vpop.permute.xlu0 %3141
      %3144 = vset.pattern.permute.xlu0 1
      %3145 = vperm.xlu0 %3144, %v804
      %v3146 = vpop.permute.xlu0 %3145
      %3148 = vset.pattern.permute.xlu0 1
      %3149 = vperm.xlu0 %3148, %v805
      %v3150 = vpop.permute.xlu0 %3149
      %3152 = vset.pattern.permute.xlu0 1
      %3153 = vperm.xlu0 %3152, %v806
      %v3154 = vpop.permute.xlu0 %3153
      %3156 = vset.pattern.permute.xlu0 1
      %3157 = vperm.xlu0 %3156, %v807
      %v3158 = vpop.permute.xlu0 %3157
      %3160 = vset.pattern.permute.xlu0 1
      %3161 = vperm.xlu0 %3160, %v808
      %v3162 = vpop.permute.xlu0 %3161
      %3164 = vset.pattern.permute.xlu0 1
      %3165 = vperm.xlu0 %3164, %v809
      %v3166 = vpop.permute.xlu0 %3165
      %3168 = vset.pattern.permute.xlu0 1
      %3169 = vperm.xlu0 %3168, %v810
      %v3170 = vpop.permute.xlu0 %3169
      %3172 = vset.pattern.permute.xlu0 1
      %3173 = vperm.xlu0 %3172, %v811
      %v3174 = vpop.permute.xlu0 %3173
      %3176 = vset.pattern.permute.xlu0 1
      %3177 = vperm.xlu0 %3176, %v812
      %v3178 = vpop.permute.xlu0 %3177
      %3180 = vset.pattern.permute.xlu0 1
      %3181 = vperm.xlu0 %3180, %v813
      %v3182 = vpop.permute.xlu0 %3181
      %3184 = vset.pattern.permute.xlu0 1
      %3185 = vperm.xlu0 %3184, %v814
      %v3186 = vpop.permute.xlu0 %3185
      %3188 = vset.pattern.permute.xlu0 1
      %3189 = vperm.xlu0 %3188, %v815
      %v3190 = vpop.permute.xlu0 %3189
      %3192 = vset.pattern.permute.xlu0 1
      %3193 = vperm.xlu0 %3192, %v816
      %v3194 = vpop.permute.xlu0 %3193
      %3196 = vset.pattern.permute.xlu0 1
      %3197 = vperm.xlu0 %3196, %v817
      %v3198 = vpop.permute.xlu0 %3197
      %3200 = vset.pattern.permute.xlu0 1
      %3201 = vperm.xlu0 %3200, %v818
      %v3202 = vpop.permute.xlu0 %3201
      %3204 = vset.pattern.permute.xlu0 1
      %3205 = vperm.xlu0 %3204, %v819
      %v3206 = vpop.permute.xlu0 %3205
      %3208 = vset.pattern.permute.xlu0 1
      %3209 = vperm.xlu0 %3208, %v820
      %v3210 = vpop.permute.xlu0 %3209
      %3212 = vset.pattern.permute.xlu0 1
      %3213 = vperm.xlu0 %3212, %v821
      %v3214 = vpop.permute.xlu0 %3213
      %3216 = vset.pattern.permute.xlu0 1
      %3217 = vperm.xlu0 %3216, %v822
      %v3218 = vpop.permute.xlu0 %3217
      %3220 = vset.pattern.permute.xlu0 1
      %3221 = vperm.xlu0 %3220, %v823
      %v3222 = vpop.permute.xlu0 %3221
      %3224 = vset.pattern.permute.xlu0 1
      %3225 = vperm.xlu0 %3224, %v824
      %v3226 = vpop.permute.xlu0 %3225
      %3228 = vset.pattern.permute.xlu0 1
      %3229 = vperm.xlu0 %3228, %v825
      %v3230 = vpop.permute.xlu0 %3229
      %3232 = vset.pattern.permute.xlu0 1
      %3233 = vperm.xlu0 %3232, %v826
      %v3234 = vpop.permute.xlu0 %3233
      %3236 = vset.pattern.permute.xlu0 1
      %3237 = vperm.xlu0 %3236, %v827
      %v3238 = vpop.permute.xlu0 %3237
      %3240 = vset.pattern.permute.xlu0 1
      %3241 = vperm.xlu0 %3240, %v828
      %v3242 = vpop.permute.xlu0 %3241
      %3244 = vset.pattern.permute.xlu0 1
      %3245 = vperm.xlu0 %3244, %v829
      %v3246 = vpop.permute.xlu0 %3245
      %3248 = vset.pattern.permute.xlu0 1
      %3249 = vperm.xlu0 %3248, %v830
      %v3250 = vpop.permute.xlu0 %3249
      %3252 = vset.pattern.permute.xlu0 1
      %3253 = vperm.xlu0 %3252, %v831
      %v3254 = vpop.permute.xlu0 %3253
      %3256 = vset.pattern.permute.xlu0 1
      %3257 = vperm.xlu0 %3256, %v832
      %v3258 = vpop.permute.xlu0 %3257
      %3260 = vset.pattern.permute.xlu0 1
      %3261 = vperm.xlu0 %3260, %v833
      %v3262 = vpop.permute.xlu0 %3261
      %3264 = vset.pattern.permute.xlu0 1
      %3265 = vperm.xlu0 %3264, %v834
      %v3266 = vpop.permute.xlu0 %3265
      %3268 = vset.pattern.permute.xlu0 1
      %3269 = vperm.xlu0 %3268, %v835
      %v3270 = vpop.permute.xlu0 %3269
      %3272 = vset.pattern.permute.xlu0 1
      %3273 = vperm.xlu0 %3272, %v836
      %v3274 = vpop.permute.xlu0 %3273
      %3276 = vset.pattern.permute.xlu0 1
      %3277 = vperm.xlu0 %3276, %v837
      %v3278 = vpop.permute.xlu0 %3277
      %3280 = vset.pattern.permute.xlu0 1
      %3281 = vperm.xlu0 %3280, %v838
      %v3282 = vpop.permute.xlu0 %3281
      %3284 = vset.pattern.permute.xlu0 1
      %3285 = vperm.xlu0 %3284, %v839
      %v3286 = vpop.permute.xlu0 %3285
      %3288 = vset.pattern.permute.xlu0 1
      %3289 = vperm.xlu0 %3288, %v840
      %v3290 = vpop.permute.xlu0 %3289
      %3292 = vset.pattern.permute.xlu0 1
      %3293 = vperm.xlu0 %3292, %v841
      %v3294 = vpop.permute.xlu0 %3293
      %3296 = vset.pattern.permute.xlu0 1
      %3297 = vperm.xlu0 %3296, %v842
      %v3298 = vpop.permute.xlu0 %3297
      %3300 = vset.pattern.permute.xlu0 1
      %3301 = vperm.xlu0 %3300, %v843
      %v3302 = vpop.permute.xlu0 %3301
      %3304 = vset.pattern.permute.xlu0 1
      %3305 = vperm.xlu0 %3304, %v844
      %v3306 = vpop.permute.xlu0 %3305
      %3308 = vset.pattern.permute.xlu0 1
      %3309 = vperm.xlu0 %3308, %v845
      %v3310 = vpop.permute.xlu0 %3309
      %3312 = vset.pattern.permute.xlu0 1
      %3313 = vperm.xlu0 %3312, %v846
      %v3314 = vpop.permute.xlu0 %3313
      %3316 = vset.pattern.permute.xlu0 1
      %3317 = vperm.xlu0 %3316, %v847
      %v3318 = vpop.permute.xlu0 %3317
      %3320 = vset.pattern.permute.xlu0 1
      %3321 = vperm.xlu0 %3320, %v848
      %v3322 = vpop.permute.xlu0 %3321
      %3324 = vset.pattern.permute.xlu0 1
      %3325 = vperm.xlu0 %3324, %v849
      %v3326 = vpop.permute.xlu0 %3325
      %3328 = vset.pattern.permute.xlu0 1
      %3329 = vperm.xlu0 %3328, %v850
      %v3330 = vpop.permute.xlu0 %3329
      %3332 = vset.pattern.permute.xlu0 1
      %3333 = vperm.xlu0 %3332, %v851
      %v3334 = vpop.permute.xlu0 %3333
      %3336 = vset.pattern.permute.xlu0 1
      %3337 = vperm.xlu0 %3336, %v852
      %v3338 = vpop.permute.xlu0 %3337
      %3340 = vset.pattern.permute.xlu0 1
      %3341 = vperm.xlu0 %3340, %v853
      %v3342 = vpop.permute.xlu0 %3341
      %3344 = vset.pattern.permute.xlu0 1
      %3345 = vperm.xlu0 %3344, %v854
      %v3346 = vpop.permute.xlu0 %3345
      %3348 = vset.pattern.permute.xlu0 1
      %3349 = vperm.xlu0 %3348, %v855
      %v3350 = vpop.permute.xlu0 %3349
      %3352 = vset.pattern.permute.xlu0 1
      %3353 = vperm.xlu0 %3352, %v856
      %v3354 = vpop.permute.xlu0 %3353
      %3356 = vset.pattern.permute.xlu0 1
      %3357 = vperm.xlu0 %3356, %v857
      %v3358 = vpop.permute.xlu0 %3357
      %3360 = vset.pattern.permute.xlu0 1
      %3361 = vperm.xlu0 %3360, %v858
      %v3362 = vpop.permute.xlu0 %3361
      %3364 = vset.pattern.permute.xlu0 1
      %3365 = vperm.xlu0 %3364, %v859
      %v3366 = vpop.permute.xlu0 %3365
      %3368 = vset.pattern.permute.xlu0 1
      %3369 = vperm.xlu0 %3368, %v860
      %v3370 = vpop.permute.xlu0 %3369
      %3372 = vset.pattern.permute.xlu0 1
      %3373 = vperm.xlu0 %3372, %v861
      %v3374 = vpop.permute.xlu0 %3373
      %3376 = vset.pattern.permute.xlu0 1
      %3377 = vperm.xlu0 %3376, %v862
      %v3378 = vpop.permute.xlu0 %3377
      %3380 = vset.pattern.permute.xlu0 1
      %3381 = vperm.xlu0 %3380, %v863
      %v3382 = vpop.permute.xlu0 %3381
      %3384 = vset.pattern.permute.xlu0 1
      %3385 = vperm.xlu0 %3384, %v864
      %v3386 = vpop.permute.xlu0 %3385
      %3388 = vset.pattern.permute.xlu0 1
      %3389 = vperm.xlu0 %3388, %v865
      %v3390 = vpop.permute.xlu0 %3389
      %3392 = vset.pattern.permute.xlu0 1
      %3393 = vperm.xlu0 %3392, %v866
      %v3394 = vpop.permute.xlu0 %3393
      %3396 = vset.pattern.permute.xlu0 1
      %3397 = vperm.xlu0 %3396, %v867
      %v3398 = vpop.permute.xlu0 %3397
      %3400 = vset.pattern.permute.xlu0 1
      %3401 = vperm.xlu0 %3400, %v868
      %v3402 = vpop.permute.xlu0 %3401
      %3404 = vset.pattern.permute.xlu0 1
      %3405 = vperm.xlu0 %3404, %v869
      %v3406 = vpop.permute.xlu0 %3405
      %3408 = vset.pattern.permute.xlu0 1
      %3409 = vperm.xlu0 %3408, %v870
      %v3410 = vpop.permute.xlu0 %3409
      %3412 = vset.pattern.permute.xlu0 1
      %3413 = vperm.xlu0 %3412, %v871
      %v3414 = vpop.permute.xlu0 %3413
      %3416 = vset.pattern.permute.xlu0 1
      %3417 = vperm.xlu0 %3416, %v872
      %v3418 = vpop.permute.xlu0 %3417
      %3420 = vset.pattern.permute.xlu0 1
      %3421 = vperm.xlu0 %3420, %v873
      %v3422 = vpop.permute.xlu0 %3421
      %3424 = vset.pattern.permute.xlu0 1
      %3425 = vperm.xlu0 %3424, %v874
      %v3426 = vpop.permute.xlu0 %3425
      %3428 = vset.pattern.permute.xlu0 1
      %3429 = vperm.xlu0 %3428, %v875
      %v3430 = vpop.permute.xlu0 %3429
      %3432 = vset.pattern.permute.xlu0 1
      %3433 = vperm.xlu0 %3432, %v876
      %v3434 = vpop.permute.xlu0 %3433
      %3436 = vset.pattern.permute.xlu0 1
      %3437 = vperm.xlu0 %3436, %v877
      %v3438 = vpop.permute.xlu0 %3437
      %3440 = vset.pattern.permute.xlu0 1
      %3441 = vperm.xlu0 %3440, %v878
      %v3442 = vpop.permute.xlu0 %3441
      %v3444 = vlaneseq
      %v3445 = vshrl.u32 %v3444, 7
      %v3446 = vsub.s32 1, %v3445
      %v3447 = vrot.slane %v879, %v3446
      %v3448 = vmul.f32 %v2422, %v3447
      %v3449 = vmul.f32 %v2426, %v3447
      %v3450 = vmul.f32 %v2430, %v3447
      %v3451 = vmul.f32 %v2434, %v3447
      %v3452 = vmul.f32 %v2438, %v3447
      %v3453 = vmul.f32 %v2442, %v3447
      %v3454 = vmul.f32 %v2446, %v3447
      %v3455 = vmul.f32 %v2450, %v3447
      %v3456 = vmul.f32 %v2454, %v3447
      %v3457 = vmul.f32 %v2458, %v3447
      %v3458 = vmul.f32 %v2462, %v3447
      %v3459 = vmul.f32 %v2466, %v3447
      %v3460 = vmul.f32 %v2470, %v3447
      %v3461 = vmul.f32 %v2474, %v3447
      %v3462 = vmul.f32 %v2478, %v3447
      %v3463 = vmul.f32 %v2482, %v3447
      %v3464 = vmul.f32 %v2486, %v3447
      %v3465 = vmul.f32 %v2490, %v3447
      %v3466 = vmul.f32 %v2494, %v3447
      %v3467 = vmul.f32 %v2498, %v3447
      %v3468 = vmul.f32 %v2502, %v3447
      %v3469 = vmul.f32 %v2506, %v3447
      %v3470 = vmul.f32 %v2510, %v3447
      %v3471 = vmul.f32 %v2514, %v3447
      %v3472 = vmul.f32 %v2518, %v3447
      %v3473 = vmul.f32 %v2522, %v3447
      %v3474 = vmul.f32 %v2526, %v3447
      %v3475 = vmul.f32 %v2530, %v3447
      %v3476 = vmul.f32 %v2534, %v3447
      %v3477 = vmul.f32 %v2538, %v3447
      %v3478 = vmul.f32 %v2542, %v3447
      %v3479 = vmul.f32 %v2546, %v3447
      %v3480 = vmul.f32 %v2550, %v3447
      %v3481 = vmul.f32 %v2554, %v3447
      %v3482 = vmul.f32 %v2558, %v3447
      %v3483 = vmul.f32 %v2562, %v3447
      %v3484 = vmul.f32 %v2566, %v3447
      %v3485 = vmul.f32 %v2570, %v3447
      %v3486 = vmul.f32 %v2574, %v3447
      %v3487 = vmul.f32 %v2578, %v3447
      %v3488 = vmul.f32 %v2582, %v3447
      %v3489 = vmul.f32 %v2586, %v3447
      %v3490 = vmul.f32 %v2590, %v3447
      %v3491 = vmul.f32 %v2594, %v3447
      %v3492 = vmul.f32 %v2598, %v3447
      %v3493 = vmul.f32 %v2602, %v3447
      %v3494 = vmul.f32 %v2606, %v3447
      %v3495 = vmul.f32 %v2610, %v3447
      %v3496 = vmul.f32 %v2614, %v3447
      %v3497 = vmul.f32 %v2618, %v3447
      %v3498 = vmul.f32 %v2622, %v3447
      %v3499 = vmul.f32 %v2626, %v3447
      %v3500 = vmul.f32 %v2630, %v3447
      %v3501 = vmul.f32 %v2634, %v3447
      %v3502 = vmul.f32 %v2638, %v3447
      %v3503 = vmul.f32 %v2642, %v3447
      %v3504 = vmul.f32 %v2646, %v3447
      %v3505 = vmul.f32 %v2650, %v3447
      %v3506 = vmul.f32 %v2654, %v3447
      %v3507 = vmul.f32 %v2658, %v3447
      %v3508 = vmul.f32 %v2662, %v3447
      %v3509 = vmul.f32 %v2666, %v3447
      %v3510 = vmul.f32 %v2670, %v3447
      %v3511 = vmul.f32 %v2674, %v3447
      %v3512 = vmul.f32 %v2678, %v3447
      %v3513 = vmul.f32 %v2682, %v3447
      %v3514 = vmul.f32 %v2686, %v3447
      %v3515 = vmul.f32 %v2690, %v3447
      %v3516 = vmul.f32 %v2694, %v3447
      %v3517 = vmul.f32 %v2698, %v3447
      %v3518 = vmul.f32 %v2702, %v3447
      %v3519 = vmul.f32 %v2706, %v3447
      %v3520 = vmul.f32 %v2710, %v3447
      %v3521 = vmul.f32 %v2714, %v3447
      %v3522 = vmul.f32 %v2718, %v3447
      %v3523 = vmul.f32 %v2722, %v3447
      %v3524 = vmul.f32 %v2726, %v3447
      %v3525 = vmul.f32 %v2730, %v3447
      %v3526 = vmul.f32 %v2734, %v3447
      %v3527 = vmul.f32 %v2738, %v3447
      %v3528 = vmul.f32 %v2742, %v3447
      %v3529 = vmul.f32 %v2746, %v3447
      %v3530 = vmul.f32 %v2750, %v3447
      %v3531 = vmul.f32 %v2754, %v3447
      %v3532 = vmul.f32 %v2758, %v3447
      %v3533 = vmul.f32 %v2762, %v3447
      %v3534 = vmul.f32 %v2766, %v3447
      %v3535 = vmul.f32 %v2770, %v3447
      %v3536 = vmul.f32 %v2774, %v3447
      %v3537 = vmul.f32 %v2778, %v3447
      %v3538 = vmul.f32 %v2782, %v3447
      %v3539 = vmul.f32 %v2786, %v3447
      %v3540 = vmul.f32 %v2790, %v3447
      %v3541 = vmul.f32 %v2794, %v3447
      %v3542 = vmul.f32 %v2798, %v3447
      %v3543 = vmul.f32 %v2802, %v3447
      %v3544 = vmul.f32 %v2806, %v3447
      %v3545 = vmul.f32 %v2810, %v3447
      %v3546 = vmul.f32 %v2814, %v3447
      %v3547 = vmul.f32 %v2818, %v3447
      %v3548 = vmul.f32 %v2822, %v3447
      %v3549 = vmul.f32 %v2826, %v3447
      %v3550 = vmul.f32 %v2830, %v3447
      %v3551 = vmul.f32 %v2834, %v3447
      %v3552 = vmul.f32 %v2838, %v3447
      %v3553 = vmul.f32 %v2842, %v3447
      %v3554 = vmul.f32 %v2846, %v3447
      %v3555 = vmul.f32 %v2850, %v3447
      %v3556 = vmul.f32 %v2854, %v3447
      %v3557 = vmul.f32 %v2858, %v3447
      %v3558 = vmul.f32 %v2862, %v3447
      %v3559 = vmul.f32 %v2866, %v3447
      %v3560 = vmul.f32 %v2870, %v3447
      %v3561 = vmul.f32 %v2874, %v3447
      %v3562 = vmul.f32 %v2878, %v3447
      %v3563 = vmul.f32 %v2882, %v3447
      %v3564 = vmul.f32 %v2886, %v3447
      %v3565 = vmul.f32 %v2890, %v3447
      %v3566 = vmul.f32 %v2894, %v3447
      %v3567 = vmul.f32 %v2898, %v3447
      %v3568 = vmul.f32 %v2902, %v3447
      %v3569 = vmul.f32 %v2906, %v3447
      %v3570 = vmul.f32 %v2910, %v3447
      %v3571 = vmul.f32 %v2914, %v3447
      %v3572 = vmul.f32 %v2918, %v3447
      %v3573 = vmul.f32 %v2922, %v3447
      %v3574 = vmul.f32 %v2926, %v3447
      %v3575 = vmul.f32 %v2930, %v3447
      %v3576 = vmul.f32 %v2934, %v3447
      %v3577 = vmul.f32 %v2938, %v3447
      %v3578 = vmul.f32 %v2942, %v3447
      %v3579 = vmul.f32 %v2946, %v3447
      %v3580 = vmul.f32 %v2950, %v3447
      %v3581 = vmul.f32 %v2954, %v3447
      %v3582 = vmul.f32 %v2958, %v3447
      %v3583 = vmul.f32 %v2962, %v3447
      %v3584 = vmul.f32 %v2966, %v3447
      %v3585 = vmul.f32 %v2970, %v3447
      %v3586 = vmul.f32 %v2974, %v3447
      %v3587 = vmul.f32 %v2978, %v3447
      %v3588 = vmul.f32 %v2982, %v3447
      %v3589 = vmul.f32 %v2986, %v3447
      %v3590 = vmul.f32 %v2990, %v3447
      %v3591 = vmul.f32 %v2994, %v3447
      %v3592 = vmul.f32 %v2998, %v3447
      %v3593 = vmul.f32 %v3002, %v3447
      %v3594 = vmul.f32 %v3006, %v3447
      %v3595 = vmul.f32 %v3010, %v3447
      %v3596 = vmul.f32 %v3014, %v3447
      %v3597 = vmul.f32 %v3018, %v3447
      %v3598 = vmul.f32 %v3022, %v3447
      %v3599 = vmul.f32 %v3026, %v3447
      %v3600 = vmul.f32 %v3030, %v3447
      %v3601 = vmul.f32 %v3034, %v3447
      %v3602 = vmul.f32 %v3038, %v3447
      %v3603 = vmul.f32 %v3042, %v3447
      %v3604 = vmul.f32 %v3046, %v3447
      %v3605 = vmul.f32 %v3050, %v3447
      %v3606 = vmul.f32 %v3054, %v3447
      %v3607 = vmul.f32 %v3058, %v3447
      %v3608 = vmul.f32 %v3062, %v3447
      %v3609 = vmul.f32 %v3066, %v3447
      %v3610 = vmul.f32 %v3070, %v3447
      %v3611 = vmul.f32 %v3074, %v3447
      %v3612 = vmul.f32 %v3078, %v3447
      %v3613 = vmul.f32 %v3082, %v3447
      %v3614 = vmul.f32 %v3086, %v3447
      %v3615 = vmul.f32 %v3090, %v3447
      %v3616 = vmul.f32 %v3094, %v3447
      %v3617 = vmul.f32 %v3098, %v3447
      %v3618 = vmul.f32 %v3102, %v3447
      %v3619 = vmul.f32 %v3106, %v3447
      %v3620 = vmul.f32 %v3110, %v3447
      %v3621 = vmul.f32 %v3114, %v3447
      %v3622 = vmul.f32 %v3118, %v3447
      %v3623 = vmul.f32 %v3122, %v3447
      %v3624 = vmul.f32 %v3126, %v3447
      %v3625 = vmul.f32 %v3130, %v3447
      %v3626 = vmul.f32 %v3134, %v3447
      %v3627 = vmul.f32 %v3138, %v3447
      %v3628 = vmul.f32 %v3142, %v3447
      %v3629 = vmul.f32 %v3146, %v3447
      %v3630 = vmul.f32 %v3150, %v3447
      %v3631 = vmul.f32 %v3154, %v3447
      %v3632 = vmul.f32 %v3158, %v3447
      %v3633 = vmul.f32 %v3162, %v3447
      %v3634 = vmul.f32 %v3166, %v3447
      %v3635 = vmul.f32 %v3170, %v3447
      %v3636 = vmul.f32 %v3174, %v3447
      %v3637 = vmul.f32 %v3178, %v3447
      %v3638 = vmul.f32 %v3182, %v3447
      %v3639 = vmul.f32 %v3186, %v3447
      %v3640 = vmul.f32 %v3190, %v3447
      %v3641 = vmul.f32 %v3194, %v3447
      %v3642 = vmul.f32 %v3198, %v3447
      %v3643 = vmul.f32 %v3202, %v3447
      %v3644 = vmul.f32 %v3206, %v3447
      %v3645 = vmul.f32 %v3210, %v3447
      %v3646 = vmul.f32 %v3214, %v3447
      %v3647 = vmul.f32 %v3218, %v3447
      %v3648 = vmul.f32 %v3222, %v3447
      %v3649 = vmul.f32 %v3226, %v3447
      %v3650 = vmul.f32 %v3230, %v3447
      %v3651 = vmul.f32 %v3234, %v3447
      %v3652 = vmul.f32 %v3238, %v3447
      %v3653 = vmul.f32 %v3242, %v3447
      %v3654 = vmul.f32 %v3246, %v3447
      %v3655 = vmul.f32 %v3250, %v3447
      %v3656 = vmul.f32 %v3254, %v3447
      %v3657 = vmul.f32 %v3258, %v3447
      %v3658 = vmul.f32 %v3262, %v3447
      %v3659 = vmul.f32 %v3266, %v3447
      %v3660 = vmul.f32 %v3270, %v3447
      %v3661 = vmul.f32 %v3274, %v3447
      %v3662 = vmul.f32 %v3278, %v3447
      %v3663 = vmul.f32 %v3282, %v3447
      %v3664 = vmul.f32 %v3286, %v3447
      %v3665 = vmul.f32 %v3290, %v3447
      %v3666 = vmul.f32 %v3294, %v3447
      %v3667 = vmul.f32 %v3298, %v3447
      %v3668 = vmul.f32 %v3302, %v3447
      %v3669 = vmul.f32 %v3306, %v3447
      %v3670 = vmul.f32 %v3310, %v3447
      %v3671 = vmul.f32 %v3314, %v3447
      %v3672 = vmul.f32 %v3318, %v3447
      %v3673 = vmul.f32 %v3322, %v3447
      %v3674 = vmul.f32 %v3326, %v3447
      %v3675 = vmul.f32 %v3330, %v3447
      %v3676 = vmul.f32 %v3334, %v3447
      %v3677 = vmul.f32 %v3338, %v3447
      %v3678 = vmul.f32 %v3342, %v3447
      %v3679 = vmul.f32 %v3346, %v3447
      %v3680 = vmul.f32 %v3350, %v3447
      %v3681 = vmul.f32 %v3354, %v3447
      %v3682 = vmul.f32 %v3358, %v3447
      %v3683 = vmul.f32 %v3362, %v3447
      %v3684 = vmul.f32 %v3366, %v3447
      %v3685 = vmul.f32 %v3370, %v3447
      %v3686 = vmul.f32 %v3374, %v3447
      %v3687 = vmul.f32 %v3378, %v3447
      %v3688 = vmul.f32 %v3382, %v3447
      %v3689 = vmul.f32 %v3386, %v3447
      %v3690 = vmul.f32 %v3390, %v3447
      %v3691 = vmul.f32 %v3394, %v3447
      %v3692 = vmul.f32 %v3398, %v3447
      %v3693 = vmul.f32 %v3402, %v3447
      %v3694 = vmul.f32 %v3406, %v3447
      %v3695 = vmul.f32 %v3410, %v3447
      %v3696 = vmul.f32 %v3414, %v3447
      %v3697 = vmul.f32 %v3418, %v3447
      %v3698 = vmul.f32 %v3422, %v3447
      %v3699 = vmul.f32 %v3426, %v3447
      %v3700 = vmul.f32 %v3430, %v3447
      %v3701 = vmul.f32 %v3434, %v3447
      %v3702 = vmul.f32 %v3438, %v3447
      %v3703 = vmul.f32 %v3442, %v3447
      %v3704 = vadd.f32 %v2164, %v3448
      %v3705 = vadd.f32 %v2165, %v3449
      %v3706 = vadd.f32 %v2166, %v3450
      %v3707 = vadd.f32 %v2167, %v3451
      %v3708 = vadd.f32 %v2168, %v3452
      %v3709 = vadd.f32 %v2169, %v3453
      %v3710 = vadd.f32 %v2170, %v3454
      %v3711 = vadd.f32 %v2171, %v3455
      %v3712 = vadd.f32 %v2172, %v3456
      %v3713 = vadd.f32 %v2173, %v3457
      %v3714 = vadd.f32 %v2174, %v3458
      %v3715 = vadd.f32 %v2175, %v3459
      %v3716 = vadd.f32 %v2176, %v3460
      %v3717 = vadd.f32 %v2177, %v3461
      %v3718 = vadd.f32 %v2178, %v3462
      %v3719 = vadd.f32 %v2179, %v3463
      %v3720 = vadd.f32 %v2180, %v3464
      %v3721 = vadd.f32 %v2181, %v3465
      %v3722 = vadd.f32 %v2182, %v3466
      %v3723 = vadd.f32 %v2183, %v3467
      %v3724 = vadd.f32 %v2184, %v3468
      %v3725 = vadd.f32 %v2185, %v3469
      %v3726 = vadd.f32 %v2186, %v3470
      %v3727 = vadd.f32 %v2187, %v3471
      %v3728 = vadd.f32 %v2188, %v3472
      %v3729 = vadd.f32 %v2189, %v3473
      %v3730 = vadd.f32 %v2190, %v3474
      %v3731 = vadd.f32 %v2191, %v3475
      %v3732 = vadd.f32 %v2192, %v3476
      %v3733 = vadd.f32 %v2193, %v3477
      %v3734 = vadd.f32 %v2194, %v3478
      %v3735 = vadd.f32 %v2195, %v3479
      %v3736 = vadd.f32 %v2196, %v3480
      %v3737 = vadd.f32 %v2197, %v3481
      %v3738 = vadd.f32 %v2198, %v3482
      %v3739 = vadd.f32 %v2199, %v3483
      %v3740 = vadd.f32 %v2200, %v3484
      %v3741 = vadd.f32 %v2201, %v3485
      %v3742 = vadd.f32 %v2202, %v3486
      %v3743 = vadd.f32 %v2203, %v3487
      %v3744 = vadd.f32 %v2204, %v3488
      %v3745 = vadd.f32 %v2205, %v3489
      %v3746 = vadd.f32 %v2206, %v3490
      %v3747 = vadd.f32 %v2207, %v3491
      %v3748 = vadd.f32 %v2208, %v3492
      %v3749 = vadd.f32 %v2209, %v3493
      %v3750 = vadd.f32 %v2210, %v3494
      %v3751 = vadd.f32 %v2211, %v3495
      %v3752 = vadd.f32 %v2212, %v3496
      %v3753 = vadd.f32 %v2213, %v3497
      %v3754 = vadd.f32 %v2214, %v3498
      %v3755 = vadd.f32 %v2215, %v3499
      %v3756 = vadd.f32 %v2216, %v3500
      %v3757 = vadd.f32 %v2217, %v3501
      %v3758 = vadd.f32 %v2218, %v3502
      %v3759 = vadd.f32 %v2219, %v3503
      %v3760 = vadd.f32 %v2220, %v3504
      %v3761 = vadd.f32 %v2221, %v3505
      %v3762 = vadd.f32 %v2222, %v3506
      %v3763 = vadd.f32 %v2223, %v3507
      %v3764 = vadd.f32 %v2224, %v3508
      %v3765 = vadd.f32 %v2225, %v3509
      %v3766 = vadd.f32 %v2226, %v3510
      %v3767 = vadd.f32 %v2227, %v3511
      %v3768 = vadd.f32 %v2228, %v3512
      %v3769 = vadd.f32 %v2229, %v3513
      %v3770 = vadd.f32 %v2230, %v3514
      %v3771 = vadd.f32 %v2231, %v3515
      %v3772 = vadd.f32 %v2232, %v3516
      %v3773 = vadd.f32 %v2233, %v3517
      %v3774 = vadd.f32 %v2234, %v3518
      %v3775 = vadd.f32 %v2235, %v3519
      %v3776 = vadd.f32 %v2236, %v3520
      %v3777 = vadd.f32 %v2237, %v3521
      %v3778 = vadd.f32 %v2238, %v3522
      %v3779 = vadd.f32 %v2239, %v3523
      %v3780 = vadd.f32 %v2240, %v3524
      %v3781 = vadd.f32 %v2241, %v3525
      %v3782 = vadd.f32 %v2242, %v3526
      %v3783 = vadd.f32 %v2243, %v3527
      %v3784 = vadd.f32 %v2244, %v3528
      %v3785 = vadd.f32 %v2245, %v3529
      %v3786 = vadd.f32 %v2246, %v3530
      %v3787 = vadd.f32 %v2247, %v3531
      %v3788 = vadd.f32 %v2248, %v3532
      %v3789 = vadd.f32 %v2249, %v3533
      %v3790 = vadd.f32 %v2250, %v3534
      %v3791 = vadd.f32 %v2251, %v3535
      %v3792 = vadd.f32 %v2252, %v3536
      %v3793 = vadd.f32 %v2253, %v3537
      %v3794 = vadd.f32 %v2254, %v3538
      %v3795 = vadd.f32 %v2255, %v3539
      %v3796 = vadd.f32 %v2256, %v3540
      %v3797 = vadd.f32 %v2257, %v3541
      %v3798 = vadd.f32 %v2258, %v3542
      %v3799 = vadd.f32 %v2259, %v3543
      %v3800 = vadd.f32 %v2260, %v3544
      %v3801 = vadd.f32 %v2261, %v3545
      %v3802 = vadd.f32 %v2262, %v3546
      %v3803 = vadd.f32 %v2263, %v3547
      %v3804 = vadd.f32 %v2264, %v3548
      %v3805 = vadd.f32 %v2265, %v3549
      %v3806 = vadd.f32 %v2266, %v3550
      %v3807 = vadd.f32 %v2267, %v3551
      %v3808 = vadd.f32 %v2268, %v3552
      %v3809 = vadd.f32 %v2269, %v3553
      %v3810 = vadd.f32 %v2270, %v3554
      %v3811 = vadd.f32 %v2271, %v3555
      %v3812 = vadd.f32 %v2272, %v3556
      %v3813 = vadd.f32 %v2273, %v3557
      %v3814 = vadd.f32 %v2274, %v3558
      %v3815 = vadd.f32 %v2275, %v3559
      %v3816 = vadd.f32 %v2276, %v3560
      %v3817 = vadd.f32 %v2277, %v3561
      %v3818 = vadd.f32 %v2278, %v3562
      %v3819 = vadd.f32 %v2279, %v3563
      %v3820 = vadd.f32 %v2280, %v3564
      %v3821 = vadd.f32 %v2281, %v3565
      %v3822 = vadd.f32 %v2282, %v3566
      %v3823 = vadd.f32 %v2283, %v3567
      %v3824 = vadd.f32 %v2284, %v3568
      %v3825 = vadd.f32 %v2285, %v3569
      %v3826 = vadd.f32 %v2286, %v3570
      %v3827 = vadd.f32 %v2287, %v3571
      %v3828 = vadd.f32 %v2288, %v3572
      %v3829 = vadd.f32 %v2289, %v3573
      %v3830 = vadd.f32 %v2290, %v3574
      %v3831 = vadd.f32 %v2291, %v3575
      %v3832 = vadd.f32 %v2292, %v3576
      %v3833 = vadd.f32 %v2293, %v3577
      %v3834 = vadd.f32 %v2294, %v3578
      %v3835 = vadd.f32 %v2295, %v3579
      %v3836 = vadd.f32 %v2296, %v3580
      %v3837 = vadd.f32 %v2297, %v3581
      %v3838 = vadd.f32 %v2298, %v3582
      %v3839 = vadd.f32 %v2299, %v3583
      %v3840 = vadd.f32 %v2300, %v3584
      %v3841 = vadd.f32 %v2301, %v3585
      %v3842 = vadd.f32 %v2302, %v3586
      %v3843 = vadd.f32 %v2303, %v3587
      %v3844 = vadd.f32 %v2304, %v3588
      %v3845 = vadd.f32 %v2305, %v3589
      %v3846 = vadd.f32 %v2306, %v3590
      %v3847 = vadd.f32 %v2307, %v3591
      %v3848 = vadd.f32 %v2308, %v3592
      %v3849 = vadd.f32 %v2309, %v3593
      %v3850 = vadd.f32 %v2310, %v3594
      %v3851 = vadd.f32 %v2311, %v3595
      %v3852 = vadd.f32 %v2312, %v3596
      %v3853 = vadd.f32 %v2313, %v3597
      %v3854 = vadd.f32 %v2314, %v3598
      %v3855 = vadd.f32 %v2315, %v3599
      %v3856 = vadd.f32 %v2316, %v3600
      %v3857 = vadd.f32 %v2317, %v3601
      %v3858 = vadd.f32 %v2318, %v3602
      %v3859 = vadd.f32 %v2319, %v3603
      %v3860 = vadd.f32 %v2320, %v3604
      %v3861 = vadd.f32 %v2321, %v3605
      %v3862 = vadd.f32 %v2322, %v3606
      %v3863 = vadd.f32 %v2323, %v3607
      %v3864 = vadd.f32 %v2324, %v3608
      %v3865 = vadd.f32 %v2325, %v3609
      %v3866 = vadd.f32 %v2326, %v3610
      %v3867 = vadd.f32 %v2327, %v3611
      %v3868 = vadd.f32 %v2328, %v3612
      %v3869 = vadd.f32 %v2329, %v3613
      %v3870 = vadd.f32 %v2330, %v3614
      %v3871 = vadd.f32 %v2331, %v3615
      %v3872 = vadd.f32 %v2332, %v3616
      %v3873 = vadd.f32 %v2333, %v3617
      %v3874 = vadd.f32 %v2334, %v3618
      %v3875 = vadd.f32 %v2335, %v3619
      %v3876 = vadd.f32 %v2336, %v3620
      %v3877 = vadd.f32 %v2337, %v3621
      %v3878 = vadd.f32 %v2338, %v3622
      %v3879 = vadd.f32 %v2339, %v3623
      %v3880 = vadd.f32 %v2340, %v3624
      %v3881 = vadd.f32 %v2341, %v3625
      %v3882 = vadd.f32 %v2342, %v3626
      %v3883 = vadd.f32 %v2343, %v3627
      %v3884 = vadd.f32 %v2344, %v3628
      %v3885 = vadd.f32 %v2345, %v3629
      %v3886 = vadd.f32 %v2346, %v3630
      %v3887 = vadd.f32 %v2347, %v3631
      %v3888 = vadd.f32 %v2348, %v3632
      %v3889 = vadd.f32 %v2349, %v3633
      %v3890 = vadd.f32 %v2350, %v3634
      %v3891 = vadd.f32 %v2351, %v3635
      %v3892 = vadd.f32 %v2352, %v3636
      %v3893 = vadd.f32 %v2353, %v3637
      %v3894 = vadd.f32 %v2354, %v3638
      %v3895 = vadd.f32 %v2355, %v3639
      %v3896 = vadd.f32 %v2356, %v3640
      %v3897 = vadd.f32 %v2357, %v3641
      %v3898 = vadd.f32 %v2358, %v3642
      %v3899 = vadd.f32 %v2359, %v3643
      %v3900 = vadd.f32 %v2360, %v3644
      %v3901 = vadd.f32 %v2361, %v3645
      %v3902 = vadd.f32 %v2362, %v3646
      %v3903 = vadd.f32 %v2363, %v3647
      %v3904 = vadd.f32 %v2364, %v3648
      %v3905 = vadd.f32 %v2365, %v3649
      %v3906 = vadd.f32 %v2366, %v3650
      %v3907 = vadd.f32 %v2367, %v3651
      %v3908 = vadd.f32 %v2368, %v3652
      %v3909 = vadd.f32 %v2369, %v3653
      %v3910 = vadd.f32 %v2370, %v3654
      %v3911 = vadd.f32 %v2371, %v3655
      %v3912 = vadd.f32 %v2372, %v3656
      %v3913 = vadd.f32 %v2373, %v3657
      %v3914 = vadd.f32 %v2374, %v3658
      %v3915 = vadd.f32 %v2375, %v3659
      %v3916 = vadd.f32 %v2376, %v3660
      %v3917 = vadd.f32 %v2377, %v3661
      %v3918 = vadd.f32 %v2378, %v3662
      %v3919 = vadd.f32 %v2379, %v3663
      %v3920 = vadd.f32 %v2380, %v3664
      %v3921 = vadd.f32 %v2381, %v3665
      %v3922 = vadd.f32 %v2382, %v3666
      %v3923 = vadd.f32 %v2383, %v3667
      %v3924 = vadd.f32 %v2384, %v3668
      %v3925 = vadd.f32 %v2385, %v3669
      %v3926 = vadd.f32 %v2386, %v3670
      %v3927 = vadd.f32 %v2387, %v3671
      %v3928 = vadd.f32 %v2388, %v3672
      %v3929 = vadd.f32 %v2389, %v3673
      %v3930 = vadd.f32 %v2390, %v3674
      %v3931 = vadd.f32 %v2391, %v3675
      %v3932 = vadd.f32 %v2392, %v3676
      %v3933 = vadd.f32 %v2393, %v3677
      %v3934 = vadd.f32 %v2394, %v3678
      %v3935 = vadd.f32 %v2395, %v3679
      %v3936 = vadd.f32 %v2396, %v3680
      %v3937 = vadd.f32 %v2397, %v3681
      %v3938 = vadd.f32 %v2398, %v3682
      %v3939 = vadd.f32 %v2399, %v3683
      %v3940 = vadd.f32 %v2400, %v3684
      %v3941 = vadd.f32 %v2401, %v3685
      %v3942 = vadd.f32 %v2402, %v3686
      %v3943 = vadd.f32 %v2403, %v3687
      %v3944 = vadd.f32 %v2404, %v3688
      %v3945 = vadd.f32 %v2405, %v3689
      %v3946 = vadd.f32 %v2406, %v3690
      %v3947 = vadd.f32 %v2407, %v3691
      %v3948 = vadd.f32 %v2408, %v3692
      %v3949 = vadd.f32 %v2409, %v3693
      %v3950 = vadd.f32 %v2410, %v3694
      %v3951 = vadd.f32 %v2411, %v3695
      %v3952 = vadd.f32 %v2412, %v3696
      %v3953 = vadd.f32 %v2413, %v3697
      %v3954 = vadd.f32 %v2414, %v3698
      %v3955 = vadd.f32 %v2415, %v3699
      %v3956 = vadd.f32 %v2416, %v3700
      %v3957 = vadd.f32 %v2417, %v3701
      %v3958 = vadd.f32 %v2418, %v3702
      %v3959 = vadd.f32 %v2419, %v3703
      %3960 = vset.pattern.permute.xlu0 2
      %3961 = vperm.xlu0 %3960, %v623
      %v3962 = vpop.permute.xlu0 %3961
      %3964 = vset.pattern.permute.xlu0 2
      %3965 = vperm.xlu0 %3964, %v624
      %v3966 = vpop.permute.xlu0 %3965
      %3968 = vset.pattern.permute.xlu0 2
      %3969 = vperm.xlu0 %3968, %v625
      %v3970 = vpop.permute.xlu0 %3969
      %3972 = vset.pattern.permute.xlu0 2
      %3973 = vperm.xlu0 %3972, %v626
      %v3974 = vpop.permute.xlu0 %3973
      %3976 = vset.pattern.permute.xlu0 2
      %3977 = vperm.xlu0 %3976, %v627
      %v3978 = vpop.permute.xlu0 %3977
      %3980 = vset.pattern.permute.xlu0 2
      %3981 = vperm.xlu0 %3980, %v628
      %v3982 = vpop.permute.xlu0 %3981
      %3984 = vset.pattern.permute.xlu0 2
      %3985 = vperm.xlu0 %3984, %v629
      %v3986 = vpop.permute.xlu0 %3985
      %3988 = vset.pattern.permute.xlu0 2
      %3989 = vperm.xlu0 %3988, %v630
      %v3990 = vpop.permute.xlu0 %3989
      %3992 = vset.pattern.permute.xlu0 2
      %3993 = vperm.xlu0 %3992, %v631
      %v3994 = vpop.permute.xlu0 %3993
      %3996 = vset.pattern.permute.xlu0 2
      %3997 = vperm.xlu0 %3996, %v632
      %v3998 = vpop.permute.xlu0 %3997
      %4000 = vset.pattern.permute.xlu0 2
      %4001 = vperm.xlu0 %4000, %v633
      %v4002 = vpop.permute.xlu0 %4001
      %4004 = vset.pattern.permute.xlu0 2
      %4005 = vperm.xlu0 %4004, %v634
      %v4006 = vpop.permute.xlu0 %4005
      %4008 = vset.pattern.permute.xlu0 2
      %4009 = vperm.xlu0 %4008, %v635
      %v4010 = vpop.permute.xlu0 %4009
      %4012 = vset.pattern.permute.xlu0 2
      %4013 = vperm.xlu0 %4012, %v636
      %v4014 = vpop.permute.xlu0 %4013
      %4016 = vset.pattern.permute.xlu0 2
      %4017 = vperm.xlu0 %4016, %v637
      %v4018 = vpop.permute.xlu0 %4017
      %4020 = vset.pattern.permute.xlu0 2
      %4021 = vperm.xlu0 %4020, %v638
      %v4022 = vpop.permute.xlu0 %4021
      %4024 = vset.pattern.permute.xlu0 2
      %4025 = vperm.xlu0 %4024, %v639
      %v4026 = vpop.permute.xlu0 %4025
      %4028 = vset.pattern.permute.xlu0 2
      %4029 = vperm.xlu0 %4028, %v640
      %v4030 = vpop.permute.xlu0 %4029
      %4032 = vset.pattern.permute.xlu0 2
      %4033 = vperm.xlu0 %4032, %v641
      %v4034 = vpop.permute.xlu0 %4033
      %4036 = vset.pattern.permute.xlu0 2
      %4037 = vperm.xlu0 %4036, %v642
      %v4038 = vpop.permute.xlu0 %4037
      %4040 = vset.pattern.permute.xlu0 2
      %4041 = vperm.xlu0 %4040, %v643
      %v4042 = vpop.permute.xlu0 %4041
      %4044 = vset.pattern.permute.xlu0 2
      %4045 = vperm.xlu0 %4044, %v644
      %v4046 = vpop.permute.xlu0 %4045
      %4048 = vset.pattern.permute.xlu0 2
      %4049 = vperm.xlu0 %4048, %v645
      %v4050 = vpop.permute.xlu0 %4049
      %4052 = vset.pattern.permute.xlu0 2
      %4053 = vperm.xlu0 %4052, %v646
      %v4054 = vpop.permute.xlu0 %4053
      %4056 = vset.pattern.permute.xlu0 2
      %4057 = vperm.xlu0 %4056, %v647
      %v4058 = vpop.permute.xlu0 %4057
      %4060 = vset.pattern.permute.xlu0 2
      %4061 = vperm.xlu0 %4060, %v648
      %v4062 = vpop.permute.xlu0 %4061
      %4064 = vset.pattern.permute.xlu0 2
      %4065 = vperm.xlu0 %4064, %v649
      %v4066 = vpop.permute.xlu0 %4065
      %4068 = vset.pattern.permute.xlu0 2
      %4069 = vperm.xlu0 %4068, %v650
      %v4070 = vpop.permute.xlu0 %4069
      %4072 = vset.pattern.permute.xlu0 2
      %4073 = vperm.xlu0 %4072, %v651
      %v4074 = vpop.permute.xlu0 %4073
      %4076 = vset.pattern.permute.xlu0 2
      %4077 = vperm.xlu0 %4076, %v652
      %v4078 = vpop.permute.xlu0 %4077
      %4080 = vset.pattern.permute.xlu0 2
      %4081 = vperm.xlu0 %4080, %v653
      %v4082 = vpop.permute.xlu0 %4081
      %4084 = vset.pattern.permute.xlu0 2
      %4085 = vperm.xlu0 %4084, %v654
      %v4086 = vpop.permute.xlu0 %4085
      %4088 = vset.pattern.permute.xlu0 2
      %4089 = vperm.xlu0 %4088, %v655
      %v4090 = vpop.permute.xlu0 %4089
      %4092 = vset.pattern.permute.xlu0 2
      %4093 = vperm.xlu0 %4092, %v656
      %v4094 = vpop.permute.xlu0 %4093
      %4096 = vset.pattern.permute.xlu0 2
      %4097 = vperm.xlu0 %4096, %v657
      %v4098 = vpop.permute.xlu0 %4097
      %4100 = vset.pattern.permute.xlu0 2
      %4101 = vperm.xlu0 %4100, %v658
      %v4102 = vpop.permute.xlu0 %4101
      %4104 = vset.pattern.permute.xlu0 2
      %4105 = vperm.xlu0 %4104, %v659
      %v4106 = vpop.permute.xlu0 %4105
      %4108 = vset.pattern.permute.xlu0 2
      %4109 = vperm.xlu0 %4108, %v660
      %v4110 = vpop.permute.xlu0 %4109
      %4112 = vset.pattern.permute.xlu0 2
      %4113 = vperm.xlu0 %4112, %v661
      %v4114 = vpop.permute.xlu0 %4113
      %4116 = vset.pattern.permute.xlu0 2
      %4117 = vperm.xlu0 %4116, %v662
      %v4118 = vpop.permute.xlu0 %4117
      %4120 = vset.pattern.permute.xlu0 2
      %4121 = vperm.xlu0 %4120, %v663
      %v4122 = vpop.permute.xlu0 %4121
      %4124 = vset.pattern.permute.xlu0 2
      %4125 = vperm.xlu0 %4124, %v664
      %v4126 = vpop.permute.xlu0 %4125
      %4128 = vset.pattern.permute.xlu0 2
      %4129 = vperm.xlu0 %4128, %v665
      %v4130 = vpop.permute.xlu0 %4129
      %4132 = vset.pattern.permute.xlu0 2
      %4133 = vperm.xlu0 %4132, %v666
      %v4134 = vpop.permute.xlu0 %4133
      %4136 = vset.pattern.permute.xlu0 2
      %4137 = vperm.xlu0 %4136, %v667
      %v4138 = vpop.permute.xlu0 %4137
      %4140 = vset.pattern.permute.xlu0 2
      %4141 = vperm.xlu0 %4140, %v668
      %v4142 = vpop.permute.xlu0 %4141
      %4144 = vset.pattern.permute.xlu0 2
      %4145 = vperm.xlu0 %4144, %v669
      %v4146 = vpop.permute.xlu0 %4145
      %4148 = vset.pattern.permute.xlu0 2
      %4149 = vperm.xlu0 %4148, %v670
      %v4150 = vpop.permute.xlu0 %4149
      %4152 = vset.pattern.permute.xlu0 2
      %4153 = vperm.xlu0 %4152, %v671
      %v4154 = vpop.permute.xlu0 %4153
      %4156 = vset.pattern.permute.xlu0 2
      %4157 = vperm.xlu0 %4156, %v672
      %v4158 = vpop.permute.xlu0 %4157
      %4160 = vset.pattern.permute.xlu0 2
      %4161 = vperm.xlu0 %4160, %v673
      %v4162 = vpop.permute.xlu0 %4161
      %4164 = vset.pattern.permute.xlu0 2
      %4165 = vperm.xlu0 %4164, %v674
      %v4166 = vpop.permute.xlu0 %4165
      %4168 = vset.pattern.permute.xlu0 2
      %4169 = vperm.xlu0 %4168, %v675
      %v4170 = vpop.permute.xlu0 %4169
      %4172 = vset.pattern.permute.xlu0 2
      %4173 = vperm.xlu0 %4172, %v676
      %v4174 = vpop.permute.xlu0 %4173
      %4176 = vset.pattern.permute.xlu0 2
      %4177 = vperm.xlu0 %4176, %v677
      %v4178 = vpop.permute.xlu0 %4177
      %4180 = vset.pattern.permute.xlu0 2
      %4181 = vperm.xlu0 %4180, %v678
      %v4182 = vpop.permute.xlu0 %4181
      %4184 = vset.pattern.permute.xlu0 2
      %4185 = vperm.xlu0 %4184, %v679
      %v4186 = vpop.permute.xlu0 %4185
      %4188 = vset.pattern.permute.xlu0 2
      %4189 = vperm.xlu0 %4188, %v680
      %v4190 = vpop.permute.xlu0 %4189
      %4192 = vset.pattern.permute.xlu0 2
      %4193 = vperm.xlu0 %4192, %v681
      %v4194 = vpop.permute.xlu0 %4193
      %4196 = vset.pattern.permute.xlu0 2
      %4197 = vperm.xlu0 %4196, %v682
      %v4198 = vpop.permute.xlu0 %4197
      %4200 = vset.pattern.permute.xlu0 2
      %4201 = vperm.xlu0 %4200, %v683
      %v4202 = vpop.permute.xlu0 %4201
      %4204 = vset.pattern.permute.xlu0 2
      %4205 = vperm.xlu0 %4204, %v684
      %v4206 = vpop.permute.xlu0 %4205
      %4208 = vset.pattern.permute.xlu0 2
      %4209 = vperm.xlu0 %4208, %v685
      %v4210 = vpop.permute.xlu0 %4209
      %4212 = vset.pattern.permute.xlu0 2
      %4213 = vperm.xlu0 %4212, %v686
      %v4214 = vpop.permute.xlu0 %4213
      %4216 = vset.pattern.permute.xlu0 2
      %4217 = vperm.xlu0 %4216, %v687
      %v4218 = vpop.permute.xlu0 %4217
      %4220 = vset.pattern.permute.xlu0 2
      %4221 = vperm.xlu0 %4220, %v688
      %v4222 = vpop.permute.xlu0 %4221
      %4224 = vset.pattern.permute.xlu0 2
      %4225 = vperm.xlu0 %4224, %v689
      %v4226 = vpop.permute.xlu0 %4225
      %4228 = vset.pattern.permute.xlu0 2
      %4229 = vperm.xlu0 %4228, %v690
      %v4230 = vpop.permute.xlu0 %4229
      %4232 = vset.pattern.permute.xlu0 2
      %4233 = vperm.xlu0 %4232, %v691
      %v4234 = vpop.permute.xlu0 %4233
      %4236 = vset.pattern.permute.xlu0 2
      %4237 = vperm.xlu0 %4236, %v692
      %v4238 = vpop.permute.xlu0 %4237
      %4240 = vset.pattern.permute.xlu0 2
      %4241 = vperm.xlu0 %4240, %v693
      %v4242 = vpop.permute.xlu0 %4241
      %4244 = vset.pattern.permute.xlu0 2
      %4245 = vperm.xlu0 %4244, %v694
      %v4246 = vpop.permute.xlu0 %4245
      %4248 = vset.pattern.permute.xlu0 2
      %4249 = vperm.xlu0 %4248, %v695
      %v4250 = vpop.permute.xlu0 %4249
      %4252 = vset.pattern.permute.xlu0 2
      %4253 = vperm.xlu0 %4252, %v696
      %v4254 = vpop.permute.xlu0 %4253
      %4256 = vset.pattern.permute.xlu0 2
      %4257 = vperm.xlu0 %4256, %v697
      %v4258 = vpop.permute.xlu0 %4257
      %4260 = vset.pattern.permute.xlu0 2
      %4261 = vperm.xlu0 %4260, %v698
      %v4262 = vpop.permute.xlu0 %4261
      %4264 = vset.pattern.permute.xlu0 2
      %4265 = vperm.xlu0 %4264, %v699
      %v4266 = vpop.permute.xlu0 %4265
      %4268 = vset.pattern.permute.xlu0 2
      %4269 = vperm.xlu0 %4268, %v700
      %v4270 = vpop.permute.xlu0 %4269
      %4272 = vset.pattern.permute.xlu0 2
      %4273 = vperm.xlu0 %4272, %v701
      %v4274 = vpop.permute.xlu0 %4273
      %4276 = vset.pattern.permute.xlu0 2
      %4277 = vperm.xlu0 %4276, %v702
      %v4278 = vpop.permute.xlu0 %4277
      %4280 = vset.pattern.permute.xlu0 2
      %4281 = vperm.xlu0 %4280, %v703
      %v4282 = vpop.permute.xlu0 %4281
      %4284 = vset.pattern.permute.xlu0 2
      %4285 = vperm.xlu0 %4284, %v704
      %v4286 = vpop.permute.xlu0 %4285
      %4288 = vset.pattern.permute.xlu0 2
      %4289 = vperm.xlu0 %4288, %v705
      %v4290 = vpop.permute.xlu0 %4289
      %4292 = vset.pattern.permute.xlu0 2
      %4293 = vperm.xlu0 %4292, %v706
      %v4294 = vpop.permute.xlu0 %4293
      %4296 = vset.pattern.permute.xlu0 2
      %4297 = vperm.xlu0 %4296, %v707
      %v4298 = vpop.permute.xlu0 %4297
      %4300 = vset.pattern.permute.xlu0 2
      %4301 = vperm.xlu0 %4300, %v708
      %v4302 = vpop.permute.xlu0 %4301
      %4304 = vset.pattern.permute.xlu0 2
      %4305 = vperm.xlu0 %4304, %v709
      %v4306 = vpop.permute.xlu0 %4305
      %4308 = vset.pattern.permute.xlu0 2
      %4309 = vperm.xlu0 %4308, %v710
      %v4310 = vpop.permute.xlu0 %4309
      %4312 = vset.pattern.permute.xlu0 2
      %4313 = vperm.xlu0 %4312, %v711
      %v4314 = vpop.permute.xlu0 %4313
      %4316 = vset.pattern.permute.xlu0 2
      %4317 = vperm.xlu0 %4316, %v712
      %v4318 = vpop.permute.xlu0 %4317
      %4320 = vset.pattern.permute.xlu0 2
      %4321 = vperm.xlu0 %4320, %v713
      %v4322 = vpop.permute.xlu0 %4321
      %4324 = vset.pattern.permute.xlu0 2
      %4325 = vperm.xlu0 %4324, %v714
      %v4326 = vpop.permute.xlu0 %4325
      %4328 = vset.pattern.permute.xlu0 2
      %4329 = vperm.xlu0 %4328, %v715
      %v4330 = vpop.permute.xlu0 %4329
      %4332 = vset.pattern.permute.xlu0 2
      %4333 = vperm.xlu0 %4332, %v716
      %v4334 = vpop.permute.xlu0 %4333
      %4336 = vset.pattern.permute.xlu0 2
      %4337 = vperm.xlu0 %4336, %v717
      %v4338 = vpop.permute.xlu0 %4337
      %4340 = vset.pattern.permute.xlu0 2
      %4341 = vperm.xlu0 %4340, %v718
      %v4342 = vpop.permute.xlu0 %4341
      %4344 = vset.pattern.permute.xlu0 2
      %4345 = vperm.xlu0 %4344, %v719
      %v4346 = vpop.permute.xlu0 %4345
      %4348 = vset.pattern.permute.xlu0 2
      %4349 = vperm.xlu0 %4348, %v720
      %v4350 = vpop.permute.xlu0 %4349
      %4352 = vset.pattern.permute.xlu0 2
      %4353 = vperm.xlu0 %4352, %v721
      %v4354 = vpop.permute.xlu0 %4353
      %4356 = vset.pattern.permute.xlu0 2
      %4357 = vperm.xlu0 %4356, %v722
      %v4358 = vpop.permute.xlu0 %4357
      %4360 = vset.pattern.permute.xlu0 2
      %4361 = vperm.xlu0 %4360, %v723
      %v4362 = vpop.permute.xlu0 %4361
      %4364 = vset.pattern.permute.xlu0 2
      %4365 = vperm.xlu0 %4364, %v724
      %v4366 = vpop.permute.xlu0 %4365
      %4368 = vset.pattern.permute.xlu0 2
      %4369 = vperm.xlu0 %4368, %v725
      %v4370 = vpop.permute.xlu0 %4369
      %4372 = vset.pattern.permute.xlu0 2
      %4373 = vperm.xlu0 %4372, %v726
      %v4374 = vpop.permute.xlu0 %4373
      %4376 = vset.pattern.permute.xlu0 2
      %4377 = vperm.xlu0 %4376, %v727
      %v4378 = vpop.permute.xlu0 %4377
      %4380 = vset.pattern.permute.xlu0 2
      %4381 = vperm.xlu0 %4380, %v728
      %v4382 = vpop.permute.xlu0 %4381
      %4384 = vset.pattern.permute.xlu0 2
      %4385 = vperm.xlu0 %4384, %v729
      %v4386 = vpop.permute.xlu0 %4385
      %4388 = vset.pattern.permute.xlu0 2
      %4389 = vperm.xlu0 %4388, %v730
      %v4390 = vpop.permute.xlu0 %4389
      %4392 = vset.pattern.permute.xlu0 2
      %4393 = vperm.xlu0 %4392, %v731
      %v4394 = vpop.permute.xlu0 %4393
      %4396 = vset.pattern.permute.xlu0 2
      %4397 = vperm.xlu0 %4396, %v732
      %v4398 = vpop.permute.xlu0 %4397
      %4400 = vset.pattern.permute.xlu0 2
      %4401 = vperm.xlu0 %4400, %v733
      %v4402 = vpop.permute.xlu0 %4401
      %4404 = vset.pattern.permute.xlu0 2
      %4405 = vperm.xlu0 %4404, %v734
      %v4406 = vpop.permute.xlu0 %4405
      %4408 = vset.pattern.permute.xlu0 2
      %4409 = vperm.xlu0 %4408, %v735
      %v4410 = vpop.permute.xlu0 %4409
      %4412 = vset.pattern.permute.xlu0 2
      %4413 = vperm.xlu0 %4412, %v736
      %v4414 = vpop.permute.xlu0 %4413
      %4416 = vset.pattern.permute.xlu0 2
      %4417 = vperm.xlu0 %4416, %v737
      %v4418 = vpop.permute.xlu0 %4417
      %4420 = vset.pattern.permute.xlu0 2
      %4421 = vperm.xlu0 %4420, %v738
      %v4422 = vpop.permute.xlu0 %4421
      %4424 = vset.pattern.permute.xlu0 2
      %4425 = vperm.xlu0 %4424, %v739
      %v4426 = vpop.permute.xlu0 %4425
      %4428 = vset.pattern.permute.xlu0 2
      %4429 = vperm.xlu0 %4428, %v740
      %v4430 = vpop.permute.xlu0 %4429
      %4432 = vset.pattern.permute.xlu0 2
      %4433 = vperm.xlu0 %4432, %v741
      %v4434 = vpop.permute.xlu0 %4433
      %4436 = vset.pattern.permute.xlu0 2
      %4437 = vperm.xlu0 %4436, %v742
      %v4438 = vpop.permute.xlu0 %4437
      %4440 = vset.pattern.permute.xlu0 2
      %4441 = vperm.xlu0 %4440, %v743
      %v4442 = vpop.permute.xlu0 %4441
      %4444 = vset.pattern.permute.xlu0 2
      %4445 = vperm.xlu0 %4444, %v744
      %v4446 = vpop.permute.xlu0 %4445
      %4448 = vset.pattern.permute.xlu0 2
      %4449 = vperm.xlu0 %4448, %v745
      %v4450 = vpop.permute.xlu0 %4449
      %4452 = vset.pattern.permute.xlu0 2
      %4453 = vperm.xlu0 %4452, %v746
      %v4454 = vpop.permute.xlu0 %4453
      %4456 = vset.pattern.permute.xlu0 2
      %4457 = vperm.xlu0 %4456, %v747
      %v4458 = vpop.permute.xlu0 %4457
      %4460 = vset.pattern.permute.xlu0 2
      %4461 = vperm.xlu0 %4460, %v748
      %v4462 = vpop.permute.xlu0 %4461
      %4464 = vset.pattern.permute.xlu0 2
      %4465 = vperm.xlu0 %4464, %v749
      %v4466 = vpop.permute.xlu0 %4465
      %4468 = vset.pattern.permute.xlu0 2
      %4469 = vperm.xlu0 %4468, %v750
      %v4470 = vpop.permute.xlu0 %4469
      %4472 = vset.pattern.permute.xlu0 2
      %4473 = vperm.xlu0 %4472, %v751
      %v4474 = vpop.permute.xlu0 %4473
      %4476 = vset.pattern.permute.xlu0 2
      %4477 = vperm.xlu0 %4476, %v752
      %v4478 = vpop.permute.xlu0 %4477
      %4480 = vset.pattern.permute.xlu0 2
      %4481 = vperm.xlu0 %4480, %v753
      %v4482 = vpop.permute.xlu0 %4481
      %4484 = vset.pattern.permute.xlu0 2
      %4485 = vperm.xlu0 %4484, %v754
      %v4486 = vpop.permute.xlu0 %4485
      %4488 = vset.pattern.permute.xlu0 2
      %4489 = vperm.xlu0 %4488, %v755
      %v4490 = vpop.permute.xlu0 %4489
      %4492 = vset.pattern.permute.xlu0 2
      %4493 = vperm.xlu0 %4492, %v756
      %v4494 = vpop.permute.xlu0 %4493
      %4496 = vset.pattern.permute.xlu0 2
      %4497 = vperm.xlu0 %4496, %v757
      %v4498 = vpop.permute.xlu0 %4497
      %4500 = vset.pattern.permute.xlu0 2
      %4501 = vperm.xlu0 %4500, %v758
      %v4502 = vpop.permute.xlu0 %4501
      %4504 = vset.pattern.permute.xlu0 2
      %4505 = vperm.xlu0 %4504, %v759
      %v4506 = vpop.permute.xlu0 %4505
      %4508 = vset.pattern.permute.xlu0 2
      %4509 = vperm.xlu0 %4508, %v760
      %v4510 = vpop.permute.xlu0 %4509
      %4512 = vset.pattern.permute.xlu0 2
      %4513 = vperm.xlu0 %4512, %v761
      %v4514 = vpop.permute.xlu0 %4513
      %4516 = vset.pattern.permute.xlu0 2
      %4517 = vperm.xlu0 %4516, %v762
      %v4518 = vpop.permute.xlu0 %4517
      %4520 = vset.pattern.permute.xlu0 2
      %4521 = vperm.xlu0 %4520, %v763
      %v4522 = vpop.permute.xlu0 %4521
      %4524 = vset.pattern.permute.xlu0 2
      %4525 = vperm.xlu0 %4524, %v764
      %v4526 = vpop.permute.xlu0 %4525
      %4528 = vset.pattern.permute.xlu0 2
      %4529 = vperm.xlu0 %4528, %v765
      %v4530 = vpop.permute.xlu0 %4529
      %4532 = vset.pattern.permute.xlu0 2
      %4533 = vperm.xlu0 %4532, %v766
      %v4534 = vpop.permute.xlu0 %4533
      %4536 = vset.pattern.permute.xlu0 2
      %4537 = vperm.xlu0 %4536, %v767
      %v4538 = vpop.permute.xlu0 %4537
      %4540 = vset.pattern.permute.xlu0 2
      %4541 = vperm.xlu0 %4540, %v768
      %v4542 = vpop.permute.xlu0 %4541
      %4544 = vset.pattern.permute.xlu0 2
      %4545 = vperm.xlu0 %4544, %v769
      %v4546 = vpop.permute.xlu0 %4545
      %4548 = vset.pattern.permute.xlu0 2
      %4549 = vperm.xlu0 %4548, %v770
      %v4550 = vpop.permute.xlu0 %4549
      %4552 = vset.pattern.permute.xlu0 2
      %4553 = vperm.xlu0 %4552, %v771
      %v4554 = vpop.permute.xlu0 %4553
      %4556 = vset.pattern.permute.xlu0 2
      %4557 = vperm.xlu0 %4556, %v772
      %v4558 = vpop.permute.xlu0 %4557
      %4560 = vset.pattern.permute.xlu0 2
      %4561 = vperm.xlu0 %4560, %v773
      %v4562 = vpop.permute.xlu0 %4561
      %4564 = vset.pattern.permute.xlu0 2
      %4565 = vperm.xlu0 %4564, %v774
      %v4566 = vpop.permute.xlu0 %4565
      %4568 = vset.pattern.permute.xlu0 2
      %4569 = vperm.xlu0 %4568, %v775
      %v4570 = vpop.permute.xlu0 %4569
      %4572 = vset.pattern.permute.xlu0 2
      %4573 = vperm.xlu0 %4572, %v776
      %v4574 = vpop.permute.xlu0 %4573
      %4576 = vset.pattern.permute.xlu0 2
      %4577 = vperm.xlu0 %4576, %v777
      %v4578 = vpop.permute.xlu0 %4577
      %4580 = vset.pattern.permute.xlu0 2
      %4581 = vperm.xlu0 %4580, %v778
      %v4582 = vpop.permute.xlu0 %4581
      %4584 = vset.pattern.permute.xlu0 2
      %4585 = vperm.xlu0 %4584, %v779
      %v4586 = vpop.permute.xlu0 %4585
      %4588 = vset.pattern.permute.xlu0 2
      %4589 = vperm.xlu0 %4588, %v780
      %v4590 = vpop.permute.xlu0 %4589
      %4592 = vset.pattern.permute.xlu0 2
      %4593 = vperm.xlu0 %4592, %v781
      %v4594 = vpop.permute.xlu0 %4593
      %4596 = vset.pattern.permute.xlu0 2
      %4597 = vperm.xlu0 %4596, %v782
      %v4598 = vpop.permute.xlu0 %4597
      %4600 = vset.pattern.permute.xlu0 2
      %4601 = vperm.xlu0 %4600, %v783
      %v4602 = vpop.permute.xlu0 %4601
      %4604 = vset.pattern.permute.xlu0 2
      %4605 = vperm.xlu0 %4604, %v784
      %v4606 = vpop.permute.xlu0 %4605
      %4608 = vset.pattern.permute.xlu0 2
      %4609 = vperm.xlu0 %4608, %v785
      %v4610 = vpop.permute.xlu0 %4609
      %4612 = vset.pattern.permute.xlu0 2
      %4613 = vperm.xlu0 %4612, %v786
      %v4614 = vpop.permute.xlu0 %4613
      %4616 = vset.pattern.permute.xlu0 2
      %4617 = vperm.xlu0 %4616, %v787
      %v4618 = vpop.permute.xlu0 %4617
      %4620 = vset.pattern.permute.xlu0 2
      %4621 = vperm.xlu0 %4620, %v788
      %v4622 = vpop.permute.xlu0 %4621
      %4624 = vset.pattern.permute.xlu0 2
      %4625 = vperm.xlu0 %4624, %v789
      %v4626 = vpop.permute.xlu0 %4625
      %4628 = vset.pattern.permute.xlu0 2
      %4629 = vperm.xlu0 %4628, %v790
      %v4630 = vpop.permute.xlu0 %4629
      %4632 = vset.pattern.permute.xlu0 2
      %4633 = vperm.xlu0 %4632, %v791
      %v4634 = vpop.permute.xlu0 %4633
      %4636 = vset.pattern.permute.xlu0 2
      %4637 = vperm.xlu0 %4636, %v792
      %v4638 = vpop.permute.xlu0 %4637
      %4640 = vset.pattern.permute.xlu0 2
      %4641 = vperm.xlu0 %4640, %v793
      %v4642 = vpop.permute.xlu0 %4641
      %4644 = vset.pattern.permute.xlu0 2
      %4645 = vperm.xlu0 %4644, %v794
      %v4646 = vpop.permute.xlu0 %4645
      %4648 = vset.pattern.permute.xlu0 2
      %4649 = vperm.xlu0 %4648, %v795
      %v4650 = vpop.permute.xlu0 %4649
      %4652 = vset.pattern.permute.xlu0 2
      %4653 = vperm.xlu0 %4652, %v796
      %v4654 = vpop.permute.xlu0 %4653
      %4656 = vset.pattern.permute.xlu0 2
      %4657 = vperm.xlu0 %4656, %v797
      %v4658 = vpop.permute.xlu0 %4657
      %4660 = vset.pattern.permute.xlu0 2
      %4661 = vperm.xlu0 %4660, %v798
      %v4662 = vpop.permute.xlu0 %4661
      %4664 = vset.pattern.permute.xlu0 2
      %4665 = vperm.xlu0 %4664, %v799
      %v4666 = vpop.permute.xlu0 %4665
      %4668 = vset.pattern.permute.xlu0 2
      %4669 = vperm.xlu0 %4668, %v800
      %v4670 = vpop.permute.xlu0 %4669
      %4672 = vset.pattern.permute.xlu0 2
      %4673 = vperm.xlu0 %4672, %v801
      %v4674 = vpop.permute.xlu0 %4673
      %4676 = vset.pattern.permute.xlu0 2
      %4677 = vperm.xlu0 %4676, %v802
      %v4678 = vpop.permute.xlu0 %4677
      %4680 = vset.pattern.permute.xlu0 2
      %4681 = vperm.xlu0 %4680, %v803
      %v4682 = vpop.permute.xlu0 %4681
      %4684 = vset.pattern.permute.xlu0 2
      %4685 = vperm.xlu0 %4684, %v804
      %v4686 = vpop.permute.xlu0 %4685
      %4688 = vset.pattern.permute.xlu0 2
      %4689 = vperm.xlu0 %4688, %v805
      %v4690 = vpop.permute.xlu0 %4689
      %4692 = vset.pattern.permute.xlu0 2
      %4693 = vperm.xlu0 %4692, %v806
      %v4694 = vpop.permute.xlu0 %4693
      %4696 = vset.pattern.permute.xlu0 2
      %4697 = vperm.xlu0 %4696, %v807
      %v4698 = vpop.permute.xlu0 %4697
      %4700 = vset.pattern.permute.xlu0 2
      %4701 = vperm.xlu0 %4700, %v808
      %v4702 = vpop.permute.xlu0 %4701
      %4704 = vset.pattern.permute.xlu0 2
      %4705 = vperm.xlu0 %4704, %v809
      %v4706 = vpop.permute.xlu0 %4705
      %4708 = vset.pattern.permute.xlu0 2
      %4709 = vperm.xlu0 %4708, %v810
      %v4710 = vpop.permute.xlu0 %4709
      %4712 = vset.pattern.permute.xlu0 2
      %4713 = vperm.xlu0 %4712, %v811
      %v4714 = vpop.permute.xlu0 %4713
      %4716 = vset.pattern.permute.xlu0 2
      %4717 = vperm.xlu0 %4716, %v812
      %v4718 = vpop.permute.xlu0 %4717
      %4720 = vset.pattern.permute.xlu0 2
      %4721 = vperm.xlu0 %4720, %v813
      %v4722 = vpop.permute.xlu0 %4721
      %4724 = vset.pattern.permute.xlu0 2
      %4725 = vperm.xlu0 %4724, %v814
      %v4726 = vpop.permute.xlu0 %4725
      %4728 = vset.pattern.permute.xlu0 2
      %4729 = vperm.xlu0 %4728, %v815
      %v4730 = vpop.permute.xlu0 %4729
      %4732 = vset.pattern.permute.xlu0 2
      %4733 = vperm.xlu0 %4732, %v816
      %v4734 = vpop.permute.xlu0 %4733
      %4736 = vset.pattern.permute.xlu0 2
      %4737 = vperm.xlu0 %4736, %v817
      %v4738 = vpop.permute.xlu0 %4737
      %4740 = vset.pattern.permute.xlu0 2
      %4741 = vperm.xlu0 %4740, %v818
      %v4742 = vpop.permute.xlu0 %4741
      %4744 = vset.pattern.permute.xlu0 2
      %4745 = vperm.xlu0 %4744, %v819
      %v4746 = vpop.permute.xlu0 %4745
      %4748 = vset.pattern.permute.xlu0 2
      %4749 = vperm.xlu0 %4748, %v820
      %v4750 = vpop.permute.xlu0 %4749
      %4752 = vset.pattern.permute.xlu0 2
      %4753 = vperm.xlu0 %4752, %v821
      %v4754 = vpop.permute.xlu0 %4753
      %4756 = vset.pattern.permute.xlu0 2
      %4757 = vperm.xlu0 %4756, %v822
      %v4758 = vpop.permute.xlu0 %4757
      %4760 = vset.pattern.permute.xlu0 2
      %4761 = vperm.xlu0 %4760, %v823
      %v4762 = vpop.permute.xlu0 %4761
      %4764 = vset.pattern.permute.xlu0 2
      %4765 = vperm.xlu0 %4764, %v824
      %v4766 = vpop.permute.xlu0 %4765
      %4768 = vset.pattern.permute.xlu0 2
      %4769 = vperm.xlu0 %4768, %v825
      %v4770 = vpop.permute.xlu0 %4769
      %4772 = vset.pattern.permute.xlu0 2
      %4773 = vperm.xlu0 %4772, %v826
      %v4774 = vpop.permute.xlu0 %4773
      %4776 = vset.pattern.permute.xlu0 2
      %4777 = vperm.xlu0 %4776, %v827
      %v4778 = vpop.permute.xlu0 %4777
      %4780 = vset.pattern.permute.xlu0 2
      %4781 = vperm.xlu0 %4780, %v828
      %v4782 = vpop.permute.xlu0 %4781
      %4784 = vset.pattern.permute.xlu0 2
      %4785 = vperm.xlu0 %4784, %v829
      %v4786 = vpop.permute.xlu0 %4785
      %4788 = vset.pattern.permute.xlu0 2
      %4789 = vperm.xlu0 %4788, %v830
      %v4790 = vpop.permute.xlu0 %4789
      %4792 = vset.pattern.permute.xlu0 2
      %4793 = vperm.xlu0 %4792, %v831
      %v4794 = vpop.permute.xlu0 %4793
      %4796 = vset.pattern.permute.xlu0 2
      %4797 = vperm.xlu0 %4796, %v832
      %v4798 = vpop.permute.xlu0 %4797
      %4800 = vset.pattern.permute.xlu0 2
      %4801 = vperm.xlu0 %4800, %v833
      %v4802 = vpop.permute.xlu0 %4801
      %4804 = vset.pattern.permute.xlu0 2
      %4805 = vperm.xlu0 %4804, %v834
      %v4806 = vpop.permute.xlu0 %4805
      %4808 = vset.pattern.permute.xlu0 2
      %4809 = vperm.xlu0 %4808, %v835
      %v4810 = vpop.permute.xlu0 %4809
      %4812 = vset.pattern.permute.xlu0 2
      %4813 = vperm.xlu0 %4812, %v836
      %v4814 = vpop.permute.xlu0 %4813
      %4816 = vset.pattern.permute.xlu0 2
      %4817 = vperm.xlu0 %4816, %v837
      %v4818 = vpop.permute.xlu0 %4817
      %4820 = vset.pattern.permute.xlu0 2
      %4821 = vperm.xlu0 %4820, %v838
      %v4822 = vpop.permute.xlu0 %4821
      %4824 = vset.pattern.permute.xlu0 2
      %4825 = vperm.xlu0 %4824, %v839
      %v4826 = vpop.permute.xlu0 %4825
      %4828 = vset.pattern.permute.xlu0 2
      %4829 = vperm.xlu0 %4828, %v840
      %v4830 = vpop.permute.xlu0 %4829
      %4832 = vset.pattern.permute.xlu0 2
      %4833 = vperm.xlu0 %4832, %v841
      %v4834 = vpop.permute.xlu0 %4833
      %4836 = vset.pattern.permute.xlu0 2
      %4837 = vperm.xlu0 %4836, %v842
      %v4838 = vpop.permute.xlu0 %4837
      %4840 = vset.pattern.permute.xlu0 2
      %4841 = vperm.xlu0 %4840, %v843
      %v4842 = vpop.permute.xlu0 %4841
      %4844 = vset.pattern.permute.xlu0 2
      %4845 = vperm.xlu0 %4844, %v844
      %v4846 = vpop.permute.xlu0 %4845
      %4848 = vset.pattern.permute.xlu0 2
      %4849 = vperm.xlu0 %4848, %v845
      %v4850 = vpop.permute.xlu0 %4849
      %4852 = vset.pattern.permute.xlu0 2
      %4853 = vperm.xlu0 %4852, %v846
      %v4854 = vpop.permute.xlu0 %4853
      %4856 = vset.pattern.permute.xlu0 2
      %4857 = vperm.xlu0 %4856, %v847
      %v4858 = vpop.permute.xlu0 %4857
      %4860 = vset.pattern.permute.xlu0 2
      %4861 = vperm.xlu0 %4860, %v848
      %v4862 = vpop.permute.xlu0 %4861
      %4864 = vset.pattern.permute.xlu0 2
      %4865 = vperm.xlu0 %4864, %v849
      %v4866 = vpop.permute.xlu0 %4865
      %4868 = vset.pattern.permute.xlu0 2
      %4869 = vperm.xlu0 %4868, %v850
      %v4870 = vpop.permute.xlu0 %4869
      %4872 = vset.pattern.permute.xlu0 2
      %4873 = vperm.xlu0 %4872, %v851
      %v4874 = vpop.permute.xlu0 %4873
      %4876 = vset.pattern.permute.xlu0 2
      %4877 = vperm.xlu0 %4876, %v852
      %v4878 = vpop.permute.xlu0 %4877
      %4880 = vset.pattern.permute.xlu0 2
      %4881 = vperm.xlu0 %4880, %v853
      %v4882 = vpop.permute.xlu0 %4881
      %4884 = vset.pattern.permute.xlu0 2
      %4885 = vperm.xlu0 %4884, %v854
      %v4886 = vpop.permute.xlu0 %4885
      %4888 = vset.pattern.permute.xlu0 2
      %4889 = vperm.xlu0 %4888, %v855
      %v4890 = vpop.permute.xlu0 %4889
      %4892 = vset.pattern.permute.xlu0 2
      %4893 = vperm.xlu0 %4892, %v856
      %v4894 = vpop.permute.xlu0 %4893
      %4896 = vset.pattern.permute.xlu0 2
      %4897 = vperm.xlu0 %4896, %v857
      %v4898 = vpop.permute.xlu0 %4897
      %4900 = vset.pattern.permute.xlu0 2
      %4901 = vperm.xlu0 %4900, %v858
      %v4902 = vpop.permute.xlu0 %4901
      %4904 = vset.pattern.permute.xlu0 2
      %4905 = vperm.xlu0 %4904, %v859
      %v4906 = vpop.permute.xlu0 %4905
      %4908 = vset.pattern.permute.xlu0 2
      %4909 = vperm.xlu0 %4908, %v860
      %v4910 = vpop.permute.xlu0 %4909
      %4912 = vset.pattern.permute.xlu0 2
      %4913 = vperm.xlu0 %4912, %v861
      %v4914 = vpop.permute.xlu0 %4913
      %4916 = vset.pattern.permute.xlu0 2
      %4917 = vperm.xlu0 %4916, %v862
      %v4918 = vpop.permute.xlu0 %4917
      %4920 = vset.pattern.permute.xlu0 2
      %4921 = vperm.xlu0 %4920, %v863
      %v4922 = vpop.permute.xlu0 %4921
      %4924 = vset.pattern.permute.xlu0 2
      %4925 = vperm.xlu0 %4924, %v864
      %v4926 = vpop.permute.xlu0 %4925
      %4928 = vset.pattern.permute.xlu0 2
      %4929 = vperm.xlu0 %4928, %v865
      %v4930 = vpop.permute.xlu0 %4929
      %4932 = vset.pattern.permute.xlu0 2
      %4933 = vperm.xlu0 %4932, %v866
      %v4934 = vpop.permute.xlu0 %4933
      %4936 = vset.pattern.permute.xlu0 2
      %4937 = vperm.xlu0 %4936, %v867
      %v4938 = vpop.permute.xlu0 %4937
      %4940 = vset.pattern.permute.xlu0 2
      %4941 = vperm.xlu0 %4940, %v868
      %v4942 = vpop.permute.xlu0 %4941
      %4944 = vset.pattern.permute.xlu0 2
      %4945 = vperm.xlu0 %4944, %v869
      %v4946 = vpop.permute.xlu0 %4945
      %4948 = vset.pattern.permute.xlu0 2
      %4949 = vperm.xlu0 %4948, %v870
      %v4950 = vpop.permute.xlu0 %4949
      %4952 = vset.pattern.permute.xlu0 2
      %4953 = vperm.xlu0 %4952, %v871
      %v4954 = vpop.permute.xlu0 %4953
      %4956 = vset.pattern.permute.xlu0 2
      %4957 = vperm.xlu0 %4956, %v872
      %v4958 = vpop.permute.xlu0 %4957
      %4960 = vset.pattern.permute.xlu0 2
      %4961 = vperm.xlu0 %4960, %v873
      %v4962 = vpop.permute.xlu0 %4961
      %4964 = vset.pattern.permute.xlu0 2
      %4965 = vperm.xlu0 %4964, %v874
      %v4966 = vpop.permute.xlu0 %4965
      %4968 = vset.pattern.permute.xlu0 2
      %4969 = vperm.xlu0 %4968, %v875
      %v4970 = vpop.permute.xlu0 %4969
      %4972 = vset.pattern.permute.xlu0 2
      %4973 = vperm.xlu0 %4972, %v876
      %v4974 = vpop.permute.xlu0 %4973
      %4976 = vset.pattern.permute.xlu0 2
      %4977 = vperm.xlu0 %4976, %v877
      %v4978 = vpop.permute.xlu0 %4977
      %4980 = vset.pattern.permute.xlu0 2
      %4981 = vperm.xlu0 %4980, %v878
      %v4982 = vpop.permute.xlu0 %4981
      %v4984 = vlaneseq
      %v4985 = vshrl.u32 %v4984, 7
      %v4986 = vsub.s32 2, %v4985
      %v4987 = vrot.slane %v879, %v4986
      %v4988 = vmul.f32 %v3962, %v4987
      %v4989 = vmul.f32 %v3966, %v4987
      %v4990 = vmul.f32 %v3970, %v4987
      %v4991 = vmul.f32 %v3974, %v4987
      %v4992 = vmul.f32 %v3978, %v4987
      %v4993 = vmul.f32 %v3982, %v4987
      %v4994 = vmul.f32 %v3986, %v4987
      %v4995 = vmul.f32 %v3990, %v4987
      %v4996 = vmul.f32 %v3994, %v4987
      %v4997 = vmul.f32 %v3998, %v4987
      %v4998 = vmul.f32 %v4002, %v4987
      %v4999 = vmul.f32 %v4006, %v4987
      %v5000 = vmul.f32 %v4010, %v4987
      %v5001 = vmul.f32 %v4014, %v4987
      %v5002 = vmul.f32 %v4018, %v4987
      %v5003 = vmul.f32 %v4022, %v4987
      %v5004 = vmul.f32 %v4026, %v4987
      %v5005 = vmul.f32 %v4030, %v4987
      %v5006 = vmul.f32 %v4034, %v4987
      %v5007 = vmul.f32 %v4038, %v4987
      %v5008 = vmul.f32 %v4042, %v4987
      %v5009 = vmul.f32 %v4046, %v4987
      %v5010 = vmul.f32 %v4050, %v4987
      %v5011 = vmul.f32 %v4054, %v4987
      %v5012 = vmul.f32 %v4058, %v4987
      %v5013 = vmul.f32 %v4062, %v4987
      %v5014 = vmul.f32 %v4066, %v4987
      %v5015 = vmul.f32 %v4070, %v4987
      %v5016 = vmul.f32 %v4074, %v4987
      %v5017 = vmul.f32 %v4078, %v4987
      %v5018 = vmul.f32 %v4082, %v4987
      %v5019 = vmul.f32 %v4086, %v4987
      %v5020 = vmul.f32 %v4090, %v4987
      %v5021 = vmul.f32 %v4094, %v4987
      %v5022 = vmul.f32 %v4098, %v4987
      %v5023 = vmul.f32 %v4102, %v4987
      %v5024 = vmul.f32 %v4106, %v4987
      %v5025 = vmul.f32 %v4110, %v4987
      %v5026 = vmul.f32 %v4114, %v4987
      %v5027 = vmul.f32 %v4118, %v4987
      %v5028 = vmul.f32 %v4122, %v4987
      %v5029 = vmul.f32 %v4126, %v4987
      %v5030 = vmul.f32 %v4130, %v4987
      %v5031 = vmul.f32 %v4134, %v4987
      %v5032 = vmul.f32 %v4138, %v4987
      %v5033 = vmul.f32 %v4142, %v4987
      %v5034 = vmul.f32 %v4146, %v4987
      %v5035 = vmul.f32 %v4150, %v4987
      %v5036 = vmul.f32 %v4154, %v4987
      %v5037 = vmul.f32 %v4158, %v4987
      %v5038 = vmul.f32 %v4162, %v4987
      %v5039 = vmul.f32 %v4166, %v4987
      %v5040 = vmul.f32 %v4170, %v4987
      %v5041 = vmul.f32 %v4174, %v4987
      %v5042 = vmul.f32 %v4178, %v4987
      %v5043 = vmul.f32 %v4182, %v4987
      %v5044 = vmul.f32 %v4186, %v4987
      %v5045 = vmul.f32 %v4190, %v4987
      %v5046 = vmul.f32 %v4194, %v4987
      %v5047 = vmul.f32 %v4198, %v4987
      %v5048 = vmul.f32 %v4202, %v4987
      %v5049 = vmul.f32 %v4206, %v4987
      %v5050 = vmul.f32 %v4210, %v4987
      %v5051 = vmul.f32 %v4214, %v4987
      %v5052 = vmul.f32 %v4218, %v4987
      %v5053 = vmul.f32 %v4222, %v4987
      %v5054 = vmul.f32 %v4226, %v4987
      %v5055 = vmul.f32 %v4230, %v4987
      %v5056 = vmul.f32 %v4234, %v4987
      %v5057 = vmul.f32 %v4238, %v4987
      %v5058 = vmul.f32 %v4242, %v4987
      %v5059 = vmul.f32 %v4246, %v4987
      %v5060 = vmul.f32 %v4250, %v4987
      %v5061 = vmul.f32 %v4254, %v4987
      %v5062 = vmul.f32 %v4258, %v4987
      %v5063 = vmul.f32 %v4262, %v4987
      %v5064 = vmul.f32 %v4266, %v4987
      %v5065 = vmul.f32 %v4270, %v4987
      %v5066 = vmul.f32 %v4274, %v4987
      %v5067 = vmul.f32 %v4278, %v4987
      %v5068 = vmul.f32 %v4282, %v4987
      %v5069 = vmul.f32 %v4286, %v4987
      %v5070 = vmul.f32 %v4290, %v4987
      %v5071 = vmul.f32 %v4294, %v4987
      %v5072 = vmul.f32 %v4298, %v4987
      %v5073 = vmul.f32 %v4302, %v4987
      %v5074 = vmul.f32 %v4306, %v4987
      %v5075 = vmul.f32 %v4310, %v4987
      %v5076 = vmul.f32 %v4314, %v4987
      %v5077 = vmul.f32 %v4318, %v4987
      %v5078 = vmul.f32 %v4322, %v4987
      %v5079 = vmul.f32 %v4326, %v4987
      %v5080 = vmul.f32 %v4330, %v4987
      %v5081 = vmul.f32 %v4334, %v4987
      %v5082 = vmul.f32 %v4338, %v4987
      %v5083 = vmul.f32 %v4342, %v4987
      %v5084 = vmul.f32 %v4346, %v4987
      %v5085 = vmul.f32 %v4350, %v4987
      %v5086 = vmul.f32 %v4354, %v4987
      %v5087 = vmul.f32 %v4358, %v4987
      %v5088 = vmul.f32 %v4362, %v4987
      %v5089 = vmul.f32 %v4366, %v4987
      %v5090 = vmul.f32 %v4370, %v4987
      %v5091 = vmul.f32 %v4374, %v4987
      %v5092 = vmul.f32 %v4378, %v4987
      %v5093 = vmul.f32 %v4382, %v4987
      %v5094 = vmul.f32 %v4386, %v4987
      %v5095 = vmul.f32 %v4390, %v4987
      %v5096 = vmul.f32 %v4394, %v4987
      %v5097 = vmul.f32 %v4398, %v4987
      %v5098 = vmul.f32 %v4402, %v4987
      %v5099 = vmul.f32 %v4406, %v4987
      %v5100 = vmul.f32 %v4410, %v4987
      %v5101 = vmul.f32 %v4414, %v4987
      %v5102 = vmul.f32 %v4418, %v4987
      %v5103 = vmul.f32 %v4422, %v4987
      %v5104 = vmul.f32 %v4426, %v4987
      %v5105 = vmul.f32 %v4430, %v4987
      %v5106 = vmul.f32 %v4434, %v4987
      %v5107 = vmul.f32 %v4438, %v4987
      %v5108 = vmul.f32 %v4442, %v4987
      %v5109 = vmul.f32 %v4446, %v4987
      %v5110 = vmul.f32 %v4450, %v4987
      %v5111 = vmul.f32 %v4454, %v4987
      %v5112 = vmul.f32 %v4458, %v4987
      %v5113 = vmul.f32 %v4462, %v4987
      %v5114 = vmul.f32 %v4466, %v4987
      %v5115 = vmul.f32 %v4470, %v4987
      %v5116 = vmul.f32 %v4474, %v4987
      %v5117 = vmul.f32 %v4478, %v4987
      %v5118 = vmul.f32 %v4482, %v4987
      %v5119 = vmul.f32 %v4486, %v4987
      %v5120 = vmul.f32 %v4490, %v4987
      %v5121 = vmul.f32 %v4494, %v4987
      %v5122 = vmul.f32 %v4498, %v4987
      %v5123 = vmul.f32 %v4502, %v4987
      %v5124 = vmul.f32 %v4506, %v4987
      %v5125 = vmul.f32 %v4510, %v4987
      %v5126 = vmul.f32 %v4514, %v4987
      %v5127 = vmul.f32 %v4518, %v4987
      %v5128 = vmul.f32 %v4522, %v4987
      %v5129 = vmul.f32 %v4526, %v4987
      %v5130 = vmul.f32 %v4530, %v4987
      %v5131 = vmul.f32 %v4534, %v4987
      %v5132 = vmul.f32 %v4538, %v4987
      %v5133 = vmul.f32 %v4542, %v4987
      %v5134 = vmul.f32 %v4546, %v4987
      %v5135 = vmul.f32 %v4550, %v4987
      %v5136 = vmul.f32 %v4554, %v4987
      %v5137 = vmul.f32 %v4558, %v4987
      %v5138 = vmul.f32 %v4562, %v4987
      %v5139 = vmul.f32 %v4566, %v4987
      %v5140 = vmul.f32 %v4570, %v4987
      %v5141 = vmul.f32 %v4574, %v4987
      %v5142 = vmul.f32 %v4578, %v4987
      %v5143 = vmul.f32 %v4582, %v4987
      %v5144 = vmul.f32 %v4586, %v4987
      %v5145 = vmul.f32 %v4590, %v4987
      %v5146 = vmul.f32 %v4594, %v4987
      %v5147 = vmul.f32 %v4598, %v4987
      %v5148 = vmul.f32 %v4602, %v4987
      %v5149 = vmul.f32 %v4606, %v4987
      %v5150 = vmul.f32 %v4610, %v4987
      %v5151 = vmul.f32 %v4614, %v4987
      %v5152 = vmul.f32 %v4618, %v4987
      %v5153 = vmul.f32 %v4622, %v4987
      %v5154 = vmul.f32 %v4626, %v4987
      %v5155 = vmul.f32 %v4630, %v4987
      %v5156 = vmul.f32 %v4634, %v4987
      %v5157 = vmul.f32 %v4638, %v4987
      %v5158 = vmul.f32 %v4642, %v4987
      %v5159 = vmul.f32 %v4646, %v4987
      %v5160 = vmul.f32 %v4650, %v4987
      %v5161 = vmul.f32 %v4654, %v4987
      %v5162 = vmul.f32 %v4658, %v4987
      %v5163 = vmul.f32 %v4662, %v4987
      %v5164 = vmul.f32 %v4666, %v4987
      %v5165 = vmul.f32 %v4670, %v4987
      %v5166 = vmul.f32 %v4674, %v4987
      %v5167 = vmul.f32 %v4678, %v4987
      %v5168 = vmul.f32 %v4682, %v4987
      %v5169 = vmul.f32 %v4686, %v4987
      %v5170 = vmul.f32 %v4690, %v4987
      %v5171 = vmul.f32 %v4694, %v4987
      %v5172 = vmul.f32 %v4698, %v4987
      %v5173 = vmul.f32 %v4702, %v4987
      %v5174 = vmul.f32 %v4706, %v4987
      %v5175 = vmul.f32 %v4710, %v4987
      %v5176 = vmul.f32 %v4714, %v4987
      %v5177 = vmul.f32 %v4718, %v4987
      %v5178 = vmul.f32 %v4722, %v4987
      %v5179 = vmul.f32 %v4726, %v4987
      %v5180 = vmul.f32 %v4730, %v4987
      %v5181 = vmul.f32 %v4734, %v4987
      %v5182 = vmul.f32 %v4738, %v4987
      %v5183 = vmul.f32 %v4742, %v4987
      %v5184 = vmul.f32 %v4746, %v4987
      %v5185 = vmul.f32 %v4750, %v4987
      %v5186 = vmul.f32 %v4754, %v4987
      %v5187 = vmul.f32 %v4758, %v4987
      %v5188 = vmul.f32 %v4762, %v4987
      %v5189 = vmul.f32 %v4766, %v4987
      %v5190 = vmul.f32 %v4770, %v4987
      %v5191 = vmul.f32 %v4774, %v4987
      %v5192 = vmul.f32 %v4778, %v4987
      %v5193 = vmul.f32 %v4782, %v4987
      %v5194 = vmul.f32 %v4786, %v4987
      %v5195 = vmul.f32 %v4790, %v4987
      %v5196 = vmul.f32 %v4794, %v4987
      %v5197 = vmul.f32 %v4798, %v4987
      %v5198 = vmul.f32 %v4802, %v4987
      %v5199 = vmul.f32 %v4806, %v4987
      %v5200 = vmul.f32 %v4810, %v4987
      %v5201 = vmul.f32 %v4814, %v4987
      %v5202 = vmul.f32 %v4818, %v4987
      %v5203 = vmul.f32 %v4822, %v4987
      %v5204 = vmul.f32 %v4826, %v4987
      %v5205 = vmul.f32 %v4830, %v4987
      %v5206 = vmul.f32 %v4834, %v4987
      %v5207 = vmul.f32 %v4838, %v4987
      %v5208 = vmul.f32 %v4842, %v4987
      %v5209 = vmul.f32 %v4846, %v4987
      %v5210 = vmul.f32 %v4850, %v4987
      %v5211 = vmul.f32 %v4854, %v4987
      %v5212 = vmul.f32 %v4858, %v4987
      %v5213 = vmul.f32 %v4862, %v4987
      %v5214 = vmul.f32 %v4866, %v4987
      %v5215 = vmul.f32 %v4870, %v4987
      %v5216 = vmul.f32 %v4874, %v4987
      %v5217 = vmul.f32 %v4878, %v4987
      %v5218 = vmul.f32 %v4882, %v4987
      %v5219 = vmul.f32 %v4886, %v4987
      %v5220 = vmul.f32 %v4890, %v4987
      %v5221 = vmul.f32 %v4894, %v4987
      %v5222 = vmul.f32 %v4898, %v4987
      %v5223 = vmul.f32 %v4902, %v4987
      %v5224 = vmul.f32 %v4906, %v4987
      %v5225 = vmul.f32 %v4910, %v4987
      %v5226 = vmul.f32 %v4914, %v4987
      %v5227 = vmul.f32 %v4918, %v4987
      %v5228 = vmul.f32 %v4922, %v4987
      %v5229 = vmul.f32 %v4926, %v4987
      %v5230 = vmul.f32 %v4930, %v4987
      %v5231 = vmul.f32 %v4934, %v4987
      %v5232 = vmul.f32 %v4938, %v4987
      %v5233 = vmul.f32 %v4942, %v4987
      %v5234 = vmul.f32 %v4946, %v4987
      %v5235 = vmul.f32 %v4950, %v4987
      %v5236 = vmul.f32 %v4954, %v4987
      %v5237 = vmul.f32 %v4958, %v4987
      %v5238 = vmul.f32 %v4962, %v4987
      %v5239 = vmul.f32 %v4966, %v4987
      %v5240 = vmul.f32 %v4970, %v4987
      %v5241 = vmul.f32 %v4974, %v4987
      %v5242 = vmul.f32 %v4978, %v4987
      %v5243 = vmul.f32 %v4982, %v4987
      %v5244 = vadd.f32 %v3704, %v4988
      %v5245 = vadd.f32 %v3705, %v4989
      %v5246 = vadd.f32 %v3706, %v4990
      %v5247 = vadd.f32 %v3707, %v4991
      %v5248 = vadd.f32 %v3708, %v4992
      %v5249 = vadd.f32 %v3709, %v4993
      %v5250 = vadd.f32 %v3710, %v4994
      %v5251 = vadd.f32 %v3711, %v4995
      %v5252 = vadd.f32 %v3712, %v4996
      %v5253 = vadd.f32 %v3713, %v4997
      %v5254 = vadd.f32 %v3714, %v4998
      %v5255 = vadd.f32 %v3715, %v4999
      %v5256 = vadd.f32 %v3716, %v5000
      %v5257 = vadd.f32 %v3717, %v5001
      %v5258 = vadd.f32 %v3718, %v5002
      %v5259 = vadd.f32 %v3719, %v5003
      %v5260 = vadd.f32 %v3720, %v5004
      %v5261 = vadd.f32 %v3721, %v5005
      %v5262 = vadd.f32 %v3722, %v5006
      %v5263 = vadd.f32 %v3723, %v5007
      %v5264 = vadd.f32 %v3724, %v5008
      %v5265 = vadd.f32 %v3725, %v5009
      %v5266 = vadd.f32 %v3726, %v5010
      %v5267 = vadd.f32 %v3727, %v5011
      %v5268 = vadd.f32 %v3728, %v5012
      %v5269 = vadd.f32 %v3729, %v5013
      %v5270 = vadd.f32 %v3730, %v5014
      %v5271 = vadd.f32 %v3731, %v5015
      %v5272 = vadd.f32 %v3732, %v5016
      %v5273 = vadd.f32 %v3733, %v5017
      %v5274 = vadd.f32 %v3734, %v5018
      %v5275 = vadd.f32 %v3735, %v5019
      %v5276 = vadd.f32 %v3736, %v5020
      %v5277 = vadd.f32 %v3737, %v5021
      %v5278 = vadd.f32 %v3738, %v5022
      %v5279 = vadd.f32 %v3739, %v5023
      %v5280 = vadd.f32 %v3740, %v5024
      %v5281 = vadd.f32 %v3741, %v5025
      %v5282 = vadd.f32 %v3742, %v5026
      %v5283 = vadd.f32 %v3743, %v5027
      %v5284 = vadd.f32 %v3744, %v5028
      %v5285 = vadd.f32 %v3745, %v5029
      %v5286 = vadd.f32 %v3746, %v5030
      %v5287 = vadd.f32 %v3747, %v5031
      %v5288 = vadd.f32 %v3748, %v5032
      %v5289 = vadd.f32 %v3749, %v5033
      %v5290 = vadd.f32 %v3750, %v5034
      %v5291 = vadd.f32 %v3751, %v5035
      %v5292 = vadd.f32 %v3752, %v5036
      %v5293 = vadd.f32 %v3753, %v5037
      %v5294 = vadd.f32 %v3754, %v5038
      %v5295 = vadd.f32 %v3755, %v5039
      %v5296 = vadd.f32 %v3756, %v5040
      %v5297 = vadd.f32 %v3757, %v5041
      %v5298 = vadd.f32 %v3758, %v5042
      %v5299 = vadd.f32 %v3759, %v5043
      %v5300 = vadd.f32 %v3760, %v5044
      %v5301 = vadd.f32 %v3761, %v5045
      %v5302 = vadd.f32 %v3762, %v5046
      %v5303 = vadd.f32 %v3763, %v5047
      %v5304 = vadd.f32 %v3764, %v5048
      %v5305 = vadd.f32 %v3765, %v5049
      %v5306 = vadd.f32 %v3766, %v5050
      %v5307 = vadd.f32 %v3767, %v5051
      %v5308 = vadd.f32 %v3768, %v5052
      %v5309 = vadd.f32 %v3769, %v5053
      %v5310 = vadd.f32 %v3770, %v5054
      %v5311 = vadd.f32 %v3771, %v5055
      %v5312 = vadd.f32 %v3772, %v5056
      %v5313 = vadd.f32 %v3773, %v5057
      %v5314 = vadd.f32 %v3774, %v5058
      %v5315 = vadd.f32 %v3775, %v5059
      %v5316 = vadd.f32 %v3776, %v5060
      %v5317 = vadd.f32 %v3777, %v5061
      %v5318 = vadd.f32 %v3778, %v5062
      %v5319 = vadd.f32 %v3779, %v5063
      %v5320 = vadd.f32 %v3780, %v5064
      %v5321 = vadd.f32 %v3781, %v5065
      %v5322 = vadd.f32 %v3782, %v5066
      %v5323 = vadd.f32 %v3783, %v5067
      %v5324 = vadd.f32 %v3784, %v5068
      %v5325 = vadd.f32 %v3785, %v5069
      %v5326 = vadd.f32 %v3786, %v5070
      %v5327 = vadd.f32 %v3787, %v5071
      %v5328 = vadd.f32 %v3788, %v5072
      %v5329 = vadd.f32 %v3789, %v5073
      %v5330 = vadd.f32 %v3790, %v5074
      %v5331 = vadd.f32 %v3791, %v5075
      %v5332 = vadd.f32 %v3792, %v5076
      %v5333 = vadd.f32 %v3793, %v5077
      %v5334 = vadd.f32 %v3794, %v5078
      %v5335 = vadd.f32 %v3795, %v5079
      %v5336 = vadd.f32 %v3796, %v5080
      %v5337 = vadd.f32 %v3797, %v5081
      %v5338 = vadd.f32 %v3798, %v5082
      %v5339 = vadd.f32 %v3799, %v5083
      %v5340 = vadd.f32 %v3800, %v5084
      %v5341 = vadd.f32 %v3801, %v5085
      %v5342 = vadd.f32 %v3802, %v5086
      %v5343 = vadd.f32 %v3803, %v5087
      %v5344 = vadd.f32 %v3804, %v5088
      %v5345 = vadd.f32 %v3805, %v5089
      %v5346 = vadd.f32 %v3806, %v5090
      %v5347 = vadd.f32 %v3807, %v5091
      %v5348 = vadd.f32 %v3808, %v5092
      %v5349 = vadd.f32 %v3809, %v5093
      %v5350 = vadd.f32 %v3810, %v5094
      %v5351 = vadd.f32 %v3811, %v5095
      %v5352 = vadd.f32 %v3812, %v5096
      %v5353 = vadd.f32 %v3813, %v5097
      %v5354 = vadd.f32 %v3814, %v5098
      %v5355 = vadd.f32 %v3815, %v5099
      %v5356 = vadd.f32 %v3816, %v5100
      %v5357 = vadd.f32 %v3817, %v5101
      %v5358 = vadd.f32 %v3818, %v5102
      %v5359 = vadd.f32 %v3819, %v5103
      %v5360 = vadd.f32 %v3820, %v5104
      %v5361 = vadd.f32 %v3821, %v5105
      %v5362 = vadd.f32 %v3822, %v5106
      %v5363 = vadd.f32 %v3823, %v5107
      %v5364 = vadd.f32 %v3824, %v5108
      %v5365 = vadd.f32 %v3825, %v5109
      %v5366 = vadd.f32 %v3826, %v5110
      %v5367 = vadd.f32 %v3827, %v5111
      %v5368 = vadd.f32 %v3828, %v5112
      %v5369 = vadd.f32 %v3829, %v5113
      %v5370 = vadd.f32 %v3830, %v5114
      %v5371 = vadd.f32 %v3831, %v5115
      %v5372 = vadd.f32 %v3832, %v5116
      %v5373 = vadd.f32 %v3833, %v5117
      %v5374 = vadd.f32 %v3834, %v5118
      %v5375 = vadd.f32 %v3835, %v5119
      %v5376 = vadd.f32 %v3836, %v5120
      %v5377 = vadd.f32 %v3837, %v5121
      %v5378 = vadd.f32 %v3838, %v5122
      %v5379 = vadd.f32 %v3839, %v5123
      %v5380 = vadd.f32 %v3840, %v5124
      %v5381 = vadd.f32 %v3841, %v5125
      %v5382 = vadd.f32 %v3842, %v5126
      %v5383 = vadd.f32 %v3843, %v5127
      %v5384 = vadd.f32 %v3844, %v5128
      %v5385 = vadd.f32 %v3845, %v5129
      %v5386 = vadd.f32 %v3846, %v5130
      %v5387 = vadd.f32 %v3847, %v5131
      %v5388 = vadd.f32 %v3848, %v5132
      %v5389 = vadd.f32 %v3849, %v5133
      %v5390 = vadd.f32 %v3850, %v5134
      %v5391 = vadd.f32 %v3851, %v5135
      %v5392 = vadd.f32 %v3852, %v5136
      %v5393 = vadd.f32 %v3853, %v5137
      %v5394 = vadd.f32 %v3854, %v5138
      %v5395 = vadd.f32 %v3855, %v5139
      %v5396 = vadd.f32 %v3856, %v5140
      %v5397 = vadd.f32 %v3857, %v5141
      %v5398 = vadd.f32 %v3858, %v5142
      %v5399 = vadd.f32 %v3859, %v5143
      %v5400 = vadd.f32 %v3860, %v5144
      %v5401 = vadd.f32 %v3861, %v5145
      %v5402 = vadd.f32 %v3862, %v5146
      %v5403 = vadd.f32 %v3863, %v5147
      %v5404 = vadd.f32 %v3864, %v5148
      %v5405 = vadd.f32 %v3865, %v5149
      %v5406 = vadd.f32 %v3866, %v5150
      %v5407 = vadd.f32 %v3867, %v5151
      %v5408 = vadd.f32 %v3868, %v5152
      %v5409 = vadd.f32 %v3869, %v5153
      %v5410 = vadd.f32 %v3870, %v5154
      %v5411 = vadd.f32 %v3871, %v5155
      %v5412 = vadd.f32 %v3872, %v5156
      %v5413 = vadd.f32 %v3873, %v5157
      %v5414 = vadd.f32 %v3874, %v5158
      %v5415 = vadd.f32 %v3875, %v5159
      %v5416 = vadd.f32 %v3876, %v5160
      %v5417 = vadd.f32 %v3877, %v5161
      %v5418 = vadd.f32 %v3878, %v5162
      %v5419 = vadd.f32 %v3879, %v5163
      %v5420 = vadd.f32 %v3880, %v5164
      %v5421 = vadd.f32 %v3881, %v5165
      %v5422 = vadd.f32 %v3882, %v5166
      %v5423 = vadd.f32 %v3883, %v5167
      %v5424 = vadd.f32 %v3884, %v5168
      %v5425 = vadd.f32 %v3885, %v5169
      %v5426 = vadd.f32 %v3886, %v5170
      %v5427 = vadd.f32 %v3887, %v5171
      %v5428 = vadd.f32 %v3888, %v5172
      %v5429 = vadd.f32 %v3889, %v5173
      %v5430 = vadd.f32 %v3890, %v5174
      %v5431 = vadd.f32 %v3891, %v5175
      %v5432 = vadd.f32 %v3892, %v5176
      %v5433 = vadd.f32 %v3893, %v5177
      %v5434 = vadd.f32 %v3894, %v5178
      %v5435 = vadd.f32 %v3895, %v5179
      %v5436 = vadd.f32 %v3896, %v5180
      %v5437 = vadd.f32 %v3897, %v5181
      %v5438 = vadd.f32 %v3898, %v5182
      %v5439 = vadd.f32 %v3899, %v5183
      %v5440 = vadd.f32 %v3900, %v5184
      %v5441 = vadd.f32 %v3901, %v5185
      %v5442 = vadd.f32 %v3902, %v5186
      %v5443 = vadd.f32 %v3903, %v5187
      %v5444 = vadd.f32 %v3904, %v5188
      %v5445 = vadd.f32 %v3905, %v5189
      %v5446 = vadd.f32 %v3906, %v5190
      %v5447 = vadd.f32 %v3907, %v5191
      %v5448 = vadd.f32 %v3908, %v5192
      %v5449 = vadd.f32 %v3909, %v5193
      %v5450 = vadd.f32 %v3910, %v5194
      %v5451 = vadd.f32 %v3911, %v5195
      %v5452 = vadd.f32 %v3912, %v5196
      %v5453 = vadd.f32 %v3913, %v5197
      %v5454 = vadd.f32 %v3914, %v5198
      %v5455 = vadd.f32 %v3915, %v5199
      %v5456 = vadd.f32 %v3916, %v5200
      %v5457 = vadd.f32 %v3917, %v5201
      %v5458 = vadd.f32 %v3918, %v5202
      %v5459 = vadd.f32 %v3919, %v5203
      %v5460 = vadd.f32 %v3920, %v5204
      %v5461 = vadd.f32 %v3921, %v5205
      %v5462 = vadd.f32 %v3922, %v5206
      %v5463 = vadd.f32 %v3923, %v5207
      %v5464 = vadd.f32 %v3924, %v5208
      %v5465 = vadd.f32 %v3925, %v5209
      %v5466 = vadd.f32 %v3926, %v5210
      %v5467 = vadd.f32 %v3927, %v5211
      %v5468 = vadd.f32 %v3928, %v5212
      %v5469 = vadd.f32 %v3929, %v5213
      %v5470 = vadd.f32 %v3930, %v5214
      %v5471 = vadd.f32 %v3931, %v5215
      %v5472 = vadd.f32 %v3932, %v5216
      %v5473 = vadd.f32 %v3933, %v5217
      %v5474 = vadd.f32 %v3934, %v5218
      %v5475 = vadd.f32 %v3935, %v5219
      %v5476 = vadd.f32 %v3936, %v5220
      %v5477 = vadd.f32 %v3937, %v5221
      %v5478 = vadd.f32 %v3938, %v5222
      %v5479 = vadd.f32 %v3939, %v5223
      %v5480 = vadd.f32 %v3940, %v5224
      %v5481 = vadd.f32 %v3941, %v5225
      %v5482 = vadd.f32 %v3942, %v5226
      %v5483 = vadd.f32 %v3943, %v5227
      %v5484 = vadd.f32 %v3944, %v5228
      %v5485 = vadd.f32 %v3945, %v5229
      %v5486 = vadd.f32 %v3946, %v5230
      %v5487 = vadd.f32 %v3947, %v5231
      %v5488 = vadd.f32 %v3948, %v5232
      %v5489 = vadd.f32 %v3949, %v5233
      %v5490 = vadd.f32 %v3950, %v5234
      %v5491 = vadd.f32 %v3951, %v5235
      %v5492 = vadd.f32 %v3952, %v5236
      %v5493 = vadd.f32 %v3953, %v5237
      %v5494 = vadd.f32 %v3954, %v5238
      %v5495 = vadd.f32 %v3955, %v5239
      %v5496 = vadd.f32 %v3956, %v5240
      %v5497 = vadd.f32 %v3957, %v5241
      %v5498 = vadd.f32 %v3958, %v5242
      %v5499 = vadd.f32 %v3959, %v5243
      %v5501 = vlaneseq
      %v5502 = vshrl.u32 %v5501, 7
      %v5503 = vsub.s32 0, %v5502
      %v5504 = vrot.slane %v621, %v5503
      %v5506 = vmul.f32 %v5244, %v5504
      %v5507 = vmul.f32 %v5245, %v5504
      %v5508 = vmul.f32 %v5246, %v5504
      %v5509 = vmul.f32 %v5247, %v5504
      %v5510 = vmul.f32 %v5248, %v5504
      %v5511 = vmul.f32 %v5249, %v5504
      %v5512 = vmul.f32 %v5250, %v5504
      %v5513 = vmul.f32 %v5251, %v5504
      %v5514 = vmul.f32 %v5252, %v5504
      %v5515 = vmul.f32 %v5253, %v5504
      %v5516 = vmul.f32 %v5254, %v5504
      %v5517 = vmul.f32 %v5255, %v5504
      %v5518 = vmul.f32 %v5256, %v5504
      %v5519 = vmul.f32 %v5257, %v5504
      %v5520 = vmul.f32 %v5258, %v5504
      %v5521 = vmul.f32 %v5259, %v5504
      %v5522 = vmul.f32 %v5260, %v5504
      %v5523 = vmul.f32 %v5261, %v5504
      %v5524 = vmul.f32 %v5262, %v5504
      %v5525 = vmul.f32 %v5263, %v5504
      %v5526 = vmul.f32 %v5264, %v5504
      %v5527 = vmul.f32 %v5265, %v5504
      %v5528 = vmul.f32 %v5266, %v5504
      %v5529 = vmul.f32 %v5267, %v5504
      %v5530 = vmul.f32 %v5268, %v5504
      %v5531 = vmul.f32 %v5269, %v5504
      %v5532 = vmul.f32 %v5270, %v5504
      %v5533 = vmul.f32 %v5271, %v5504
      %v5534 = vmul.f32 %v5272, %v5504
      %v5535 = vmul.f32 %v5273, %v5504
      %v5536 = vmul.f32 %v5274, %v5504
      %v5537 = vmul.f32 %v5275, %v5504
      %v5538 = vmul.f32 %v5276, %v5504
      %v5539 = vmul.f32 %v5277, %v5504
      %v5540 = vmul.f32 %v5278, %v5504
      %v5541 = vmul.f32 %v5279, %v5504
      %v5542 = vmul.f32 %v5280, %v5504
      %v5543 = vmul.f32 %v5281, %v5504
      %v5544 = vmul.f32 %v5282, %v5504
      %v5545 = vmul.f32 %v5283, %v5504
      %v5546 = vmul.f32 %v5284, %v5504
      %v5547 = vmul.f32 %v5285, %v5504
      %v5548 = vmul.f32 %v5286, %v5504
      %v5549 = vmul.f32 %v5287, %v5504
      %v5550 = vmul.f32 %v5288, %v5504
      %v5551 = vmul.f32 %v5289, %v5504
      %v5552 = vmul.f32 %v5290, %v5504
      %v5553 = vmul.f32 %v5291, %v5504
      %v5554 = vmul.f32 %v5292, %v5504
      %v5555 = vmul.f32 %v5293, %v5504
      %v5556 = vmul.f32 %v5294, %v5504
      %v5557 = vmul.f32 %v5295, %v5504
      %v5558 = vmul.f32 %v5296, %v5504
      %v5559 = vmul.f32 %v5297, %v5504
      %v5560 = vmul.f32 %v5298, %v5504
      %v5561 = vmul.f32 %v5299, %v5504
      %v5562 = vmul.f32 %v5300, %v5504
      %v5563 = vmul.f32 %v5301, %v5504
      %v5564 = vmul.f32 %v5302, %v5504
      %v5565 = vmul.f32 %v5303, %v5504
      %v5566 = vmul.f32 %v5304, %v5504
      %v5567 = vmul.f32 %v5305, %v5504
      %v5568 = vmul.f32 %v5306, %v5504
      %v5569 = vmul.f32 %v5307, %v5504
      %v5570 = vmul.f32 %v5308, %v5504
      %v5571 = vmul.f32 %v5309, %v5504
      %v5572 = vmul.f32 %v5310, %v5504
      %v5573 = vmul.f32 %v5311, %v5504
      %v5574 = vmul.f32 %v5312, %v5504
      %v5575 = vmul.f32 %v5313, %v5504
      %v5576 = vmul.f32 %v5314, %v5504
      %v5577 = vmul.f32 %v5315, %v5504
      %v5578 = vmul.f32 %v5316, %v5504
      %v5579 = vmul.f32 %v5317, %v5504
      %v5580 = vmul.f32 %v5318, %v5504
      %v5581 = vmul.f32 %v5319, %v5504
      %v5582 = vmul.f32 %v5320, %v5504
      %v5583 = vmul.f32 %v5321, %v5504
      %v5584 = vmul.f32 %v5322, %v5504
      %v5585 = vmul.f32 %v5323, %v5504
      %v5586 = vmul.f32 %v5324, %v5504
      %v5587 = vmul.f32 %v5325, %v5504
      %v5588 = vmul.f32 %v5326, %v5504
      %v5589 = vmul.f32 %v5327, %v5504
      %v5590 = vmul.f32 %v5328, %v5504
      %v5591 = vmul.f32 %v5329, %v5504
      %v5592 = vmul.f32 %v5330, %v5504
      %v5593 = vmul.f32 %v5331, %v5504
      %v5594 = vmul.f32 %v5332, %v5504
      %v5595 = vmul.f32 %v5333, %v5504
      %v5596 = vmul.f32 %v5334, %v5504
      %v5597 = vmul.f32 %v5335, %v5504
      %v5598 = vmul.f32 %v5336, %v5504
      %v5599 = vmul.f32 %v5337, %v5504
      %v5600 = vmul.f32 %v5338, %v5504
      %v5601 = vmul.f32 %v5339, %v5504
      %v5602 = vmul.f32 %v5340, %v5504
      %v5603 = vmul.f32 %v5341, %v5504
      %v5604 = vmul.f32 %v5342, %v5504
      %v5605 = vmul.f32 %v5343, %v5504
      %v5606 = vmul.f32 %v5344, %v5504
      %v5607 = vmul.f32 %v5345, %v5504
      %v5608 = vmul.f32 %v5346, %v5504
      %v5609 = vmul.f32 %v5347, %v5504
      %v5610 = vmul.f32 %v5348, %v5504
      %v5611 = vmul.f32 %v5349, %v5504
      %v5612 = vmul.f32 %v5350, %v5504
      %v5613 = vmul.f32 %v5351, %v5504
      %v5614 = vmul.f32 %v5352, %v5504
      %v5615 = vmul.f32 %v5353, %v5504
      %v5616 = vmul.f32 %v5354, %v5504
      %v5617 = vmul.f32 %v5355, %v5504
      %v5618 = vmul.f32 %v5356, %v5504
      %v5619 = vmul.f32 %v5357, %v5504
      %v5620 = vmul.f32 %v5358, %v5504
      %v5621 = vmul.f32 %v5359, %v5504
      %v5622 = vmul.f32 %v5360, %v5504
      %v5623 = vmul.f32 %v5361, %v5504
      %v5624 = vmul.f32 %v5362, %v5504
      %v5625 = vmul.f32 %v5363, %v5504
      %v5626 = vmul.f32 %v5364, %v5504
      %v5627 = vmul.f32 %v5365, %v5504
      %v5628 = vmul.f32 %v5366, %v5504
      %v5629 = vmul.f32 %v5367, %v5504
      %v5630 = vmul.f32 %v5368, %v5504
      %v5631 = vmul.f32 %v5369, %v5504
      %v5632 = vmul.f32 %v5370, %v5504
      %v5633 = vmul.f32 %v5371, %v5504
      %v5634 = vmul.f32 %v5372, %v5504
      %v5635 = vmul.f32 %v5373, %v5504
      %v5636 = vmul.f32 %v5374, %v5504
      %v5637 = vmul.f32 %v5375, %v5504
      %v5638 = vmul.f32 %v5376, %v5504
      %v5639 = vmul.f32 %v5377, %v5504
      %v5640 = vmul.f32 %v5378, %v5504
      %v5641 = vmul.f32 %v5379, %v5504
      %v5642 = vmul.f32 %v5380, %v5504
      %v5643 = vmul.f32 %v5381, %v5504
      %v5644 = vmul.f32 %v5382, %v5504
      %v5645 = vmul.f32 %v5383, %v5504
      %v5646 = vmul.f32 %v5384, %v5504
      %v5647 = vmul.f32 %v5385, %v5504
      %v5648 = vmul.f32 %v5386, %v5504
      %v5649 = vmul.f32 %v5387, %v5504
      %v5650 = vmul.f32 %v5388, %v5504
      %v5651 = vmul.f32 %v5389, %v5504
      %v5652 = vmul.f32 %v5390, %v5504
      %v5653 = vmul.f32 %v5391, %v5504
      %v5654 = vmul.f32 %v5392, %v5504
      %v5655 = vmul.f32 %v5393, %v5504
      %v5656 = vmul.f32 %v5394, %v5504
      %v5657 = vmul.f32 %v5395, %v5504
      %v5658 = vmul.f32 %v5396, %v5504
      %v5659 = vmul.f32 %v5397, %v5504
      %v5660 = vmul.f32 %v5398, %v5504
      %v5661 = vmul.f32 %v5399, %v5504
      %v5662 = vmul.f32 %v5400, %v5504
      %v5663 = vmul.f32 %v5401, %v5504
      %v5664 = vmul.f32 %v5402, %v5504
      %v5665 = vmul.f32 %v5403, %v5504
      %v5666 = vmul.f32 %v5404, %v5504
      %v5667 = vmul.f32 %v5405, %v5504
      %v5668 = vmul.f32 %v5406, %v5504
      %v5669 = vmul.f32 %v5407, %v5504
      %v5670 = vmul.f32 %v5408, %v5504
      %v5671 = vmul.f32 %v5409, %v5504
      %v5672 = vmul.f32 %v5410, %v5504
      %v5673 = vmul.f32 %v5411, %v5504
      %v5674 = vmul.f32 %v5412, %v5504
      %v5675 = vmul.f32 %v5413, %v5504
      %v5676 = vmul.f32 %v5414, %v5504
      %v5677 = vmul.f32 %v5415, %v5504
      %v5678 = vmul.f32 %v5416, %v5504
      %v5679 = vmul.f32 %v5417, %v5504
      %v5680 = vmul.f32 %v5418, %v5504
      %v5681 = vmul.f32 %v5419, %v5504
      %v5682 = vmul.f32 %v5420, %v5504
      %v5683 = vmul.f32 %v5421, %v5504
      %v5684 = vmul.f32 %v5422, %v5504
      %v5685 = vmul.f32 %v5423, %v5504
      %v5686 = vmul.f32 %v5424, %v5504
      %v5687 = vmul.f32 %v5425, %v5504
      %v5688 = vmul.f32 %v5426, %v5504
      %v5689 = vmul.f32 %v5427, %v5504
      %v5690 = vmul.f32 %v5428, %v5504
      %v5691 = vmul.f32 %v5429, %v5504
      %v5692 = vmul.f32 %v5430, %v5504
      %v5693 = vmul.f32 %v5431, %v5504
      %v5694 = vmul.f32 %v5432, %v5504
      %v5695 = vmul.f32 %v5433, %v5504
      %v5696 = vmul.f32 %v5434, %v5504
      %v5697 = vmul.f32 %v5435, %v5504
      %v5698 = vmul.f32 %v5436, %v5504
      %v5699 = vmul.f32 %v5437, %v5504
      %v5700 = vmul.f32 %v5438, %v5504
      %v5701 = vmul.f32 %v5439, %v5504
      %v5702 = vmul.f32 %v5440, %v5504
      %v5703 = vmul.f32 %v5441, %v5504
      %v5704 = vmul.f32 %v5442, %v5504
      %v5705 = vmul.f32 %v5443, %v5504
      %v5706 = vmul.f32 %v5444, %v5504
      %v5707 = vmul.f32 %v5445, %v5504
      %v5708 = vmul.f32 %v5446, %v5504
      %v5709 = vmul.f32 %v5447, %v5504
      %v5710 = vmul.f32 %v5448, %v5504
      %v5711 = vmul.f32 %v5449, %v5504
      %v5712 = vmul.f32 %v5450, %v5504
      %v5713 = vmul.f32 %v5451, %v5504
      %v5714 = vmul.f32 %v5452, %v5504
      %v5715 = vmul.f32 %v5453, %v5504
      %v5716 = vmul.f32 %v5454, %v5504
      %v5717 = vmul.f32 %v5455, %v5504
      %v5718 = vmul.f32 %v5456, %v5504
      %v5719 = vmul.f32 %v5457, %v5504
      %v5720 = vmul.f32 %v5458, %v5504
      %v5721 = vmul.f32 %v5459, %v5504
      %v5722 = vmul.f32 %v5460, %v5504
      %v5723 = vmul.f32 %v5461, %v5504
      %v5724 = vmul.f32 %v5462, %v5504
      %v5725 = vmul.f32 %v5463, %v5504
      %v5726 = vmul.f32 %v5464, %v5504
      %v5727 = vmul.f32 %v5465, %v5504
      %v5728 = vmul.f32 %v5466, %v5504
      %v5729 = vmul.f32 %v5467, %v5504
      %v5730 = vmul.f32 %v5468, %v5504
      %v5731 = vmul.f32 %v5469, %v5504
      %v5732 = vmul.f32 %v5470, %v5504
      %v5733 = vmul.f32 %v5471, %v5504
      %v5734 = vmul.f32 %v5472, %v5504
      %v5735 = vmul.f32 %v5473, %v5504
      %v5736 = vmul.f32 %v5474, %v5504
      %v5737 = vmul.f32 %v5475, %v5504
      %v5738 = vmul.f32 %v5476, %v5504
      %v5739 = vmul.f32 %v5477, %v5504
      %v5740 = vmul.f32 %v5478, %v5504
      %v5741 = vmul.f32 %v5479, %v5504
      %v5742 = vmul.f32 %v5480, %v5504
      %v5743 = vmul.f32 %v5481, %v5504
      %v5744 = vmul.f32 %v5482, %v5504
      %v5745 = vmul.f32 %v5483, %v5504
      %v5746 = vmul.f32 %v5484, %v5504
      %v5747 = vmul.f32 %v5485, %v5504
      %v5748 = vmul.f32 %v5486, %v5504
      %v5749 = vmul.f32 %v5487, %v5504
      %v5750 = vmul.f32 %v5488, %v5504
      %v5751 = vmul.f32 %v5489, %v5504
      %v5752 = vmul.f32 %v5490, %v5504
      %v5753 = vmul.f32 %v5491, %v5504
      %v5754 = vmul.f32 %v5492, %v5504
      %v5755 = vmul.f32 %v5493, %v5504
      %v5756 = vmul.f32 %v5494, %v5504
      %v5757 = vmul.f32 %v5495, %v5504
      %v5758 = vmul.f32 %v5496, %v5504
      %v5759 = vmul.f32 %v5497, %v5504
      %v5760 = vmul.f32 %v5498, %v5504
      %v5761 = vmul.f32 %v5499, %v5504
      %v5763 = vlaneseq
      %v5764 = vshrl.u32 %v5763, 7
      %v5765 = vsub.s32 0, %v5764
      %v5766 = vrot.slane %v622, %v5765
      %v5768 = vadd.f32 %v5506, %v5766
      %v5769 = vadd.f32 %v5507, %v5766
      %v5770 = vadd.f32 %v5508, %v5766
      %v5771 = vadd.f32 %v5509, %v5766
      %v5772 = vadd.f32 %v5510, %v5766
      %v5773 = vadd.f32 %v5511, %v5766
      %v5774 = vadd.f32 %v5512, %v5766
      %v5775 = vadd.f32 %v5513, %v5766
      %v5776 = vadd.f32 %v5514, %v5766
      %v5777 = vadd.f32 %v5515, %v5766
      %v5778 = vadd.f32 %v5516, %v5766
      %v5779 = vadd.f32 %v5517, %v5766
      %v5780 = vadd.f32 %v5518, %v5766
      %v5781 = vadd.f32 %v5519, %v5766
      %v5782 = vadd.f32 %v5520, %v5766
      %v5783 = vadd.f32 %v5521, %v5766
      %v5784 = vadd.f32 %v5522, %v5766
      %v5785 = vadd.f32 %v5523, %v5766
      %v5786 = vadd.f32 %v5524, %v5766
      %v5787 = vadd.f32 %v5525, %v5766
      %v5788 = vadd.f32 %v5526, %v5766
      %v5789 = vadd.f32 %v5527, %v5766
      %v5790 = vadd.f32 %v5528, %v5766
      %v5791 = vadd.f32 %v5529, %v5766
      %v5792 = vadd.f32 %v5530, %v5766
      %v5793 = vadd.f32 %v5531, %v5766
      %v5794 = vadd.f32 %v5532, %v5766
      %v5795 = vadd.f32 %v5533, %v5766
      %v5796 = vadd.f32 %v5534, %v5766
      %v5797 = vadd.f32 %v5535, %v5766
      %v5798 = vadd.f32 %v5536, %v5766
      %v5799 = vadd.f32 %v5537, %v5766
      %v5800 = vadd.f32 %v5538, %v5766
      %v5801 = vadd.f32 %v5539, %v5766
      %v5802 = vadd.f32 %v5540, %v5766
      %v5803 = vadd.f32 %v5541, %v5766
      %v5804 = vadd.f32 %v5542, %v5766
      %v5805 = vadd.f32 %v5543, %v5766
      %v5806 = vadd.f32 %v5544, %v5766
      %v5807 = vadd.f32 %v5545, %v5766
      %v5808 = vadd.f32 %v5546, %v5766
      %v5809 = vadd.f32 %v5547, %v5766
      %v5810 = vadd.f32 %v5548, %v5766
      %v5811 = vadd.f32 %v5549, %v5766
      %v5812 = vadd.f32 %v5550, %v5766
      %v5813 = vadd.f32 %v5551, %v5766
      %v5814 = vadd.f32 %v5552, %v5766
      %v5815 = vadd.f32 %v5553, %v5766
      %v5816 = vadd.f32 %v5554, %v5766
      %v5817 = vadd.f32 %v5555, %v5766
      %v5818 = vadd.f32 %v5556, %v5766
      %v5819 = vadd.f32 %v5557, %v5766
      %v5820 = vadd.f32 %v5558, %v5766
      %v5821 = vadd.f32 %v5559, %v5766
      %v5822 = vadd.f32 %v5560, %v5766
      %v5823 = vadd.f32 %v5561, %v5766
      %v5824 = vadd.f32 %v5562, %v5766
      %v5825 = vadd.f32 %v5563, %v5766
      %v5826 = vadd.f32 %v5564, %v5766
      %v5827 = vadd.f32 %v5565, %v5766
      %v5828 = vadd.f32 %v5566, %v5766
      %v5829 = vadd.f32 %v5567, %v5766
      %v5830 = vadd.f32 %v5568, %v5766
      %v5831 = vadd.f32 %v5569, %v5766
      %v5832 = vadd.f32 %v5570, %v5766
      %v5833 = vadd.f32 %v5571, %v5766
      %v5834 = vadd.f32 %v5572, %v5766
      %v5835 = vadd.f32 %v5573, %v5766
      %v5836 = vadd.f32 %v5574, %v5766
      %v5837 = vadd.f32 %v5575, %v5766
      %v5838 = vadd.f32 %v5576, %v5766
      %v5839 = vadd.f32 %v5577, %v5766
      %v5840 = vadd.f32 %v5578, %v5766
      %v5841 = vadd.f32 %v5579, %v5766
      %v5842 = vadd.f32 %v5580, %v5766
      %v5843 = vadd.f32 %v5581, %v5766
      %v5844 = vadd.f32 %v5582, %v5766
      %v5845 = vadd.f32 %v5583, %v5766
      %v5846 = vadd.f32 %v5584, %v5766
      %v5847 = vadd.f32 %v5585, %v5766
      %v5848 = vadd.f32 %v5586, %v5766
      %v5849 = vadd.f32 %v5587, %v5766
      %v5850 = vadd.f32 %v5588, %v5766
      %v5851 = vadd.f32 %v5589, %v5766
      %v5852 = vadd.f32 %v5590, %v5766
      %v5853 = vadd.f32 %v5591, %v5766
      %v5854 = vadd.f32 %v5592, %v5766
      %v5855 = vadd.f32 %v5593, %v5766
      %v5856 = vadd.f32 %v5594, %v5766
      %v5857 = vadd.f32 %v5595, %v5766
      %v5858 = vadd.f32 %v5596, %v5766
      %v5859 = vadd.f32 %v5597, %v5766
      %v5860 = vadd.f32 %v5598, %v5766
      %v5861 = vadd.f32 %v5599, %v5766
      %v5862 = vadd.f32 %v5600, %v5766
      %v5863 = vadd.f32 %v5601, %v5766
      %v5864 = vadd.f32 %v5602, %v5766
      %v5865 = vadd.f32 %v5603, %v5766
      %v5866 = vadd.f32 %v5604, %v5766
      %v5867 = vadd.f32 %v5605, %v5766
      %v5868 = vadd.f32 %v5606, %v5766
      %v5869 = vadd.f32 %v5607, %v5766
      %v5870 = vadd.f32 %v5608, %v5766
      %v5871 = vadd.f32 %v5609, %v5766
      %v5872 = vadd.f32 %v5610, %v5766
      %v5873 = vadd.f32 %v5611, %v5766
      %v5874 = vadd.f32 %v5612, %v5766
      %v5875 = vadd.f32 %v5613, %v5766
      %v5876 = vadd.f32 %v5614, %v5766
      %v5877 = vadd.f32 %v5615, %v5766
      %v5878 = vadd.f32 %v5616, %v5766
      %v5879 = vadd.f32 %v5617, %v5766
      %v5880 = vadd.f32 %v5618, %v5766
      %v5881 = vadd.f32 %v5619, %v5766
      %v5882 = vadd.f32 %v5620, %v5766
      %v5883 = vadd.f32 %v5621, %v5766
      %v5884 = vadd.f32 %v5622, %v5766
      %v5885 = vadd.f32 %v5623, %v5766
      %v5886 = vadd.f32 %v5624, %v5766
      %v5887 = vadd.f32 %v5625, %v5766
      %v5888 = vadd.f32 %v5626, %v5766
      %v5889 = vadd.f32 %v5627, %v5766
      %v5890 = vadd.f32 %v5628, %v5766
      %v5891 = vadd.f32 %v5629, %v5766
      %v5892 = vadd.f32 %v5630, %v5766
      %v5893 = vadd.f32 %v5631, %v5766
      %v5894 = vadd.f32 %v5632, %v5766
      %v5895 = vadd.f32 %v5633, %v5766
      %v5896 = vadd.f32 %v5634, %v5766
      %v5897 = vadd.f32 %v5635, %v5766
      %v5898 = vadd.f32 %v5636, %v5766
      %v5899 = vadd.f32 %v5637, %v5766
      %v5900 = vadd.f32 %v5638, %v5766
      %v5901 = vadd.f32 %v5639, %v5766
      %v5902 = vadd.f32 %v5640, %v5766
      %v5903 = vadd.f32 %v5641, %v5766
      %v5904 = vadd.f32 %v5642, %v5766
      %v5905 = vadd.f32 %v5643, %v5766
      %v5906 = vadd.f32 %v5644, %v5766
      %v5907 = vadd.f32 %v5645, %v5766
      %v5908 = vadd.f32 %v5646, %v5766
      %v5909 = vadd.f32 %v5647, %v5766
      %v5910 = vadd.f32 %v5648, %v5766
      %v5911 = vadd.f32 %v5649, %v5766
      %v5912 = vadd.f32 %v5650, %v5766
      %v5913 = vadd.f32 %v5651, %v5766
      %v5914 = vadd.f32 %v5652, %v5766
      %v5915 = vadd.f32 %v5653, %v5766
      %v5916 = vadd.f32 %v5654, %v5766
      %v5917 = vadd.f32 %v5655, %v5766
      %v5918 = vadd.f32 %v5656, %v5766
      %v5919 = vadd.f32 %v5657, %v5766
      %v5920 = vadd.f32 %v5658, %v5766
      %v5921 = vadd.f32 %v5659, %v5766
      %v5922 = vadd.f32 %v5660, %v5766
      %v5923 = vadd.f32 %v5661, %v5766
      %v5924 = vadd.f32 %v5662, %v5766
      %v5925 = vadd.f32 %v5663, %v5766
      %v5926 = vadd.f32 %v5664, %v5766
      %v5927 = vadd.f32 %v5665, %v5766
      %v5928 = vadd.f32 %v5666, %v5766
      %v5929 = vadd.f32 %v5667, %v5766
      %v5930 = vadd.f32 %v5668, %v5766
      %v5931 = vadd.f32 %v5669, %v5766
      %v5932 = vadd.f32 %v5670, %v5766
      %v5933 = vadd.f32 %v5671, %v5766
      %v5934 = vadd.f32 %v5672, %v5766
      %v5935 = vadd.f32 %v5673, %v5766
      %v5936 = vadd.f32 %v5674, %v5766
      %v5937 = vadd.f32 %v5675, %v5766
      %v5938 = vadd.f32 %v5676, %v5766
      %v5939 = vadd.f32 %v5677, %v5766
      %v5940 = vadd.f32 %v5678, %v5766
      %v5941 = vadd.f32 %v5679, %v5766
      %v5942 = vadd.f32 %v5680, %v5766
      %v5943 = vadd.f32 %v5681, %v5766
      %v5944 = vadd.f32 %v5682, %v5766
      %v5945 = vadd.f32 %v5683, %v5766
      %v5946 = vadd.f32 %v5684, %v5766
      %v5947 = vadd.f32 %v5685, %v5766
      %v5948 = vadd.f32 %v5686, %v5766
      %v5949 = vadd.f32 %v5687, %v5766
      %v5950 = vadd.f32 %v5688, %v5766
      %v5951 = vadd.f32 %v5689, %v5766
      %v5952 = vadd.f32 %v5690, %v5766
      %v5953 = vadd.f32 %v5691, %v5766
      %v5954 = vadd.f32 %v5692, %v5766
      %v5955 = vadd.f32 %v5693, %v5766
      %v5956 = vadd.f32 %v5694, %v5766
      %v5957 = vadd.f32 %v5695, %v5766
      %v5958 = vadd.f32 %v5696, %v5766
      %v5959 = vadd.f32 %v5697, %v5766
      %v5960 = vadd.f32 %v5698, %v5766
      %v5961 = vadd.f32 %v5699, %v5766
      %v5962 = vadd.f32 %v5700, %v5766
      %v5963 = vadd.f32 %v5701, %v5766
      %v5964 = vadd.f32 %v5702, %v5766
      %v5965 = vadd.f32 %v5703, %v5766
      %v5966 = vadd.f32 %v5704, %v5766
      %v5967 = vadd.f32 %v5705, %v5766
      %v5968 = vadd.f32 %v5706, %v5766
      %v5969 = vadd.f32 %v5707, %v5766
      %v5970 = vadd.f32 %v5708, %v5766
      %v5971 = vadd.f32 %v5709, %v5766
      %v5972 = vadd.f32 %v5710, %v5766
      %v5973 = vadd.f32 %v5711, %v5766
      %v5974 = vadd.f32 %v5712, %v5766
      %v5975 = vadd.f32 %v5713, %v5766
      %v5976 = vadd.f32 %v5714, %v5766
      %v5977 = vadd.f32 %v5715, %v5766
      %v5978 = vadd.f32 %v5716, %v5766
      %v5979 = vadd.f32 %v5717, %v5766
      %v5980 = vadd.f32 %v5718, %v5766
      %v5981 = vadd.f32 %v5719, %v5766
      %v5982 = vadd.f32 %v5720, %v5766
      %v5983 = vadd.f32 %v5721, %v5766
      %v5984 = vadd.f32 %v5722, %v5766
      %v5985 = vadd.f32 %v5723, %v5766
      %v5986 = vadd.f32 %v5724, %v5766
      %v5987 = vadd.f32 %v5725, %v5766
      %v5988 = vadd.f32 %v5726, %v5766
      %v5989 = vadd.f32 %v5727, %v5766
      %v5990 = vadd.f32 %v5728, %v5766
      %v5991 = vadd.f32 %v5729, %v5766
      %v5992 = vadd.f32 %v5730, %v5766
      %v5993 = vadd.f32 %v5731, %v5766
      %v5994 = vadd.f32 %v5732, %v5766
      %v5995 = vadd.f32 %v5733, %v5766
      %v5996 = vadd.f32 %v5734, %v5766
      %v5997 = vadd.f32 %v5735, %v5766
      %v5998 = vadd.f32 %v5736, %v5766
      %v5999 = vadd.f32 %v5737, %v5766
      %v6000 = vadd.f32 %v5738, %v5766
      %v6001 = vadd.f32 %v5739, %v5766
      %v6002 = vadd.f32 %v5740, %v5766
      %v6003 = vadd.f32 %v5741, %v5766
      %v6004 = vadd.f32 %v5742, %v5766
      %v6005 = vadd.f32 %v5743, %v5766
      %v6006 = vadd.f32 %v5744, %v5766
      %v6007 = vadd.f32 %v5745, %v5766
      %v6008 = vadd.f32 %v5746, %v5766
      %v6009 = vadd.f32 %v5747, %v5766
      %v6010 = vadd.f32 %v5748, %v5766
      %v6011 = vadd.f32 %v5749, %v5766
      %v6012 = vadd.f32 %v5750, %v5766
      %v6013 = vadd.f32 %v5751, %v5766
      %v6014 = vadd.f32 %v5752, %v5766
      %v6015 = vadd.f32 %v5753, %v5766
      %v6016 = vadd.f32 %v5754, %v5766
      %v6017 = vadd.f32 %v5755, %v5766
      %v6018 = vadd.f32 %v5756, %v5766
      %v6019 = vadd.f32 %v5757, %v5766
      %v6020 = vadd.f32 %v5758, %v5766
      %v6021 = vadd.f32 %v5759, %v5766
      %v6022 = vadd.f32 %v5760, %v5766
      %v6023 = vadd.f32 %v5761, %v5766
      %v6024 = vmax.f32 %v5768, 0.0
      %v6025 = vmax.f32 %v5769, 0.0
      %v6026 = vmax.f32 %v5770, 0.0
      %v6027 = vmax.f32 %v5771, 0.0
      %v6028 = vmax.f32 %v5772, 0.0
      %v6029 = vmax.f32 %v5773, 0.0
      %v6030 = vmax.f32 %v5774, 0.0
      %v6031 = vmax.f32 %v5775, 0.0
      %v6032 = vmax.f32 %v5776, 0.0
      %v6033 = vmax.f32 %v5777, 0.0
      %v6034 = vmax.f32 %v5778, 0.0
      %v6035 = vmax.f32 %v5779, 0.0
      %v6036 = vmax.f32 %v5780, 0.0
      %v6037 = vmax.f32 %v5781, 0.0
      %v6038 = vmax.f32 %v5782, 0.0
      %v6039 = vmax.f32 %v5783, 0.0
      %v6040 = vmax.f32 %v5784, 0.0
      %v6041 = vmax.f32 %v5785, 0.0
      %v6042 = vmax.f32 %v5786, 0.0
      %v6043 = vmax.f32 %v5787, 0.0
      %v6044 = vmax.f32 %v5788, 0.0
      %v6045 = vmax.f32 %v5789, 0.0
      %v6046 = vmax.f32 %v5790, 0.0
      %v6047 = vmax.f32 %v5791, 0.0
      %v6048 = vmax.f32 %v5792, 0.0
      %v6049 = vmax.f32 %v5793, 0.0
      %v6050 = vmax.f32 %v5794, 0.0
      %v6051 = vmax.f32 %v5795, 0.0
      %v6052 = vmax.f32 %v5796, 0.0
      %v6053 = vmax.f32 %v5797, 0.0
      %v6054 = vmax.f32 %v5798, 0.0
      %v6055 = vmax.f32 %v5799, 0.0
      %v6056 = vmax.f32 %v5800, 0.0
      %v6057 = vmax.f32 %v5801, 0.0
      %v6058 = vmax.f32 %v5802, 0.0
      %v6059 = vmax.f32 %v5803, 0.0
      %v6060 = vmax.f32 %v5804, 0.0
      %v6061 = vmax.f32 %v5805, 0.0
      %v6062 = vmax.f32 %v5806, 0.0
      %v6063 = vmax.f32 %v5807, 0.0
      %v6064 = vmax.f32 %v5808, 0.0
      %v6065 = vmax.f32 %v5809, 0.0
      %v6066 = vmax.f32 %v5810, 0.0
      %v6067 = vmax.f32 %v5811, 0.0
      %v6068 = vmax.f32 %v5812, 0.0
      %v6069 = vmax.f32 %v5813, 0.0
      %v6070 = vmax.f32 %v5814, 0.0
      %v6071 = vmax.f32 %v5815, 0.0
      %v6072 = vmax.f32 %v5816, 0.0
      %v6073 = vmax.f32 %v5817, 0.0
      %v6074 = vmax.f32 %v5818, 0.0
      %v6075 = vmax.f32 %v5819, 0.0
      %v6076 = vmax.f32 %v5820, 0.0
      %v6077 = vmax.f32 %v5821, 0.0
      %v6078 = vmax.f32 %v5822, 0.0
      %v6079 = vmax.f32 %v5823, 0.0
      %v6080 = vmax.f32 %v5824, 0.0
      %v6081 = vmax.f32 %v5825, 0.0
      %v6082 = vmax.f32 %v5826, 0.0
      %v6083 = vmax.f32 %v5827, 0.0
      %v6084 = vmax.f32 %v5828, 0.0
      %v6085 = vmax.f32 %v5829, 0.0
      %v6086 = vmax.f32 %v5830, 0.0
      %v6087 = vmax.f32 %v5831, 0.0
      %v6088 = vmax.f32 %v5832, 0.0
      %v6089 = vmax.f32 %v5833, 0.0
      %v6090 = vmax.f32 %v5834, 0.0
      %v6091 = vmax.f32 %v5835, 0.0
      %v6092 = vmax.f32 %v5836, 0.0
      %v6093 = vmax.f32 %v5837, 0.0
      %v6094 = vmax.f32 %v5838, 0.0
      %v6095 = vmax.f32 %v5839, 0.0
      %v6096 = vmax.f32 %v5840, 0.0
      %v6097 = vmax.f32 %v5841, 0.0
      %v6098 = vmax.f32 %v5842, 0.0
      %v6099 = vmax.f32 %v5843, 0.0
      %v6100 = vmax.f32 %v5844, 0.0
      %v6101 = vmax.f32 %v5845, 0.0
      %v6102 = vmax.f32 %v5846, 0.0
      %v6103 = vmax.f32 %v5847, 0.0
      %v6104 = vmax.f32 %v5848, 0.0
      %v6105 = vmax.f32 %v5849, 0.0
      %v6106 = vmax.f32 %v5850, 0.0
      %v6107 = vmax.f32 %v5851, 0.0
      %v6108 = vmax.f32 %v5852, 0.0
      %v6109 = vmax.f32 %v5853, 0.0
      %v6110 = vmax.f32 %v5854, 0.0
      %v6111 = vmax.f32 %v5855, 0.0
      %v6112 = vmax.f32 %v5856, 0.0
      %v6113 = vmax.f32 %v5857, 0.0
      %v6114 = vmax.f32 %v5858, 0.0
      %v6115 = vmax.f32 %v5859, 0.0
      %v6116 = vmax.f32 %v5860, 0.0
      %v6117 = vmax.f32 %v5861, 0.0
      %v6118 = vmax.f32 %v5862, 0.0
      %v6119 = vmax.f32 %v5863, 0.0
      %v6120 = vmax.f32 %v5864, 0.0
      %v6121 = vmax.f32 %v5865, 0.0
      %v6122 = vmax.f32 %v5866, 0.0
      %v6123 = vmax.f32 %v5867, 0.0
      %v6124 = vmax.f32 %v5868, 0.0
      %v6125 = vmax.f32 %v5869, 0.0
      %v6126 = vmax.f32 %v5870, 0.0
      %v6127 = vmax.f32 %v5871, 0.0
      %v6128 = vmax.f32 %v5872, 0.0
      %v6129 = vmax.f32 %v5873, 0.0
      %v6130 = vmax.f32 %v5874, 0.0
      %v6131 = vmax.f32 %v5875, 0.0
      %v6132 = vmax.f32 %v5876, 0.0
      %v6133 = vmax.f32 %v5877, 0.0
      %v6134 = vmax.f32 %v5878, 0.0
      %v6135 = vmax.f32 %v5879, 0.0
      %v6136 = vmax.f32 %v5880, 0.0
      %v6137 = vmax.f32 %v5881, 0.0
      %v6138 = vmax.f32 %v5882, 0.0
      %v6139 = vmax.f32 %v5883, 0.0
      %v6140 = vmax.f32 %v5884, 0.0
      %v6141 = vmax.f32 %v5885, 0.0
      %v6142 = vmax.f32 %v5886, 0.0
      %v6143 = vmax.f32 %v5887, 0.0
      %v6144 = vmax.f32 %v5888, 0.0
      %v6145 = vmax.f32 %v5889, 0.0
      %v6146 = vmax.f32 %v5890, 0.0
      %v6147 = vmax.f32 %v5891, 0.0
      %v6148 = vmax.f32 %v5892, 0.0
      %v6149 = vmax.f32 %v5893, 0.0
      %v6150 = vmax.f32 %v5894, 0.0
      %v6151 = vmax.f32 %v5895, 0.0
      %v6152 = vmax.f32 %v5896, 0.0
      %v6153 = vmax.f32 %v5897, 0.0
      %v6154 = vmax.f32 %v5898, 0.0
      %v6155 = vmax.f32 %v5899, 0.0
      %v6156 = vmax.f32 %v5900, 0.0
      %v6157 = vmax.f32 %v5901, 0.0
      %v6158 = vmax.f32 %v5902, 0.0
      %v6159 = vmax.f32 %v5903, 0.0
      %v6160 = vmax.f32 %v5904, 0.0
      %v6161 = vmax.f32 %v5905, 0.0
      %v6162 = vmax.f32 %v5906, 0.0
      %v6163 = vmax.f32 %v5907, 0.0
      %v6164 = vmax.f32 %v5908, 0.0
      %v6165 = vmax.f32 %v5909, 0.0
      %v6166 = vmax.f32 %v5910, 0.0
      %v6167 = vmax.f32 %v5911, 0.0
      %v6168 = vmax.f32 %v5912, 0.0
      %v6169 = vmax.f32 %v5913, 0.0
      %v6170 = vmax.f32 %v5914, 0.0
      %v6171 = vmax.f32 %v5915, 0.0
      %v6172 = vmax.f32 %v5916, 0.0
      %v6173 = vmax.f32 %v5917, 0.0
      %v6174 = vmax.f32 %v5918, 0.0
      %v6175 = vmax.f32 %v5919, 0.0
      %v6176 = vmax.f32 %v5920, 0.0
      %v6177 = vmax.f32 %v5921, 0.0
      %v6178 = vmax.f32 %v5922, 0.0
      %v6179 = vmax.f32 %v5923, 0.0
      %v6180 = vmax.f32 %v5924, 0.0
      %v6181 = vmax.f32 %v5925, 0.0
      %v6182 = vmax.f32 %v5926, 0.0
      %v6183 = vmax.f32 %v5927, 0.0
      %v6184 = vmax.f32 %v5928, 0.0
      %v6185 = vmax.f32 %v5929, 0.0
      %v6186 = vmax.f32 %v5930, 0.0
      %v6187 = vmax.f32 %v5931, 0.0
      %v6188 = vmax.f32 %v5932, 0.0
      %v6189 = vmax.f32 %v5933, 0.0
      %v6190 = vmax.f32 %v5934, 0.0
      %v6191 = vmax.f32 %v5935, 0.0
      %v6192 = vmax.f32 %v5936, 0.0
      %v6193 = vmax.f32 %v5937, 0.0
      %v6194 = vmax.f32 %v5938, 0.0
      %v6195 = vmax.f32 %v5939, 0.0
      %v6196 = vmax.f32 %v5940, 0.0
      %v6197 = vmax.f32 %v5941, 0.0
      %v6198 = vmax.f32 %v5942, 0.0
      %v6199 = vmax.f32 %v5943, 0.0
      %v6200 = vmax.f32 %v5944, 0.0
      %v6201 = vmax.f32 %v5945, 0.0
      %v6202 = vmax.f32 %v5946, 0.0
      %v6203 = vmax.f32 %v5947, 0.0
      %v6204 = vmax.f32 %v5948, 0.0
      %v6205 = vmax.f32 %v5949, 0.0
      %v6206 = vmax.f32 %v5950, 0.0
      %v6207 = vmax.f32 %v5951, 0.0
      %v6208 = vmax.f32 %v5952, 0.0
      %v6209 = vmax.f32 %v5953, 0.0
      %v6210 = vmax.f32 %v5954, 0.0
      %v6211 = vmax.f32 %v5955, 0.0
      %v6212 = vmax.f32 %v5956, 0.0
      %v6213 = vmax.f32 %v5957, 0.0
      %v6214 = vmax.f32 %v5958, 0.0
      %v6215 = vmax.f32 %v5959, 0.0
      %v6216 = vmax.f32 %v5960, 0.0
      %v6217 = vmax.f32 %v5961, 0.0
      %v6218 = vmax.f32 %v5962, 0.0
      %v6219 = vmax.f32 %v5963, 0.0
      %v6220 = vmax.f32 %v5964, 0.0
      %v6221 = vmax.f32 %v5965, 0.0
      %v6222 = vmax.f32 %v5966, 0.0
      %v6223 = vmax.f32 %v5967, 0.0
      %v6224 = vmax.f32 %v5968, 0.0
      %v6225 = vmax.f32 %v5969, 0.0
      %v6226 = vmax.f32 %v5970, 0.0
      %v6227 = vmax.f32 %v5971, 0.0
      %v6228 = vmax.f32 %v5972, 0.0
      %v6229 = vmax.f32 %v5973, 0.0
      %v6230 = vmax.f32 %v5974, 0.0
      %v6231 = vmax.f32 %v5975, 0.0
      %v6232 = vmax.f32 %v5976, 0.0
      %v6233 = vmax.f32 %v5977, 0.0
      %v6234 = vmax.f32 %v5978, 0.0
      %v6235 = vmax.f32 %v5979, 0.0
      %v6236 = vmax.f32 %v5980, 0.0
      %v6237 = vmax.f32 %v5981, 0.0
      %v6238 = vmax.f32 %v5982, 0.0
      %v6239 = vmax.f32 %v5983, 0.0
      %v6240 = vmax.f32 %v5984, 0.0
      %v6241 = vmax.f32 %v5985, 0.0
      %v6242 = vmax.f32 %v5986, 0.0
      %v6243 = vmax.f32 %v5987, 0.0
      %v6244 = vmax.f32 %v5988, 0.0
      %v6245 = vmax.f32 %v5989, 0.0
      %v6246 = vmax.f32 %v5990, 0.0
      %v6247 = vmax.f32 %v5991, 0.0
      %v6248 = vmax.f32 %v5992, 0.0
      %v6249 = vmax.f32 %v5993, 0.0
      %v6250 = vmax.f32 %v5994, 0.0
      %v6251 = vmax.f32 %v5995, 0.0
      %v6252 = vmax.f32 %v5996, 0.0
      %v6253 = vmax.f32 %v5997, 0.0
      %v6254 = vmax.f32 %v5998, 0.0
      %v6255 = vmax.f32 %v5999, 0.0
      %v6256 = vmax.f32 %v6000, 0.0
      %v6257 = vmax.f32 %v6001, 0.0
      %v6258 = vmax.f32 %v6002, 0.0
      %v6259 = vmax.f32 %v6003, 0.0
      %v6260 = vmax.f32 %v6004, 0.0
      %v6261 = vmax.f32 %v6005, 0.0
      %v6262 = vmax.f32 %v6006, 0.0
      %v6263 = vmax.f32 %v6007, 0.0
      %v6264 = vmax.f32 %v6008, 0.0
      %v6265 = vmax.f32 %v6009, 0.0
      %v6266 = vmax.f32 %v6010, 0.0
      %v6267 = vmax.f32 %v6011, 0.0
      %v6268 = vmax.f32 %v6012, 0.0
      %v6269 = vmax.f32 %v6013, 0.0
      %v6270 = vmax.f32 %v6014, 0.0
      %v6271 = vmax.f32 %v6015, 0.0
      %v6272 = vmax.f32 %v6016, 0.0
      %v6273 = vmax.f32 %v6017, 0.0
      %v6274 = vmax.f32 %v6018, 0.0
      %v6275 = vmax.f32 %v6019, 0.0
      %v6276 = vmax.f32 %v6020, 0.0
      %v6277 = vmax.f32 %v6021, 0.0
      %v6278 = vmax.f32 %v6022, 0.0
      %v6279 = vmax.f32 %v6023, 0.0
      %v6280 = vld [vmem:[%s4] sm:$0xf]
      %v6281 = vld [vmem:[%s4 + $0x4] sm:$0xf]
      %v6282 = vld [vmem:[%s4 + $0x8] sm:$0xf]
      %v6283 = vld [vmem:[%s4 + $0xc] sm:$0xf]
      %v6284 = vld [vmem:[%s5] sm:$0x1]
      %v6285 = vld [vmem:[%s6] sm:$0x1]
      %v6286 = vpack.c.bf16 %v6025, %v6024
      %v6287 = vpack.c.bf16 %v6027, %v6026
      %v6288 = vpack.c.bf16 %v6029, %v6028
      %v6289 = vpack.c.bf16 %v6031, %v6030
      %v6290 = vpack.c.bf16 %v6033, %v6032
      %v6291 = vpack.c.bf16 %v6035, %v6034
      %v6292 = vpack.c.bf16 %v6037, %v6036
      %v6293 = vpack.c.bf16 %v6039, %v6038
      %v6294 = vpack.c.bf16 %v6041, %v6040
      %v6295 = vpack.c.bf16 %v6043, %v6042
      %v6296 = vpack.c.bf16 %v6045, %v6044
      %v6297 = vpack.c.bf16 %v6047, %v6046
      %v6298 = vpack.c.bf16 %v6049, %v6048
      %v6299 = vpack.c.bf16 %v6051, %v6050
      %v6300 = vpack.c.bf16 %v6053, %v6052
      %v6301 = vpack.c.bf16 %v6055, %v6054
      %v6302 = vpack.c.bf16 %v6057, %v6056
      %v6303 = vpack.c.bf16 %v6059, %v6058
      %v6304 = vpack.c.bf16 %v6061, %v6060
      %v6305 = vpack.c.bf16 %v6063, %v6062
      %v6306 = vpack.c.bf16 %v6065, %v6064
      %v6307 = vpack.c.bf16 %v6067, %v6066
      %v6308 = vpack.c.bf16 %v6069, %v6068
      %v6309 = vpack.c.bf16 %v6071, %v6070
      %v6310 = vpack.c.bf16 %v6073, %v6072
      %v6311 = vpack.c.bf16 %v6075, %v6074
      %v6312 = vpack.c.bf16 %v6077, %v6076
      %v6313 = vpack.c.bf16 %v6079, %v6078
      %v6314 = vpack.c.bf16 %v6081, %v6080
      %v6315 = vpack.c.bf16 %v6083, %v6082
      %v6316 = vpack.c.bf16 %v6085, %v6084
      %v6317 = vpack.c.bf16 %v6087, %v6086
      %v6318 = vpack.c.bf16 %v6089, %v6088
      %v6319 = vpack.c.bf16 %v6091, %v6090
      %v6320 = vpack.c.bf16 %v6093, %v6092
      %v6321 = vpack.c.bf16 %v6095, %v6094
      %v6322 = vpack.c.bf16 %v6097, %v6096
      %v6323 = vpack.c.bf16 %v6099, %v6098
      %v6324 = vpack.c.bf16 %v6101, %v6100
      %v6325 = vpack.c.bf16 %v6103, %v6102
      %v6326 = vpack.c.bf16 %v6105, %v6104
      %v6327 = vpack.c.bf16 %v6107, %v6106
      %v6328 = vpack.c.bf16 %v6109, %v6108
      %v6329 = vpack.c.bf16 %v6111, %v6110
      %v6330 = vpack.c.bf16 %v6113, %v6112
      %v6331 = vpack.c.bf16 %v6115, %v6114
      %v6332 = vpack.c.bf16 %v6117, %v6116
      %v6333 = vpack.c.bf16 %v6119, %v6118
      %v6334 = vpack.c.bf16 %v6121, %v6120
      %v6335 = vpack.c.bf16 %v6123, %v6122
      %v6336 = vpack.c.bf16 %v6125, %v6124
      %v6337 = vpack.c.bf16 %v6127, %v6126
      %v6338 = vpack.c.bf16 %v6129, %v6128
      %v6339 = vpack.c.bf16 %v6131, %v6130
      %v6340 = vpack.c.bf16 %v6133, %v6132
      %v6341 = vpack.c.bf16 %v6135, %v6134
      %v6342 = vpack.c.bf16 %v6137, %v6136
      %v6343 = vpack.c.bf16 %v6139, %v6138
      %v6344 = vpack.c.bf16 %v6141, %v6140
      %v6345 = vpack.c.bf16 %v6143, %v6142
      %v6346 = vpack.c.bf16 %v6145, %v6144
      %v6347 = vpack.c.bf16 %v6147, %v6146
      %v6348 = vpack.c.bf16 %v6149, %v6148
      %v6349 = vpack.c.bf16 %v6151, %v6150
      %v6350 = vpack.c.bf16 %v6153, %v6152
      %v6351 = vpack.c.bf16 %v6155, %v6154
      %v6352 = vpack.c.bf16 %v6157, %v6156
      %v6353 = vpack.c.bf16 %v6159, %v6158
      %v6354 = vpack.c.bf16 %v6161, %v6160
      %v6355 = vpack.c.bf16 %v6163, %v6162
      %v6356 = vpack.c.bf16 %v6165, %v6164
      %v6357 = vpack.c.bf16 %v6167, %v6166
      %v6358 = vpack.c.bf16 %v6169, %v6168
      %v6359 = vpack.c.bf16 %v6171, %v6170
      %v6360 = vpack.c.bf16 %v6173, %v6172
      %v6361 = vpack.c.bf16 %v6175, %v6174
      %v6362 = vpack.c.bf16 %v6177, %v6176
      %v6363 = vpack.c.bf16 %v6179, %v6178
      %v6364 = vpack.c.bf16 %v6181, %v6180
      %v6365 = vpack.c.bf16 %v6183, %v6182
      %v6366 = vpack.c.bf16 %v6185, %v6184
      %v6367 = vpack.c.bf16 %v6187, %v6186
      %v6368 = vpack.c.bf16 %v6189, %v6188
      %v6369 = vpack.c.bf16 %v6191, %v6190
      %v6370 = vpack.c.bf16 %v6193, %v6192
      %v6371 = vpack.c.bf16 %v6195, %v6194
      %v6372 = vpack.c.bf16 %v6197, %v6196
      %v6373 = vpack.c.bf16 %v6199, %v6198
      %v6374 = vpack.c.bf16 %v6201, %v6200
      %v6375 = vpack.c.bf16 %v6203, %v6202
      %v6376 = vpack.c.bf16 %v6205, %v6204
      %v6377 = vpack.c.bf16 %v6207, %v6206
      %v6378 = vpack.c.bf16 %v6209, %v6208
      %v6379 = vpack.c.bf16 %v6211, %v6210
      %v6380 = vpack.c.bf16 %v6213, %v6212
      %v6381 = vpack.c.bf16 %v6215, %v6214
      %v6382 = vpack.c.bf16 %v6217, %v6216
      %v6383 = vpack.c.bf16 %v6219, %v6218
      %v6384 = vpack.c.bf16 %v6221, %v6220
      %v6385 = vpack.c.bf16 %v6223, %v6222
      %v6386 = vpack.c.bf16 %v6225, %v6224
      %v6387 = vpack.c.bf16 %v6227, %v6226
      %v6388 = vpack.c.bf16 %v6229, %v6228
      %v6389 = vpack.c.bf16 %v6231, %v6230
      %v6390 = vpack.c.bf16 %v6233, %v6232
      %v6391 = vpack.c.bf16 %v6235, %v6234
      %v6392 = vpack.c.bf16 %v6237, %v6236
      %v6393 = vpack.c.bf16 %v6239, %v6238
      %v6394 = vpack.c.bf16 %v6241, %v6240
      %v6395 = vpack.c.bf16 %v6243, %v6242
      %v6396 = vpack.c.bf16 %v6245, %v6244
      %v6397 = vpack.c.bf16 %v6247, %v6246
      %v6398 = vpack.c.bf16 %v6249, %v6248
      %v6399 = vpack.c.bf16 %v6251, %v6250
      %v6400 = vpack.c.bf16 %v6253, %v6252
      %v6401 = vpack.c.bf16 %v6255, %v6254
      %v6402 = vpack.c.bf16 %v6257, %v6256
      %v6403 = vpack.c.bf16 %v6259, %v6258
      %v6404 = vpack.c.bf16 %v6261, %v6260
      %v6405 = vpack.c.bf16 %v6263, %v6262
      %v6406 = vpack.c.bf16 %v6265, %v6264
      %v6407 = vpack.c.bf16 %v6267, %v6266
      %v6408 = vpack.c.bf16 %v6269, %v6268
      %v6409 = vpack.c.bf16 %v6271, %v6270
      %v6410 = vpack.c.bf16 %v6273, %v6272
      %v6411 = vpack.c.bf16 %v6275, %v6274
      %v6412 = vpack.c.bf16 %v6277, %v6276
      %v6413 = vpack.c.bf16 %v6279, %v6278
      %v6418 = vunpack.c.l.b16 %v6280
      %v6419 = vunpack.c.l.b16 %v6281
      %v6420 = vunpack.c.l.b16 %v6282
      %v6421 = vunpack.c.l.b16 %v6283
      %v6422 = vpack.c.b16 %v6419, %v6418
      %v6423 = vpack.c.b16 %v6421, %v6420
      %vm6426 = vcmask 261120
      %v6428 = vsel %vm6426, %v6286, 0
      %v6431 = vsel %vm6426, %v6287, 0
      %v6434 = vsel %vm6426, %v6288, 0
      %v6437 = vsel %vm6426, %v6289, 0
      %v6440 = vsel %vm6426, %v6290, 0
      %v6443 = vsel %vm6426, %v6291, 0
      %v6446 = vsel %vm6426, %v6292, 0
      %v6449 = vsel %vm6426, %v6293, 0
      %v6452 = vsel %vm6426, %v6294, 0
      %v6455 = vsel %vm6426, %v6295, 0
      %v6458 = vsel %vm6426, %v6296, 0
      %v6461 = vsel %vm6426, %v6297, 0
      %v6464 = vsel %vm6426, %v6298, 0
      %v6467 = vsel %vm6426, %v6299, 0
      %v6470 = vsel %vm6426, %v6300, 0
      %v6473 = vsel %vm6426, %v6301, 0
      %v6476 = vsel %vm6426, %v6302, 0
      %v6479 = vsel %vm6426, %v6303, 0
      %v6482 = vsel %vm6426, %v6304, 0
      %v6485 = vsel %vm6426, %v6305, 0
      %v6488 = vsel %vm6426, %v6306, 0
      %v6491 = vsel %vm6426, %v6307, 0
      %v6494 = vsel %vm6426, %v6308, 0
      %v6497 = vsel %vm6426, %v6309, 0
      %v6500 = vsel %vm6426, %v6310, 0
      %v6503 = vsel %vm6426, %v6311, 0
      %v6506 = vsel %vm6426, %v6312, 0
      %v6509 = vsel %vm6426, %v6313, 0
      %v6512 = vsel %vm6426, %v6314, 0
      %v6515 = vsel %vm6426, %v6315, 0
      %v6518 = vsel %vm6426, %v6316, 0
      %v6521 = vsel %vm6426, %v6317, 0
      %v6524 = vsel %vm6426, %v6318, 0
      %v6527 = vsel %vm6426, %v6319, 0
      %v6530 = vsel %vm6426, %v6320, 0
      %v6533 = vsel %vm6426, %v6321, 0
      %v6536 = vsel %vm6426, %v6322, 0
      %v6539 = vsel %vm6426, %v6323, 0
      %v6542 = vsel %vm6426, %v6324, 0
      %v6545 = vsel %vm6426, %v6325, 0
      %v6548 = vsel %vm6426, %v6326, 0
      %v6551 = vsel %vm6426, %v6327, 0
      %v6554 = vsel %vm6426, %v6328, 0
      %v6557 = vsel %vm6426, %v6329, 0
      %v6560 = vsel %vm6426, %v6330, 0
      %v6563 = vsel %vm6426, %v6331, 0
      %v6566 = vsel %vm6426, %v6332, 0
      %v6569 = vsel %vm6426, %v6333, 0
      %v6572 = vsel %vm6426, %v6334, 0
      %v6575 = vsel %vm6426, %v6335, 0
      %v6578 = vsel %vm6426, %v6336, 0
      %v6581 = vsel %vm6426, %v6337, 0
      %v6584 = vsel %vm6426, %v6338, 0
      %v6587 = vsel %vm6426, %v6339, 0
      %v6590 = vsel %vm6426, %v6340, 0
      %v6593 = vsel %vm6426, %v6341, 0
      %v6596 = vsel %vm6426, %v6342, 0
      %v6599 = vsel %vm6426, %v6343, 0
      %v6602 = vsel %vm6426, %v6344, 0
      %v6605 = vsel %vm6426, %v6345, 0
      %v6608 = vsel %vm6426, %v6346, 0
      %v6611 = vsel %vm6426, %v6347, 0
      %v6614 = vsel %vm6426, %v6348, 0
      %v6617 = vsel %vm6426, %v6349, 0
      %v6620 = vsel %vm6426, %v6350, 0
      %v6623 = vsel %vm6426, %v6351, 0
      %v6626 = vsel %vm6426, %v6352, 0
      %v6629 = vsel %vm6426, %v6353, 0
      %v6632 = vsel %vm6426, %v6354, 0
      %v6635 = vsel %vm6426, %v6355, 0
      %v6638 = vsel %vm6426, %v6356, 0
      %v6641 = vsel %vm6426, %v6357, 0
      %v6644 = vsel %vm6426, %v6358, 0
      %v6647 = vsel %vm6426, %v6359, 0
      %v6650 = vsel %vm6426, %v6360, 0
      %v6653 = vsel %vm6426, %v6361, 0
      %v6656 = vsel %vm6426, %v6362, 0
      %v6659 = vsel %vm6426, %v6363, 0
      %v6662 = vsel %vm6426, %v6364, 0
      %v6665 = vsel %vm6426, %v6365, 0
      %v6668 = vsel %vm6426, %v6366, 0
      %v6671 = vsel %vm6426, %v6367, 0
      %v6674 = vsel %vm6426, %v6368, 0
      %v6677 = vsel %vm6426, %v6369, 0
      %v6680 = vsel %vm6426, %v6370, 0
      %v6683 = vsel %vm6426, %v6371, 0
      %v6686 = vsel %vm6426, %v6372, 0
      %v6689 = vsel %vm6426, %v6373, 0
      %v6692 = vsel %vm6426, %v6374, 0
      %v6695 = vsel %vm6426, %v6375, 0
      %v6698 = vsel %vm6426, %v6376, 0
      %v6701 = vsel %vm6426, %v6377, 0
      %v6704 = vsel %vm6426, %v6378, 0
      %v6707 = vsel %vm6426, %v6379, 0
      %v6710 = vsel %vm6426, %v6380, 0
      %v6713 = vsel %vm6426, %v6381, 0
      %v6716 = vsel %vm6426, %v6382, 0
      %v6719 = vsel %vm6426, %v6383, 0
      %v6722 = vsel %vm6426, %v6384, 0
      %v6725 = vsel %vm6426, %v6385, 0
      %v6728 = vsel %vm6426, %v6386, 0
      %v6731 = vsel %vm6426, %v6387, 0
      %v6734 = vsel %vm6426, %v6388, 0
      %v6737 = vsel %vm6426, %v6389, 0
      %v6740 = vsel %vm6426, %v6390, 0
      %v6743 = vsel %vm6426, %v6391, 0
      %v6746 = vsel %vm6426, %v6392, 0
      %v6749 = vsel %vm6426, %v6393, 0
      %v6752 = vsel %vm6426, %v6394, 0
      %v6755 = vsel %vm6426, %v6395, 0
      %v6758 = vsel %vm6426, %v6396, 0
      %v6761 = vsel %vm6426, %v6397, 0
      %v6764 = vsel %vm6426, %v6398, 0
      %v6767 = vsel %vm6426, %v6399, 0
      %v6770 = vsel %vm6426, %v6400, 0
      %v6773 = vsel %vm6426, %v6401, 0
      %v6776 = vsel %vm6426, %v6402, 0
      %v6779 = vsel %vm6426, %v6403, 0
      %v6782 = vsel %vm6426, %v6404, 0
      %v6785 = vsel %vm6426, %v6405, 0
      %v6788 = vsel %vm6426, %v6406, 0
      %v6791 = vsel %vm6426, %v6407, 0
      %v6794 = vsel %vm6426, %v6408, 0
      %v6797 = vsel %vm6426, %v6409, 0
      %v6800 = vsel %vm6426, %v6410, 0
      %v6803 = vsel %vm6426, %v6411, 0
      %v6806 = vsel %vm6426, %v6412, 0
      %v6809 = vsel %vm6426, %v6413, 0
      %6811 = vmatprep.subr.bf16.mxu0 0
      %6812 = vmatpush1.bf16.msra.mxu0 0
      %6813 = vmatprep.subr.bf16.mxu0 0
      %6814 = vmatpush1.bf16.msra.mxu0 0
      %6815 = vmatprep.subr.bf16.mxu0 0
      %6816 = vmatpush1.bf16.msra.mxu0 0
      %6817 = vmatprep.subr.bf16.mxu0 0
      %6818 = vmatpush1.bf16.msra.mxu0 0
      %6819 = vmatprep.subr.bf16.mxu0 0
      %6820 = vmatpush1.bf16.msra.mxu0 0
      %6821 = vmatprep.subr.bf16.mxu0 0
      %6822 = vmatpush1.bf16.msra.mxu0 0
      %6823 = vmatprep.subr.bf16.mxu0 0
      %6824 = vmatpush1.bf16.msra.mxu0 %v6423
      %6825 = vmatprep.subr.bf16.mxu0 0
      %6826 = vmatpush1.bf16.msra.mxu0 %v6422
      %6827 = vmatprep.subr.bf16.mxu0 0
      %6828 = vmatpush2.bf16.msra.mxu0 0
      %6829 = vmatprep.subr.bf16.mxu0 0
      %6830 = vmatpush2.bf16.msra.mxu0 0
      %6831 = vmatprep.subr.bf16.mxu0 0
      %6832 = vmatpush2.bf16.msra.mxu0 0
      %6833 = vmatprep.subr.bf16.mxu0 0
      %6834 = vmatpush2.bf16.msra.mxu0 0
      %6835 = vmatprep.subr.bf16.mxu0 0
      %6836 = vmatpush2.bf16.msra.mxu0 0
      %6837 = vmatprep.subr.bf16.mxu0 0
      %6838 = vmatpush2.bf16.msra.mxu0 0
      %6839 = vmatprep.subr.bf16.mxu0 0
      %6840 = vmatpush2.bf16.msra.mxu0 0
      %6841 = vmatprep.subr.bf16.mxu0 0
      %6842 = vmatpush2.bf16.msra.mxu0 0
      %6843 = vmatprep.mubr.bf16.mxu0 0
      %6844 = vmatmul.mubr.bf16.gmra.mxu0 %v6428
      %v6845 = vpop.f32.mrf.mxu0
      %v6846 = vadd.f32 0.0, %v6845
      %v6847 = vpop.f32.mrf.mxu0
      %v6848 = vpop.f32.mrf.mxu0
      %v6849 = vadd.f32 0.0, %v6848
      %v6850 = vpop.f32.mrf.mxu0
      %6851 = vmatprep.mubr.bf16.mxu0 0
      %6852 = vmatmul.mubr.bf16.gmra.mxu0 %v6431
      %v6853 = vpop.f32.mrf.mxu0
      %v6854 = vadd.f32 0.0, %v6853
      %v6855 = vpop.f32.mrf.mxu0
      %v6856 = vpop.f32.mrf.mxu0
      %v6857 = vadd.f32 0.0, %v6856
      %v6858 = vpop.f32.mrf.mxu0
      %6859 = vmatprep.mubr.bf16.mxu0 0
      %6860 = vmatmul.mubr.bf16.gmra.mxu0 %v6434
      %v6861 = vpop.f32.mrf.mxu0
      %v6862 = vadd.f32 0.0, %v6861
      %v6863 = vpop.f32.mrf.mxu0
      %v6864 = vpop.f32.mrf.mxu0
      %v6865 = vadd.f32 0.0, %v6864
      %v6866 = vpop.f32.mrf.mxu0
      %6867 = vmatprep.mubr.bf16.mxu0 0
      %6868 = vmatmul.mubr.bf16.gmra.mxu0 %v6437
      %v6869 = vpop.f32.mrf.mxu0
      %v6870 = vadd.f32 0.0, %v6869
      %v6871 = vpop.f32.mrf.mxu0
      %v6872 = vpop.f32.mrf.mxu0
      %v6873 = vadd.f32 0.0, %v6872
      %v6874 = vpop.f32.mrf.mxu0
      %6875 = vmatprep.mubr.bf16.mxu0 0
      %6876 = vmatmul.mubr.bf16.gmra.mxu0 %v6440
      %v6877 = vpop.f32.mrf.mxu0
      %v6878 = vadd.f32 0.0, %v6877
      %v6879 = vpop.f32.mrf.mxu0
      %v6880 = vpop.f32.mrf.mxu0
      %v6881 = vadd.f32 0.0, %v6880
      %v6882 = vpop.f32.mrf.mxu0
      %6883 = vmatprep.mubr.bf16.mxu0 0
      %6884 = vmatmul.mubr.bf16.gmra.mxu0 %v6443
      %v6885 = vpop.f32.mrf.mxu0
      %v6886 = vadd.f32 0.0, %v6885
      %v6887 = vpop.f32.mrf.mxu0
      %v6888 = vpop.f32.mrf.mxu0
      %v6889 = vadd.f32 0.0, %v6888
      %v6890 = vpop.f32.mrf.mxu0
      %6891 = vmatprep.mubr.bf16.mxu0 0
      %6892 = vmatmul.mubr.bf16.gmra.mxu0 %v6446
      %v6893 = vpop.f32.mrf.mxu0
      %v6894 = vadd.f32 0.0, %v6893
      %v6895 = vpop.f32.mrf.mxu0
      %v6896 = vpop.f32.mrf.mxu0
      %v6897 = vadd.f32 0.0, %v6896
      %v6898 = vpop.f32.mrf.mxu0
      %6899 = vmatprep.mubr.bf16.mxu0 0
      %6900 = vmatmul.mubr.bf16.gmra.mxu0 %v6449
      %v6901 = vpop.f32.mrf.mxu0
      %v6902 = vadd.f32 0.0, %v6901
      %v6903 = vpop.f32.mrf.mxu0
      %v6904 = vpop.f32.mrf.mxu0
      %v6905 = vadd.f32 0.0, %v6904
      %v6906 = vpop.f32.mrf.mxu0
      %6907 = vmatprep.mubr.bf16.mxu0 0
      %6908 = vmatmul.mubr.bf16.gmra.mxu0 %v6452
      %v6909 = vpop.f32.mrf.mxu0
      %v6910 = vadd.f32 0.0, %v6909
      %v6911 = vpop.f32.mrf.mxu0
      %v6912 = vpop.f32.mrf.mxu0
      %v6913 = vadd.f32 0.0, %v6912
      %v6914 = vpop.f32.mrf.mxu0
      %6915 = vmatprep.mubr.bf16.mxu0 0
      %6916 = vmatmul.mubr.bf16.gmra.mxu0 %v6455
      %v6917 = vpop.f32.mrf.mxu0
      %v6918 = vadd.f32 0.0, %v6917
      %v6919 = vpop.f32.mrf.mxu0
      %v6920 = vpop.f32.mrf.mxu0
      %v6921 = vadd.f32 0.0, %v6920
      %v6922 = vpop.f32.mrf.mxu0
      %6923 = vmatprep.mubr.bf16.mxu0 0
      %6924 = vmatmul.mubr.bf16.gmra.mxu0 %v6458
      %v6925 = vpop.f32.mrf.mxu0
      %v6926 = vadd.f32 0.0, %v6925
      %v6927 = vpop.f32.mrf.mxu0
      %v6928 = vpop.f32.mrf.mxu0
      %v6929 = vadd.f32 0.0, %v6928
      %v6930 = vpop.f32.mrf.mxu0
      %6931 = vmatprep.mubr.bf16.mxu0 0
      %6932 = vmatmul.mubr.bf16.gmra.mxu0 %v6461
      %v6933 = vpop.f32.mrf.mxu0
      %v6934 = vadd.f32 0.0, %v6933
      %v6935 = vpop.f32.mrf.mxu0
      %v6936 = vpop.f32.mrf.mxu0
      %v6937 = vadd.f32 0.0, %v6936
      %v6938 = vpop.f32.mrf.mxu0
      %6939 = vmatprep.mubr.bf16.mxu0 0
      %6940 = vmatmul.mubr.bf16.gmra.mxu0 %v6464
      %v6941 = vpop.f32.mrf.mxu0
      %v6942 = vadd.f32 0.0, %v6941
      %v6943 = vpop.f32.mrf.mxu0
      %v6944 = vpop.f32.mrf.mxu0
      %v6945 = vadd.f32 0.0, %v6944
      %v6946 = vpop.f32.mrf.mxu0
      %6947 = vmatprep.mubr.bf16.mxu0 0
      %6948 = vmatmul.mubr.bf16.gmra.mxu0 %v6467
      %v6949 = vpop.f32.mrf.mxu0
      %v6950 = vadd.f32 0.0, %v6949
      %v6951 = vpop.f32.mrf.mxu0
      %v6952 = vpop.f32.mrf.mxu0
      %v6953 = vadd.f32 0.0, %v6952
      %v6954 = vpop.f32.mrf.mxu0
      %6955 = vmatprep.mubr.bf16.mxu0 0
      %6956 = vmatmul.mubr.bf16.gmra.mxu0 %v6470
      %v6957 = vpop.f32.mrf.mxu0
      %v6958 = vadd.f32 0.0, %v6957
      %v6959 = vpop.f32.mrf.mxu0
      %v6960 = vpop.f32.mrf.mxu0
      %v6961 = vadd.f32 0.0, %v6960
      %v6962 = vpop.f32.mrf.mxu0
      %6963 = vmatprep.mubr.bf16.mxu0 0
      %6964 = vmatmul.mubr.bf16.gmra.mxu0 %v6473
      %v6965 = vpop.f32.mrf.mxu0
      %v6966 = vadd.f32 0.0, %v6965
      %v6967 = vpop.f32.mrf.mxu0
      %v6968 = vpop.f32.mrf.mxu0
      %v6969 = vadd.f32 0.0, %v6968
      %v6970 = vpop.f32.mrf.mxu0
      %6971 = vmatprep.mubr.bf16.mxu0 0
      %6972 = vmatmul.mubr.bf16.gmra.mxu0 %v6476
      %v6973 = vpop.f32.mrf.mxu0
      %v6974 = vadd.f32 0.0, %v6973
      %v6975 = vpop.f32.mrf.mxu0
      %v6976 = vpop.f32.mrf.mxu0
      %v6977 = vadd.f32 0.0, %v6976
      %v6978 = vpop.f32.mrf.mxu0
      %6979 = vmatprep.mubr.bf16.mxu0 0
      %6980 = vmatmul.mubr.bf16.gmra.mxu0 %v6479
      %v6981 = vpop.f32.mrf.mxu0
      %v6982 = vadd.f32 0.0, %v6981
      %v6983 = vpop.f32.mrf.mxu0
      %v6984 = vpop.f32.mrf.mxu0
      %v6985 = vadd.f32 0.0, %v6984
      %v6986 = vpop.f32.mrf.mxu0
      %6987 = vmatprep.mubr.bf16.mxu0 0
      %6988 = vmatmul.mubr.bf16.gmra.mxu0 %v6482
      %v6989 = vpop.f32.mrf.mxu0
      %v6990 = vadd.f32 0.0, %v6989
      %v6991 = vpop.f32.mrf.mxu0
      %v6992 = vpop.f32.mrf.mxu0
      %v6993 = vadd.f32 0.0, %v6992
      %v6994 = vpop.f32.mrf.mxu0
      %6995 = vmatprep.mubr.bf16.mxu0 0
      %6996 = vmatmul.mubr.bf16.gmra.mxu0 %v6485
      %v6997 = vpop.f32.mrf.mxu0
      %v6998 = vadd.f32 0.0, %v6997
      %v6999 = vpop.f32.mrf.mxu0
      %v7000 = vpop.f32.mrf.mxu0
      %v7001 = vadd.f32 0.0, %v7000
      %v7002 = vpop.f32.mrf.mxu0
      %7003 = vmatprep.mubr.bf16.mxu0 0
      %7004 = vmatmul.mubr.bf16.gmra.mxu0 %v6488
      %v7005 = vpop.f32.mrf.mxu0
      %v7006 = vadd.f32 0.0, %v7005
      %v7007 = vpop.f32.mrf.mxu0
      %v7008 = vpop.f32.mrf.mxu0
      %v7009 = vadd.f32 0.0, %v7008
      %v7010 = vpop.f32.mrf.mxu0
      %7011 = vmatprep.mubr.bf16.mxu0 0
      %7012 = vmatmul.mubr.bf16.gmra.mxu0 %v6491
      %v7013 = vpop.f32.mrf.mxu0
      %v7014 = vadd.f32 0.0, %v7013
      %v7015 = vpop.f32.mrf.mxu0
      %v7016 = vpop.f32.mrf.mxu0
      %v7017 = vadd.f32 0.0, %v7016
      %v7018 = vpop.f32.mrf.mxu0
      %7019 = vmatprep.mubr.bf16.mxu0 0
      %7020 = vmatmul.mubr.bf16.gmra.mxu0 %v6494
      %v7021 = vpop.f32.mrf.mxu0
      %v7022 = vadd.f32 0.0, %v7021
      %v7023 = vpop.f32.mrf.mxu0
      %v7024 = vpop.f32.mrf.mxu0
      %v7025 = vadd.f32 0.0, %v7024
      %v7026 = vpop.f32.mrf.mxu0
      %7027 = vmatprep.mubr.bf16.mxu0 0
      %7028 = vmatmul.mubr.bf16.gmra.mxu0 %v6497
      %v7029 = vpop.f32.mrf.mxu0
      %v7030 = vadd.f32 0.0, %v7029
      %v7031 = vpop.f32.mrf.mxu0
      %v7032 = vpop.f32.mrf.mxu0
      %v7033 = vadd.f32 0.0, %v7032
      %v7034 = vpop.f32.mrf.mxu0
      %7035 = vmatprep.mubr.bf16.mxu0 0
      %7036 = vmatmul.mubr.bf16.gmra.mxu0 %v6500
      %v7037 = vpop.f32.mrf.mxu0
      %v7038 = vadd.f32 0.0, %v7037
      %v7039 = vpop.f32.mrf.mxu0
      %v7040 = vpop.f32.mrf.mxu0
      %v7041 = vadd.f32 0.0, %v7040
      %v7042 = vpop.f32.mrf.mxu0
      %7043 = vmatprep.mubr.bf16.mxu0 0
      %7044 = vmatmul.mubr.bf16.gmra.mxu0 %v6503
      %v7045 = vpop.f32.mrf.mxu0
      %v7046 = vadd.f32 0.0, %v7045
      %v7047 = vpop.f32.mrf.mxu0
      %v7048 = vpop.f32.mrf.mxu0
      %v7049 = vadd.f32 0.0, %v7048
      %v7050 = vpop.f32.mrf.mxu0
      %7051 = vmatprep.mubr.bf16.mxu0 0
      %7052 = vmatmul.mubr.bf16.gmra.mxu0 %v6506
      %v7053 = vpop.f32.mrf.mxu0
      %v7054 = vadd.f32 0.0, %v7053
      %v7055 = vpop.f32.mrf.mxu0
      %v7056 = vpop.f32.mrf.mxu0
      %v7057 = vadd.f32 0.0, %v7056
      %v7058 = vpop.f32.mrf.mxu0
      %7059 = vmatprep.mubr.bf16.mxu0 0
      %7060 = vmatmul.mubr.bf16.gmra.mxu0 %v6509
      %v7061 = vpop.f32.mrf.mxu0
      %v7062 = vadd.f32 0.0, %v7061
      %v7063 = vpop.f32.mrf.mxu0
      %v7064 = vpop.f32.mrf.mxu0
      %v7065 = vadd.f32 0.0, %v7064
      %v7066 = vpop.f32.mrf.mxu0
      %7067 = vmatprep.mubr.bf16.mxu0 0
      %7068 = vmatmul.mubr.bf16.gmra.mxu0 %v6512
      %v7069 = vpop.f32.mrf.mxu0
      %v7070 = vadd.f32 0.0, %v7069
      %v7071 = vpop.f32.mrf.mxu0
      %v7072 = vpop.f32.mrf.mxu0
      %v7073 = vadd.f32 0.0, %v7072
      %v7074 = vpop.f32.mrf.mxu0
      %7075 = vmatprep.mubr.bf16.mxu0 0
      %7076 = vmatmul.mubr.bf16.gmra.mxu0 %v6515
      %v7077 = vpop.f32.mrf.mxu0
      %v7078 = vadd.f32 0.0, %v7077
      %v7079 = vpop.f32.mrf.mxu0
      %v7080 = vpop.f32.mrf.mxu0
      %v7081 = vadd.f32 0.0, %v7080
      %v7082 = vpop.f32.mrf.mxu0
      %7083 = vmatprep.mubr.bf16.mxu0 0
      %7084 = vmatmul.mubr.bf16.gmra.mxu0 %v6518
      %v7085 = vpop.f32.mrf.mxu0
      %v7086 = vadd.f32 0.0, %v7085
      %v7087 = vpop.f32.mrf.mxu0
      %v7088 = vpop.f32.mrf.mxu0
      %v7089 = vadd.f32 0.0, %v7088
      %v7090 = vpop.f32.mrf.mxu0
      %7091 = vmatprep.mubr.bf16.mxu0 0
      %7092 = vmatmul.mubr.bf16.gmra.mxu0 %v6521
      %v7093 = vpop.f32.mrf.mxu0
      %v7094 = vadd.f32 0.0, %v7093
      %v7095 = vpop.f32.mrf.mxu0
      %v7096 = vpop.f32.mrf.mxu0
      %v7097 = vadd.f32 0.0, %v7096
      %v7098 = vpop.f32.mrf.mxu0
      %7099 = vmatprep.mubr.bf16.mxu0 0
      %7100 = vmatmul.mubr.bf16.gmra.mxu0 %v6524
      %v7101 = vpop.f32.mrf.mxu0
      %v7102 = vadd.f32 0.0, %v7101
      %v7103 = vpop.f32.mrf.mxu0
      %v7104 = vpop.f32.mrf.mxu0
      %v7105 = vadd.f32 0.0, %v7104
      %v7106 = vpop.f32.mrf.mxu0
      %7107 = vmatprep.mubr.bf16.mxu0 0
      %7108 = vmatmul.mubr.bf16.gmra.mxu0 %v6527
      %v7109 = vpop.f32.mrf.mxu0
      %v7110 = vadd.f32 0.0, %v7109
      %v7111 = vpop.f32.mrf.mxu0
      %v7112 = vpop.f32.mrf.mxu0
      %v7113 = vadd.f32 0.0, %v7112
      %v7114 = vpop.f32.mrf.mxu0
      %7115 = vmatprep.mubr.bf16.mxu0 0
      %7116 = vmatmul.mubr.bf16.gmra.mxu0 %v6530
      %v7117 = vpop.f32.mrf.mxu0
      %v7118 = vadd.f32 0.0, %v7117
      %v7119 = vpop.f32.mrf.mxu0
      %v7120 = vpop.f32.mrf.mxu0
      %v7121 = vadd.f32 0.0, %v7120
      %v7122 = vpop.f32.mrf.mxu0
      %7123 = vmatprep.mubr.bf16.mxu0 0
      %7124 = vmatmul.mubr.bf16.gmra.mxu0 %v6533
      %v7125 = vpop.f32.mrf.mxu0
      %v7126 = vadd.f32 0.0, %v7125
      %v7127 = vpop.f32.mrf.mxu0
      %v7128 = vpop.f32.mrf.mxu0
      %v7129 = vadd.f32 0.0, %v7128
      %v7130 = vpop.f32.mrf.mxu0
      %7131 = vmatprep.mubr.bf16.mxu0 0
      %7132 = vmatmul.mubr.bf16.gmra.mxu0 %v6536
      %v7133 = vpop.f32.mrf.mxu0
      %v7134 = vadd.f32 0.0, %v7133
      %v7135 = vpop.f32.mrf.mxu0
      %v7136 = vpop.f32.mrf.mxu0
      %v7137 = vadd.f32 0.0, %v7136
      %v7138 = vpop.f32.mrf.mxu0
      %7139 = vmatprep.mubr.bf16.mxu0 0
      %7140 = vmatmul.mubr.bf16.gmra.mxu0 %v6539
      %v7141 = vpop.f32.mrf.mxu0
      %v7142 = vadd.f32 0.0, %v7141
      %v7143 = vpop.f32.mrf.mxu0
      %v7144 = vpop.f32.mrf.mxu0
      %v7145 = vadd.f32 0.0, %v7144
      %v7146 = vpop.f32.mrf.mxu0
      %7147 = vmatprep.mubr.bf16.mxu0 0
      %7148 = vmatmul.mubr.bf16.gmra.mxu0 %v6542
      %v7149 = vpop.f32.mrf.mxu0
      %v7150 = vadd.f32 0.0, %v7149
      %v7151 = vpop.f32.mrf.mxu0
      %v7152 = vpop.f32.mrf.mxu0
      %v7153 = vadd.f32 0.0, %v7152
      %v7154 = vpop.f32.mrf.mxu0
      %7155 = vmatprep.mubr.bf16.mxu0 0
      %7156 = vmatmul.mubr.bf16.gmra.mxu0 %v6545
      %v7157 = vpop.f32.mrf.mxu0
      %v7158 = vadd.f32 0.0, %v7157
      %v7159 = vpop.f32.mrf.mxu0
      %v7160 = vpop.f32.mrf.mxu0
      %v7161 = vadd.f32 0.0, %v7160
      %v7162 = vpop.f32.mrf.mxu0
      %7163 = vmatprep.mubr.bf16.mxu0 0
      %7164 = vmatmul.mubr.bf16.gmra.mxu0 %v6548
      %v7165 = vpop.f32.mrf.mxu0
      %v7166 = vadd.f32 0.0, %v7165
      %v7167 = vpop.f32.mrf.mxu0
      %v7168 = vpop.f32.mrf.mxu0
      %v7169 = vadd.f32 0.0, %v7168
      %v7170 = vpop.f32.mrf.mxu0
      %7171 = vmatprep.mubr.bf16.mxu0 0
      %7172 = vmatmul.mubr.bf16.gmra.mxu0 %v6551
      %v7173 = vpop.f32.mrf.mxu0
      %v7174 = vadd.f32 0.0, %v7173
      %v7175 = vpop.f32.mrf.mxu0
      %v7176 = vpop.f32.mrf.mxu0
      %v7177 = vadd.f32 0.0, %v7176
      %v7178 = vpop.f32.mrf.mxu0
      %7179 = vmatprep.mubr.bf16.mxu0 0
      %7180 = vmatmul.mubr.bf16.gmra.mxu0 %v6554
      %v7181 = vpop.f32.mrf.mxu0
      %v7182 = vadd.f32 0.0, %v7181
      %v7183 = vpop.f32.mrf.mxu0
      %v7184 = vpop.f32.mrf.mxu0
      %v7185 = vadd.f32 0.0, %v7184
      %v7186 = vpop.f32.mrf.mxu0
      %7187 = vmatprep.mubr.bf16.mxu0 0
      %7188 = vmatmul.mubr.bf16.gmra.mxu0 %v6557
      %v7189 = vpop.f32.mrf.mxu0
      %v7190 = vadd.f32 0.0, %v7189
      %v7191 = vpop.f32.mrf.mxu0
      %v7192 = vpop.f32.mrf.mxu0
      %v7193 = vadd.f32 0.0, %v7192
      %v7194 = vpop.f32.mrf.mxu0
      %7195 = vmatprep.mubr.bf16.mxu0 0
      %7196 = vmatmul.mubr.bf16.gmra.mxu0 %v6560
      %v7197 = vpop.f32.mrf.mxu0
      %v7198 = vadd.f32 0.0, %v7197
      %v7199 = vpop.f32.mrf.mxu0
      %v7200 = vpop.f32.mrf.mxu0
      %v7201 = vadd.f32 0.0, %v7200
      %v7202 = vpop.f32.mrf.mxu0
      %7203 = vmatprep.mubr.bf16.mxu0 0
      %7204 = vmatmul.mubr.bf16.gmra.mxu0 %v6563
      %v7205 = vpop.f32.mrf.mxu0
      %v7206 = vadd.f32 0.0, %v7205
      %v7207 = vpop.f32.mrf.mxu0
      %v7208 = vpop.f32.mrf.mxu0
      %v7209 = vadd.f32 0.0, %v7208
      %v7210 = vpop.f32.mrf.mxu0
      %7211 = vmatprep.mubr.bf16.mxu0 0
      %7212 = vmatmul.mubr.bf16.gmra.mxu0 %v6566
      %v7213 = vpop.f32.mrf.mxu0
      %v7214 = vadd.f32 0.0, %v7213
      %v7215 = vpop.f32.mrf.mxu0
      %v7216 = vpop.f32.mrf.mxu0
      %v7217 = vadd.f32 0.0, %v7216
      %v7218 = vpop.f32.mrf.mxu0
      %7219 = vmatprep.mubr.bf16.mxu0 0
      %7220 = vmatmul.mubr.bf16.gmra.mxu0 %v6569
      %v7221 = vpop.f32.mrf.mxu0
      %v7222 = vadd.f32 0.0, %v7221
      %v7223 = vpop.f32.mrf.mxu0
      %v7224 = vpop.f32.mrf.mxu0
      %v7225 = vadd.f32 0.0, %v7224
      %v7226 = vpop.f32.mrf.mxu0
      %7227 = vmatprep.mubr.bf16.mxu0 0
      %7228 = vmatmul.mubr.bf16.gmra.mxu0 %v6572
      %v7229 = vpop.f32.mrf.mxu0
      %v7230 = vadd.f32 0.0, %v7229
      %v7231 = vpop.f32.mrf.mxu0
      %v7232 = vpop.f32.mrf.mxu0
      %v7233 = vadd.f32 0.0, %v7232
      %v7234 = vpop.f32.mrf.mxu0
      %7235 = vmatprep.mubr.bf16.mxu0 0
      %7236 = vmatmul.mubr.bf16.gmra.mxu0 %v6575
      %v7237 = vpop.f32.mrf.mxu0
      %v7238 = vadd.f32 0.0, %v7237
      %v7239 = vpop.f32.mrf.mxu0
      %v7240 = vpop.f32.mrf.mxu0
      %v7241 = vadd.f32 0.0, %v7240
      %v7242 = vpop.f32.mrf.mxu0
      %7243 = vmatprep.mubr.bf16.mxu0 0
      %7244 = vmatmul.mubr.bf16.gmra.mxu0 %v6578
      %v7245 = vpop.f32.mrf.mxu0
      %v7246 = vadd.f32 0.0, %v7245
      %v7247 = vpop.f32.mrf.mxu0
      %v7248 = vpop.f32.mrf.mxu0
      %v7249 = vadd.f32 0.0, %v7248
      %v7250 = vpop.f32.mrf.mxu0
      %7251 = vmatprep.mubr.bf16.mxu0 0
      %7252 = vmatmul.mubr.bf16.gmra.mxu0 %v6581
      %v7253 = vpop.f32.mrf.mxu0
      %v7254 = vadd.f32 0.0, %v7253
      %v7255 = vpop.f32.mrf.mxu0
      %v7256 = vpop.f32.mrf.mxu0
      %v7257 = vadd.f32 0.0, %v7256
      %v7258 = vpop.f32.mrf.mxu0
      %7259 = vmatprep.mubr.bf16.mxu0 0
      %7260 = vmatmul.mubr.bf16.gmra.mxu0 %v6584
      %v7261 = vpop.f32.mrf.mxu0
      %v7262 = vadd.f32 0.0, %v7261
      %v7263 = vpop.f32.mrf.mxu0
      %v7264 = vpop.f32.mrf.mxu0
      %v7265 = vadd.f32 0.0, %v7264
      %v7266 = vpop.f32.mrf.mxu0
      %7267 = vmatprep.mubr.bf16.mxu0 0
      %7268 = vmatmul.mubr.bf16.gmra.mxu0 %v6587
      %v7269 = vpop.f32.mrf.mxu0
      %v7270 = vadd.f32 0.0, %v7269
      %v7271 = vpop.f32.mrf.mxu0
      %v7272 = vpop.f32.mrf.mxu0
      %v7273 = vadd.f32 0.0, %v7272
      %v7274 = vpop.f32.mrf.mxu0
      %7275 = vmatprep.mubr.bf16.mxu0 0
      %7276 = vmatmul.mubr.bf16.gmra.mxu0 %v6590
      %v7277 = vpop.f32.mrf.mxu0
      %v7278 = vadd.f32 0.0, %v7277
      %v7279 = vpop.f32.mrf.mxu0
      %v7280 = vpop.f32.mrf.mxu0
      %v7281 = vadd.f32 0.0, %v7280
      %v7282 = vpop.f32.mrf.mxu0
      %7283 = vmatprep.mubr.bf16.mxu0 0
      %7284 = vmatmul.mubr.bf16.gmra.mxu0 %v6593
      %v7285 = vpop.f32.mrf.mxu0
      %v7286 = vadd.f32 0.0, %v7285
      %v7287 = vpop.f32.mrf.mxu0
      %v7288 = vpop.f32.mrf.mxu0
      %v7289 = vadd.f32 0.0, %v7288
      %v7290 = vpop.f32.mrf.mxu0
      %7291 = vmatprep.mubr.bf16.mxu0 0
      %7292 = vmatmul.mubr.bf16.gmra.mxu0 %v6596
      %v7293 = vpop.f32.mrf.mxu0
      %v7294 = vadd.f32 0.0, %v7293
      %v7295 = vpop.f32.mrf.mxu0
      %v7296 = vpop.f32.mrf.mxu0
      %v7297 = vadd.f32 0.0, %v7296
      %v7298 = vpop.f32.mrf.mxu0
      %7299 = vmatprep.mubr.bf16.mxu0 0
      %7300 = vmatmul.mubr.bf16.gmra.mxu0 %v6599
      %v7301 = vpop.f32.mrf.mxu0
      %v7302 = vadd.f32 0.0, %v7301
      %v7303 = vpop.f32.mrf.mxu0
      %v7304 = vpop.f32.mrf.mxu0
      %v7305 = vadd.f32 0.0, %v7304
      %v7306 = vpop.f32.mrf.mxu0
      %7307 = vmatprep.mubr.bf16.mxu0 0
      %7308 = vmatmul.mubr.bf16.gmra.mxu0 %v6602
      %v7309 = vpop.f32.mrf.mxu0
      %v7310 = vadd.f32 0.0, %v7309
      %v7311 = vpop.f32.mrf.mxu0
      %v7312 = vpop.f32.mrf.mxu0
      %v7313 = vadd.f32 0.0, %v7312
      %v7314 = vpop.f32.mrf.mxu0
      %7315 = vmatprep.mubr.bf16.mxu0 0
      %7316 = vmatmul.mubr.bf16.gmra.mxu0 %v6605
      %v7317 = vpop.f32.mrf.mxu0
      %v7318 = vadd.f32 0.0, %v7317
      %v7319 = vpop.f32.mrf.mxu0
      %v7320 = vpop.f32.mrf.mxu0
      %v7321 = vadd.f32 0.0, %v7320
      %v7322 = vpop.f32.mrf.mxu0
      %7323 = vmatprep.mubr.bf16.mxu0 0
      %7324 = vmatmul.mubr.bf16.gmra.mxu0 %v6608
      %v7325 = vpop.f32.mrf.mxu0
      %v7326 = vadd.f32 0.0, %v7325
      %v7327 = vpop.f32.mrf.mxu0
      %v7328 = vpop.f32.mrf.mxu0
      %v7329 = vadd.f32 0.0, %v7328
      %v7330 = vpop.f32.mrf.mxu0
      %7331 = vmatprep.mubr.bf16.mxu0 0
      %7332 = vmatmul.mubr.bf16.gmra.mxu0 %v6611
      %v7333 = vpop.f32.mrf.mxu0
      %v7334 = vadd.f32 0.0, %v7333
      %v7335 = vpop.f32.mrf.mxu0
      %v7336 = vpop.f32.mrf.mxu0
      %v7337 = vadd.f32 0.0, %v7336
      %v7338 = vpop.f32.mrf.mxu0
      %7339 = vmatprep.mubr.bf16.mxu0 0
      %7340 = vmatmul.mubr.bf16.gmra.mxu0 %v6614
      %v7341 = vpop.f32.mrf.mxu0
      %v7342 = vadd.f32 0.0, %v7341
      %v7343 = vpop.f32.mrf.mxu0
      %v7344 = vpop.f32.mrf.mxu0
      %v7345 = vadd.f32 0.0, %v7344
      %v7346 = vpop.f32.mrf.mxu0
      %7347 = vmatprep.mubr.bf16.mxu0 0
      %7348 = vmatmul.mubr.bf16.gmra.mxu0 %v6617
      %v7349 = vpop.f32.mrf.mxu0
      %v7350 = vadd.f32 0.0, %v7349
      %v7351 = vpop.f32.mrf.mxu0
      %v7352 = vpop.f32.mrf.mxu0
      %v7353 = vadd.f32 0.0, %v7352
      %v7354 = vpop.f32.mrf.mxu0
      %7355 = vmatprep.mubr.bf16.mxu0 0
      %7356 = vmatmul.mubr.bf16.gmra.mxu0 %v6620
      %v7357 = vpop.f32.mrf.mxu0
      %v7358 = vadd.f32 0.0, %v7357
      %v7359 = vpop.f32.mrf.mxu0
      %v7360 = vpop.f32.mrf.mxu0
      %v7361 = vadd.f32 0.0, %v7360
      %v7362 = vpop.f32.mrf.mxu0
      %7363 = vmatprep.mubr.bf16.mxu0 0
      %7364 = vmatmul.mubr.bf16.gmra.mxu0 %v6623
      %v7365 = vpop.f32.mrf.mxu0
      %v7366 = vadd.f32 0.0, %v7365
      %v7367 = vpop.f32.mrf.mxu0
      %v7368 = vpop.f32.mrf.mxu0
      %v7369 = vadd.f32 0.0, %v7368
      %v7370 = vpop.f32.mrf.mxu0
      %7371 = vmatprep.mubr.bf16.mxu0 0
      %7372 = vmatmul.mubr.bf16.gmra.mxu0 %v6626
      %v7373 = vpop.f32.mrf.mxu0
      %v7374 = vadd.f32 0.0, %v7373
      %v7375 = vpop.f32.mrf.mxu0
      %v7376 = vpop.f32.mrf.mxu0
      %v7377 = vadd.f32 0.0, %v7376
      %v7378 = vpop.f32.mrf.mxu0
      %7379 = vmatprep.mubr.bf16.mxu0 0
      %7380 = vmatmul.mubr.bf16.gmra.mxu0 %v6629
      %v7381 = vpop.f32.mrf.mxu0
      %v7382 = vadd.f32 0.0, %v7381
      %v7383 = vpop.f32.mrf.mxu0
      %v7384 = vpop.f32.mrf.mxu0
      %v7385 = vadd.f32 0.0, %v7384
      %v7386 = vpop.f32.mrf.mxu0
      %7387 = vmatprep.mubr.bf16.mxu0 0
      %7388 = vmatmul.mubr.bf16.gmra.mxu0 %v6632
      %v7389 = vpop.f32.mrf.mxu0
      %v7390 = vadd.f32 0.0, %v7389
      %v7391 = vpop.f32.mrf.mxu0
      %v7392 = vpop.f32.mrf.mxu0
      %v7393 = vadd.f32 0.0, %v7392
      %v7394 = vpop.f32.mrf.mxu0
      %7395 = vmatprep.mubr.bf16.mxu0 0
      %7396 = vmatmul.mubr.bf16.gmra.mxu0 %v6635
      %v7397 = vpop.f32.mrf.mxu0
      %v7398 = vadd.f32 0.0, %v7397
      %v7399 = vpop.f32.mrf.mxu0
      %v7400 = vpop.f32.mrf.mxu0
      %v7401 = vadd.f32 0.0, %v7400
      %v7402 = vpop.f32.mrf.mxu0
      %7403 = vmatprep.mubr.bf16.mxu0 0
      %7404 = vmatmul.mubr.bf16.gmra.mxu0 %v6638
      %v7405 = vpop.f32.mrf.mxu0
      %v7406 = vadd.f32 0.0, %v7405
      %v7407 = vpop.f32.mrf.mxu0
      %v7408 = vpop.f32.mrf.mxu0
      %v7409 = vadd.f32 0.0, %v7408
      %v7410 = vpop.f32.mrf.mxu0
      %7411 = vmatprep.mubr.bf16.mxu0 0
      %7412 = vmatmul.mubr.bf16.gmra.mxu0 %v6641
      %v7413 = vpop.f32.mrf.mxu0
      %v7414 = vadd.f32 0.0, %v7413
      %v7415 = vpop.f32.mrf.mxu0
      %v7416 = vpop.f32.mrf.mxu0
      %v7417 = vadd.f32 0.0, %v7416
      %v7418 = vpop.f32.mrf.mxu0
      %7419 = vmatprep.mubr.bf16.mxu0 0
      %7420 = vmatmul.mubr.bf16.gmra.mxu0 %v6644
      %v7421 = vpop.f32.mrf.mxu0
      %v7422 = vadd.f32 0.0, %v7421
      %v7423 = vpop.f32.mrf.mxu0
      %v7424 = vpop.f32.mrf.mxu0
      %v7425 = vadd.f32 0.0, %v7424
      %v7426 = vpop.f32.mrf.mxu0
      %7427 = vmatprep.mubr.bf16.mxu0 0
      %7428 = vmatmul.mubr.bf16.gmra.mxu0 %v6647
      %v7429 = vpop.f32.mrf.mxu0
      %v7430 = vadd.f32 0.0, %v7429
      %v7431 = vpop.f32.mrf.mxu0
      %v7432 = vpop.f32.mrf.mxu0
      %v7433 = vadd.f32 0.0, %v7432
      %v7434 = vpop.f32.mrf.mxu0
      %7435 = vmatprep.mubr.bf16.mxu0 0
      %7436 = vmatmul.mubr.bf16.gmra.mxu0 %v6650
      %v7437 = vpop.f32.mrf.mxu0
      %v7438 = vadd.f32 0.0, %v7437
      %v7439 = vpop.f32.mrf.mxu0
      %v7440 = vpop.f32.mrf.mxu0
      %v7441 = vadd.f32 0.0, %v7440
      %v7442 = vpop.f32.mrf.mxu0
      %7443 = vmatprep.mubr.bf16.mxu0 0
      %7444 = vmatmul.mubr.bf16.gmra.mxu0 %v6653
      %v7445 = vpop.f32.mrf.mxu0
      %v7446 = vadd.f32 0.0, %v7445
      %v7447 = vpop.f32.mrf.mxu0
      %v7448 = vpop.f32.mrf.mxu0
      %v7449 = vadd.f32 0.0, %v7448
      %v7450 = vpop.f32.mrf.mxu0
      %7451 = vmatprep.mubr.bf16.mxu0 0
      %7452 = vmatmul.mubr.bf16.gmra.mxu0 %v6656
      %v7453 = vpop.f32.mrf.mxu0
      %v7454 = vadd.f32 0.0, %v7453
      %v7455 = vpop.f32.mrf.mxu0
      %v7456 = vpop.f32.mrf.mxu0
      %v7457 = vadd.f32 0.0, %v7456
      %v7458 = vpop.f32.mrf.mxu0
      %7459 = vmatprep.mubr.bf16.mxu0 0
      %7460 = vmatmul.mubr.bf16.gmra.mxu0 %v6659
      %v7461 = vpop.f32.mrf.mxu0
      %v7462 = vadd.f32 0.0, %v7461
      %v7463 = vpop.f32.mrf.mxu0
      %v7464 = vpop.f32.mrf.mxu0
      %v7465 = vadd.f32 0.0, %v7464
      %v7466 = vpop.f32.mrf.mxu0
      %7467 = vmatprep.mubr.bf16.mxu0 0
      %7468 = vmatmul.mubr.bf16.gmra.mxu0 %v6662
      %v7469 = vpop.f32.mrf.mxu0
      %v7470 = vadd.f32 0.0, %v7469
      %v7471 = vpop.f32.mrf.mxu0
      %v7472 = vpop.f32.mrf.mxu0
      %v7473 = vadd.f32 0.0, %v7472
      %v7474 = vpop.f32.mrf.mxu0
      %7475 = vmatprep.mubr.bf16.mxu0 0
      %7476 = vmatmul.mubr.bf16.gmra.mxu0 %v6665
      %v7477 = vpop.f32.mrf.mxu0
      %v7478 = vadd.f32 0.0, %v7477
      %v7479 = vpop.f32.mrf.mxu0
      %v7480 = vpop.f32.mrf.mxu0
      %v7481 = vadd.f32 0.0, %v7480
      %v7482 = vpop.f32.mrf.mxu0
      %7483 = vmatprep.mubr.bf16.mxu0 0
      %7484 = vmatmul.mubr.bf16.gmra.mxu0 %v6668
      %v7485 = vpop.f32.mrf.mxu0
      %v7486 = vadd.f32 0.0, %v7485
      %v7487 = vpop.f32.mrf.mxu0
      %v7488 = vpop.f32.mrf.mxu0
      %v7489 = vadd.f32 0.0, %v7488
      %v7490 = vpop.f32.mrf.mxu0
      %7491 = vmatprep.mubr.bf16.mxu0 0
      %7492 = vmatmul.mubr.bf16.gmra.mxu0 %v6671
      %v7493 = vpop.f32.mrf.mxu0
      %v7494 = vadd.f32 0.0, %v7493
      %v7495 = vpop.f32.mrf.mxu0
      %v7496 = vpop.f32.mrf.mxu0
      %v7497 = vadd.f32 0.0, %v7496
      %v7498 = vpop.f32.mrf.mxu0
      %7499 = vmatprep.mubr.bf16.mxu0 0
      %7500 = vmatmul.mubr.bf16.gmra.mxu0 %v6674
      %v7501 = vpop.f32.mrf.mxu0
      %v7502 = vadd.f32 0.0, %v7501
      %v7503 = vpop.f32.mrf.mxu0
      %v7504 = vpop.f32.mrf.mxu0
      %v7505 = vadd.f32 0.0, %v7504
      %v7506 = vpop.f32.mrf.mxu0
      %7507 = vmatprep.mubr.bf16.mxu0 0
      %7508 = vmatmul.mubr.bf16.gmra.mxu0 %v6677
      %v7509 = vpop.f32.mrf.mxu0
      %v7510 = vadd.f32 0.0, %v7509
      %v7511 = vpop.f32.mrf.mxu0
      %v7512 = vpop.f32.mrf.mxu0
      %v7513 = vadd.f32 0.0, %v7512
      %v7514 = vpop.f32.mrf.mxu0
      %7515 = vmatprep.mubr.bf16.mxu0 0
      %7516 = vmatmul.mubr.bf16.gmra.mxu0 %v6680
      %v7517 = vpop.f32.mrf.mxu0
      %v7518 = vadd.f32 0.0, %v7517
      %v7519 = vpop.f32.mrf.mxu0
      %v7520 = vpop.f32.mrf.mxu0
      %v7521 = vadd.f32 0.0, %v7520
      %v7522 = vpop.f32.mrf.mxu0
      %7523 = vmatprep.mubr.bf16.mxu0 0
      %7524 = vmatmul.mubr.bf16.gmra.mxu0 %v6683
      %v7525 = vpop.f32.mrf.mxu0
      %v7526 = vadd.f32 0.0, %v7525
      %v7527 = vpop.f32.mrf.mxu0
      %v7528 = vpop.f32.mrf.mxu0
      %v7529 = vadd.f32 0.0, %v7528
      %v7530 = vpop.f32.mrf.mxu0
      %7531 = vmatprep.mubr.bf16.mxu0 0
      %7532 = vmatmul.mubr.bf16.gmra.mxu0 %v6686
      %v7533 = vpop.f32.mrf.mxu0
      %v7534 = vadd.f32 0.0, %v7533
      %v7535 = vpop.f32.mrf.mxu0
      %v7536 = vpop.f32.mrf.mxu0
      %v7537 = vadd.f32 0.0, %v7536
      %v7538 = vpop.f32.mrf.mxu0
      %7539 = vmatprep.mubr.bf16.mxu0 0
      %7540 = vmatmul.mubr.bf16.gmra.mxu0 %v6689
      %v7541 = vpop.f32.mrf.mxu0
      %v7542 = vadd.f32 0.0, %v7541
      %v7543 = vpop.f32.mrf.mxu0
      %v7544 = vpop.f32.mrf.mxu0
      %v7545 = vadd.f32 0.0, %v7544
      %v7546 = vpop.f32.mrf.mxu0
      %7547 = vmatprep.mubr.bf16.mxu0 0
      %7548 = vmatmul.mubr.bf16.gmra.mxu0 %v6692
      %v7549 = vpop.f32.mrf.mxu0
      %v7550 = vadd.f32 0.0, %v7549
      %v7551 = vpop.f32.mrf.mxu0
      %v7552 = vpop.f32.mrf.mxu0
      %v7553 = vadd.f32 0.0, %v7552
      %v7554 = vpop.f32.mrf.mxu0
      %7555 = vmatprep.mubr.bf16.mxu0 0
      %7556 = vmatmul.mubr.bf16.gmra.mxu0 %v6695
      %v7557 = vpop.f32.mrf.mxu0
      %v7558 = vadd.f32 0.0, %v7557
      %v7559 = vpop.f32.mrf.mxu0
      %v7560 = vpop.f32.mrf.mxu0
      %v7561 = vadd.f32 0.0, %v7560
      %v7562 = vpop.f32.mrf.mxu0
      %7563 = vmatprep.mubr.bf16.mxu0 0
      %7564 = vmatmul.mubr.bf16.gmra.mxu0 %v6698
      %v7565 = vpop.f32.mrf.mxu0
      %v7566 = vadd.f32 0.0, %v7565
      %v7567 = vpop.f32.mrf.mxu0
      %v7568 = vpop.f32.mrf.mxu0
      %v7569 = vadd.f32 0.0, %v7568
      %v7570 = vpop.f32.mrf.mxu0
      %7571 = vmatprep.mubr.bf16.mxu0 0
      %7572 = vmatmul.mubr.bf16.gmra.mxu0 %v6701
      %v7573 = vpop.f32.mrf.mxu0
      %v7574 = vadd.f32 0.0, %v7573
      %v7575 = vpop.f32.mrf.mxu0
      %v7576 = vpop.f32.mrf.mxu0
      %v7577 = vadd.f32 0.0, %v7576
      %v7578 = vpop.f32.mrf.mxu0
      %7579 = vmatprep.mubr.bf16.mxu0 0
      %7580 = vmatmul.mubr.bf16.gmra.mxu0 %v6704
      %v7581 = vpop.f32.mrf.mxu0
      %v7582 = vadd.f32 0.0, %v7581
      %v7583 = vpop.f32.mrf.mxu0
      %v7584 = vpop.f32.mrf.mxu0
      %v7585 = vadd.f32 0.0, %v7584
      %v7586 = vpop.f32.mrf.mxu0
      %7587 = vmatprep.mubr.bf16.mxu0 0
      %7588 = vmatmul.mubr.bf16.gmra.mxu0 %v6707
      %v7589 = vpop.f32.mrf.mxu0
      %v7590 = vadd.f32 0.0, %v7589
      %v7591 = vpop.f32.mrf.mxu0
      %v7592 = vpop.f32.mrf.mxu0
      %v7593 = vadd.f32 0.0, %v7592
      %v7594 = vpop.f32.mrf.mxu0
      %7595 = vmatprep.mubr.bf16.mxu0 0
      %7596 = vmatmul.mubr.bf16.gmra.mxu0 %v6710
      %v7597 = vpop.f32.mrf.mxu0
      %v7598 = vadd.f32 0.0, %v7597
      %v7599 = vpop.f32.mrf.mxu0
      %v7600 = vpop.f32.mrf.mxu0
      %v7601 = vadd.f32 0.0, %v7600
      %v7602 = vpop.f32.mrf.mxu0
      %7603 = vmatprep.mubr.bf16.mxu0 0
      %7604 = vmatmul.mubr.bf16.gmra.mxu0 %v6713
      %v7605 = vpop.f32.mrf.mxu0
      %v7606 = vadd.f32 0.0, %v7605
      %v7607 = vpop.f32.mrf.mxu0
      %v7608 = vpop.f32.mrf.mxu0
      %v7609 = vadd.f32 0.0, %v7608
      %v7610 = vpop.f32.mrf.mxu0
      %7611 = vmatprep.mubr.bf16.mxu0 0
      %7612 = vmatmul.mubr.bf16.gmra.mxu0 %v6716
      %v7613 = vpop.f32.mrf.mxu0
      %v7614 = vadd.f32 0.0, %v7613
      %v7615 = vpop.f32.mrf.mxu0
      %v7616 = vpop.f32.mrf.mxu0
      %v7617 = vadd.f32 0.0, %v7616
      %v7618 = vpop.f32.mrf.mxu0
      %7619 = vmatprep.mubr.bf16.mxu0 0
      %7620 = vmatmul.mubr.bf16.gmra.mxu0 %v6719
      %v7621 = vpop.f32.mrf.mxu0
      %v7622 = vadd.f32 0.0, %v7621
      %v7623 = vpop.f32.mrf.mxu0
      %v7624 = vpop.f32.mrf.mxu0
      %v7625 = vadd.f32 0.0, %v7624
      %v7626 = vpop.f32.mrf.mxu0
      %7627 = vmatprep.mubr.bf16.mxu0 0
      %7628 = vmatmul.mubr.bf16.gmra.mxu0 %v6722
      %v7629 = vpop.f32.mrf.mxu0
      %v7630 = vadd.f32 0.0, %v7629
      %v7631 = vpop.f32.mrf.mxu0
      %v7632 = vpop.f32.mrf.mxu0
      %v7633 = vadd.f32 0.0, %v7632
      %v7634 = vpop.f32.mrf.mxu0
      %7635 = vmatprep.mubr.bf16.mxu0 0
      %7636 = vmatmul.mubr.bf16.gmra.mxu0 %v6725
      %v7637 = vpop.f32.mrf.mxu0
      %v7638 = vadd.f32 0.0, %v7637
      %v7639 = vpop.f32.mrf.mxu0
      %v7640 = vpop.f32.mrf.mxu0
      %v7641 = vadd.f32 0.0, %v7640
      %v7642 = vpop.f32.mrf.mxu0
      %7643 = vmatprep.mubr.bf16.mxu0 0
      %7644 = vmatmul.mubr.bf16.gmra.mxu0 %v6728
      %v7645 = vpop.f32.mrf.mxu0
      %v7646 = vadd.f32 0.0, %v7645
      %v7647 = vpop.f32.mrf.mxu0
      %v7648 = vpop.f32.mrf.mxu0
      %v7649 = vadd.f32 0.0, %v7648
      %v7650 = vpop.f32.mrf.mxu0
      %7651 = vmatprep.mubr.bf16.mxu0 0
      %7652 = vmatmul.mubr.bf16.gmra.mxu0 %v6731
      %v7653 = vpop.f32.mrf.mxu0
      %v7654 = vadd.f32 0.0, %v7653
      %v7655 = vpop.f32.mrf.mxu0
      %v7656 = vpop.f32.mrf.mxu0
      %v7657 = vadd.f32 0.0, %v7656
      %v7658 = vpop.f32.mrf.mxu0
      %7659 = vmatprep.mubr.bf16.mxu0 0
      %7660 = vmatmul.mubr.bf16.gmra.mxu0 %v6734
      %v7661 = vpop.f32.mrf.mxu0
      %v7662 = vadd.f32 0.0, %v7661
      %v7663 = vpop.f32.mrf.mxu0
      %v7664 = vpop.f32.mrf.mxu0
      %v7665 = vadd.f32 0.0, %v7664
      %v7666 = vpop.f32.mrf.mxu0
      %7667 = vmatprep.mubr.bf16.mxu0 0
      %7668 = vmatmul.mubr.bf16.gmra.mxu0 %v6737
      %v7669 = vpop.f32.mrf.mxu0
      %v7670 = vadd.f32 0.0, %v7669
      %v7671 = vpop.f32.mrf.mxu0
      %v7672 = vpop.f32.mrf.mxu0
      %v7673 = vadd.f32 0.0, %v7672
      %v7674 = vpop.f32.mrf.mxu0
      %7675 = vmatprep.mubr.bf16.mxu0 0
      %7676 = vmatmul.mubr.bf16.gmra.mxu0 %v6740
      %v7677 = vpop.f32.mrf.mxu0
      %v7678 = vadd.f32 0.0, %v7677
      %v7679 = vpop.f32.mrf.mxu0
      %v7680 = vpop.f32.mrf.mxu0
      %v7681 = vadd.f32 0.0, %v7680
      %v7682 = vpop.f32.mrf.mxu0
      %7683 = vmatprep.mubr.bf16.mxu0 0
      %7684 = vmatmul.mubr.bf16.gmra.mxu0 %v6743
      %v7685 = vpop.f32.mrf.mxu0
      %v7686 = vadd.f32 0.0, %v7685
      %v7687 = vpop.f32.mrf.mxu0
      %v7688 = vpop.f32.mrf.mxu0
      %v7689 = vadd.f32 0.0, %v7688
      %v7690 = vpop.f32.mrf.mxu0
      %7691 = vmatprep.mubr.bf16.mxu0 0
      %7692 = vmatmul.mubr.bf16.gmra.mxu0 %v6746
      %v7693 = vpop.f32.mrf.mxu0
      %v7694 = vadd.f32 0.0, %v7693
      %v7695 = vpop.f32.mrf.mxu0
      %v7696 = vpop.f32.mrf.mxu0
      %v7697 = vadd.f32 0.0, %v7696
      %v7698 = vpop.f32.mrf.mxu0
      %7699 = vmatprep.mubr.bf16.mxu0 0
      %7700 = vmatmul.mubr.bf16.gmra.mxu0 %v6749
      %v7701 = vpop.f32.mrf.mxu0
      %v7702 = vadd.f32 0.0, %v7701
      %v7703 = vpop.f32.mrf.mxu0
      %v7704 = vpop.f32.mrf.mxu0
      %v7705 = vadd.f32 0.0, %v7704
      %v7706 = vpop.f32.mrf.mxu0
      %7707 = vmatprep.mubr.bf16.mxu0 0
      %7708 = vmatmul.mubr.bf16.gmra.mxu0 %v6752
      %v7709 = vpop.f32.mrf.mxu0
      %v7710 = vadd.f32 0.0, %v7709
      %v7711 = vpop.f32.mrf.mxu0
      %v7712 = vpop.f32.mrf.mxu0
      %v7713 = vadd.f32 0.0, %v7712
      %v7714 = vpop.f32.mrf.mxu0
      %7715 = vmatprep.mubr.bf16.mxu0 0
      %7716 = vmatmul.mubr.bf16.gmra.mxu0 %v6755
      %v7717 = vpop.f32.mrf.mxu0
      %v7718 = vadd.f32 0.0, %v7717
      %v7719 = vpop.f32.mrf.mxu0
      %v7720 = vpop.f32.mrf.mxu0
      %v7721 = vadd.f32 0.0, %v7720
      %v7722 = vpop.f32.mrf.mxu0
      %7723 = vmatprep.mubr.bf16.mxu0 0
      %7724 = vmatmul.mubr.bf16.gmra.mxu0 %v6758
      %v7725 = vpop.f32.mrf.mxu0
      %v7726 = vadd.f32 0.0, %v7725
      %v7727 = vpop.f32.mrf.mxu0
      %v7728 = vpop.f32.mrf.mxu0
      %v7729 = vadd.f32 0.0, %v7728
      %v7730 = vpop.f32.mrf.mxu0
      %7731 = vmatprep.mubr.bf16.mxu0 0
      %7732 = vmatmul.mubr.bf16.gmra.mxu0 %v6761
      %v7733 = vpop.f32.mrf.mxu0
      %v7734 = vadd.f32 0.0, %v7733
      %v7735 = vpop.f32.mrf.mxu0
      %v7736 = vpop.f32.mrf.mxu0
      %v7737 = vadd.f32 0.0, %v7736
      %v7738 = vpop.f32.mrf.mxu0
      %7739 = vmatprep.mubr.bf16.mxu0 0
      %7740 = vmatmul.mubr.bf16.gmra.mxu0 %v6764
      %v7741 = vpop.f32.mrf.mxu0
      %v7742 = vadd.f32 0.0, %v7741
      %v7743 = vpop.f32.mrf.mxu0
      %v7744 = vpop.f32.mrf.mxu0
      %v7745 = vadd.f32 0.0, %v7744
      %v7746 = vpop.f32.mrf.mxu0
      %7747 = vmatprep.mubr.bf16.mxu0 0
      %7748 = vmatmul.mubr.bf16.gmra.mxu0 %v6767
      %v7749 = vpop.f32.mrf.mxu0
      %v7750 = vadd.f32 0.0, %v7749
      %v7751 = vpop.f32.mrf.mxu0
      %v7752 = vpop.f32.mrf.mxu0
      %v7753 = vadd.f32 0.0, %v7752
      %v7754 = vpop.f32.mrf.mxu0
      %7755 = vmatprep.mubr.bf16.mxu0 0
      %7756 = vmatmul.mubr.bf16.gmra.mxu0 %v6770
      %v7757 = vpop.f32.mrf.mxu0
      %v7758 = vadd.f32 0.0, %v7757
      %v7759 = vpop.f32.mrf.mxu0
      %v7760 = vpop.f32.mrf.mxu0
      %v7761 = vadd.f32 0.0, %v7760
      %v7762 = vpop.f32.mrf.mxu0
      %7763 = vmatprep.mubr.bf16.mxu0 0
      %7764 = vmatmul.mubr.bf16.gmra.mxu0 %v6773
      %v7765 = vpop.f32.mrf.mxu0
      %v7766 = vadd.f32 0.0, %v7765
      %v7767 = vpop.f32.mrf.mxu0
      %v7768 = vpop.f32.mrf.mxu0
      %v7769 = vadd.f32 0.0, %v7768
      %v7770 = vpop.f32.mrf.mxu0
      %7771 = vmatprep.mubr.bf16.mxu0 0
      %7772 = vmatmul.mubr.bf16.gmra.mxu0 %v6776
      %v7773 = vpop.f32.mrf.mxu0
      %v7774 = vadd.f32 0.0, %v7773
      %v7775 = vpop.f32.mrf.mxu0
      %v7776 = vpop.f32.mrf.mxu0
      %v7777 = vadd.f32 0.0, %v7776
      %v7778 = vpop.f32.mrf.mxu0
      %7779 = vmatprep.mubr.bf16.mxu0 0
      %7780 = vmatmul.mubr.bf16.gmra.mxu0 %v6779
      %v7781 = vpop.f32.mrf.mxu0
      %v7782 = vadd.f32 0.0, %v7781
      %v7783 = vpop.f32.mrf.mxu0
      %v7784 = vpop.f32.mrf.mxu0
      %v7785 = vadd.f32 0.0, %v7784
      %v7786 = vpop.f32.mrf.mxu0
      %7787 = vmatprep.mubr.bf16.mxu0 0
      %7788 = vmatmul.mubr.bf16.gmra.mxu0 %v6782
      %v7789 = vpop.f32.mrf.mxu0
      %v7790 = vadd.f32 0.0, %v7789
      %v7791 = vpop.f32.mrf.mxu0
      %v7792 = vpop.f32.mrf.mxu0
      %v7793 = vadd.f32 0.0, %v7792
      %v7794 = vpop.f32.mrf.mxu0
      %7795 = vmatprep.mubr.bf16.mxu0 0
      %7796 = vmatmul.mubr.bf16.gmra.mxu0 %v6785
      %v7797 = vpop.f32.mrf.mxu0
      %v7798 = vadd.f32 0.0, %v7797
      %v7799 = vpop.f32.mrf.mxu0
      %v7800 = vpop.f32.mrf.mxu0
      %v7801 = vadd.f32 0.0, %v7800
      %v7802 = vpop.f32.mrf.mxu0
      %7803 = vmatprep.mubr.bf16.mxu0 0
      %7804 = vmatmul.mubr.bf16.gmra.mxu0 %v6788
      %v7805 = vpop.f32.mrf.mxu0
      %v7806 = vadd.f32 0.0, %v7805
      %v7807 = vpop.f32.mrf.mxu0
      %v7808 = vpop.f32.mrf.mxu0
      %v7809 = vadd.f32 0.0, %v7808
      %v7810 = vpop.f32.mrf.mxu0
      %7811 = vmatprep.mubr.bf16.mxu0 0
      %7812 = vmatmul.mubr.bf16.gmra.mxu0 %v6791
      %v7813 = vpop.f32.mrf.mxu0
      %v7814 = vadd.f32 0.0, %v7813
      %v7815 = vpop.f32.mrf.mxu0
      %v7816 = vpop.f32.mrf.mxu0
      %v7817 = vadd.f32 0.0, %v7816
      %v7818 = vpop.f32.mrf.mxu0
      %7819 = vmatprep.mubr.bf16.mxu0 0
      %7820 = vmatmul.mubr.bf16.gmra.mxu0 %v6794
      %v7821 = vpop.f32.mrf.mxu0
      %v7822 = vadd.f32 0.0, %v7821
      %v7823 = vpop.f32.mrf.mxu0
      %v7824 = vpop.f32.mrf.mxu0
      %v7825 = vadd.f32 0.0, %v7824
      %v7826 = vpop.f32.mrf.mxu0
      %7827 = vmatprep.mubr.bf16.mxu0 0
      %7828 = vmatmul.mubr.bf16.gmra.mxu0 %v6797
      %v7829 = vpop.f32.mrf.mxu0
      %v7830 = vadd.f32 0.0, %v7829
      %v7831 = vpop.f32.mrf.mxu0
      %v7832 = vpop.f32.mrf.mxu0
      %v7833 = vadd.f32 0.0, %v7832
      %v7834 = vpop.f32.mrf.mxu0
      %7835 = vmatprep.mubr.bf16.mxu0 0
      %7836 = vmatmul.mubr.bf16.gmra.mxu0 %v6800
      %v7837 = vpop.f32.mrf.mxu0
      %v7838 = vadd.f32 0.0, %v7837
      %v7839 = vpop.f32.mrf.mxu0
      %v7840 = vpop.f32.mrf.mxu0
      %v7841 = vadd.f32 0.0, %v7840
      %v7842 = vpop.f32.mrf.mxu0
      %7843 = vmatprep.mubr.bf16.mxu0 0
      %7844 = vmatmul.mubr.bf16.gmra.mxu0 %v6803
      %v7845 = vpop.f32.mrf.mxu0
      %v7846 = vadd.f32 0.0, %v7845
      %v7847 = vpop.f32.mrf.mxu0
      %v7848 = vpop.f32.mrf.mxu0
      %v7849 = vadd.f32 0.0, %v7848
      %v7850 = vpop.f32.mrf.mxu0
      %7851 = vmatprep.mubr.bf16.mxu0 0
      %7852 = vmatmul.mubr.bf16.gmra.mxu0 %v6806
      %v7853 = vpop.f32.mrf.mxu0
      %v7854 = vadd.f32 0.0, %v7853
      %v7855 = vpop.f32.mrf.mxu0
      %v7856 = vpop.f32.mrf.mxu0
      %v7857 = vadd.f32 0.0, %v7856
      %v7858 = vpop.f32.mrf.mxu0
      %7859 = vmatprep.mubr.bf16.mxu0 0
      %7860 = vmatmul.mubr.bf16.gmra.mxu0 %v6809
      %v7861 = vpop.f32.mrf.mxu0
      %v7862 = vadd.f32 0.0, %v7861
      %v7863 = vpop.f32.mrf.mxu0
      %v7864 = vpop.f32.mrf.mxu0
      %v7865 = vadd.f32 0.0, %v7864
      %v7866 = vpop.f32.mrf.mxu0
      %7867 = vdwg.mxu0
      %v7869 = vlaneseq
      %v7870 = vshrl.u32 %v7869, 7
      %v7871 = vsub.s32 0, %v7870
      %v7872 = vrot.slane %v6284, %v7871
      %v7874 = vmul.f32 %v6846, %v7872
      %v7875 = vmul.f32 %v6849, %v7872
      %v7876 = vmul.f32 %v6854, %v7872
      %v7877 = vmul.f32 %v6857, %v7872
      %v7878 = vmul.f32 %v6862, %v7872
      %v7879 = vmul.f32 %v6865, %v7872
      %v7880 = vmul.f32 %v6870, %v7872
      %v7881 = vmul.f32 %v6873, %v7872
      %v7882 = vmul.f32 %v6878, %v7872
      %v7883 = vmul.f32 %v6881, %v7872
      %v7884 = vmul.f32 %v6886, %v7872
      %v7885 = vmul.f32 %v6889, %v7872
      %v7886 = vmul.f32 %v6894, %v7872
      %v7887 = vmul.f32 %v6897, %v7872
      %v7888 = vmul.f32 %v6902, %v7872
      %v7889 = vmul.f32 %v6905, %v7872
      %v7890 = vmul.f32 %v6910, %v7872
      %v7891 = vmul.f32 %v6913, %v7872
      %v7892 = vmul.f32 %v6918, %v7872
      %v7893 = vmul.f32 %v6921, %v7872
      %v7894 = vmul.f32 %v6926, %v7872
      %v7895 = vmul.f32 %v6929, %v7872
      %v7896 = vmul.f32 %v6934, %v7872
      %v7897 = vmul.f32 %v6937, %v7872
      %v7898 = vmul.f32 %v6942, %v7872
      %v7899 = vmul.f32 %v6945, %v7872
      %v7900 = vmul.f32 %v6950, %v7872
      %v7901 = vmul.f32 %v6953, %v7872
      %v7902 = vmul.f32 %v6958, %v7872
      %v7903 = vmul.f32 %v6961, %v7872
      %v7904 = vmul.f32 %v6966, %v7872
      %v7905 = vmul.f32 %v6969, %v7872
      %v7906 = vmul.f32 %v6974, %v7872
      %v7907 = vmul.f32 %v6977, %v7872
      %v7908 = vmul.f32 %v6982, %v7872
      %v7909 = vmul.f32 %v6985, %v7872
      %v7910 = vmul.f32 %v6990, %v7872
      %v7911 = vmul.f32 %v6993, %v7872
      %v7912 = vmul.f32 %v6998, %v7872
      %v7913 = vmul.f32 %v7001, %v7872
      %v7914 = vmul.f32 %v7006, %v7872
      %v7915 = vmul.f32 %v7009, %v7872
      %v7916 = vmul.f32 %v7014, %v7872
      %v7917 = vmul.f32 %v7017, %v7872
      %v7918 = vmul.f32 %v7022, %v7872
      %v7919 = vmul.f32 %v7025, %v7872
      %v7920 = vmul.f32 %v7030, %v7872
      %v7921 = vmul.f32 %v7033, %v7872
      %v7922 = vmul.f32 %v7038, %v7872
      %v7923 = vmul.f32 %v7041, %v7872
      %v7924 = vmul.f32 %v7046, %v7872
      %v7925 = vmul.f32 %v7049, %v7872
      %v7926 = vmul.f32 %v7054, %v7872
      %v7927 = vmul.f32 %v7057, %v7872
      %v7928 = vmul.f32 %v7062, %v7872
      %v7929 = vmul.f32 %v7065, %v7872
      %v7930 = vmul.f32 %v7070, %v7872
      %v7931 = vmul.f32 %v7073, %v7872
      %v7932 = vmul.f32 %v7078, %v7872
      %v7933 = vmul.f32 %v7081, %v7872
      %v7934 = vmul.f32 %v7086, %v7872
      %v7935 = vmul.f32 %v7089, %v7872
      %v7936 = vmul.f32 %v7094, %v7872
      %v7937 = vmul.f32 %v7097, %v7872
      %v7938 = vmul.f32 %v7102, %v7872
      %v7939 = vmul.f32 %v7105, %v7872
      %v7940 = vmul.f32 %v7110, %v7872
      %v7941 = vmul.f32 %v7113, %v7872
      %v7942 = vmul.f32 %v7118, %v7872
      %v7943 = vmul.f32 %v7121, %v7872
      %v7944 = vmul.f32 %v7126, %v7872
      %v7945 = vmul.f32 %v7129, %v7872
      %v7946 = vmul.f32 %v7134, %v7872
      %v7947 = vmul.f32 %v7137, %v7872
      %v7948 = vmul.f32 %v7142, %v7872
      %v7949 = vmul.f32 %v7145, %v7872
      %v7950 = vmul.f32 %v7150, %v7872
      %v7951 = vmul.f32 %v7153, %v7872
      %v7952 = vmul.f32 %v7158, %v7872
      %v7953 = vmul.f32 %v7161, %v7872
      %v7954 = vmul.f32 %v7166, %v7872
      %v7955 = vmul.f32 %v7169, %v7872
      %v7956 = vmul.f32 %v7174, %v7872
      %v7957 = vmul.f32 %v7177, %v7872
      %v7958 = vmul.f32 %v7182, %v7872
      %v7959 = vmul.f32 %v7185, %v7872
      %v7960 = vmul.f32 %v7190, %v7872
      %v7961 = vmul.f32 %v7193, %v7872
      %v7962 = vmul.f32 %v7198, %v7872
      %v7963 = vmul.f32 %v7201, %v7872
      %v7964 = vmul.f32 %v7206, %v7872
      %v7965 = vmul.f32 %v7209, %v7872
      %v7966 = vmul.f32 %v7214, %v7872
      %v7967 = vmul.f32 %v7217, %v7872
      %v7968 = vmul.f32 %v7222, %v7872
      %v7969 = vmul.f32 %v7225, %v7872
      %v7970 = vmul.f32 %v7230, %v7872
      %v7971 = vmul.f32 %v7233, %v7872
      %v7972 = vmul.f32 %v7238, %v7872
      %v7973 = vmul.f32 %v7241, %v7872
      %v7974 = vmul.f32 %v7246, %v7872
      %v7975 = vmul.f32 %v7249, %v7872
      %v7976 = vmul.f32 %v7254, %v7872
      %v7977 = vmul.f32 %v7257, %v7872
      %v7978 = vmul.f32 %v7262, %v7872
      %v7979 = vmul.f32 %v7265, %v7872
      %v7980 = vmul.f32 %v7270, %v7872
      %v7981 = vmul.f32 %v7273, %v7872
      %v7982 = vmul.f32 %v7278, %v7872
      %v7983 = vmul.f32 %v7281, %v7872
      %v7984 = vmul.f32 %v7286, %v7872
      %v7985 = vmul.f32 %v7289, %v7872
      %v7986 = vmul.f32 %v7294, %v7872
      %v7987 = vmul.f32 %v7297, %v7872
      %v7988 = vmul.f32 %v7302, %v7872
      %v7989 = vmul.f32 %v7305, %v7872
      %v7990 = vmul.f32 %v7310, %v7872
      %v7991 = vmul.f32 %v7313, %v7872
      %v7992 = vmul.f32 %v7318, %v7872
      %v7993 = vmul.f32 %v7321, %v7872
      %v7994 = vmul.f32 %v7326, %v7872
      %v7995 = vmul.f32 %v7329, %v7872
      %v7996 = vmul.f32 %v7334, %v7872
      %v7997 = vmul.f32 %v7337, %v7872
      %v7998 = vmul.f32 %v7342, %v7872
      %v7999 = vmul.f32 %v7345, %v7872
      %v8000 = vmul.f32 %v7350, %v7872
      %v8001 = vmul.f32 %v7353, %v7872
      %v8002 = vmul.f32 %v7358, %v7872
      %v8003 = vmul.f32 %v7361, %v7872
      %v8004 = vmul.f32 %v7366, %v7872
      %v8005 = vmul.f32 %v7369, %v7872
      %v8006 = vmul.f32 %v7374, %v7872
      %v8007 = vmul.f32 %v7377, %v7872
      %v8008 = vmul.f32 %v7382, %v7872
      %v8009 = vmul.f32 %v7385, %v7872
      %v8010 = vmul.f32 %v7390, %v7872
      %v8011 = vmul.f32 %v7393, %v7872
      %v8012 = vmul.f32 %v7398, %v7872
      %v8013 = vmul.f32 %v7401, %v7872
      %v8014 = vmul.f32 %v7406, %v7872
      %v8015 = vmul.f32 %v7409, %v7872
      %v8016 = vmul.f32 %v7414, %v7872
      %v8017 = vmul.f32 %v7417, %v7872
      %v8018 = vmul.f32 %v7422, %v7872
      %v8019 = vmul.f32 %v7425, %v7872
      %v8020 = vmul.f32 %v7430, %v7872
      %v8021 = vmul.f32 %v7433, %v7872
      %v8022 = vmul.f32 %v7438, %v7872
      %v8023 = vmul.f32 %v7441, %v7872
      %v8024 = vmul.f32 %v7446, %v7872
      %v8025 = vmul.f32 %v7449, %v7872
      %v8026 = vmul.f32 %v7454, %v7872
      %v8027 = vmul.f32 %v7457, %v7872
      %v8028 = vmul.f32 %v7462, %v7872
      %v8029 = vmul.f32 %v7465, %v7872
      %v8030 = vmul.f32 %v7470, %v7872
      %v8031 = vmul.f32 %v7473, %v7872
      %v8032 = vmul.f32 %v7478, %v7872
      %v8033 = vmul.f32 %v7481, %v7872
      %v8034 = vmul.f32 %v7486, %v7872
      %v8035 = vmul.f32 %v7489, %v7872
      %v8036 = vmul.f32 %v7494, %v7872
      %v8037 = vmul.f32 %v7497, %v7872
      %v8038 = vmul.f32 %v7502, %v7872
      %v8039 = vmul.f32 %v7505, %v7872
      %v8040 = vmul.f32 %v7510, %v7872
      %v8041 = vmul.f32 %v7513, %v7872
      %v8042 = vmul.f32 %v7518, %v7872
      %v8043 = vmul.f32 %v7521, %v7872
      %v8044 = vmul.f32 %v7526, %v7872
      %v8045 = vmul.f32 %v7529, %v7872
      %v8046 = vmul.f32 %v7534, %v7872
      %v8047 = vmul.f32 %v7537, %v7872
      %v8048 = vmul.f32 %v7542, %v7872
      %v8049 = vmul.f32 %v7545, %v7872
      %v8050 = vmul.f32 %v7550, %v7872
      %v8051 = vmul.f32 %v7553, %v7872
      %v8052 = vmul.f32 %v7558, %v7872
      %v8053 = vmul.f32 %v7561, %v7872
      %v8054 = vmul.f32 %v7566, %v7872
      %v8055 = vmul.f32 %v7569, %v7872
      %v8056 = vmul.f32 %v7574, %v7872
      %v8057 = vmul.f32 %v7577, %v7872
      %v8058 = vmul.f32 %v7582, %v7872
      %v8059 = vmul.f32 %v7585, %v7872
      %v8060 = vmul.f32 %v7590, %v7872
      %v8061 = vmul.f32 %v7593, %v7872
      %v8062 = vmul.f32 %v7598, %v7872
      %v8063 = vmul.f32 %v7601, %v7872
      %v8064 = vmul.f32 %v7606, %v7872
      %v8065 = vmul.f32 %v7609, %v7872
      %v8066 = vmul.f32 %v7614, %v7872
      %v8067 = vmul.f32 %v7617, %v7872
      %v8068 = vmul.f32 %v7622, %v7872
      %v8069 = vmul.f32 %v7625, %v7872
      %v8070 = vmul.f32 %v7630, %v7872
      %v8071 = vmul.f32 %v7633, %v7872
      %v8072 = vmul.f32 %v7638, %v7872
      %v8073 = vmul.f32 %v7641, %v7872
      %v8074 = vmul.f32 %v7646, %v7872
      %v8075 = vmul.f32 %v7649, %v7872
      %v8076 = vmul.f32 %v7654, %v7872
      %v8077 = vmul.f32 %v7657, %v7872
      %v8078 = vmul.f32 %v7662, %v7872
      %v8079 = vmul.f32 %v7665, %v7872
      %v8080 = vmul.f32 %v7670, %v7872
      %v8081 = vmul.f32 %v7673, %v7872
      %v8082 = vmul.f32 %v7678, %v7872
      %v8083 = vmul.f32 %v7681, %v7872
      %v8084 = vmul.f32 %v7686, %v7872
      %v8085 = vmul.f32 %v7689, %v7872
      %v8086 = vmul.f32 %v7694, %v7872
      %v8087 = vmul.f32 %v7697, %v7872
      %v8088 = vmul.f32 %v7702, %v7872
      %v8089 = vmul.f32 %v7705, %v7872
      %v8090 = vmul.f32 %v7710, %v7872
      %v8091 = vmul.f32 %v7713, %v7872
      %v8092 = vmul.f32 %v7718, %v7872
      %v8093 = vmul.f32 %v7721, %v7872
      %v8094 = vmul.f32 %v7726, %v7872
      %v8095 = vmul.f32 %v7729, %v7872
      %v8096 = vmul.f32 %v7734, %v7872
      %v8097 = vmul.f32 %v7737, %v7872
      %v8098 = vmul.f32 %v7742, %v7872
      %v8099 = vmul.f32 %v7745, %v7872
      %v8100 = vmul.f32 %v7750, %v7872
      %v8101 = vmul.f32 %v7753, %v7872
      %v8102 = vmul.f32 %v7758, %v7872
      %v8103 = vmul.f32 %v7761, %v7872
      %v8104 = vmul.f32 %v7766, %v7872
      %v8105 = vmul.f32 %v7769, %v7872
      %v8106 = vmul.f32 %v7774, %v7872
      %v8107 = vmul.f32 %v7777, %v7872
      %v8108 = vmul.f32 %v7782, %v7872
      %v8109 = vmul.f32 %v7785, %v7872
      %v8110 = vmul.f32 %v7790, %v7872
      %v8111 = vmul.f32 %v7793, %v7872
      %v8112 = vmul.f32 %v7798, %v7872
      %v8113 = vmul.f32 %v7801, %v7872
      %v8114 = vmul.f32 %v7806, %v7872
      %v8115 = vmul.f32 %v7809, %v7872
      %v8116 = vmul.f32 %v7814, %v7872
      %v8117 = vmul.f32 %v7817, %v7872
      %v8118 = vmul.f32 %v7822, %v7872
      %v8119 = vmul.f32 %v7825, %v7872
      %v8120 = vmul.f32 %v7830, %v7872
      %v8121 = vmul.f32 %v7833, %v7872
      %v8122 = vmul.f32 %v7838, %v7872
      %v8123 = vmul.f32 %v7841, %v7872
      %v8124 = vmul.f32 %v7846, %v7872
      %v8125 = vmul.f32 %v7849, %v7872
      %v8126 = vmul.f32 %v7854, %v7872
      %v8127 = vmul.f32 %v7857, %v7872
      %v8128 = vmul.f32 %v7862, %v7872
      %v8129 = vmul.f32 %v7865, %v7872
      %v8131 = vlaneseq
      %v8132 = vshrl.u32 %v8131, 7
      %v8133 = vsub.s32 0, %v8132
      %v8134 = vrot.slane %v6285, %v8133
      %v8136 = vadd.f32 %v7874, %v8134
      %v8137 = vadd.f32 %v7875, %v8134
      %v8138 = vadd.f32 %v7876, %v8134
      %v8139 = vadd.f32 %v7877, %v8134
      %v8140 = vadd.f32 %v7878, %v8134
      %v8141 = vadd.f32 %v7879, %v8134
      %v8142 = vadd.f32 %v7880, %v8134
      %v8143 = vadd.f32 %v7881, %v8134
      %v8144 = vadd.f32 %v7882, %v8134
      %v8145 = vadd.f32 %v7883, %v8134
      %v8146 = vadd.f32 %v7884, %v8134
      %v8147 = vadd.f32 %v7885, %v8134
      %v8148 = vadd.f32 %v7886, %v8134
      %v8149 = vadd.f32 %v7887, %v8134
      %v8150 = vadd.f32 %v7888, %v8134
      %v8151 = vadd.f32 %v7889, %v8134
      %v8152 = vadd.f32 %v7890, %v8134
      %v8153 = vadd.f32 %v7891, %v8134
      %v8154 = vadd.f32 %v7892, %v8134
      %v8155 = vadd.f32 %v7893, %v8134
      %v8156 = vadd.f32 %v7894, %v8134
      %v8157 = vadd.f32 %v7895, %v8134
      %v8158 = vadd.f32 %v7896, %v8134
      %v8159 = vadd.f32 %v7897, %v8134
      %v8160 = vadd.f32 %v7898, %v8134
      %v8161 = vadd.f32 %v7899, %v8134
      %v8162 = vadd.f32 %v7900, %v8134
      %v8163 = vadd.f32 %v7901, %v8134
      %v8164 = vadd.f32 %v7902, %v8134
      %v8165 = vadd.f32 %v7903, %v8134
      %v8166 = vadd.f32 %v7904, %v8134
      %v8167 = vadd.f32 %v7905, %v8134
      %v8168 = vadd.f32 %v7906, %v8134
      %v8169 = vadd.f32 %v7907, %v8134
      %v8170 = vadd.f32 %v7908, %v8134
      %v8171 = vadd.f32 %v7909, %v8134
      %v8172 = vadd.f32 %v7910, %v8134
      %v8173 = vadd.f32 %v7911, %v8134
      %v8174 = vadd.f32 %v7912, %v8134
      %v8175 = vadd.f32 %v7913, %v8134
      %v8176 = vadd.f32 %v7914, %v8134
      %v8177 = vadd.f32 %v7915, %v8134
      %v8178 = vadd.f32 %v7916, %v8134
      %v8179 = vadd.f32 %v7917, %v8134
      %v8180 = vadd.f32 %v7918, %v8134
      %v8181 = vadd.f32 %v7919, %v8134
      %v8182 = vadd.f32 %v7920, %v8134
      %v8183 = vadd.f32 %v7921, %v8134
      %v8184 = vadd.f32 %v7922, %v8134
      %v8185 = vadd.f32 %v7923, %v8134
      %v8186 = vadd.f32 %v7924, %v8134
      %v8187 = vadd.f32 %v7925, %v8134
      %v8188 = vadd.f32 %v7926, %v8134
      %v8189 = vadd.f32 %v7927, %v8134
      %v8190 = vadd.f32 %v7928, %v8134
      %v8191 = vadd.f32 %v7929, %v8134
      %v8192 = vadd.f32 %v7930, %v8134
      %v8193 = vadd.f32 %v7931, %v8134
      %v8194 = vadd.f32 %v7932, %v8134
      %v8195 = vadd.f32 %v7933, %v8134
      %v8196 = vadd.f32 %v7934, %v8134
      %v8197 = vadd.f32 %v7935, %v8134
      %v8198 = vadd.f32 %v7936, %v8134
      %v8199 = vadd.f32 %v7937, %v8134
      %v8200 = vadd.f32 %v7938, %v8134
      %v8201 = vadd.f32 %v7939, %v8134
      %v8202 = vadd.f32 %v7940, %v8134
      %v8203 = vadd.f32 %v7941, %v8134
      %v8204 = vadd.f32 %v7942, %v8134
      %v8205 = vadd.f32 %v7943, %v8134
      %v8206 = vadd.f32 %v7944, %v8134
      %v8207 = vadd.f32 %v7945, %v8134
      %v8208 = vadd.f32 %v7946, %v8134
      %v8209 = vadd.f32 %v7947, %v8134
      %v8210 = vadd.f32 %v7948, %v8134
      %v8211 = vadd.f32 %v7949, %v8134
      %v8212 = vadd.f32 %v7950, %v8134
      %v8213 = vadd.f32 %v7951, %v8134
      %v8214 = vadd.f32 %v7952, %v8134
      %v8215 = vadd.f32 %v7953, %v8134
      %v8216 = vadd.f32 %v7954, %v8134
      %v8217 = vadd.f32 %v7955, %v8134
      %v8218 = vadd.f32 %v7956, %v8134
      %v8219 = vadd.f32 %v7957, %v8134
      %v8220 = vadd.f32 %v7958, %v8134
      %v8221 = vadd.f32 %v7959, %v8134
      %v8222 = vadd.f32 %v7960, %v8134
      %v8223 = vadd.f32 %v7961, %v8134
      %v8224 = vadd.f32 %v7962, %v8134
      %v8225 = vadd.f32 %v7963, %v8134
      %v8226 = vadd.f32 %v7964, %v8134
      %v8227 = vadd.f32 %v7965, %v8134
      %v8228 = vadd.f32 %v7966, %v8134
      %v8229 = vadd.f32 %v7967, %v8134
      %v8230 = vadd.f32 %v7968, %v8134
      %v8231 = vadd.f32 %v7969, %v8134
      %v8232 = vadd.f32 %v7970, %v8134
      %v8233 = vadd.f32 %v7971, %v8134
      %v8234 = vadd.f32 %v7972, %v8134
      %v8235 = vadd.f32 %v7973, %v8134
      %v8236 = vadd.f32 %v7974, %v8134
      %v8237 = vadd.f32 %v7975, %v8134
      %v8238 = vadd.f32 %v7976, %v8134
      %v8239 = vadd.f32 %v7977, %v8134
      %v8240 = vadd.f32 %v7978, %v8134
      %v8241 = vadd.f32 %v7979, %v8134
      %v8242 = vadd.f32 %v7980, %v8134
      %v8243 = vadd.f32 %v7981, %v8134
      %v8244 = vadd.f32 %v7982, %v8134
      %v8245 = vadd.f32 %v7983, %v8134
      %v8246 = vadd.f32 %v7984, %v8134
      %v8247 = vadd.f32 %v7985, %v8134
      %v8248 = vadd.f32 %v7986, %v8134
      %v8249 = vadd.f32 %v7987, %v8134
      %v8250 = vadd.f32 %v7988, %v8134
      %v8251 = vadd.f32 %v7989, %v8134
      %v8252 = vadd.f32 %v7990, %v8134
      %v8253 = vadd.f32 %v7991, %v8134
      %v8254 = vadd.f32 %v7992, %v8134
      %v8255 = vadd.f32 %v7993, %v8134
      %v8256 = vadd.f32 %v7994, %v8134
      %v8257 = vadd.f32 %v7995, %v8134
      %v8258 = vadd.f32 %v7996, %v8134
      %v8259 = vadd.f32 %v7997, %v8134
      %v8260 = vadd.f32 %v7998, %v8134
      %v8261 = vadd.f32 %v7999, %v8134
      %v8262 = vadd.f32 %v8000, %v8134
      %v8263 = vadd.f32 %v8001, %v8134
      %v8264 = vadd.f32 %v8002, %v8134
      %v8265 = vadd.f32 %v8003, %v8134
      %v8266 = vadd.f32 %v8004, %v8134
      %v8267 = vadd.f32 %v8005, %v8134
      %v8268 = vadd.f32 %v8006, %v8134
      %v8269 = vadd.f32 %v8007, %v8134
      %v8270 = vadd.f32 %v8008, %v8134
      %v8271 = vadd.f32 %v8009, %v8134
      %v8272 = vadd.f32 %v8010, %v8134
      %v8273 = vadd.f32 %v8011, %v8134
      %v8274 = vadd.f32 %v8012, %v8134
      %v8275 = vadd.f32 %v8013, %v8134
      %v8276 = vadd.f32 %v8014, %v8134
      %v8277 = vadd.f32 %v8015, %v8134
      %v8278 = vadd.f32 %v8016, %v8134
      %v8279 = vadd.f32 %v8017, %v8134
      %v8280 = vadd.f32 %v8018, %v8134
      %v8281 = vadd.f32 %v8019, %v8134
      %v8282 = vadd.f32 %v8020, %v8134
      %v8283 = vadd.f32 %v8021, %v8134
      %v8284 = vadd.f32 %v8022, %v8134
      %v8285 = vadd.f32 %v8023, %v8134
      %v8286 = vadd.f32 %v8024, %v8134
      %v8287 = vadd.f32 %v8025, %v8134
      %v8288 = vadd.f32 %v8026, %v8134
      %v8289 = vadd.f32 %v8027, %v8134
      %v8290 = vadd.f32 %v8028, %v8134
      %v8291 = vadd.f32 %v8029, %v8134
      %v8292 = vadd.f32 %v8030, %v8134
      %v8293 = vadd.f32 %v8031, %v8134
      %v8294 = vadd.f32 %v8032, %v8134
      %v8295 = vadd.f32 %v8033, %v8134
      %v8296 = vadd.f32 %v8034, %v8134
      %v8297 = vadd.f32 %v8035, %v8134
      %v8298 = vadd.f32 %v8036, %v8134
      %v8299 = vadd.f32 %v8037, %v8134
      %v8300 = vadd.f32 %v8038, %v8134
      %v8301 = vadd.f32 %v8039, %v8134
      %v8302 = vadd.f32 %v8040, %v8134
      %v8303 = vadd.f32 %v8041, %v8134
      %v8304 = vadd.f32 %v8042, %v8134
      %v8305 = vadd.f32 %v8043, %v8134
      %v8306 = vadd.f32 %v8044, %v8134
      %v8307 = vadd.f32 %v8045, %v8134
      %v8308 = vadd.f32 %v8046, %v8134
      %v8309 = vadd.f32 %v8047, %v8134
      %v8310 = vadd.f32 %v8048, %v8134
      %v8311 = vadd.f32 %v8049, %v8134
      %v8312 = vadd.f32 %v8050, %v8134
      %v8313 = vadd.f32 %v8051, %v8134
      %v8314 = vadd.f32 %v8052, %v8134
      %v8315 = vadd.f32 %v8053, %v8134
      %v8316 = vadd.f32 %v8054, %v8134
      %v8317 = vadd.f32 %v8055, %v8134
      %v8318 = vadd.f32 %v8056, %v8134
      %v8319 = vadd.f32 %v8057, %v8134
      %v8320 = vadd.f32 %v8058, %v8134
      %v8321 = vadd.f32 %v8059, %v8134
      %v8322 = vadd.f32 %v8060, %v8134
      %v8323 = vadd.f32 %v8061, %v8134
      %v8324 = vadd.f32 %v8062, %v8134
      %v8325 = vadd.f32 %v8063, %v8134
      %v8326 = vadd.f32 %v8064, %v8134
      %v8327 = vadd.f32 %v8065, %v8134
      %v8328 = vadd.f32 %v8066, %v8134
      %v8329 = vadd.f32 %v8067, %v8134
      %v8330 = vadd.f32 %v8068, %v8134
      %v8331 = vadd.f32 %v8069, %v8134
      %v8332 = vadd.f32 %v8070, %v8134
      %v8333 = vadd.f32 %v8071, %v8134
      %v8334 = vadd.f32 %v8072, %v8134
      %v8335 = vadd.f32 %v8073, %v8134
      %v8336 = vadd.f32 %v8074, %v8134
      %v8337 = vadd.f32 %v8075, %v8134
      %v8338 = vadd.f32 %v8076, %v8134
      %v8339 = vadd.f32 %v8077, %v8134
      %v8340 = vadd.f32 %v8078, %v8134
      %v8341 = vadd.f32 %v8079, %v8134
      %v8342 = vadd.f32 %v8080, %v8134
      %v8343 = vadd.f32 %v8081, %v8134
      %v8344 = vadd.f32 %v8082, %v8134
      %v8345 = vadd.f32 %v8083, %v8134
      %v8346 = vadd.f32 %v8084, %v8134
      %v8347 = vadd.f32 %v8085, %v8134
      %v8348 = vadd.f32 %v8086, %v8134
      %v8349 = vadd.f32 %v8087, %v8134
      %v8350 = vadd.f32 %v8088, %v8134
      %v8351 = vadd.f32 %v8089, %v8134
      %v8352 = vadd.f32 %v8090, %v8134
      %v8353 = vadd.f32 %v8091, %v8134
      %v8354 = vadd.f32 %v8092, %v8134
      %v8355 = vadd.f32 %v8093, %v8134
      %v8356 = vadd.f32 %v8094, %v8134
      %v8357 = vadd.f32 %v8095, %v8134
      %v8358 = vadd.f32 %v8096, %v8134
      %v8359 = vadd.f32 %v8097, %v8134
      %v8360 = vadd.f32 %v8098, %v8134
      %v8361 = vadd.f32 %v8099, %v8134
      %v8362 = vadd.f32 %v8100, %v8134
      %v8363 = vadd.f32 %v8101, %v8134
      %v8364 = vadd.f32 %v8102, %v8134
      %v8365 = vadd.f32 %v8103, %v8134
      %v8366 = vadd.f32 %v8104, %v8134
      %v8367 = vadd.f32 %v8105, %v8134
      %v8368 = vadd.f32 %v8106, %v8134
      %v8369 = vadd.f32 %v8107, %v8134
      %v8370 = vadd.f32 %v8108, %v8134
      %v8371 = vadd.f32 %v8109, %v8134
      %v8372 = vadd.f32 %v8110, %v8134
      %v8373 = vadd.f32 %v8111, %v8134
      %v8374 = vadd.f32 %v8112, %v8134
      %v8375 = vadd.f32 %v8113, %v8134
      %v8376 = vadd.f32 %v8114, %v8134
      %v8377 = vadd.f32 %v8115, %v8134
      %v8378 = vadd.f32 %v8116, %v8134
      %v8379 = vadd.f32 %v8117, %v8134
      %v8380 = vadd.f32 %v8118, %v8134
      %v8381 = vadd.f32 %v8119, %v8134
      %v8382 = vadd.f32 %v8120, %v8134
      %v8383 = vadd.f32 %v8121, %v8134
      %v8384 = vadd.f32 %v8122, %v8134
      %v8385 = vadd.f32 %v8123, %v8134
      %v8386 = vadd.f32 %v8124, %v8134
      %v8387 = vadd.f32 %v8125, %v8134
      %v8388 = vadd.f32 %v8126, %v8134
      %v8389 = vadd.f32 %v8127, %v8134
      %v8390 = vadd.f32 %v8128, %v8134
      %v8391 = vadd.f32 %v8129, %v8134
      %v8392 = vmax.f32 %v8136, 0.0
      %v8393 = vmax.f32 %v8137, 0.0
      %v8394 = vmax.f32 %v8138, 0.0
      %v8395 = vmax.f32 %v8139, 0.0
      %v8396 = vmax.f32 %v8140, 0.0
      %v8397 = vmax.f32 %v8141, 0.0
      %v8398 = vmax.f32 %v8142, 0.0
      %v8399 = vmax.f32 %v8143, 0.0
      %v8400 = vmax.f32 %v8144, 0.0
      %v8401 = vmax.f32 %v8145, 0.0
      %v8402 = vmax.f32 %v8146, 0.0
      %v8403 = vmax.f32 %v8147, 0.0
      %v8404 = vmax.f32 %v8148, 0.0
      %v8405 = vmax.f32 %v8149, 0.0
      %v8406 = vmax.f32 %v8150, 0.0
      %v8407 = vmax.f32 %v8151, 0.0
      %v8408 = vmax.f32 %v8152, 0.0
      %v8409 = vmax.f32 %v8153, 0.0
      %v8410 = vmax.f32 %v8154, 0.0
      %v8411 = vmax.f32 %v8155, 0.0
      %v8412 = vmax.f32 %v8156, 0.0
      %v8413 = vmax.f32 %v8157, 0.0
      %v8414 = vmax.f32 %v8158, 0.0
      %v8415 = vmax.f32 %v8159, 0.0
      %v8416 = vmax.f32 %v8160, 0.0
      %v8417 = vmax.f32 %v8161, 0.0
      %v8418 = vmax.f32 %v8162, 0.0
      %v8419 = vmax.f32 %v8163, 0.0
      %v8420 = vmax.f32 %v8164, 0.0
      %v8421 = vmax.f32 %v8165, 0.0
      %v8422 = vmax.f32 %v8166, 0.0
      %v8423 = vmax.f32 %v8167, 0.0
      %v8424 = vmax.f32 %v8168, 0.0
      %v8425 = vmax.f32 %v8169, 0.0
      %v8426 = vmax.f32 %v8170, 0.0
      %v8427 = vmax.f32 %v8171, 0.0
      %v8428 = vmax.f32 %v8172, 0.0
      %v8429 = vmax.f32 %v8173, 0.0
      %v8430 = vmax.f32 %v8174, 0.0
      %v8431 = vmax.f32 %v8175, 0.0
      %v8432 = vmax.f32 %v8176, 0.0
      %v8433 = vmax.f32 %v8177, 0.0
      %v8434 = vmax.f32 %v8178, 0.0
      %v8435 = vmax.f32 %v8179, 0.0
      %v8436 = vmax.f32 %v8180, 0.0
      %v8437 = vmax.f32 %v8181, 0.0
      %v8438 = vmax.f32 %v8182, 0.0
      %v8439 = vmax.f32 %v8183, 0.0
      %v8440 = vmax.f32 %v8184, 0.0
      %v8441 = vmax.f32 %v8185, 0.0
      %v8442 = vmax.f32 %v8186, 0.0
      %v8443 = vmax.f32 %v8187, 0.0
      %v8444 = vmax.f32 %v8188, 0.0
      %v8445 = vmax.f32 %v8189, 0.0
      %v8446 = vmax.f32 %v8190, 0.0
      %v8447 = vmax.f32 %v8191, 0.0
      %v8448 = vmax.f32 %v8192, 0.0
      %v8449 = vmax.f32 %v8193, 0.0
      %v8450 = vmax.f32 %v8194, 0.0
      %v8451 = vmax.f32 %v8195, 0.0
      %v8452 = vmax.f32 %v8196, 0.0
      %v8453 = vmax.f32 %v8197, 0.0
      %v8454 = vmax.f32 %v8198, 0.0
      %v8455 = vmax.f32 %v8199, 0.0
      %v8456 = vmax.f32 %v8200, 0.0
      %v8457 = vmax.f32 %v8201, 0.0
      %v8458 = vmax.f32 %v8202, 0.0
      %v8459 = vmax.f32 %v8203, 0.0
      %v8460 = vmax.f32 %v8204, 0.0
      %v8461 = vmax.f32 %v8205, 0.0
      %v8462 = vmax.f32 %v8206, 0.0
      %v8463 = vmax.f32 %v8207, 0.0
      %v8464 = vmax.f32 %v8208, 0.0
      %v8465 = vmax.f32 %v8209, 0.0
      %v8466 = vmax.f32 %v8210, 0.0
      %v8467 = vmax.f32 %v8211, 0.0
      %v8468 = vmax.f32 %v8212, 0.0
      %v8469 = vmax.f32 %v8213, 0.0
      %v8470 = vmax.f32 %v8214, 0.0
      %v8471 = vmax.f32 %v8215, 0.0
      %v8472 = vmax.f32 %v8216, 0.0
      %v8473 = vmax.f32 %v8217, 0.0
      %v8474 = vmax.f32 %v8218, 0.0
      %v8475 = vmax.f32 %v8219, 0.0
      %v8476 = vmax.f32 %v8220, 0.0
      %v8477 = vmax.f32 %v8221, 0.0
      %v8478 = vmax.f32 %v8222, 0.0
      %v8479 = vmax.f32 %v8223, 0.0
      %v8480 = vmax.f32 %v8224, 0.0
      %v8481 = vmax.f32 %v8225, 0.0
      %v8482 = vmax.f32 %v8226, 0.0
      %v8483 = vmax.f32 %v8227, 0.0
      %v8484 = vmax.f32 %v8228, 0.0
      %v8485 = vmax.f32 %v8229, 0.0
      %v8486 = vmax.f32 %v8230, 0.0
      %v8487 = vmax.f32 %v8231, 0.0
      %v8488 = vmax.f32 %v8232, 0.0
      %v8489 = vmax.f32 %v8233, 0.0
      %v8490 = vmax.f32 %v8234, 0.0
      %v8491 = vmax.f32 %v8235, 0.0
      %v8492 = vmax.f32 %v8236, 0.0
      %v8493 = vmax.f32 %v8237, 0.0
      %v8494 = vmax.f32 %v8238, 0.0
      %v8495 = vmax.f32 %v8239, 0.0
      %v8496 = vmax.f32 %v8240, 0.0
      %v8497 = vmax.f32 %v8241, 0.0
      %v8498 = vmax.f32 %v8242, 0.0
      %v8499 = vmax.f32 %v8243, 0.0
      %v8500 = vmax.f32 %v8244, 0.0
      %v8501 = vmax.f32 %v8245, 0.0
      %v8502 = vmax.f32 %v8246, 0.0
      %v8503 = vmax.f32 %v8247, 0.0
      %v8504 = vmax.f32 %v8248, 0.0
      %v8505 = vmax.f32 %v8249, 0.0
      %v8506 = vmax.f32 %v8250, 0.0
      %v8507 = vmax.f32 %v8251, 0.0
      %v8508 = vmax.f32 %v8252, 0.0
      %v8509 = vmax.f32 %v8253, 0.0
      %v8510 = vmax.f32 %v8254, 0.0
      %v8511 = vmax.f32 %v8255, 0.0
      %v8512 = vmax.f32 %v8256, 0.0
      %v8513 = vmax.f32 %v8257, 0.0
      %v8514 = vmax.f32 %v8258, 0.0
      %v8515 = vmax.f32 %v8259, 0.0
      %v8516 = vmax.f32 %v8260, 0.0
      %v8517 = vmax.f32 %v8261, 0.0
      %v8518 = vmax.f32 %v8262, 0.0
      %v8519 = vmax.f32 %v8263, 0.0
      %v8520 = vmax.f32 %v8264, 0.0
      %v8521 = vmax.f32 %v8265, 0.0
      %v8522 = vmax.f32 %v8266, 0.0
      %v8523 = vmax.f32 %v8267, 0.0
      %v8524 = vmax.f32 %v8268, 0.0
      %v8525 = vmax.f32 %v8269, 0.0
      %v8526 = vmax.f32 %v8270, 0.0
      %v8527 = vmax.f32 %v8271, 0.0
      %v8528 = vmax.f32 %v8272, 0.0
      %v8529 = vmax.f32 %v8273, 0.0
      %v8530 = vmax.f32 %v8274, 0.0
      %v8531 = vmax.f32 %v8275, 0.0
      %v8532 = vmax.f32 %v8276, 0.0
      %v8533 = vmax.f32 %v8277, 0.0
      %v8534 = vmax.f32 %v8278, 0.0
      %v8535 = vmax.f32 %v8279, 0.0
      %v8536 = vmax.f32 %v8280, 0.0
      %v8537 = vmax.f32 %v8281, 0.0
      %v8538 = vmax.f32 %v8282, 0.0
      %v8539 = vmax.f32 %v8283, 0.0
      %v8540 = vmax.f32 %v8284, 0.0
      %v8541 = vmax.f32 %v8285, 0.0
      %v8542 = vmax.f32 %v8286, 0.0
      %v8543 = vmax.f32 %v8287, 0.0
      %v8544 = vmax.f32 %v8288, 0.0
      %v8545 = vmax.f32 %v8289, 0.0
      %v8546 = vmax.f32 %v8290, 0.0
      %v8547 = vmax.f32 %v8291, 0.0
      %v8548 = vmax.f32 %v8292, 0.0
      %v8549 = vmax.f32 %v8293, 0.0
      %v8550 = vmax.f32 %v8294, 0.0
      %v8551 = vmax.f32 %v8295, 0.0
      %v8552 = vmax.f32 %v8296, 0.0
      %v8553 = vmax.f32 %v8297, 0.0
      %v8554 = vmax.f32 %v8298, 0.0
      %v8555 = vmax.f32 %v8299, 0.0
      %v8556 = vmax.f32 %v8300, 0.0
      %v8557 = vmax.f32 %v8301, 0.0
      %v8558 = vmax.f32 %v8302, 0.0
      %v8559 = vmax.f32 %v8303, 0.0
      %v8560 = vmax.f32 %v8304, 0.0
      %v8561 = vmax.f32 %v8305, 0.0
      %v8562 = vmax.f32 %v8306, 0.0
      %v8563 = vmax.f32 %v8307, 0.0
      %v8564 = vmax.f32 %v8308, 0.0
      %v8565 = vmax.f32 %v8309, 0.0
      %v8566 = vmax.f32 %v8310, 0.0
      %v8567 = vmax.f32 %v8311, 0.0
      %v8568 = vmax.f32 %v8312, 0.0
      %v8569 = vmax.f32 %v8313, 0.0
      %v8570 = vmax.f32 %v8314, 0.0
      %v8571 = vmax.f32 %v8315, 0.0
      %v8572 = vmax.f32 %v8316, 0.0
      %v8573 = vmax.f32 %v8317, 0.0
      %v8574 = vmax.f32 %v8318, 0.0
      %v8575 = vmax.f32 %v8319, 0.0
      %v8576 = vmax.f32 %v8320, 0.0
      %v8577 = vmax.f32 %v8321, 0.0
      %v8578 = vmax.f32 %v8322, 0.0
      %v8579 = vmax.f32 %v8323, 0.0
      %v8580 = vmax.f32 %v8324, 0.0
      %v8581 = vmax.f32 %v8325, 0.0
      %v8582 = vmax.f32 %v8326, 0.0
      %v8583 = vmax.f32 %v8327, 0.0
      %v8584 = vmax.f32 %v8328, 0.0
      %v8585 = vmax.f32 %v8329, 0.0
      %v8586 = vmax.f32 %v8330, 0.0
      %v8587 = vmax.f32 %v8331, 0.0
      %v8588 = vmax.f32 %v8332, 0.0
      %v8589 = vmax.f32 %v8333, 0.0
      %v8590 = vmax.f32 %v8334, 0.0
      %v8591 = vmax.f32 %v8335, 0.0
      %v8592 = vmax.f32 %v8336, 0.0
      %v8593 = vmax.f32 %v8337, 0.0
      %v8594 = vmax.f32 %v8338, 0.0
      %v8595 = vmax.f32 %v8339, 0.0
      %v8596 = vmax.f32 %v8340, 0.0
      %v8597 = vmax.f32 %v8341, 0.0
      %v8598 = vmax.f32 %v8342, 0.0
      %v8599 = vmax.f32 %v8343, 0.0
      %v8600 = vmax.f32 %v8344, 0.0
      %v8601 = vmax.f32 %v8345, 0.0
      %v8602 = vmax.f32 %v8346, 0.0
      %v8603 = vmax.f32 %v8347, 0.0
      %v8604 = vmax.f32 %v8348, 0.0
      %v8605 = vmax.f32 %v8349, 0.0
      %v8606 = vmax.f32 %v8350, 0.0
      %v8607 = vmax.f32 %v8351, 0.0
      %v8608 = vmax.f32 %v8352, 0.0
      %v8609 = vmax.f32 %v8353, 0.0
      %v8610 = vmax.f32 %v8354, 0.0
      %v8611 = vmax.f32 %v8355, 0.0
      %v8612 = vmax.f32 %v8356, 0.0
      %v8613 = vmax.f32 %v8357, 0.0
      %v8614 = vmax.f32 %v8358, 0.0
      %v8615 = vmax.f32 %v8359, 0.0
      %v8616 = vmax.f32 %v8360, 0.0
      %v8617 = vmax.f32 %v8361, 0.0
      %v8618 = vmax.f32 %v8362, 0.0
      %v8619 = vmax.f32 %v8363, 0.0
      %v8620 = vmax.f32 %v8364, 0.0
      %v8621 = vmax.f32 %v8365, 0.0
      %v8622 = vmax.f32 %v8366, 0.0
      %v8623 = vmax.f32 %v8367, 0.0
      %v8624 = vmax.f32 %v8368, 0.0
      %v8625 = vmax.f32 %v8369, 0.0
      %v8626 = vmax.f32 %v8370, 0.0
      %v8627 = vmax.f32 %v8371, 0.0
      %v8628 = vmax.f32 %v8372, 0.0
      %v8629 = vmax.f32 %v8373, 0.0
      %v8630 = vmax.f32 %v8374, 0.0
      %v8631 = vmax.f32 %v8375, 0.0
      %v8632 = vmax.f32 %v8376, 0.0
      %v8633 = vmax.f32 %v8377, 0.0
      %v8634 = vmax.f32 %v8378, 0.0
      %v8635 = vmax.f32 %v8379, 0.0
      %v8636 = vmax.f32 %v8380, 0.0
      %v8637 = vmax.f32 %v8381, 0.0
      %v8638 = vmax.f32 %v8382, 0.0
      %v8639 = vmax.f32 %v8383, 0.0
      %v8640 = vmax.f32 %v8384, 0.0
      %v8641 = vmax.f32 %v8385, 0.0
      %v8642 = vmax.f32 %v8386, 0.0
      %v8643 = vmax.f32 %v8387, 0.0
      %v8644 = vmax.f32 %v8388, 0.0
      %v8645 = vmax.f32 %v8389, 0.0
      %v8646 = vmax.f32 %v8390, 0.0
      %v8647 = vmax.f32 %v8391, 0.0
      %v8648 = vld [vmem:[%s7] sm:$0xf]
      %v8649 = vld [vmem:[%s7 + $0x4] sm:$0xf]
      %v8650 = vld [vmem:[%s7 + $0x8] sm:$0xf]
      %v8651 = vld [vmem:[%s7 + $0xc] sm:$0xf]
      %v8652 = vld [vmem:[%s8] sm:$0x1]
      %v8653 = vld [vmem:[%s9] sm:$0x1]
      %v8654 = vpack.c.bf16 %v8393, %v8392
      %v8655 = vpack.c.bf16 %v8395, %v8394
      %v8656 = vpack.c.bf16 %v8397, %v8396
      %v8657 = vpack.c.bf16 %v8399, %v8398
      %v8658 = vpack.c.bf16 %v8401, %v8400
      %v8659 = vpack.c.bf16 %v8403, %v8402
      %v8660 = vpack.c.bf16 %v8405, %v8404
      %v8661 = vpack.c.bf16 %v8407, %v8406
      %v8662 = vpack.c.bf16 %v8409, %v8408
      %v8663 = vpack.c.bf16 %v8411, %v8410
      %v8664 = vpack.c.bf16 %v8413, %v8412
      %v8665 = vpack.c.bf16 %v8415, %v8414
      %v8666 = vpack.c.bf16 %v8417, %v8416
      %v8667 = vpack.c.bf16 %v8419, %v8418
      %v8668 = vpack.c.bf16 %v8421, %v8420
      %v8669 = vpack.c.bf16 %v8423, %v8422
      %v8670 = vpack.c.bf16 %v8425, %v8424
      %v8671 = vpack.c.bf16 %v8427, %v8426
      %v8672 = vpack.c.bf16 %v8429, %v8428
      %v8673 = vpack.c.bf16 %v8431, %v8430
      %v8674 = vpack.c.bf16 %v8433, %v8432
      %v8675 = vpack.c.bf16 %v8435, %v8434
      %v8676 = vpack.c.bf16 %v8437, %v8436
      %v8677 = vpack.c.bf16 %v8439, %v8438
      %v8678 = vpack.c.bf16 %v8441, %v8440
      %v8679 = vpack.c.bf16 %v8443, %v8442
      %v8680 = vpack.c.bf16 %v8445, %v8444
      %v8681 = vpack.c.bf16 %v8447, %v8446
      %v8682 = vpack.c.bf16 %v8449, %v8448
      %v8683 = vpack.c.bf16 %v8451, %v8450
      %v8684 = vpack.c.bf16 %v8453, %v8452
      %v8685 = vpack.c.bf16 %v8455, %v8454
      %v8686 = vpack.c.bf16 %v8457, %v8456
      %v8687 = vpack.c.bf16 %v8459, %v8458
      %v8688 = vpack.c.bf16 %v8461, %v8460
      %v8689 = vpack.c.bf16 %v8463, %v8462
      %v8690 = vpack.c.bf16 %v8465, %v8464
      %v8691 = vpack.c.bf16 %v8467, %v8466
      %v8692 = vpack.c.bf16 %v8469, %v8468
      %v8693 = vpack.c.bf16 %v8471, %v8470
      %v8694 = vpack.c.bf16 %v8473, %v8472
      %v8695 = vpack.c.bf16 %v8475, %v8474
      %v8696 = vpack.c.bf16 %v8477, %v8476
      %v8697 = vpack.c.bf16 %v8479, %v8478
      %v8698 = vpack.c.bf16 %v8481, %v8480
      %v8699 = vpack.c.bf16 %v8483, %v8482
      %v8700 = vpack.c.bf16 %v8485, %v8484
      %v8701 = vpack.c.bf16 %v8487, %v8486
      %v8702 = vpack.c.bf16 %v8489, %v8488
      %v8703 = vpack.c.bf16 %v8491, %v8490
      %v8704 = vpack.c.bf16 %v8493, %v8492
      %v8705 = vpack.c.bf16 %v8495, %v8494
      %v8706 = vpack.c.bf16 %v8497, %v8496
      %v8707 = vpack.c.bf16 %v8499, %v8498
      %v8708 = vpack.c.bf16 %v8501, %v8500
      %v8709 = vpack.c.bf16 %v8503, %v8502
      %v8710 = vpack.c.bf16 %v8505, %v8504
      %v8711 = vpack.c.bf16 %v8507, %v8506
      %v8712 = vpack.c.bf16 %v8509, %v8508
      %v8713 = vpack.c.bf16 %v8511, %v8510
      %v8714 = vpack.c.bf16 %v8513, %v8512
      %v8715 = vpack.c.bf16 %v8515, %v8514
      %v8716 = vpack.c.bf16 %v8517, %v8516
      %v8717 = vpack.c.bf16 %v8519, %v8518
      %v8718 = vpack.c.bf16 %v8521, %v8520
      %v8719 = vpack.c.bf16 %v8523, %v8522
      %v8720 = vpack.c.bf16 %v8525, %v8524
      %v8721 = vpack.c.bf16 %v8527, %v8526
      %v8722 = vpack.c.bf16 %v8529, %v8528
      %v8723 = vpack.c.bf16 %v8531, %v8530
      %v8724 = vpack.c.bf16 %v8533, %v8532
      %v8725 = vpack.c.bf16 %v8535, %v8534
      %v8726 = vpack.c.bf16 %v8537, %v8536
      %v8727 = vpack.c.bf16 %v8539, %v8538
      %v8728 = vpack.c.bf16 %v8541, %v8540
      %v8729 = vpack.c.bf16 %v8543, %v8542
      %v8730 = vpack.c.bf16 %v8545, %v8544
      %v8731 = vpack.c.bf16 %v8547, %v8546
      %v8732 = vpack.c.bf16 %v8549, %v8548
      %v8733 = vpack.c.bf16 %v8551, %v8550
      %v8734 = vpack.c.bf16 %v8553, %v8552
      %v8735 = vpack.c.bf16 %v8555, %v8554
      %v8736 = vpack.c.bf16 %v8557, %v8556
      %v8737 = vpack.c.bf16 %v8559, %v8558
      %v8738 = vpack.c.bf16 %v8561, %v8560
      %v8739 = vpack.c.bf16 %v8563, %v8562
      %v8740 = vpack.c.bf16 %v8565, %v8564
      %v8741 = vpack.c.bf16 %v8567, %v8566
      %v8742 = vpack.c.bf16 %v8569, %v8568
      %v8743 = vpack.c.bf16 %v8571, %v8570
      %v8744 = vpack.c.bf16 %v8573, %v8572
      %v8745 = vpack.c.bf16 %v8575, %v8574
      %v8746 = vpack.c.bf16 %v8577, %v8576
      %v8747 = vpack.c.bf16 %v8579, %v8578
      %v8748 = vpack.c.bf16 %v8581, %v8580
      %v8749 = vpack.c.bf16 %v8583, %v8582
      %v8750 = vpack.c.bf16 %v8585, %v8584
      %v8751 = vpack.c.bf16 %v8587, %v8586
      %v8752 = vpack.c.bf16 %v8589, %v8588
      %v8753 = vpack.c.bf16 %v8591, %v8590
      %v8754 = vpack.c.bf16 %v8593, %v8592
      %v8755 = vpack.c.bf16 %v8595, %v8594
      %v8756 = vpack.c.bf16 %v8597, %v8596
      %v8757 = vpack.c.bf16 %v8599, %v8598
      %v8758 = vpack.c.bf16 %v8601, %v8600
      %v8759 = vpack.c.bf16 %v8603, %v8602
      %v8760 = vpack.c.bf16 %v8605, %v8604
      %v8761 = vpack.c.bf16 %v8607, %v8606
      %v8762 = vpack.c.bf16 %v8609, %v8608
      %v8763 = vpack.c.bf16 %v8611, %v8610
      %v8764 = vpack.c.bf16 %v8613, %v8612
      %v8765 = vpack.c.bf16 %v8615, %v8614
      %v8766 = vpack.c.bf16 %v8617, %v8616
      %v8767 = vpack.c.bf16 %v8619, %v8618
      %v8768 = vpack.c.bf16 %v8621, %v8620
      %v8769 = vpack.c.bf16 %v8623, %v8622
      %v8770 = vpack.c.bf16 %v8625, %v8624
      %v8771 = vpack.c.bf16 %v8627, %v8626
      %v8772 = vpack.c.bf16 %v8629, %v8628
      %v8773 = vpack.c.bf16 %v8631, %v8630
      %v8774 = vpack.c.bf16 %v8633, %v8632
      %v8775 = vpack.c.bf16 %v8635, %v8634
      %v8776 = vpack.c.bf16 %v8637, %v8636
      %v8777 = vpack.c.bf16 %v8639, %v8638
      %v8778 = vpack.c.bf16 %v8641, %v8640
      %v8779 = vpack.c.bf16 %v8643, %v8642
      %v8780 = vpack.c.bf16 %v8645, %v8644
      %v8781 = vpack.c.bf16 %v8647, %v8646
      %v8786 = vunpack.c.l.b16 %v8648
      %v8787 = vunpack.c.l.b16 %v8649
      %v8788 = vunpack.c.l.b16 %v8650
      %v8789 = vunpack.c.l.b16 %v8651
      %v8790 = vpack.c.b16 %v8787, %v8786
      %v8791 = vpack.c.b16 %v8789, %v8788
      %v8795 = vsel %vm6426, %v8654, 0
      %v8798 = vsel %vm6426, %v8655, 0
      %v8801 = vsel %vm6426, %v8656, 0
      %v8804 = vsel %vm6426, %v8657, 0
      %v8807 = vsel %vm6426, %v8658, 0
      %v8810 = vsel %vm6426, %v8659, 0
      %v8813 = vsel %vm6426, %v8660, 0
      %v8816 = vsel %vm6426, %v8661, 0
      %v8819 = vsel %vm6426, %v8662, 0
      %v8822 = vsel %vm6426, %v8663, 0
      %v8825 = vsel %vm6426, %v8664, 0
      %v8828 = vsel %vm6426, %v8665, 0
      %v8831 = vsel %vm6426, %v8666, 0
      %v8834 = vsel %vm6426, %v8667, 0
      %v8837 = vsel %vm6426, %v8668, 0
      %v8840 = vsel %vm6426, %v8669, 0
      %v8843 = vsel %vm6426, %v8670, 0
      %v8846 = vsel %vm6426, %v8671, 0
      %v8849 = vsel %vm6426, %v8672, 0
      %v8852 = vsel %vm6426, %v8673, 0
      %v8855 = vsel %vm6426, %v8674, 0
      %v8858 = vsel %vm6426, %v8675, 0
      %v8861 = vsel %vm6426, %v8676, 0
      %v8864 = vsel %vm6426, %v8677, 0
      %v8867 = vsel %vm6426, %v8678, 0
      %v8870 = vsel %vm6426, %v8679, 0
      %v8873 = vsel %vm6426, %v8680, 0
      %v8876 = vsel %vm6426, %v8681, 0
      %v8879 = vsel %vm6426, %v8682, 0
      %v8882 = vsel %vm6426, %v8683, 0
      %v8885 = vsel %vm6426, %v8684, 0
      %v8888 = vsel %vm6426, %v8685, 0
      %v8891 = vsel %vm6426, %v8686, 0
      %v8894 = vsel %vm6426, %v8687, 0
      %v8897 = vsel %vm6426, %v8688, 0
      %v8900 = vsel %vm6426, %v8689, 0
      %v8903 = vsel %vm6426, %v8690, 0
      %v8906 = vsel %vm6426, %v8691, 0
      %v8909 = vsel %vm6426, %v8692, 0
      %v8912 = vsel %vm6426, %v8693, 0
      %v8915 = vsel %vm6426, %v8694, 0
      %v8918 = vsel %vm6426, %v8695, 0
      %v8921 = vsel %vm6426, %v8696, 0
      %v8924 = vsel %vm6426, %v8697, 0
      %v8927 = vsel %vm6426, %v8698, 0
      %v8930 = vsel %vm6426, %v8699, 0
      %v8933 = vsel %vm6426, %v8700, 0
      %v8936 = vsel %vm6426, %v8701, 0
      %v8939 = vsel %vm6426, %v8702, 0
      %v8942 = vsel %vm6426, %v8703, 0
      %v8945 = vsel %vm6426, %v8704, 0
      %v8948 = vsel %vm6426, %v8705, 0
      %v8951 = vsel %vm6426, %v8706, 0
      %v8954 = vsel %vm6426, %v8707, 0
      %v8957 = vsel %vm6426, %v8708, 0
      %v8960 = vsel %vm6426, %v8709, 0
      %v8963 = vsel %vm6426, %v8710, 0
      %v8966 = vsel %vm6426, %v8711, 0
      %v8969 = vsel %vm6426, %v8712, 0
      %v8972 = vsel %vm6426, %v8713, 0
      %v8975 = vsel %vm6426, %v8714, 0
      %v8978 = vsel %vm6426, %v8715, 0
      %v8981 = vsel %vm6426, %v8716, 0
      %v8984 = vsel %vm6426, %v8717, 0
      %v8987 = vsel %vm6426, %v8718, 0
      %v8990 = vsel %vm6426, %v8719, 0
      %v8993 = vsel %vm6426, %v8720, 0
      %v8996 = vsel %vm6426, %v8721, 0
      %v8999 = vsel %vm6426, %v8722, 0
      %v9002 = vsel %vm6426, %v8723, 0
      %v9005 = vsel %vm6426, %v8724, 0
      %v9008 = vsel %vm6426, %v8725, 0
      %v9011 = vsel %vm6426, %v8726, 0
      %v9014 = vsel %vm6426, %v8727, 0
      %v9017 = vsel %vm6426, %v8728, 0
      %v9020 = vsel %vm6426, %v8729, 0
      %v9023 = vsel %vm6426, %v8730, 0
      %v9026 = vsel %vm6426, %v8731, 0
      %v9029 = vsel %vm6426, %v8732, 0
      %v9032 = vsel %vm6426, %v8733, 0
      %v9035 = vsel %vm6426, %v8734, 0
      %v9038 = vsel %vm6426, %v8735, 0
      %v9041 = vsel %vm6426, %v8736, 0
      %v9044 = vsel %vm6426, %v8737, 0
      %v9047 = vsel %vm6426, %v8738, 0
      %v9050 = vsel %vm6426, %v8739, 0
      %v9053 = vsel %vm6426, %v8740, 0
      %v9056 = vsel %vm6426, %v8741, 0
      %v9059 = vsel %vm6426, %v8742, 0
      %v9062 = vsel %vm6426, %v8743, 0
      %v9065 = vsel %vm6426, %v8744, 0
      %v9068 = vsel %vm6426, %v8745, 0
      %v9071 = vsel %vm6426, %v8746, 0
      %v9074 = vsel %vm6426, %v8747, 0
      %v9077 = vsel %vm6426, %v8748, 0
      %v9080 = vsel %vm6426, %v8749, 0
      %v9083 = vsel %vm6426, %v8750, 0
      %v9086 = vsel %vm6426, %v8751, 0
      %v9089 = vsel %vm6426, %v8752, 0
      %v9092 = vsel %vm6426, %v8753, 0
      %v9095 = vsel %vm6426, %v8754, 0
      %v9098 = vsel %vm6426, %v8755, 0
      %v9101 = vsel %vm6426, %v8756, 0
      %v9104 = vsel %vm6426, %v8757, 0
      %v9107 = vsel %vm6426, %v8758, 0
      %v9110 = vsel %vm6426, %v8759, 0
      %v9113 = vsel %vm6426, %v8760, 0
      %v9116 = vsel %vm6426, %v8761, 0
      %v9119 = vsel %vm6426, %v8762, 0
      %v9122 = vsel %vm6426, %v8763, 0
      %v9125 = vsel %vm6426, %v8764, 0
      %v9128 = vsel %vm6426, %v8765, 0
      %v9131 = vsel %vm6426, %v8766, 0
      %v9134 = vsel %vm6426, %v8767, 0
      %v9137 = vsel %vm6426, %v8768, 0
      %v9140 = vsel %vm6426, %v8769, 0
      %v9143 = vsel %vm6426, %v8770, 0
      %v9146 = vsel %vm6426, %v8771, 0
      %v9149 = vsel %vm6426, %v8772, 0
      %v9152 = vsel %vm6426, %v8773, 0
      %v9155 = vsel %vm6426, %v8774, 0
      %v9158 = vsel %vm6426, %v8775, 0
      %v9161 = vsel %vm6426, %v8776, 0
      %v9164 = vsel %vm6426, %v8777, 0
      %v9167 = vsel %vm6426, %v8778, 0
      %v9170 = vsel %vm6426, %v8779, 0
      %v9173 = vsel %vm6426, %v8780, 0
      %v9176 = vsel %vm6426, %v8781, 0
      %9178 = vmatprep.subr.bf16.mxu0 0
      %9179 = vmatpush1.bf16.msra.mxu0 0
      %9180 = vmatprep.subr.bf16.mxu0 0
      %9181 = vmatpush1.bf16.msra.mxu0 0
      %9182 = vmatprep.subr.bf16.mxu0 0
      %9183 = vmatpush1.bf16.msra.mxu0 0
      %9184 = vmatprep.subr.bf16.mxu0 0
      %9185 = vmatpush1.bf16.msra.mxu0 0
      %9186 = vmatprep.subr.bf16.mxu0 0
      %9187 = vmatpush1.bf16.msra.mxu0 0
      %9188 = vmatprep.subr.bf16.mxu0 0
      %9189 = vmatpush1.bf16.msra.mxu0 0
      %9190 = vmatprep.subr.bf16.mxu0 0
      %9191 = vmatpush1.bf16.msra.mxu0 %v8791
      %9192 = vmatprep.subr.bf16.mxu0 0
      %9193 = vmatpush1.bf16.msra.mxu0 %v8790
      %9194 = vmatprep.subr.bf16.mxu0 0
      %9195 = vmatpush2.bf16.msra.mxu0 0
      %9196 = vmatprep.subr.bf16.mxu0 0
      %9197 = vmatpush2.bf16.msra.mxu0 0
      %9198 = vmatprep.subr.bf16.mxu0 0
      %9199 = vmatpush2.bf16.msra.mxu0 0
      %9200 = vmatprep.subr.bf16.mxu0 0
      %9201 = vmatpush2.bf16.msra.mxu0 0
      %9202 = vmatprep.subr.bf16.mxu0 0
      %9203 = vmatpush2.bf16.msra.mxu0 0
      %9204 = vmatprep.subr.bf16.mxu0 0
      %9205 = vmatpush2.bf16.msra.mxu0 0
      %9206 = vmatprep.subr.bf16.mxu0 0
      %9207 = vmatpush2.bf16.msra.mxu0 0
      %9208 = vmatprep.subr.bf16.mxu0 0
      %9209 = vmatpush2.bf16.msra.mxu0 0
      %9210 = vmatprep.mubr.bf16.mxu0 0
      %9211 = vmatmul.mubr.bf16.gmra.mxu0 %v8795
      %v9212 = vpop.f32.mrf.mxu0
      %v9213 = vadd.f32 0.0, %v9212
      %v9214 = vpop.f32.mrf.mxu0
      %v9215 = vpop.f32.mrf.mxu0
      %v9216 = vadd.f32 0.0, %v9215
      %v9217 = vpop.f32.mrf.mxu0
      %9218 = vmatprep.mubr.bf16.mxu0 0
      %9219 = vmatmul.mubr.bf16.gmra.mxu0 %v8798
      %v9220 = vpop.f32.mrf.mxu0
      %v9221 = vadd.f32 0.0, %v9220
      %v9222 = vpop.f32.mrf.mxu0
      %v9223 = vpop.f32.mrf.mxu0
      %v9224 = vadd.f32 0.0, %v9223
      %v9225 = vpop.f32.mrf.mxu0
      %9226 = vmatprep.mubr.bf16.mxu0 0
      %9227 = vmatmul.mubr.bf16.gmra.mxu0 %v8801
      %v9228 = vpop.f32.mrf.mxu0
      %v9229 = vadd.f32 0.0, %v9228
      %v9230 = vpop.f32.mrf.mxu0
      %v9231 = vpop.f32.mrf.mxu0
      %v9232 = vadd.f32 0.0, %v9231
      %v9233 = vpop.f32.mrf.mxu0
      %9234 = vmatprep.mubr.bf16.mxu0 0
      %9235 = vmatmul.mubr.bf16.gmra.mxu0 %v8804
      %v9236 = vpop.f32.mrf.mxu0
      %v9237 = vadd.f32 0.0, %v9236
      %v9238 = vpop.f32.mrf.mxu0
      %v9239 = vpop.f32.mrf.mxu0
      %v9240 = vadd.f32 0.0, %v9239
      %v9241 = vpop.f32.mrf.mxu0
      %9242 = vmatprep.mubr.bf16.mxu0 0
      %9243 = vmatmul.mubr.bf16.gmra.mxu0 %v8807
      %v9244 = vpop.f32.mrf.mxu0
      %v9245 = vadd.f32 0.0, %v9244
      %v9246 = vpop.f32.mrf.mxu0
      %v9247 = vpop.f32.mrf.mxu0
      %v9248 = vadd.f32 0.0, %v9247
      %v9249 = vpop.f32.mrf.mxu0
      %9250 = vmatprep.mubr.bf16.mxu0 0
      %9251 = vmatmul.mubr.bf16.gmra.mxu0 %v8810
      %v9252 = vpop.f32.mrf.mxu0
      %v9253 = vadd.f32 0.0, %v9252
      %v9254 = vpop.f32.mrf.mxu0
      %v9255 = vpop.f32.mrf.mxu0
      %v9256 = vadd.f32 0.0, %v9255
      %v9257 = vpop.f32.mrf.mxu0
      %9258 = vmatprep.mubr.bf16.mxu0 0
      %9259 = vmatmul.mubr.bf16.gmra.mxu0 %v8813
      %v9260 = vpop.f32.mrf.mxu0
      %v9261 = vadd.f32 0.0, %v9260
      %v9262 = vpop.f32.mrf.mxu0
      %v9263 = vpop.f32.mrf.mxu0
      %v9264 = vadd.f32 0.0, %v9263
      %v9265 = vpop.f32.mrf.mxu0
      %9266 = vmatprep.mubr.bf16.mxu0 0
      %9267 = vmatmul.mubr.bf16.gmra.mxu0 %v8816
      %v9268 = vpop.f32.mrf.mxu0
      %v9269 = vadd.f32 0.0, %v9268
      %v9270 = vpop.f32.mrf.mxu0
      %v9271 = vpop.f32.mrf.mxu0
      %v9272 = vadd.f32 0.0, %v9271
      %v9273 = vpop.f32.mrf.mxu0
      %9274 = vmatprep.mubr.bf16.mxu0 0
      %9275 = vmatmul.mubr.bf16.gmra.mxu0 %v8819
      %v9276 = vpop.f32.mrf.mxu0
      %v9277 = vadd.f32 0.0, %v9276
      %v9278 = vpop.f32.mrf.mxu0
      %v9279 = vpop.f32.mrf.mxu0
      %v9280 = vadd.f32 0.0, %v9279
      %v9281 = vpop.f32.mrf.mxu0
      %9282 = vmatprep.mubr.bf16.mxu0 0
      %9283 = vmatmul.mubr.bf16.gmra.mxu0 %v8822
      %v9284 = vpop.f32.mrf.mxu0
      %v9285 = vadd.f32 0.0, %v9284
      %v9286 = vpop.f32.mrf.mxu0
      %v9287 = vpop.f32.mrf.mxu0
      %v9288 = vadd.f32 0.0, %v9287
      %v9289 = vpop.f32.mrf.mxu0
      %9290 = vmatprep.mubr.bf16.mxu0 0
      %9291 = vmatmul.mubr.bf16.gmra.mxu0 %v8825
      %v9292 = vpop.f32.mrf.mxu0
      %v9293 = vadd.f32 0.0, %v9292
      %v9294 = vpop.f32.mrf.mxu0
      %v9295 = vpop.f32.mrf.mxu0
      %v9296 = vadd.f32 0.0, %v9295
      %v9297 = vpop.f32.mrf.mxu0
      %9298 = vmatprep.mubr.bf16.mxu0 0
      %9299 = vmatmul.mubr.bf16.gmra.mxu0 %v8828
      %v9300 = vpop.f32.mrf.mxu0
      %v9301 = vadd.f32 0.0, %v9300
      %v9302 = vpop.f32.mrf.mxu0
      %v9303 = vpop.f32.mrf.mxu0
      %v9304 = vadd.f32 0.0, %v9303
      %v9305 = vpop.f32.mrf.mxu0
      %9306 = vmatprep.mubr.bf16.mxu0 0
      %9307 = vmatmul.mubr.bf16.gmra.mxu0 %v8831
      %v9308 = vpop.f32.mrf.mxu0
      %v9309 = vadd.f32 0.0, %v9308
      %v9310 = vpop.f32.mrf.mxu0
      %v9311 = vpop.f32.mrf.mxu0
      %v9312 = vadd.f32 0.0, %v9311
      %v9313 = vpop.f32.mrf.mxu0
      %9314 = vmatprep.mubr.bf16.mxu0 0
      %9315 = vmatmul.mubr.bf16.gmra.mxu0 %v8834
      %v9316 = vpop.f32.mrf.mxu0
      %v9317 = vadd.f32 0.0, %v9316
      %v9318 = vpop.f32.mrf.mxu0
      %v9319 = vpop.f32.mrf.mxu0
      %v9320 = vadd.f32 0.0, %v9319
      %v9321 = vpop.f32.mrf.mxu0
      %9322 = vmatprep.mubr.bf16.mxu0 0
      %9323 = vmatmul.mubr.bf16.gmra.mxu0 %v8837
      %v9324 = vpop.f32.mrf.mxu0
      %v9325 = vadd.f32 0.0, %v9324
      %v9326 = vpop.f32.mrf.mxu0
      %v9327 = vpop.f32.mrf.mxu0
      %v9328 = vadd.f32 0.0, %v9327
      %v9329 = vpop.f32.mrf.mxu0
      %9330 = vmatprep.mubr.bf16.mxu0 0
      %9331 = vmatmul.mubr.bf16.gmra.mxu0 %v8840
      %v9332 = vpop.f32.mrf.mxu0
      %v9333 = vadd.f32 0.0, %v9332
      %v9334 = vpop.f32.mrf.mxu0
      %v9335 = vpop.f32.mrf.mxu0
      %v9336 = vadd.f32 0.0, %v9335
      %v9337 = vpop.f32.mrf.mxu0
      %9338 = vmatprep.mubr.bf16.mxu0 0
      %9339 = vmatmul.mubr.bf16.gmra.mxu0 %v8843
      %v9340 = vpop.f32.mrf.mxu0
      %v9341 = vadd.f32 0.0, %v9340
      %v9342 = vpop.f32.mrf.mxu0
      %v9343 = vpop.f32.mrf.mxu0
      %v9344 = vadd.f32 0.0, %v9343
      %v9345 = vpop.f32.mrf.mxu0
      %9346 = vmatprep.mubr.bf16.mxu0 0
      %9347 = vmatmul.mubr.bf16.gmra.mxu0 %v8846
      %v9348 = vpop.f32.mrf.mxu0
      %v9349 = vadd.f32 0.0, %v9348
      %v9350 = vpop.f32.mrf.mxu0
      %v9351 = vpop.f32.mrf.mxu0
      %v9352 = vadd.f32 0.0, %v9351
      %v9353 = vpop.f32.mrf.mxu0
      %9354 = vmatprep.mubr.bf16.mxu0 0
      %9355 = vmatmul.mubr.bf16.gmra.mxu0 %v8849
      %v9356 = vpop.f32.mrf.mxu0
      %v9357 = vadd.f32 0.0, %v9356
      %v9358 = vpop.f32.mrf.mxu0
      %v9359 = vpop.f32.mrf.mxu0
      %v9360 = vadd.f32 0.0, %v9359
      %v9361 = vpop.f32.mrf.mxu0
      %9362 = vmatprep.mubr.bf16.mxu0 0
      %9363 = vmatmul.mubr.bf16.gmra.mxu0 %v8852
      %v9364 = vpop.f32.mrf.mxu0
      %v9365 = vadd.f32 0.0, %v9364
      %v9366 = vpop.f32.mrf.mxu0
      %v9367 = vpop.f32.mrf.mxu0
      %v9368 = vadd.f32 0.0, %v9367
      %v9369 = vpop.f32.mrf.mxu0
      %9370 = vmatprep.mubr.bf16.mxu0 0
      %9371 = vmatmul.mubr.bf16.gmra.mxu0 %v8855
      %v9372 = vpop.f32.mrf.mxu0
      %v9373 = vadd.f32 0.0, %v9372
      %v9374 = vpop.f32.mrf.mxu0
      %v9375 = vpop.f32.mrf.mxu0
      %v9376 = vadd.f32 0.0, %v9375
      %v9377 = vpop.f32.mrf.mxu0
      %9378 = vmatprep.mubr.bf16.mxu0 0
      %9379 = vmatmul.mubr.bf16.gmra.mxu0 %v8858
      %v9380 = vpop.f32.mrf.mxu0
      %v9381 = vadd.f32 0.0, %v9380
      %v9382 = vpop.f32.mrf.mxu0
      %v9383 = vpop.f32.mrf.mxu0
      %v9384 = vadd.f32 0.0, %v9383
      %v9385 = vpop.f32.mrf.mxu0
      %9386 = vmatprep.mubr.bf16.mxu0 0
      %9387 = vmatmul.mubr.bf16.gmra.mxu0 %v8861
      %v9388 = vpop.f32.mrf.mxu0
      %v9389 = vadd.f32 0.0, %v9388
      %v9390 = vpop.f32.mrf.mxu0
      %v9391 = vpop.f32.mrf.mxu0
      %v9392 = vadd.f32 0.0, %v9391
      %v9393 = vpop.f32.mrf.mxu0
      %9394 = vmatprep.mubr.bf16.mxu0 0
      %9395 = vmatmul.mubr.bf16.gmra.mxu0 %v8864
      %v9396 = vpop.f32.mrf.mxu0
      %v9397 = vadd.f32 0.0, %v9396
      %v9398 = vpop.f32.mrf.mxu0
      %v9399 = vpop.f32.mrf.mxu0
      %v9400 = vadd.f32 0.0, %v9399
      %v9401 = vpop.f32.mrf.mxu0
      %9402 = vmatprep.mubr.bf16.mxu0 0
      %9403 = vmatmul.mubr.bf16.gmra.mxu0 %v8867
      %v9404 = vpop.f32.mrf.mxu0
      %v9405 = vadd.f32 0.0, %v9404
      %v9406 = vpop.f32.mrf.mxu0
      %v9407 = vpop.f32.mrf.mxu0
      %v9408 = vadd.f32 0.0, %v9407
      %v9409 = vpop.f32.mrf.mxu0
      %9410 = vmatprep.mubr.bf16.mxu0 0
      %9411 = vmatmul.mubr.bf16.gmra.mxu0 %v8870
      %v9412 = vpop.f32.mrf.mxu0
      %v9413 = vadd.f32 0.0, %v9412
      %v9414 = vpop.f32.mrf.mxu0
      %v9415 = vpop.f32.mrf.mxu0
      %v9416 = vadd.f32 0.0, %v9415
      %v9417 = vpop.f32.mrf.mxu0
      %9418 = vmatprep.mubr.bf16.mxu0 0
      %9419 = vmatmul.mubr.bf16.gmra.mxu0 %v8873
      %v9420 = vpop.f32.mrf.mxu0
      %v9421 = vadd.f32 0.0, %v9420
      %v9422 = vpop.f32.mrf.mxu0
      %v9423 = vpop.f32.mrf.mxu0
      %v9424 = vadd.f32 0.0, %v9423
      %v9425 = vpop.f32.mrf.mxu0
      %9426 = vmatprep.mubr.bf16.mxu0 0
      %9427 = vmatmul.mubr.bf16.gmra.mxu0 %v8876
      %v9428 = vpop.f32.mrf.mxu0
      %v9429 = vadd.f32 0.0, %v9428
      %v9430 = vpop.f32.mrf.mxu0
      %v9431 = vpop.f32.mrf.mxu0
      %v9432 = vadd.f32 0.0, %v9431
      %v9433 = vpop.f32.mrf.mxu0
      %9434 = vmatprep.mubr.bf16.mxu0 0
      %9435 = vmatmul.mubr.bf16.gmra.mxu0 %v8879
      %v9436 = vpop.f32.mrf.mxu0
      %v9437 = vadd.f32 0.0, %v9436
      %v9438 = vpop.f32.mrf.mxu0
      %v9439 = vpop.f32.mrf.mxu0
      %v9440 = vadd.f32 0.0, %v9439
      %v9441 = vpop.f32.mrf.mxu0
      %9442 = vmatprep.mubr.bf16.mxu0 0
      %9443 = vmatmul.mubr.bf16.gmra.mxu0 %v8882
      %v9444 = vpop.f32.mrf.mxu0
      %v9445 = vadd.f32 0.0, %v9444
      %v9446 = vpop.f32.mrf.mxu0
      %v9447 = vpop.f32.mrf.mxu0
      %v9448 = vadd.f32 0.0, %v9447
      %v9449 = vpop.f32.mrf.mxu0
      %9450 = vmatprep.mubr.bf16.mxu0 0
      %9451 = vmatmul.mubr.bf16.gmra.mxu0 %v8885
      %v9452 = vpop.f32.mrf.mxu0
      %v9453 = vadd.f32 0.0, %v9452
      %v9454 = vpop.f32.mrf.mxu0
      %v9455 = vpop.f32.mrf.mxu0
      %v9456 = vadd.f32 0.0, %v9455
      %v9457 = vpop.f32.mrf.mxu0
      %9458 = vmatprep.mubr.bf16.mxu0 0
      %9459 = vmatmul.mubr.bf16.gmra.mxu0 %v8888
      %v9460 = vpop.f32.mrf.mxu0
      %v9461 = vadd.f32 0.0, %v9460
      %v9462 = vpop.f32.mrf.mxu0
      %v9463 = vpop.f32.mrf.mxu0
      %v9464 = vadd.f32 0.0, %v9463
      %v9465 = vpop.f32.mrf.mxu0
      %9466 = vmatprep.mubr.bf16.mxu0 0
      %9467 = vmatmul.mubr.bf16.gmra.mxu0 %v8891
      %v9468 = vpop.f32.mrf.mxu0
      %v9469 = vadd.f32 0.0, %v9468
      %v9470 = vpop.f32.mrf.mxu0
      %v9471 = vpop.f32.mrf.mxu0
      %v9472 = vadd.f32 0.0, %v9471
      %v9473 = vpop.f32.mrf.mxu0
      %9474 = vmatprep.mubr.bf16.mxu0 0
      %9475 = vmatmul.mubr.bf16.gmra.mxu0 %v8894
      %v9476 = vpop.f32.mrf.mxu0
      %v9477 = vadd.f32 0.0, %v9476
      %v9478 = vpop.f32.mrf.mxu0
      %v9479 = vpop.f32.mrf.mxu0
      %v9480 = vadd.f32 0.0, %v9479
      %v9481 = vpop.f32.mrf.mxu0
      %9482 = vmatprep.mubr.bf16.mxu0 0
      %9483 = vmatmul.mubr.bf16.gmra.mxu0 %v8897
      %v9484 = vpop.f32.mrf.mxu0
      %v9485 = vadd.f32 0.0, %v9484
      %v9486 = vpop.f32.mrf.mxu0
      %v9487 = vpop.f32.mrf.mxu0
      %v9488 = vadd.f32 0.0, %v9487
      %v9489 = vpop.f32.mrf.mxu0
      %9490 = vmatprep.mubr.bf16.mxu0 0
      %9491 = vmatmul.mubr.bf16.gmra.mxu0 %v8900
      %v9492 = vpop.f32.mrf.mxu0
      %v9493 = vadd.f32 0.0, %v9492
      %v9494 = vpop.f32.mrf.mxu0
      %v9495 = vpop.f32.mrf.mxu0
      %v9496 = vadd.f32 0.0, %v9495
      %v9497 = vpop.f32.mrf.mxu0
      %9498 = vmatprep.mubr.bf16.mxu0 0
      %9499 = vmatmul.mubr.bf16.gmra.mxu0 %v8903
      %v9500 = vpop.f32.mrf.mxu0
      %v9501 = vadd.f32 0.0, %v9500
      %v9502 = vpop.f32.mrf.mxu0
      %v9503 = vpop.f32.mrf.mxu0
      %v9504 = vadd.f32 0.0, %v9503
      %v9505 = vpop.f32.mrf.mxu0
      %9506 = vmatprep.mubr.bf16.mxu0 0
      %9507 = vmatmul.mubr.bf16.gmra.mxu0 %v8906
      %v9508 = vpop.f32.mrf.mxu0
      %v9509 = vadd.f32 0.0, %v9508
      %v9510 = vpop.f32.mrf.mxu0
      %v9511 = vpop.f32.mrf.mxu0
      %v9512 = vadd.f32 0.0, %v9511
      %v9513 = vpop.f32.mrf.mxu0
      %9514 = vmatprep.mubr.bf16.mxu0 0
      %9515 = vmatmul.mubr.bf16.gmra.mxu0 %v8909
      %v9516 = vpop.f32.mrf.mxu0
      %v9517 = vadd.f32 0.0, %v9516
      %v9518 = vpop.f32.mrf.mxu0
      %v9519 = vpop.f32.mrf.mxu0
      %v9520 = vadd.f32 0.0, %v9519
      %v9521 = vpop.f32.mrf.mxu0
      %9522 = vmatprep.mubr.bf16.mxu0 0
      %9523 = vmatmul.mubr.bf16.gmra.mxu0 %v8912
      %v9524 = vpop.f32.mrf.mxu0
      %v9525 = vadd.f32 0.0, %v9524
      %v9526 = vpop.f32.mrf.mxu0
      %v9527 = vpop.f32.mrf.mxu0
      %v9528 = vadd.f32 0.0, %v9527
      %v9529 = vpop.f32.mrf.mxu0
      %9530 = vmatprep.mubr.bf16.mxu0 0
      %9531 = vmatmul.mubr.bf16.gmra.mxu0 %v8915
      %v9532 = vpop.f32.mrf.mxu0
      %v9533 = vadd.f32 0.0, %v9532
      %v9534 = vpop.f32.mrf.mxu0
      %v9535 = vpop.f32.mrf.mxu0
      %v9536 = vadd.f32 0.0, %v9535
      %v9537 = vpop.f32.mrf.mxu0
      %9538 = vmatprep.mubr.bf16.mxu0 0
      %9539 = vmatmul.mubr.bf16.gmra.mxu0 %v8918
      %v9540 = vpop.f32.mrf.mxu0
      %v9541 = vadd.f32 0.0, %v9540
      %v9542 = vpop.f32.mrf.mxu0
      %v9543 = vpop.f32.mrf.mxu0
      %v9544 = vadd.f32 0.0, %v9543
      %v9545 = vpop.f32.mrf.mxu0
      %9546 = vmatprep.mubr.bf16.mxu0 0
      %9547 = vmatmul.mubr.bf16.gmra.mxu0 %v8921
      %v9548 = vpop.f32.mrf.mxu0
      %v9549 = vadd.f32 0.0, %v9548
      %v9550 = vpop.f32.mrf.mxu0
      %v9551 = vpop.f32.mrf.mxu0
      %v9552 = vadd.f32 0.0, %v9551
      %v9553 = vpop.f32.mrf.mxu0
      %9554 = vmatprep.mubr.bf16.mxu0 0
      %9555 = vmatmul.mubr.bf16.gmra.mxu0 %v8924
      %v9556 = vpop.f32.mrf.mxu0
      %v9557 = vadd.f32 0.0, %v9556
      %v9558 = vpop.f32.mrf.mxu0
      %v9559 = vpop.f32.mrf.mxu0
      %v9560 = vadd.f32 0.0, %v9559
      %v9561 = vpop.f32.mrf.mxu0
      %9562 = vmatprep.mubr.bf16.mxu0 0
      %9563 = vmatmul.mubr.bf16.gmra.mxu0 %v8927
      %v9564 = vpop.f32.mrf.mxu0
      %v9565 = vadd.f32 0.0, %v9564
      %v9566 = vpop.f32.mrf.mxu0
      %v9567 = vpop.f32.mrf.mxu0
      %v9568 = vadd.f32 0.0, %v9567
      %v9569 = vpop.f32.mrf.mxu0
      %9570 = vmatprep.mubr.bf16.mxu0 0
      %9571 = vmatmul.mubr.bf16.gmra.mxu0 %v8930
      %v9572 = vpop.f32.mrf.mxu0
      %v9573 = vadd.f32 0.0, %v9572
      %v9574 = vpop.f32.mrf.mxu0
      %v9575 = vpop.f32.mrf.mxu0
      %v9576 = vadd.f32 0.0, %v9575
      %v9577 = vpop.f32.mrf.mxu0
      %9578 = vmatprep.mubr.bf16.mxu0 0
      %9579 = vmatmul.mubr.bf16.gmra.mxu0 %v8933
      %v9580 = vpop.f32.mrf.mxu0
      %v9581 = vadd.f32 0.0, %v9580
      %v9582 = vpop.f32.mrf.mxu0
      %v9583 = vpop.f32.mrf.mxu0
      %v9584 = vadd.f32 0.0, %v9583
      %v9585 = vpop.f32.mrf.mxu0
      %9586 = vmatprep.mubr.bf16.mxu0 0
      %9587 = vmatmul.mubr.bf16.gmra.mxu0 %v8936
      %v9588 = vpop.f32.mrf.mxu0
      %v9589 = vadd.f32 0.0, %v9588
      %v9590 = vpop.f32.mrf.mxu0
      %v9591 = vpop.f32.mrf.mxu0
      %v9592 = vadd.f32 0.0, %v9591
      %v9593 = vpop.f32.mrf.mxu0
      %9594 = vmatprep.mubr.bf16.mxu0 0
      %9595 = vmatmul.mubr.bf16.gmra.mxu0 %v8939
      %v9596 = vpop.f32.mrf.mxu0
      %v9597 = vadd.f32 0.0, %v9596
      %v9598 = vpop.f32.mrf.mxu0
      %v9599 = vpop.f32.mrf.mxu0
      %v9600 = vadd.f32 0.0, %v9599
      %v9601 = vpop.f32.mrf.mxu0
      %9602 = vmatprep.mubr.bf16.mxu0 0
      %9603 = vmatmul.mubr.bf16.gmra.mxu0 %v8942
      %v9604 = vpop.f32.mrf.mxu0
      %v9605 = vadd.f32 0.0, %v9604
      %v9606 = vpop.f32.mrf.mxu0
      %v9607 = vpop.f32.mrf.mxu0
      %v9608 = vadd.f32 0.0, %v9607
      %v9609 = vpop.f32.mrf.mxu0
      %9610 = vmatprep.mubr.bf16.mxu0 0
      %9611 = vmatmul.mubr.bf16.gmra.mxu0 %v8945
      %v9612 = vpop.f32.mrf.mxu0
      %v9613 = vadd.f32 0.0, %v9612
      %v9614 = vpop.f32.mrf.mxu0
      %v9615 = vpop.f32.mrf.mxu0
      %v9616 = vadd.f32 0.0, %v9615
      %v9617 = vpop.f32.mrf.mxu0
      %9618 = vmatprep.mubr.bf16.mxu0 0
      %9619 = vmatmul.mubr.bf16.gmra.mxu0 %v8948
      %v9620 = vpop.f32.mrf.mxu0
      %v9621 = vadd.f32 0.0, %v9620
      %v9622 = vpop.f32.mrf.mxu0
      %v9623 = vpop.f32.mrf.mxu0
      %v9624 = vadd.f32 0.0, %v9623
      %v9625 = vpop.f32.mrf.mxu0
      %9626 = vmatprep.mubr.bf16.mxu0 0
      %9627 = vmatmul.mubr.bf16.gmra.mxu0 %v8951
      %v9628 = vpop.f32.mrf.mxu0
      %v9629 = vadd.f32 0.0, %v9628
      %v9630 = vpop.f32.mrf.mxu0
      %v9631 = vpop.f32.mrf.mxu0
      %v9632 = vadd.f32 0.0, %v9631
      %v9633 = vpop.f32.mrf.mxu0
      %9634 = vmatprep.mubr.bf16.mxu0 0
      %9635 = vmatmul.mubr.bf16.gmra.mxu0 %v8954
      %v9636 = vpop.f32.mrf.mxu0
      %v9637 = vadd.f32 0.0, %v9636
      %v9638 = vpop.f32.mrf.mxu0
      %v9639 = vpop.f32.mrf.mxu0
      %v9640 = vadd.f32 0.0, %v9639
      %v9641 = vpop.f32.mrf.mxu0
      %9642 = vmatprep.mubr.bf16.mxu0 0
      %9643 = vmatmul.mubr.bf16.gmra.mxu0 %v8957
      %v9644 = vpop.f32.mrf.mxu0
      %v9645 = vadd.f32 0.0, %v9644
      %v9646 = vpop.f32.mrf.mxu0
      %v9647 = vpop.f32.mrf.mxu0
      %v9648 = vadd.f32 0.0, %v9647
      %v9649 = vpop.f32.mrf.mxu0
      %9650 = vmatprep.mubr.bf16.mxu0 0
      %9651 = vmatmul.mubr.bf16.gmra.mxu0 %v8960
      %v9652 = vpop.f32.mrf.mxu0
      %v9653 = vadd.f32 0.0, %v9652
      %v9654 = vpop.f32.mrf.mxu0
      %v9655 = vpop.f32.mrf.mxu0
      %v9656 = vadd.f32 0.0, %v9655
      %v9657 = vpop.f32.mrf.mxu0
      %9658 = vmatprep.mubr.bf16.mxu0 0
      %9659 = vmatmul.mubr.bf16.gmra.mxu0 %v8963
      %v9660 = vpop.f32.mrf.mxu0
      %v9661 = vadd.f32 0.0, %v9660
      %v9662 = vpop.f32.mrf.mxu0
      %v9663 = vpop.f32.mrf.mxu0
      %v9664 = vadd.f32 0.0, %v9663
      %v9665 = vpop.f32.mrf.mxu0
      %9666 = vmatprep.mubr.bf16.mxu0 0
      %9667 = vmatmul.mubr.bf16.gmra.mxu0 %v8966
      %v9668 = vpop.f32.mrf.mxu0
      %v9669 = vadd.f32 0.0, %v9668
      %v9670 = vpop.f32.mrf.mxu0
      %v9671 = vpop.f32.mrf.mxu0
      %v9672 = vadd.f32 0.0, %v9671
      %v9673 = vpop.f32.mrf.mxu0
      %9674 = vmatprep.mubr.bf16.mxu0 0
      %9675 = vmatmul.mubr.bf16.gmra.mxu0 %v8969
      %v9676 = vpop.f32.mrf.mxu0
      %v9677 = vadd.f32 0.0, %v9676
      %v9678 = vpop.f32.mrf.mxu0
      %v9679 = vpop.f32.mrf.mxu0
      %v9680 = vadd.f32 0.0, %v9679
      %v9681 = vpop.f32.mrf.mxu0
      %9682 = vmatprep.mubr.bf16.mxu0 0
      %9683 = vmatmul.mubr.bf16.gmra.mxu0 %v8972
      %v9684 = vpop.f32.mrf.mxu0
      %v9685 = vadd.f32 0.0, %v9684
      %v9686 = vpop.f32.mrf.mxu0
      %v9687 = vpop.f32.mrf.mxu0
      %v9688 = vadd.f32 0.0, %v9687
      %v9689 = vpop.f32.mrf.mxu0
      %9690 = vmatprep.mubr.bf16.mxu0 0
      %9691 = vmatmul.mubr.bf16.gmra.mxu0 %v8975
      %v9692 = vpop.f32.mrf.mxu0
      %v9693 = vadd.f32 0.0, %v9692
      %v9694 = vpop.f32.mrf.mxu0
      %v9695 = vpop.f32.mrf.mxu0
      %v9696 = vadd.f32 0.0, %v9695
      %v9697 = vpop.f32.mrf.mxu0
      %9698 = vmatprep.mubr.bf16.mxu0 0
      %9699 = vmatmul.mubr.bf16.gmra.mxu0 %v8978
      %v9700 = vpop.f32.mrf.mxu0
      %v9701 = vadd.f32 0.0, %v9700
      %v9702 = vpop.f32.mrf.mxu0
      %v9703 = vpop.f32.mrf.mxu0
      %v9704 = vadd.f32 0.0, %v9703
      %v9705 = vpop.f32.mrf.mxu0
      %9706 = vmatprep.mubr.bf16.mxu0 0
      %9707 = vmatmul.mubr.bf16.gmra.mxu0 %v8981
      %v9708 = vpop.f32.mrf.mxu0
      %v9709 = vadd.f32 0.0, %v9708
      %v9710 = vpop.f32.mrf.mxu0
      %v9711 = vpop.f32.mrf.mxu0
      %v9712 = vadd.f32 0.0, %v9711
      %v9713 = vpop.f32.mrf.mxu0
      %9714 = vmatprep.mubr.bf16.mxu0 0
      %9715 = vmatmul.mubr.bf16.gmra.mxu0 %v8984
      %v9716 = vpop.f32.mrf.mxu0
      %v9717 = vadd.f32 0.0, %v9716
      %v9718 = vpop.f32.mrf.mxu0
      %v9719 = vpop.f32.mrf.mxu0
      %v9720 = vadd.f32 0.0, %v9719
      %v9721 = vpop.f32.mrf.mxu0
      %9722 = vmatprep.mubr.bf16.mxu0 0
      %9723 = vmatmul.mubr.bf16.gmra.mxu0 %v8987
      %v9724 = vpop.f32.mrf.mxu0
      %v9725 = vadd.f32 0.0, %v9724
      %v9726 = vpop.f32.mrf.mxu0
      %v9727 = vpop.f32.mrf.mxu0
      %v9728 = vadd.f32 0.0, %v9727
      %v9729 = vpop.f32.mrf.mxu0
      %9730 = vmatprep.mubr.bf16.mxu0 0
      %9731 = vmatmul.mubr.bf16.gmra.mxu0 %v8990
      %v9732 = vpop.f32.mrf.mxu0
      %v9733 = vadd.f32 0.0, %v9732
      %v9734 = vpop.f32.mrf.mxu0
      %v9735 = vpop.f32.mrf.mxu0
      %v9736 = vadd.f32 0.0, %v9735
      %v9737 = vpop.f32.mrf.mxu0
      %9738 = vmatprep.mubr.bf16.mxu0 0
      %9739 = vmatmul.mubr.bf16.gmra.mxu0 %v8993
      %v9740 = vpop.f32.mrf.mxu0
      %v9741 = vadd.f32 0.0, %v9740
      %v9742 = vpop.f32.mrf.mxu0
      %v9743 = vpop.f32.mrf.mxu0
      %v9744 = vadd.f32 0.0, %v9743
      %v9745 = vpop.f32.mrf.mxu0
      %9746 = vmatprep.mubr.bf16.mxu0 0
      %9747 = vmatmul.mubr.bf16.gmra.mxu0 %v8996
      %v9748 = vpop.f32.mrf.mxu0
      %v9749 = vadd.f32 0.0, %v9748
      %v9750 = vpop.f32.mrf.mxu0
      %v9751 = vpop.f32.mrf.mxu0
      %v9752 = vadd.f32 0.0, %v9751
      %v9753 = vpop.f32.mrf.mxu0
      %9754 = vmatprep.mubr.bf16.mxu0 0
      %9755 = vmatmul.mubr.bf16.gmra.mxu0 %v8999
      %v9756 = vpop.f32.mrf.mxu0
      %v9757 = vadd.f32 0.0, %v9756
      %v9758 = vpop.f32.mrf.mxu0
      %v9759 = vpop.f32.mrf.mxu0
      %v9760 = vadd.f32 0.0, %v9759
      %v9761 = vpop.f32.mrf.mxu0
      %9762 = vmatprep.mubr.bf16.mxu0 0
      %9763 = vmatmul.mubr.bf16.gmra.mxu0 %v9002
      %v9764 = vpop.f32.mrf.mxu0
      %v9765 = vadd.f32 0.0, %v9764
      %v9766 = vpop.f32.mrf.mxu0
      %v9767 = vpop.f32.mrf.mxu0
      %v9768 = vadd.f32 0.0, %v9767
      %v9769 = vpop.f32.mrf.mxu0
      %9770 = vmatprep.mubr.bf16.mxu0 0
      %9771 = vmatmul.mubr.bf16.gmra.mxu0 %v9005
      %v9772 = vpop.f32.mrf.mxu0
      %v9773 = vadd.f32 0.0, %v9772
      %v9774 = vpop.f32.mrf.mxu0
      %v9775 = vpop.f32.mrf.mxu0
      %v9776 = vadd.f32 0.0, %v9775
      %v9777 = vpop.f32.mrf.mxu0
      %9778 = vmatprep.mubr.bf16.mxu0 0
      %9779 = vmatmul.mubr.bf16.gmra.mxu0 %v9008
      %v9780 = vpop.f32.mrf.mxu0
      %v9781 = vadd.f32 0.0, %v9780
      %v9782 = vpop.f32.mrf.mxu0
      %v9783 = vpop.f32.mrf.mxu0
      %v9784 = vadd.f32 0.0, %v9783
      %v9785 = vpop.f32.mrf.mxu0
      %9786 = vmatprep.mubr.bf16.mxu0 0
      %9787 = vmatmul.mubr.bf16.gmra.mxu0 %v9011
      %v9788 = vpop.f32.mrf.mxu0
      %v9789 = vadd.f32 0.0, %v9788
      %v9790 = vpop.f32.mrf.mxu0
      %v9791 = vpop.f32.mrf.mxu0
      %v9792 = vadd.f32 0.0, %v9791
      %v9793 = vpop.f32.mrf.mxu0
      %9794 = vmatprep.mubr.bf16.mxu0 0
      %9795 = vmatmul.mubr.bf16.gmra.mxu0 %v9014
      %v9796 = vpop.f32.mrf.mxu0
      %v9797 = vadd.f32 0.0, %v9796
      %v9798 = vpop.f32.mrf.mxu0
      %v9799 = vpop.f32.mrf.mxu0
      %v9800 = vadd.f32 0.0, %v9799
      %v9801 = vpop.f32.mrf.mxu0
      %9802 = vmatprep.mubr.bf16.mxu0 0
      %9803 = vmatmul.mubr.bf16.gmra.mxu0 %v9017
      %v9804 = vpop.f32.mrf.mxu0
      %v9805 = vadd.f32 0.0, %v9804
      %v9806 = vpop.f32.mrf.mxu0
      %v9807 = vpop.f32.mrf.mxu0
      %v9808 = vadd.f32 0.0, %v9807
      %v9809 = vpop.f32.mrf.mxu0
      %9810 = vmatprep.mubr.bf16.mxu0 0
      %9811 = vmatmul.mubr.bf16.gmra.mxu0 %v9020
      %v9812 = vpop.f32.mrf.mxu0
      %v9813 = vadd.f32 0.0, %v9812
      %v9814 = vpop.f32.mrf.mxu0
      %v9815 = vpop.f32.mrf.mxu0
      %v9816 = vadd.f32 0.0, %v9815
      %v9817 = vpop.f32.mrf.mxu0
      %9818 = vmatprep.mubr.bf16.mxu0 0
      %9819 = vmatmul.mubr.bf16.gmra.mxu0 %v9023
      %v9820 = vpop.f32.mrf.mxu0
      %v9821 = vadd.f32 0.0, %v9820
      %v9822 = vpop.f32.mrf.mxu0
      %v9823 = vpop.f32.mrf.mxu0
      %v9824 = vadd.f32 0.0, %v9823
      %v9825 = vpop.f32.mrf.mxu0
      %9826 = vmatprep.mubr.bf16.mxu0 0
      %9827 = vmatmul.mubr.bf16.gmra.mxu0 %v9026
      %v9828 = vpop.f32.mrf.mxu0
      %v9829 = vadd.f32 0.0, %v9828
      %v9830 = vpop.f32.mrf.mxu0
      %v9831 = vpop.f32.mrf.mxu0
      %v9832 = vadd.f32 0.0, %v9831
      %v9833 = vpop.f32.mrf.mxu0
      %9834 = vmatprep.mubr.bf16.mxu0 0
      %9835 = vmatmul.mubr.bf16.gmra.mxu0 %v9029
      %v9836 = vpop.f32.mrf.mxu0
      %v9837 = vadd.f32 0.0, %v9836
      %v9838 = vpop.f32.mrf.mxu0
      %v9839 = vpop.f32.mrf.mxu0
      %v9840 = vadd.f32 0.0, %v9839
      %v9841 = vpop.f32.mrf.mxu0
      %9842 = vmatprep.mubr.bf16.mxu0 0
      %9843 = vmatmul.mubr.bf16.gmra.mxu0 %v9032
      %v9844 = vpop.f32.mrf.mxu0
      %v9845 = vadd.f32 0.0, %v9844
      %v9846 = vpop.f32.mrf.mxu0
      %v9847 = vpop.f32.mrf.mxu0
      %v9848 = vadd.f32 0.0, %v9847
      %v9849 = vpop.f32.mrf.mxu0
      %9850 = vmatprep.mubr.bf16.mxu0 0
      %9851 = vmatmul.mubr.bf16.gmra.mxu0 %v9035
      %v9852 = vpop.f32.mrf.mxu0
      %v9853 = vadd.f32 0.0, %v9852
      %v9854 = vpop.f32.mrf.mxu0
      %v9855 = vpop.f32.mrf.mxu0
      %v9856 = vadd.f32 0.0, %v9855
      %v9857 = vpop.f32.mrf.mxu0
      %9858 = vmatprep.mubr.bf16.mxu0 0
      %9859 = vmatmul.mubr.bf16.gmra.mxu0 %v9038
      %v9860 = vpop.f32.mrf.mxu0
      %v9861 = vadd.f32 0.0, %v9860
      %v9862 = vpop.f32.mrf.mxu0
      %v9863 = vpop.f32.mrf.mxu0
      %v9864 = vadd.f32 0.0, %v9863
      %v9865 = vpop.f32.mrf.mxu0
      %9866 = vmatprep.mubr.bf16.mxu0 0
      %9867 = vmatmul.mubr.bf16.gmra.mxu0 %v9041
      %v9868 = vpop.f32.mrf.mxu0
      %v9869 = vadd.f32 0.0, %v9868
      %v9870 = vpop.f32.mrf.mxu0
      %v9871 = vpop.f32.mrf.mxu0
      %v9872 = vadd.f32 0.0, %v9871
      %v9873 = vpop.f32.mrf.mxu0
      %9874 = vmatprep.mubr.bf16.mxu0 0
      %9875 = vmatmul.mubr.bf16.gmra.mxu0 %v9044
      %v9876 = vpop.f32.mrf.mxu0
      %v9877 = vadd.f32 0.0, %v9876
      %v9878 = vpop.f32.mrf.mxu0
      %v9879 = vpop.f32.mrf.mxu0
      %v9880 = vadd.f32 0.0, %v9879
      %v9881 = vpop.f32.mrf.mxu0
      %9882 = vmatprep.mubr.bf16.mxu0 0
      %9883 = vmatmul.mubr.bf16.gmra.mxu0 %v9047
      %v9884 = vpop.f32.mrf.mxu0
      %v9885 = vadd.f32 0.0, %v9884
      %v9886 = vpop.f32.mrf.mxu0
      %v9887 = vpop.f32.mrf.mxu0
      %v9888 = vadd.f32 0.0, %v9887
      %v9889 = vpop.f32.mrf.mxu0
      %9890 = vmatprep.mubr.bf16.mxu0 0
      %9891 = vmatmul.mubr.bf16.gmra.mxu0 %v9050
      %v9892 = vpop.f32.mrf.mxu0
      %v9893 = vadd.f32 0.0, %v9892
      %v9894 = vpop.f32.mrf.mxu0
      %v9895 = vpop.f32.mrf.mxu0
      %v9896 = vadd.f32 0.0, %v9895
      %v9897 = vpop.f32.mrf.mxu0
      %9898 = vmatprep.mubr.bf16.mxu0 0
      %9899 = vmatmul.mubr.bf16.gmra.mxu0 %v9053
      %v9900 = vpop.f32.mrf.mxu0
      %v9901 = vadd.f32 0.0, %v9900
      %v9902 = vpop.f32.mrf.mxu0
      %v9903 = vpop.f32.mrf.mxu0
      %v9904 = vadd.f32 0.0, %v9903
      %v9905 = vpop.f32.mrf.mxu0
      %9906 = vmatprep.mubr.bf16.mxu0 0
      %9907 = vmatmul.mubr.bf16.gmra.mxu0 %v9056
      %v9908 = vpop.f32.mrf.mxu0
      %v9909 = vadd.f32 0.0, %v9908
      %v9910 = vpop.f32.mrf.mxu0
      %v9911 = vpop.f32.mrf.mxu0
      %v9912 = vadd.f32 0.0, %v9911
      %v9913 = vpop.f32.mrf.mxu0
      %9914 = vmatprep.mubr.bf16.mxu0 0
      %9915 = vmatmul.mubr.bf16.gmra.mxu0 %v9059
      %v9916 = vpop.f32.mrf.mxu0
      %v9917 = vadd.f32 0.0, %v9916
      %v9918 = vpop.f32.mrf.mxu0
      %v9919 = vpop.f32.mrf.mxu0
      %v9920 = vadd.f32 0.0, %v9919
      %v9921 = vpop.f32.mrf.mxu0
      %9922 = vmatprep.mubr.bf16.mxu0 0
      %9923 = vmatmul.mubr.bf16.gmra.mxu0 %v9062
      %v9924 = vpop.f32.mrf.mxu0
      %v9925 = vadd.f32 0.0, %v9924
      %v9926 = vpop.f32.mrf.mxu0
      %v9927 = vpop.f32.mrf.mxu0
      %v9928 = vadd.f32 0.0, %v9927
      %v9929 = vpop.f32.mrf.mxu0
      %9930 = vmatprep.mubr.bf16.mxu0 0
      %9931 = vmatmul.mubr.bf16.gmra.mxu0 %v9065
      %v9932 = vpop.f32.mrf.mxu0
      %v9933 = vadd.f32 0.0, %v9932
      %v9934 = vpop.f32.mrf.mxu0
      %v9935 = vpop.f32.mrf.mxu0
      %v9936 = vadd.f32 0.0, %v9935
      %v9937 = vpop.f32.mrf.mxu0
      %9938 = vmatprep.mubr.bf16.mxu0 0
      %9939 = vmatmul.mubr.bf16.gmra.mxu0 %v9068
      %v9940 = vpop.f32.mrf.mxu0
      %v9941 = vadd.f32 0.0, %v9940
      %v9942 = vpop.f32.mrf.mxu0
      %v9943 = vpop.f32.mrf.mxu0
      %v9944 = vadd.f32 0.0, %v9943
      %v9945 = vpop.f32.mrf.mxu0
      %9946 = vmatprep.mubr.bf16.mxu0 0
      %9947 = vmatmul.mubr.bf16.gmra.mxu0 %v9071
      %v9948 = vpop.f32.mrf.mxu0
      %v9949 = vadd.f32 0.0, %v9948
      %v9950 = vpop.f32.mrf.mxu0
      %v9951 = vpop.f32.mrf.mxu0
      %v9952 = vadd.f32 0.0, %v9951
      %v9953 = vpop.f32.mrf.mxu0
      %9954 = vmatprep.mubr.bf16.mxu0 0
      %9955 = vmatmul.mubr.bf16.gmra.mxu0 %v9074
      %v9956 = vpop.f32.mrf.mxu0
      %v9957 = vadd.f32 0.0, %v9956
      %v9958 = vpop.f32.mrf.mxu0
      %v9959 = vpop.f32.mrf.mxu0
      %v9960 = vadd.f32 0.0, %v9959
      %v9961 = vpop.f32.mrf.mxu0
      %9962 = vmatprep.mubr.bf16.mxu0 0
      %9963 = vmatmul.mubr.bf16.gmra.mxu0 %v9077
      %v9964 = vpop.f32.mrf.mxu0
      %v9965 = vadd.f32 0.0, %v9964
      %v9966 = vpop.f32.mrf.mxu0
      %v9967 = vpop.f32.mrf.mxu0
      %v9968 = vadd.f32 0.0, %v9967
      %v9969 = vpop.f32.mrf.mxu0
      %9970 = vmatprep.mubr.bf16.mxu0 0
      %9971 = vmatmul.mubr.bf16.gmra.mxu0 %v9080
      %v9972 = vpop.f32.mrf.mxu0
      %v9973 = vadd.f32 0.0, %v9972
      %v9974 = vpop.f32.mrf.mxu0
      %v9975 = vpop.f32.mrf.mxu0
      %v9976 = vadd.f32 0.0, %v9975
      %v9977 = vpop.f32.mrf.mxu0
      %9978 = vmatprep.mubr.bf16.mxu0 0
      %9979 = vmatmul.mubr.bf16.gmra.mxu0 %v9083
      %v9980 = vpop.f32.mrf.mxu0
      %v9981 = vadd.f32 0.0, %v9980
      %v9982 = vpop.f32.mrf.mxu0
      %v9983 = vpop.f32.mrf.mxu0
      %v9984 = vadd.f32 0.0, %v9983
      %v9985 = vpop.f32.mrf.mxu0
      %9986 = vmatprep.mubr.bf16.mxu0 0
      %9987 = vmatmul.mubr.bf16.gmra.mxu0 %v9086
      %v9988 = vpop.f32.mrf.mxu0
      %v9989 = vadd.f32 0.0, %v9988
      %v9990 = vpop.f32.mrf.mxu0
      %v9991 = vpop.f32.mrf.mxu0
      %v9992 = vadd.f32 0.0, %v9991
      %v9993 = vpop.f32.mrf.mxu0
      %9994 = vmatprep.mubr.bf16.mxu0 0
      %9995 = vmatmul.mubr.bf16.gmra.mxu0 %v9089
      %v9996 = vpop.f32.mrf.mxu0
      %v9997 = vadd.f32 0.0, %v9996
      %v9998 = vpop.f32.mrf.mxu0
      %v9999 = vpop.f32.mrf.mxu0
      %v10000 = vadd.f32 0.0, %v9999
      %v10001 = vpop.f32.mrf.mxu0
      %10002 = vmatprep.mubr.bf16.mxu0 0
      %10003 = vmatmul.mubr.bf16.gmra.mxu0 %v9092
      %v10004 = vpop.f32.mrf.mxu0
      %v10005 = vadd.f32 0.0, %v10004
      %v10006 = vpop.f32.mrf.mxu0
      %v10007 = vpop.f32.mrf.mxu0
      %v10008 = vadd.f32 0.0, %v10007
      %v10009 = vpop.f32.mrf.mxu0
      %10010 = vmatprep.mubr.bf16.mxu0 0
      %10011 = vmatmul.mubr.bf16.gmra.mxu0 %v9095
      %v10012 = vpop.f32.mrf.mxu0
      %v10013 = vadd.f32 0.0, %v10012
      %v10014 = vpop.f32.mrf.mxu0
      %v10015 = vpop.f32.mrf.mxu0
      %v10016 = vadd.f32 0.0, %v10015
      %v10017 = vpop.f32.mrf.mxu0
      %10018 = vmatprep.mubr.bf16.mxu0 0
      %10019 = vmatmul.mubr.bf16.gmra.mxu0 %v9098
      %v10020 = vpop.f32.mrf.mxu0
      %v10021 = vadd.f32 0.0, %v10020
      %v10022 = vpop.f32.mrf.mxu0
      %v10023 = vpop.f32.mrf.mxu0
      %v10024 = vadd.f32 0.0, %v10023
      %v10025 = vpop.f32.mrf.mxu0
      %10026 = vmatprep.mubr.bf16.mxu0 0
      %10027 = vmatmul.mubr.bf16.gmra.mxu0 %v9101
      %v10028 = vpop.f32.mrf.mxu0
      %v10029 = vadd.f32 0.0, %v10028
      %v10030 = vpop.f32.mrf.mxu0
      %v10031 = vpop.f32.mrf.mxu0
      %v10032 = vadd.f32 0.0, %v10031
      %v10033 = vpop.f32.mrf.mxu0
      %10034 = vmatprep.mubr.bf16.mxu0 0
      %10035 = vmatmul.mubr.bf16.gmra.mxu0 %v9104
      %v10036 = vpop.f32.mrf.mxu0
      %v10037 = vadd.f32 0.0, %v10036
      %v10038 = vpop.f32.mrf.mxu0
      %v10039 = vpop.f32.mrf.mxu0
      %v10040 = vadd.f32 0.0, %v10039
      %v10041 = vpop.f32.mrf.mxu0
      %10042 = vmatprep.mubr.bf16.mxu0 0
      %10043 = vmatmul.mubr.bf16.gmra.mxu0 %v9107
      %v10044 = vpop.f32.mrf.mxu0
      %v10045 = vadd.f32 0.0, %v10044
      %v10046 = vpop.f32.mrf.mxu0
      %v10047 = vpop.f32.mrf.mxu0
      %v10048 = vadd.f32 0.0, %v10047
      %v10049 = vpop.f32.mrf.mxu0
      %10050 = vmatprep.mubr.bf16.mxu0 0
      %10051 = vmatmul.mubr.bf16.gmra.mxu0 %v9110
      %v10052 = vpop.f32.mrf.mxu0
      %v10053 = vadd.f32 0.0, %v10052
      %v10054 = vpop.f32.mrf.mxu0
      %v10055 = vpop.f32.mrf.mxu0
      %v10056 = vadd.f32 0.0, %v10055
      %v10057 = vpop.f32.mrf.mxu0
      %10058 = vmatprep.mubr.bf16.mxu0 0
      %10059 = vmatmul.mubr.bf16.gmra.mxu0 %v9113
      %v10060 = vpop.f32.mrf.mxu0
      %v10061 = vadd.f32 0.0, %v10060
      %v10062 = vpop.f32.mrf.mxu0
      %v10063 = vpop.f32.mrf.mxu0
      %v10064 = vadd.f32 0.0, %v10063
      %v10065 = vpop.f32.mrf.mxu0
      %10066 = vmatprep.mubr.bf16.mxu0 0
      %10067 = vmatmul.mubr.bf16.gmra.mxu0 %v9116
      %v10068 = vpop.f32.mrf.mxu0
      %v10069 = vadd.f32 0.0, %v10068
      %v10070 = vpop.f32.mrf.mxu0
      %v10071 = vpop.f32.mrf.mxu0
      %v10072 = vadd.f32 0.0, %v10071
      %v10073 = vpop.f32.mrf.mxu0
      %10074 = vmatprep.mubr.bf16.mxu0 0
      %10075 = vmatmul.mubr.bf16.gmra.mxu0 %v9119
      %v10076 = vpop.f32.mrf.mxu0
      %v10077 = vadd.f32 0.0, %v10076
      %v10078 = vpop.f32.mrf.mxu0
      %v10079 = vpop.f32.mrf.mxu0
      %v10080 = vadd.f32 0.0, %v10079
      %v10081 = vpop.f32.mrf.mxu0
      %10082 = vmatprep.mubr.bf16.mxu0 0
      %10083 = vmatmul.mubr.bf16.gmra.mxu0 %v9122
      %v10084 = vpop.f32.mrf.mxu0
      %v10085 = vadd.f32 0.0, %v10084
      %v10086 = vpop.f32.mrf.mxu0
      %v10087 = vpop.f32.mrf.mxu0
      %v10088 = vadd.f32 0.0, %v10087
      %v10089 = vpop.f32.mrf.mxu0
      %10090 = vmatprep.mubr.bf16.mxu0 0
      %10091 = vmatmul.mubr.bf16.gmra.mxu0 %v9125
      %v10092 = vpop.f32.mrf.mxu0
      %v10093 = vadd.f32 0.0, %v10092
      %v10094 = vpop.f32.mrf.mxu0
      %v10095 = vpop.f32.mrf.mxu0
      %v10096 = vadd.f32 0.0, %v10095
      %v10097 = vpop.f32.mrf.mxu0
      %10098 = vmatprep.mubr.bf16.mxu0 0
      %10099 = vmatmul.mubr.bf16.gmra.mxu0 %v9128
      %v10100 = vpop.f32.mrf.mxu0
      %v10101 = vadd.f32 0.0, %v10100
      %v10102 = vpop.f32.mrf.mxu0
      %v10103 = vpop.f32.mrf.mxu0
      %v10104 = vadd.f32 0.0, %v10103
      %v10105 = vpop.f32.mrf.mxu0
      %10106 = vmatprep.mubr.bf16.mxu0 0
      %10107 = vmatmul.mubr.bf16.gmra.mxu0 %v9131
      %v10108 = vpop.f32.mrf.mxu0
      %v10109 = vadd.f32 0.0, %v10108
      %v10110 = vpop.f32.mrf.mxu0
      %v10111 = vpop.f32.mrf.mxu0
      %v10112 = vadd.f32 0.0, %v10111
      %v10113 = vpop.f32.mrf.mxu0
      %10114 = vmatprep.mubr.bf16.mxu0 0
      %10115 = vmatmul.mubr.bf16.gmra.mxu0 %v9134
      %v10116 = vpop.f32.mrf.mxu0
      %v10117 = vadd.f32 0.0, %v10116
      %v10118 = vpop.f32.mrf.mxu0
      %v10119 = vpop.f32.mrf.mxu0
      %v10120 = vadd.f32 0.0, %v10119
      %v10121 = vpop.f32.mrf.mxu0
      %10122 = vmatprep.mubr.bf16.mxu0 0
      %10123 = vmatmul.mubr.bf16.gmra.mxu0 %v9137
      %v10124 = vpop.f32.mrf.mxu0
      %v10125 = vadd.f32 0.0, %v10124
      %v10126 = vpop.f32.mrf.mxu0
      %v10127 = vpop.f32.mrf.mxu0
      %v10128 = vadd.f32 0.0, %v10127
      %v10129 = vpop.f32.mrf.mxu0
      %10130 = vmatprep.mubr.bf16.mxu0 0
      %10131 = vmatmul.mubr.bf16.gmra.mxu0 %v9140
      %v10132 = vpop.f32.mrf.mxu0
      %v10133 = vadd.f32 0.0, %v10132
      %v10134 = vpop.f32.mrf.mxu0
      %v10135 = vpop.f32.mrf.mxu0
      %v10136 = vadd.f32 0.0, %v10135
      %v10137 = vpop.f32.mrf.mxu0
      %10138 = vmatprep.mubr.bf16.mxu0 0
      %10139 = vmatmul.mubr.bf16.gmra.mxu0 %v9143
      %v10140 = vpop.f32.mrf.mxu0
      %v10141 = vadd.f32 0.0, %v10140
      %v10142 = vpop.f32.mrf.mxu0
      %v10143 = vpop.f32.mrf.mxu0
      %v10144 = vadd.f32 0.0, %v10143
      %v10145 = vpop.f32.mrf.mxu0
      %10146 = vmatprep.mubr.bf16.mxu0 0
      %10147 = vmatmul.mubr.bf16.gmra.mxu0 %v9146
      %v10148 = vpop.f32.mrf.mxu0
      %v10149 = vadd.f32 0.0, %v10148
      %v10150 = vpop.f32.mrf.mxu0
      %v10151 = vpop.f32.mrf.mxu0
      %v10152 = vadd.f32 0.0, %v10151
      %v10153 = vpop.f32.mrf.mxu0
      %10154 = vmatprep.mubr.bf16.mxu0 0
      %10155 = vmatmul.mubr.bf16.gmra.mxu0 %v9149
      %v10156 = vpop.f32.mrf.mxu0
      %v10157 = vadd.f32 0.0, %v10156
      %v10158 = vpop.f32.mrf.mxu0
      %v10159 = vpop.f32.mrf.mxu0
      %v10160 = vadd.f32 0.0, %v10159
      %v10161 = vpop.f32.mrf.mxu0
      %10162 = vmatprep.mubr.bf16.mxu0 0
      %10163 = vmatmul.mubr.bf16.gmra.mxu0 %v9152
      %v10164 = vpop.f32.mrf.mxu0
      %v10165 = vadd.f32 0.0, %v10164
      %v10166 = vpop.f32.mrf.mxu0
      %v10167 = vpop.f32.mrf.mxu0
      %v10168 = vadd.f32 0.0, %v10167
      %v10169 = vpop.f32.mrf.mxu0
      %10170 = vmatprep.mubr.bf16.mxu0 0
      %10171 = vmatmul.mubr.bf16.gmra.mxu0 %v9155
      %v10172 = vpop.f32.mrf.mxu0
      %v10173 = vadd.f32 0.0, %v10172
      %v10174 = vpop.f32.mrf.mxu0
      %v10175 = vpop.f32.mrf.mxu0
      %v10176 = vadd.f32 0.0, %v10175
      %v10177 = vpop.f32.mrf.mxu0
      %10178 = vmatprep.mubr.bf16.mxu0 0
      %10179 = vmatmul.mubr.bf16.gmra.mxu0 %v9158
      %v10180 = vpop.f32.mrf.mxu0
      %v10181 = vadd.f32 0.0, %v10180
      %v10182 = vpop.f32.mrf.mxu0
      %v10183 = vpop.f32.mrf.mxu0
      %v10184 = vadd.f32 0.0, %v10183
      %v10185 = vpop.f32.mrf.mxu0
      %10186 = vmatprep.mubr.bf16.mxu0 0
      %10187 = vmatmul.mubr.bf16.gmra.mxu0 %v9161
      %v10188 = vpop.f32.mrf.mxu0
      %v10189 = vadd.f32 0.0, %v10188
      %v10190 = vpop.f32.mrf.mxu0
      %v10191 = vpop.f32.mrf.mxu0
      %v10192 = vadd.f32 0.0, %v10191
      %v10193 = vpop.f32.mrf.mxu0
      %10194 = vmatprep.mubr.bf16.mxu0 0
      %10195 = vmatmul.mubr.bf16.gmra.mxu0 %v9164
      %v10196 = vpop.f32.mrf.mxu0
      %v10197 = vadd.f32 0.0, %v10196
      %v10198 = vpop.f32.mrf.mxu0
      %v10199 = vpop.f32.mrf.mxu0
      %v10200 = vadd.f32 0.0, %v10199
      %v10201 = vpop.f32.mrf.mxu0
      %10202 = vmatprep.mubr.bf16.mxu0 0
      %10203 = vmatmul.mubr.bf16.gmra.mxu0 %v9167
      %v10204 = vpop.f32.mrf.mxu0
      %v10205 = vadd.f32 0.0, %v10204
      %v10206 = vpop.f32.mrf.mxu0
      %v10207 = vpop.f32.mrf.mxu0
      %v10208 = vadd.f32 0.0, %v10207
      %v10209 = vpop.f32.mrf.mxu0
      %10210 = vmatprep.mubr.bf16.mxu0 0
      %10211 = vmatmul.mubr.bf16.gmra.mxu0 %v9170
      %v10212 = vpop.f32.mrf.mxu0
      %v10213 = vadd.f32 0.0, %v10212
      %v10214 = vpop.f32.mrf.mxu0
      %v10215 = vpop.f32.mrf.mxu0
      %v10216 = vadd.f32 0.0, %v10215
      %v10217 = vpop.f32.mrf.mxu0
      %10218 = vmatprep.mubr.bf16.mxu0 0
      %10219 = vmatmul.mubr.bf16.gmra.mxu0 %v9173
      %v10220 = vpop.f32.mrf.mxu0
      %v10221 = vadd.f32 0.0, %v10220
      %v10222 = vpop.f32.mrf.mxu0
      %v10223 = vpop.f32.mrf.mxu0
      %v10224 = vadd.f32 0.0, %v10223
      %v10225 = vpop.f32.mrf.mxu0
      %10226 = vmatprep.mubr.bf16.mxu0 0
      %10227 = vmatmul.mubr.bf16.gmra.mxu0 %v9176
      %v10228 = vpop.f32.mrf.mxu0
      %v10229 = vadd.f32 0.0, %v10228
      %v10230 = vpop.f32.mrf.mxu0
      %v10231 = vpop.f32.mrf.mxu0
      %v10232 = vadd.f32 0.0, %v10231
      %v10233 = vpop.f32.mrf.mxu0
      %10234 = vdwg.mxu0
      %v10236 = vlaneseq
      %v10237 = vshrl.u32 %v10236, 7
      %v10238 = vsub.s32 0, %v10237
      %v10239 = vrot.slane %v8652, %v10238
      %v10241 = vmul.f32 %v9213, %v10239
      %v10242 = vmul.f32 %v9216, %v10239
      %v10243 = vmul.f32 %v9221, %v10239
      %v10244 = vmul.f32 %v9224, %v10239
      %v10245 = vmul.f32 %v9229, %v10239
      %v10246 = vmul.f32 %v9232, %v10239
      %v10247 = vmul.f32 %v9237, %v10239
      %v10248 = vmul.f32 %v9240, %v10239
      %v10249 = vmul.f32 %v9245, %v10239
      %v10250 = vmul.f32 %v9248, %v10239
      %v10251 = vmul.f32 %v9253, %v10239
      %v10252 = vmul.f32 %v9256, %v10239
      %v10253 = vmul.f32 %v9261, %v10239
      %v10254 = vmul.f32 %v9264, %v10239
      %v10255 = vmul.f32 %v9269, %v10239
      %v10256 = vmul.f32 %v9272, %v10239
      %v10257 = vmul.f32 %v9277, %v10239
      %v10258 = vmul.f32 %v9280, %v10239
      %v10259 = vmul.f32 %v9285, %v10239
      %v10260 = vmul.f32 %v9288, %v10239
      %v10261 = vmul.f32 %v9293, %v10239
      %v10262 = vmul.f32 %v9296, %v10239
      %v10263 = vmul.f32 %v9301, %v10239
      %v10264 = vmul.f32 %v9304, %v10239
      %v10265 = vmul.f32 %v9309, %v10239
      %v10266 = vmul.f32 %v9312, %v10239
      %v10267 = vmul.f32 %v9317, %v10239
      %v10268 = vmul.f32 %v9320, %v10239
      %v10269 = vmul.f32 %v9325, %v10239
      %v10270 = vmul.f32 %v9328, %v10239
      %v10271 = vmul.f32 %v9333, %v10239
      %v10272 = vmul.f32 %v9336, %v10239
      %v10273 = vmul.f32 %v9341, %v10239
      %v10274 = vmul.f32 %v9344, %v10239
      %v10275 = vmul.f32 %v9349, %v10239
      %v10276 = vmul.f32 %v9352, %v10239
      %v10277 = vmul.f32 %v9357, %v10239
      %v10278 = vmul.f32 %v9360, %v10239
      %v10279 = vmul.f32 %v9365, %v10239
      %v10280 = vmul.f32 %v9368, %v10239
      %v10281 = vmul.f32 %v9373, %v10239
      %v10282 = vmul.f32 %v9376, %v10239
      %v10283 = vmul.f32 %v9381, %v10239
      %v10284 = vmul.f32 %v9384, %v10239
      %v10285 = vmul.f32 %v9389, %v10239
      %v10286 = vmul.f32 %v9392, %v10239
      %v10287 = vmul.f32 %v9397, %v10239
      %v10288 = vmul.f32 %v9400, %v10239
      %v10289 = vmul.f32 %v9405, %v10239
      %v10290 = vmul.f32 %v9408, %v10239
      %v10291 = vmul.f32 %v9413, %v10239
      %v10292 = vmul.f32 %v9416, %v10239
      %v10293 = vmul.f32 %v9421, %v10239
      %v10294 = vmul.f32 %v9424, %v10239
      %v10295 = vmul.f32 %v9429, %v10239
      %v10296 = vmul.f32 %v9432, %v10239
      %v10297 = vmul.f32 %v9437, %v10239
      %v10298 = vmul.f32 %v9440, %v10239
      %v10299 = vmul.f32 %v9445, %v10239
      %v10300 = vmul.f32 %v9448, %v10239
      %v10301 = vmul.f32 %v9453, %v10239
      %v10302 = vmul.f32 %v9456, %v10239
      %v10303 = vmul.f32 %v9461, %v10239
      %v10304 = vmul.f32 %v9464, %v10239
      %v10305 = vmul.f32 %v9469, %v10239
      %v10306 = vmul.f32 %v9472, %v10239
      %v10307 = vmul.f32 %v9477, %v10239
      %v10308 = vmul.f32 %v9480, %v10239
      %v10309 = vmul.f32 %v9485, %v10239
      %v10310 = vmul.f32 %v9488, %v10239
      %v10311 = vmul.f32 %v9493, %v10239
      %v10312 = vmul.f32 %v9496, %v10239
      %v10313 = vmul.f32 %v9501, %v10239
      %v10314 = vmul.f32 %v9504, %v10239
      %v10315 = vmul.f32 %v9509, %v10239
      %v10316 = vmul.f32 %v9512, %v10239
      %v10317 = vmul.f32 %v9517, %v10239
      %v10318 = vmul.f32 %v9520, %v10239
      %v10319 = vmul.f32 %v9525, %v10239
      %v10320 = vmul.f32 %v9528, %v10239
      %v10321 = vmul.f32 %v9533, %v10239
      %v10322 = vmul.f32 %v9536, %v10239
      %v10323 = vmul.f32 %v9541, %v10239
      %v10324 = vmul.f32 %v9544, %v10239
      %v10325 = vmul.f32 %v9549, %v10239
      %v10326 = vmul.f32 %v9552, %v10239
      %v10327 = vmul.f32 %v9557, %v10239
      %v10328 = vmul.f32 %v9560, %v10239
      %v10329 = vmul.f32 %v9565, %v10239
      %v10330 = vmul.f32 %v9568, %v10239
      %v10331 = vmul.f32 %v9573, %v10239
      %v10332 = vmul.f32 %v9576, %v10239
      %v10333 = vmul.f32 %v9581, %v10239
      %v10334 = vmul.f32 %v9584, %v10239
      %v10335 = vmul.f32 %v9589, %v10239
      %v10336 = vmul.f32 %v9592, %v10239
      %v10337 = vmul.f32 %v9597, %v10239
      %v10338 = vmul.f32 %v9600, %v10239
      %v10339 = vmul.f32 %v9605, %v10239
      %v10340 = vmul.f32 %v9608, %v10239
      %v10341 = vmul.f32 %v9613, %v10239
      %v10342 = vmul.f32 %v9616, %v10239
      %v10343 = vmul.f32 %v9621, %v10239
      %v10344 = vmul.f32 %v9624, %v10239
      %v10345 = vmul.f32 %v9629, %v10239
      %v10346 = vmul.f32 %v9632, %v10239
      %v10347 = vmul.f32 %v9637, %v10239
      %v10348 = vmul.f32 %v9640, %v10239
      %v10349 = vmul.f32 %v9645, %v10239
      %v10350 = vmul.f32 %v9648, %v10239
      %v10351 = vmul.f32 %v9653, %v10239
      %v10352 = vmul.f32 %v9656, %v10239
      %v10353 = vmul.f32 %v9661, %v10239
      %v10354 = vmul.f32 %v9664, %v10239
      %v10355 = vmul.f32 %v9669, %v10239
      %v10356 = vmul.f32 %v9672, %v10239
      %v10357 = vmul.f32 %v9677, %v10239
      %v10358 = vmul.f32 %v9680, %v10239
      %v10359 = vmul.f32 %v9685, %v10239
      %v10360 = vmul.f32 %v9688, %v10239
      %v10361 = vmul.f32 %v9693, %v10239
      %v10362 = vmul.f32 %v9696, %v10239
      %v10363 = vmul.f32 %v9701, %v10239
      %v10364 = vmul.f32 %v9704, %v10239
      %v10365 = vmul.f32 %v9709, %v10239
      %v10366 = vmul.f32 %v9712, %v10239
      %v10367 = vmul.f32 %v9717, %v10239
      %v10368 = vmul.f32 %v9720, %v10239
      %v10369 = vmul.f32 %v9725, %v10239
      %v10370 = vmul.f32 %v9728, %v10239
      %v10371 = vmul.f32 %v9733, %v10239
      %v10372 = vmul.f32 %v9736, %v10239
      %v10373 = vmul.f32 %v9741, %v10239
      %v10374 = vmul.f32 %v9744, %v10239
      %v10375 = vmul.f32 %v9749, %v10239
      %v10376 = vmul.f32 %v9752, %v10239
      %v10377 = vmul.f32 %v9757, %v10239
      %v10378 = vmul.f32 %v9760, %v10239
      %v10379 = vmul.f32 %v9765, %v10239
      %v10380 = vmul.f32 %v9768, %v10239
      %v10381 = vmul.f32 %v9773, %v10239
      %v10382 = vmul.f32 %v9776, %v10239
      %v10383 = vmul.f32 %v9781, %v10239
      %v10384 = vmul.f32 %v9784, %v10239
      %v10385 = vmul.f32 %v9789, %v10239
      %v10386 = vmul.f32 %v9792, %v10239
      %v10387 = vmul.f32 %v9797, %v10239
      %v10388 = vmul.f32 %v9800, %v10239
      %v10389 = vmul.f32 %v9805, %v10239
      %v10390 = vmul.f32 %v9808, %v10239
      %v10391 = vmul.f32 %v9813, %v10239
      %v10392 = vmul.f32 %v9816, %v10239
      %v10393 = vmul.f32 %v9821, %v10239
      %v10394 = vmul.f32 %v9824, %v10239
      %v10395 = vmul.f32 %v9829, %v10239
      %v10396 = vmul.f32 %v9832, %v10239
      %v10397 = vmul.f32 %v9837, %v10239
      %v10398 = vmul.f32 %v9840, %v10239
      %v10399 = vmul.f32 %v9845, %v10239
      %v10400 = vmul.f32 %v9848, %v10239
      %v10401 = vmul.f32 %v9853, %v10239
      %v10402 = vmul.f32 %v9856, %v10239
      %v10403 = vmul.f32 %v9861, %v10239
      %v10404 = vmul.f32 %v9864, %v10239
      %v10405 = vmul.f32 %v9869, %v10239
      %v10406 = vmul.f32 %v9872, %v10239
      %v10407 = vmul.f32 %v9877, %v10239
      %v10408 = vmul.f32 %v9880, %v10239
      %v10409 = vmul.f32 %v9885, %v10239
      %v10410 = vmul.f32 %v9888, %v10239
      %v10411 = vmul.f32 %v9893, %v10239
      %v10412 = vmul.f32 %v9896, %v10239
      %v10413 = vmul.f32 %v9901, %v10239
      %v10414 = vmul.f32 %v9904, %v10239
      %v10415 = vmul.f32 %v9909, %v10239
      %v10416 = vmul.f32 %v9912, %v10239
      %v10417 = vmul.f32 %v9917, %v10239
      %v10418 = vmul.f32 %v9920, %v10239
      %v10419 = vmul.f32 %v9925, %v10239
      %v10420 = vmul.f32 %v9928, %v10239
      %v10421 = vmul.f32 %v9933, %v10239
      %v10422 = vmul.f32 %v9936, %v10239
      %v10423 = vmul.f32 %v9941, %v10239
      %v10424 = vmul.f32 %v9944, %v10239
      %v10425 = vmul.f32 %v9949, %v10239
      %v10426 = vmul.f32 %v9952, %v10239
      %v10427 = vmul.f32 %v9957, %v10239
      %v10428 = vmul.f32 %v9960, %v10239
      %v10429 = vmul.f32 %v9965, %v10239
      %v10430 = vmul.f32 %v9968, %v10239
      %v10431 = vmul.f32 %v9973, %v10239
      %v10432 = vmul.f32 %v9976, %v10239
      %v10433 = vmul.f32 %v9981, %v10239
      %v10434 = vmul.f32 %v9984, %v10239
      %v10435 = vmul.f32 %v9989, %v10239
      %v10436 = vmul.f32 %v9992, %v10239
      %v10437 = vmul.f32 %v9997, %v10239
      %v10438 = vmul.f32 %v10000, %v10239
      %v10439 = vmul.f32 %v10005, %v10239
      %v10440 = vmul.f32 %v10008, %v10239
      %v10441 = vmul.f32 %v10013, %v10239
      %v10442 = vmul.f32 %v10016, %v10239
      %v10443 = vmul.f32 %v10021, %v10239
      %v10444 = vmul.f32 %v10024, %v10239
      %v10445 = vmul.f32 %v10029, %v10239
      %v10446 = vmul.f32 %v10032, %v10239
      %v10447 = vmul.f32 %v10037, %v10239
      %v10448 = vmul.f32 %v10040, %v10239
      %v10449 = vmul.f32 %v10045, %v10239
      %v10450 = vmul.f32 %v10048, %v10239
      %v10451 = vmul.f32 %v10053, %v10239
      %v10452 = vmul.f32 %v10056, %v10239
      %v10453 = vmul.f32 %v10061, %v10239
      %v10454 = vmul.f32 %v10064, %v10239
      %v10455 = vmul.f32 %v10069, %v10239
      %v10456 = vmul.f32 %v10072, %v10239
      %v10457 = vmul.f32 %v10077, %v10239
      %v10458 = vmul.f32 %v10080, %v10239
      %v10459 = vmul.f32 %v10085, %v10239
      %v10460 = vmul.f32 %v10088, %v10239
      %v10461 = vmul.f32 %v10093, %v10239
      %v10462 = vmul.f32 %v10096, %v10239
      %v10463 = vmul.f32 %v10101, %v10239
      %v10464 = vmul.f32 %v10104, %v10239
      %v10465 = vmul.f32 %v10109, %v10239
      %v10466 = vmul.f32 %v10112, %v10239
      %v10467 = vmul.f32 %v10117, %v10239
      %v10468 = vmul.f32 %v10120, %v10239
      %v10469 = vmul.f32 %v10125, %v10239
      %v10470 = vmul.f32 %v10128, %v10239
      %v10471 = vmul.f32 %v10133, %v10239
      %v10472 = vmul.f32 %v10136, %v10239
      %v10473 = vmul.f32 %v10141, %v10239
      %v10474 = vmul.f32 %v10144, %v10239
      %v10475 = vmul.f32 %v10149, %v10239
      %v10476 = vmul.f32 %v10152, %v10239
      %v10477 = vmul.f32 %v10157, %v10239
      %v10478 = vmul.f32 %v10160, %v10239
      %v10479 = vmul.f32 %v10165, %v10239
      %v10480 = vmul.f32 %v10168, %v10239
      %v10481 = vmul.f32 %v10173, %v10239
      %v10482 = vmul.f32 %v10176, %v10239
      %v10483 = vmul.f32 %v10181, %v10239
      %v10484 = vmul.f32 %v10184, %v10239
      %v10485 = vmul.f32 %v10189, %v10239
      %v10486 = vmul.f32 %v10192, %v10239
      %v10487 = vmul.f32 %v10197, %v10239
      %v10488 = vmul.f32 %v10200, %v10239
      %v10489 = vmul.f32 %v10205, %v10239
      %v10490 = vmul.f32 %v10208, %v10239
      %v10491 = vmul.f32 %v10213, %v10239
      %v10492 = vmul.f32 %v10216, %v10239
      %v10493 = vmul.f32 %v10221, %v10239
      %v10494 = vmul.f32 %v10224, %v10239
      %v10495 = vmul.f32 %v10229, %v10239
      %v10496 = vmul.f32 %v10232, %v10239
      %v10498 = vlaneseq
      %v10499 = vshrl.u32 %v10498, 7
      %v10500 = vsub.s32 0, %v10499
      %v10501 = vrot.slane %v8653, %v10500
      %v10503 = vadd.f32 %v10241, %v10501
      %v10504 = vadd.f32 %v10242, %v10501
      %v10505 = vadd.f32 %v10243, %v10501
      %v10506 = vadd.f32 %v10244, %v10501
      %v10507 = vadd.f32 %v10245, %v10501
      %v10508 = vadd.f32 %v10246, %v10501
      %v10509 = vadd.f32 %v10247, %v10501
      %v10510 = vadd.f32 %v10248, %v10501
      %v10511 = vadd.f32 %v10249, %v10501
      %v10512 = vadd.f32 %v10250, %v10501
      %v10513 = vadd.f32 %v10251, %v10501
      %v10514 = vadd.f32 %v10252, %v10501
      %v10515 = vadd.f32 %v10253, %v10501
      %v10516 = vadd.f32 %v10254, %v10501
      %v10517 = vadd.f32 %v10255, %v10501
      %v10518 = vadd.f32 %v10256, %v10501
      %v10519 = vadd.f32 %v10257, %v10501
      %v10520 = vadd.f32 %v10258, %v10501
      %v10521 = vadd.f32 %v10259, %v10501
      %v10522 = vadd.f32 %v10260, %v10501
      %v10523 = vadd.f32 %v10261, %v10501
      %v10524 = vadd.f32 %v10262, %v10501
      %v10525 = vadd.f32 %v10263, %v10501
      %v10526 = vadd.f32 %v10264, %v10501
      %v10527 = vadd.f32 %v10265, %v10501
      %v10528 = vadd.f32 %v10266, %v10501
      %v10529 = vadd.f32 %v10267, %v10501
      %v10530 = vadd.f32 %v10268, %v10501
      %v10531 = vadd.f32 %v10269, %v10501
      %v10532 = vadd.f32 %v10270, %v10501
      %v10533 = vadd.f32 %v10271, %v10501
      %v10534 = vadd.f32 %v10272, %v10501
      %v10535 = vadd.f32 %v10273, %v10501
      %v10536 = vadd.f32 %v10274, %v10501
      %v10537 = vadd.f32 %v10275, %v10501
      %v10538 = vadd.f32 %v10276, %v10501
      %v10539 = vadd.f32 %v10277, %v10501
      %v10540 = vadd.f32 %v10278, %v10501
      %v10541 = vadd.f32 %v10279, %v10501
      %v10542 = vadd.f32 %v10280, %v10501
      %v10543 = vadd.f32 %v10281, %v10501
      %v10544 = vadd.f32 %v10282, %v10501
      %v10545 = vadd.f32 %v10283, %v10501
      %v10546 = vadd.f32 %v10284, %v10501
      %v10547 = vadd.f32 %v10285, %v10501
      %v10548 = vadd.f32 %v10286, %v10501
      %v10549 = vadd.f32 %v10287, %v10501
      %v10550 = vadd.f32 %v10288, %v10501
      %v10551 = vadd.f32 %v10289, %v10501
      %v10552 = vadd.f32 %v10290, %v10501
      %v10553 = vadd.f32 %v10291, %v10501
      %v10554 = vadd.f32 %v10292, %v10501
      %v10555 = vadd.f32 %v10293, %v10501
      %v10556 = vadd.f32 %v10294, %v10501
      %v10557 = vadd.f32 %v10295, %v10501
      %v10558 = vadd.f32 %v10296, %v10501
      %v10559 = vadd.f32 %v10297, %v10501
      %v10560 = vadd.f32 %v10298, %v10501
      %v10561 = vadd.f32 %v10299, %v10501
      %v10562 = vadd.f32 %v10300, %v10501
      %v10563 = vadd.f32 %v10301, %v10501
      %v10564 = vadd.f32 %v10302, %v10501
      %v10565 = vadd.f32 %v10303, %v10501
      %v10566 = vadd.f32 %v10304, %v10501
      %v10567 = vadd.f32 %v10305, %v10501
      %v10568 = vadd.f32 %v10306, %v10501
      %v10569 = vadd.f32 %v10307, %v10501
      %v10570 = vadd.f32 %v10308, %v10501
      %v10571 = vadd.f32 %v10309, %v10501
      %v10572 = vadd.f32 %v10310, %v10501
      %v10573 = vadd.f32 %v10311, %v10501
      %v10574 = vadd.f32 %v10312, %v10501
      %v10575 = vadd.f32 %v10313, %v10501
      %v10576 = vadd.f32 %v10314, %v10501
      %v10577 = vadd.f32 %v10315, %v10501
      %v10578 = vadd.f32 %v10316, %v10501
      %v10579 = vadd.f32 %v10317, %v10501
      %v10580 = vadd.f32 %v10318, %v10501
      %v10581 = vadd.f32 %v10319, %v10501
      %v10582 = vadd.f32 %v10320, %v10501
      %v10583 = vadd.f32 %v10321, %v10501
      %v10584 = vadd.f32 %v10322, %v10501
      %v10585 = vadd.f32 %v10323, %v10501
      %v10586 = vadd.f32 %v10324, %v10501
      %v10587 = vadd.f32 %v10325, %v10501
      %v10588 = vadd.f32 %v10326, %v10501
      %v10589 = vadd.f32 %v10327, %v10501
      %v10590 = vadd.f32 %v10328, %v10501
      %v10591 = vadd.f32 %v10329, %v10501
      %v10592 = vadd.f32 %v10330, %v10501
      %v10593 = vadd.f32 %v10331, %v10501
      %v10594 = vadd.f32 %v10332, %v10501
      %v10595 = vadd.f32 %v10333, %v10501
      %v10596 = vadd.f32 %v10334, %v10501
      %v10597 = vadd.f32 %v10335, %v10501
      %v10598 = vadd.f32 %v10336, %v10501
      %v10599 = vadd.f32 %v10337, %v10501
      %v10600 = vadd.f32 %v10338, %v10501
      %v10601 = vadd.f32 %v10339, %v10501
      %v10602 = vadd.f32 %v10340, %v10501
      %v10603 = vadd.f32 %v10341, %v10501
      %v10604 = vadd.f32 %v10342, %v10501
      %v10605 = vadd.f32 %v10343, %v10501
      %v10606 = vadd.f32 %v10344, %v10501
      %v10607 = vadd.f32 %v10345, %v10501
      %v10608 = vadd.f32 %v10346, %v10501
      %v10609 = vadd.f32 %v10347, %v10501
      %v10610 = vadd.f32 %v10348, %v10501
      %v10611 = vadd.f32 %v10349, %v10501
      %v10612 = vadd.f32 %v10350, %v10501
      %v10613 = vadd.f32 %v10351, %v10501
      %v10614 = vadd.f32 %v10352, %v10501
      %v10615 = vadd.f32 %v10353, %v10501
      %v10616 = vadd.f32 %v10354, %v10501
      %v10617 = vadd.f32 %v10355, %v10501
      %v10618 = vadd.f32 %v10356, %v10501
      %v10619 = vadd.f32 %v10357, %v10501
      %v10620 = vadd.f32 %v10358, %v10501
      %v10621 = vadd.f32 %v10359, %v10501
      %v10622 = vadd.f32 %v10360, %v10501
      %v10623 = vadd.f32 %v10361, %v10501
      %v10624 = vadd.f32 %v10362, %v10501
      %v10625 = vadd.f32 %v10363, %v10501
      %v10626 = vadd.f32 %v10364, %v10501
      %v10627 = vadd.f32 %v10365, %v10501
      %v10628 = vadd.f32 %v10366, %v10501
      %v10629 = vadd.f32 %v10367, %v10501
      %v10630 = vadd.f32 %v10368, %v10501
      %v10631 = vadd.f32 %v10369, %v10501
      %v10632 = vadd.f32 %v10370, %v10501
      %v10633 = vadd.f32 %v10371, %v10501
      %v10634 = vadd.f32 %v10372, %v10501
      %v10635 = vadd.f32 %v10373, %v10501
      %v10636 = vadd.f32 %v10374, %v10501
      %v10637 = vadd.f32 %v10375, %v10501
      %v10638 = vadd.f32 %v10376, %v10501
      %v10639 = vadd.f32 %v10377, %v10501
      %v10640 = vadd.f32 %v10378, %v10501
      %v10641 = vadd.f32 %v10379, %v10501
      %v10642 = vadd.f32 %v10380, %v10501
      %v10643 = vadd.f32 %v10381, %v10501
      %v10644 = vadd.f32 %v10382, %v10501
      %v10645 = vadd.f32 %v10383, %v10501
      %v10646 = vadd.f32 %v10384, %v10501
      %v10647 = vadd.f32 %v10385, %v10501
      %v10648 = vadd.f32 %v10386, %v10501
      %v10649 = vadd.f32 %v10387, %v10501
      %v10650 = vadd.f32 %v10388, %v10501
      %v10651 = vadd.f32 %v10389, %v10501
      %v10652 = vadd.f32 %v10390, %v10501
      %v10653 = vadd.f32 %v10391, %v10501
      %v10654 = vadd.f32 %v10392, %v10501
      %v10655 = vadd.f32 %v10393, %v10501
      %v10656 = vadd.f32 %v10394, %v10501
      %v10657 = vadd.f32 %v10395, %v10501
      %v10658 = vadd.f32 %v10396, %v10501
      %v10659 = vadd.f32 %v10397, %v10501
      %v10660 = vadd.f32 %v10398, %v10501
      %v10661 = vadd.f32 %v10399, %v10501
      %v10662 = vadd.f32 %v10400, %v10501
      %v10663 = vadd.f32 %v10401, %v10501
      %v10664 = vadd.f32 %v10402, %v10501
      %v10665 = vadd.f32 %v10403, %v10501
      %v10666 = vadd.f32 %v10404, %v10501
      %v10667 = vadd.f32 %v10405, %v10501
      %v10668 = vadd.f32 %v10406, %v10501
      %v10669 = vadd.f32 %v10407, %v10501
      %v10670 = vadd.f32 %v10408, %v10501
      %v10671 = vadd.f32 %v10409, %v10501
      %v10672 = vadd.f32 %v10410, %v10501
      %v10673 = vadd.f32 %v10411, %v10501
      %v10674 = vadd.f32 %v10412, %v10501
      %v10675 = vadd.f32 %v10413, %v10501
      %v10676 = vadd.f32 %v10414, %v10501
      %v10677 = vadd.f32 %v10415, %v10501
      %v10678 = vadd.f32 %v10416, %v10501
      %v10679 = vadd.f32 %v10417, %v10501
      %v10680 = vadd.f32 %v10418, %v10501
      %v10681 = vadd.f32 %v10419, %v10501
      %v10682 = vadd.f32 %v10420, %v10501
      %v10683 = vadd.f32 %v10421, %v10501
      %v10684 = vadd.f32 %v10422, %v10501
      %v10685 = vadd.f32 %v10423, %v10501
      %v10686 = vadd.f32 %v10424, %v10501
      %v10687 = vadd.f32 %v10425, %v10501
      %v10688 = vadd.f32 %v10426, %v10501
      %v10689 = vadd.f32 %v10427, %v10501
      %v10690 = vadd.f32 %v10428, %v10501
      %v10691 = vadd.f32 %v10429, %v10501
      %v10692 = vadd.f32 %v10430, %v10501
      %v10693 = vadd.f32 %v10431, %v10501
      %v10694 = vadd.f32 %v10432, %v10501
      %v10695 = vadd.f32 %v10433, %v10501
      %v10696 = vadd.f32 %v10434, %v10501
      %v10697 = vadd.f32 %v10435, %v10501
      %v10698 = vadd.f32 %v10436, %v10501
      %v10699 = vadd.f32 %v10437, %v10501
      %v10700 = vadd.f32 %v10438, %v10501
      %v10701 = vadd.f32 %v10439, %v10501
      %v10702 = vadd.f32 %v10440, %v10501
      %v10703 = vadd.f32 %v10441, %v10501
      %v10704 = vadd.f32 %v10442, %v10501
      %v10705 = vadd.f32 %v10443, %v10501
      %v10706 = vadd.f32 %v10444, %v10501
      %v10707 = vadd.f32 %v10445, %v10501
      %v10708 = vadd.f32 %v10446, %v10501
      %v10709 = vadd.f32 %v10447, %v10501
      %v10710 = vadd.f32 %v10448, %v10501
      %v10711 = vadd.f32 %v10449, %v10501
      %v10712 = vadd.f32 %v10450, %v10501
      %v10713 = vadd.f32 %v10451, %v10501
      %v10714 = vadd.f32 %v10452, %v10501
      %v10715 = vadd.f32 %v10453, %v10501
      %v10716 = vadd.f32 %v10454, %v10501
      %v10717 = vadd.f32 %v10455, %v10501
      %v10718 = vadd.f32 %v10456, %v10501
      %v10719 = vadd.f32 %v10457, %v10501
      %v10720 = vadd.f32 %v10458, %v10501
      %v10721 = vadd.f32 %v10459, %v10501
      %v10722 = vadd.f32 %v10460, %v10501
      %v10723 = vadd.f32 %v10461, %v10501
      %v10724 = vadd.f32 %v10462, %v10501
      %v10725 = vadd.f32 %v10463, %v10501
      %v10726 = vadd.f32 %v10464, %v10501
      %v10727 = vadd.f32 %v10465, %v10501
      %v10728 = vadd.f32 %v10466, %v10501
      %v10729 = vadd.f32 %v10467, %v10501
      %v10730 = vadd.f32 %v10468, %v10501
      %v10731 = vadd.f32 %v10469, %v10501
      %v10732 = vadd.f32 %v10470, %v10501
      %v10733 = vadd.f32 %v10471, %v10501
      %v10734 = vadd.f32 %v10472, %v10501
      %v10735 = vadd.f32 %v10473, %v10501
      %v10736 = vadd.f32 %v10474, %v10501
      %v10737 = vadd.f32 %v10475, %v10501
      %v10738 = vadd.f32 %v10476, %v10501
      %v10739 = vadd.f32 %v10477, %v10501
      %v10740 = vadd.f32 %v10478, %v10501
      %v10741 = vadd.f32 %v10479, %v10501
      %v10742 = vadd.f32 %v10480, %v10501
      %v10743 = vadd.f32 %v10481, %v10501
      %v10744 = vadd.f32 %v10482, %v10501
      %v10745 = vadd.f32 %v10483, %v10501
      %v10746 = vadd.f32 %v10484, %v10501
      %v10747 = vadd.f32 %v10485, %v10501
      %v10748 = vadd.f32 %v10486, %v10501
      %v10749 = vadd.f32 %v10487, %v10501
      %v10750 = vadd.f32 %v10488, %v10501
      %v10751 = vadd.f32 %v10489, %v10501
      %v10752 = vadd.f32 %v10490, %v10501
      %v10753 = vadd.f32 %v10491, %v10501
      %v10754 = vadd.f32 %v10492, %v10501
      %v10755 = vadd.f32 %v10493, %v10501
      %v10756 = vadd.f32 %v10494, %v10501
      %v10757 = vadd.f32 %v10495, %v10501
      %v10758 = vadd.f32 %v10496, %v10501
      %v10759 = vmax.f32 %v10503, 0.0
      %v10760 = vmax.f32 %v10504, 0.0
      %v10761 = vmax.f32 %v10505, 0.0
      %v10762 = vmax.f32 %v10506, 0.0
      %v10763 = vmax.f32 %v10507, 0.0
      %v10764 = vmax.f32 %v10508, 0.0
      %v10765 = vmax.f32 %v10509, 0.0
      %v10766 = vmax.f32 %v10510, 0.0
      %v10767 = vmax.f32 %v10511, 0.0
      %v10768 = vmax.f32 %v10512, 0.0
      %v10769 = vmax.f32 %v10513, 0.0
      %v10770 = vmax.f32 %v10514, 0.0
      %v10771 = vmax.f32 %v10515, 0.0
      %v10772 = vmax.f32 %v10516, 0.0
      %v10773 = vmax.f32 %v10517, 0.0
      %v10774 = vmax.f32 %v10518, 0.0
      %v10775 = vmax.f32 %v10519, 0.0
      %v10776 = vmax.f32 %v10520, 0.0
      %v10777 = vmax.f32 %v10521, 0.0
      %v10778 = vmax.f32 %v10522, 0.0
      %v10779 = vmax.f32 %v10523, 0.0
      %v10780 = vmax.f32 %v10524, 0.0
      %v10781 = vmax.f32 %v10525, 0.0
      %v10782 = vmax.f32 %v10526, 0.0
      %v10783 = vmax.f32 %v10527, 0.0
      %v10784 = vmax.f32 %v10528, 0.0
      %v10785 = vmax.f32 %v10529, 0.0
      %v10786 = vmax.f32 %v10530, 0.0
      %v10787 = vmax.f32 %v10531, 0.0
      %v10788 = vmax.f32 %v10532, 0.0
      %v10789 = vmax.f32 %v10533, 0.0
      %v10790 = vmax.f32 %v10534, 0.0
      %v10791 = vmax.f32 %v10535, 0.0
      %v10792 = vmax.f32 %v10536, 0.0
      %v10793 = vmax.f32 %v10537, 0.0
      %v10794 = vmax.f32 %v10538, 0.0
      %v10795 = vmax.f32 %v10539, 0.0
      %v10796 = vmax.f32 %v10540, 0.0
      %v10797 = vmax.f32 %v10541, 0.0
      %v10798 = vmax.f32 %v10542, 0.0
      %v10799 = vmax.f32 %v10543, 0.0
      %v10800 = vmax.f32 %v10544, 0.0
      %v10801 = vmax.f32 %v10545, 0.0
      %v10802 = vmax.f32 %v10546, 0.0
      %v10803 = vmax.f32 %v10547, 0.0
      %v10804 = vmax.f32 %v10548, 0.0
      %v10805 = vmax.f32 %v10549, 0.0
      %v10806 = vmax.f32 %v10550, 0.0
      %v10807 = vmax.f32 %v10551, 0.0
      %v10808 = vmax.f32 %v10552, 0.0
      %v10809 = vmax.f32 %v10553, 0.0
      %v10810 = vmax.f32 %v10554, 0.0
      %v10811 = vmax.f32 %v10555, 0.0
      %v10812 = vmax.f32 %v10556, 0.0
      %v10813 = vmax.f32 %v10557, 0.0
      %v10814 = vmax.f32 %v10558, 0.0
      %v10815 = vmax.f32 %v10559, 0.0
      %v10816 = vmax.f32 %v10560, 0.0
      %v10817 = vmax.f32 %v10561, 0.0
      %v10818 = vmax.f32 %v10562, 0.0
      %v10819 = vmax.f32 %v10563, 0.0
      %v10820 = vmax.f32 %v10564, 0.0
      %v10821 = vmax.f32 %v10565, 0.0
      %v10822 = vmax.f32 %v10566, 0.0
      %v10823 = vmax.f32 %v10567, 0.0
      %v10824 = vmax.f32 %v10568, 0.0
      %v10825 = vmax.f32 %v10569, 0.0
      %v10826 = vmax.f32 %v10570, 0.0
      %v10827 = vmax.f32 %v10571, 0.0
      %v10828 = vmax.f32 %v10572, 0.0
      %v10829 = vmax.f32 %v10573, 0.0
      %v10830 = vmax.f32 %v10574, 0.0
      %v10831 = vmax.f32 %v10575, 0.0
      %v10832 = vmax.f32 %v10576, 0.0
      %v10833 = vmax.f32 %v10577, 0.0
      %v10834 = vmax.f32 %v10578, 0.0
      %v10835 = vmax.f32 %v10579, 0.0
      %v10836 = vmax.f32 %v10580, 0.0
      %v10837 = vmax.f32 %v10581, 0.0
      %v10838 = vmax.f32 %v10582, 0.0
      %v10839 = vmax.f32 %v10583, 0.0
      %v10840 = vmax.f32 %v10584, 0.0
      %v10841 = vmax.f32 %v10585, 0.0
      %v10842 = vmax.f32 %v10586, 0.0
      %v10843 = vmax.f32 %v10587, 0.0
      %v10844 = vmax.f32 %v10588, 0.0
      %v10845 = vmax.f32 %v10589, 0.0
      %v10846 = vmax.f32 %v10590, 0.0
      %v10847 = vmax.f32 %v10591, 0.0
      %v10848 = vmax.f32 %v10592, 0.0
      %v10849 = vmax.f32 %v10593, 0.0
      %v10850 = vmax.f32 %v10594, 0.0
      %v10851 = vmax.f32 %v10595, 0.0
      %v10852 = vmax.f32 %v10596, 0.0
      %v10853 = vmax.f32 %v10597, 0.0
      %v10854 = vmax.f32 %v10598, 0.0
      %v10855 = vmax.f32 %v10599, 0.0
      %v10856 = vmax.f32 %v10600, 0.0
      %v10857 = vmax.f32 %v10601, 0.0
      %v10858 = vmax.f32 %v10602, 0.0
      %v10859 = vmax.f32 %v10603, 0.0
      %v10860 = vmax.f32 %v10604, 0.0
      %v10861 = vmax.f32 %v10605, 0.0
      %v10862 = vmax.f32 %v10606, 0.0
      %v10863 = vmax.f32 %v10607, 0.0
      %v10864 = vmax.f32 %v10608, 0.0
      %v10865 = vmax.f32 %v10609, 0.0
      %v10866 = vmax.f32 %v10610, 0.0
      %v10867 = vmax.f32 %v10611, 0.0
      %v10868 = vmax.f32 %v10612, 0.0
      %v10869 = vmax.f32 %v10613, 0.0
      %v10870 = vmax.f32 %v10614, 0.0
      %v10871 = vmax.f32 %v10615, 0.0
      %v10872 = vmax.f32 %v10616, 0.0
      %v10873 = vmax.f32 %v10617, 0.0
      %v10874 = vmax.f32 %v10618, 0.0
      %v10875 = vmax.f32 %v10619, 0.0
      %v10876 = vmax.f32 %v10620, 0.0
      %v10877 = vmax.f32 %v10621, 0.0
      %v10878 = vmax.f32 %v10622, 0.0
      %v10879 = vmax.f32 %v10623, 0.0
      %v10880 = vmax.f32 %v10624, 0.0
      %v10881 = vmax.f32 %v10625, 0.0
      %v10882 = vmax.f32 %v10626, 0.0
      %v10883 = vmax.f32 %v10627, 0.0
      %v10884 = vmax.f32 %v10628, 0.0
      %v10885 = vmax.f32 %v10629, 0.0
      %v10886 = vmax.f32 %v10630, 0.0
      %v10887 = vmax.f32 %v10631, 0.0
      %v10888 = vmax.f32 %v10632, 0.0
      %v10889 = vmax.f32 %v10633, 0.0
      %v10890 = vmax.f32 %v10634, 0.0
      %v10891 = vmax.f32 %v10635, 0.0
      %v10892 = vmax.f32 %v10636, 0.0
      %v10893 = vmax.f32 %v10637, 0.0
      %v10894 = vmax.f32 %v10638, 0.0
      %v10895 = vmax.f32 %v10639, 0.0
      %v10896 = vmax.f32 %v10640, 0.0
      %v10897 = vmax.f32 %v10641, 0.0
      %v10898 = vmax.f32 %v10642, 0.0
      %v10899 = vmax.f32 %v10643, 0.0
      %v10900 = vmax.f32 %v10644, 0.0
      %v10901 = vmax.f32 %v10645, 0.0
      %v10902 = vmax.f32 %v10646, 0.0
      %v10903 = vmax.f32 %v10647, 0.0
      %v10904 = vmax.f32 %v10648, 0.0
      %v10905 = vmax.f32 %v10649, 0.0
      %v10906 = vmax.f32 %v10650, 0.0
      %v10907 = vmax.f32 %v10651, 0.0
      %v10908 = vmax.f32 %v10652, 0.0
      %v10909 = vmax.f32 %v10653, 0.0
      %v10910 = vmax.f32 %v10654, 0.0
      %v10911 = vmax.f32 %v10655, 0.0
      %v10912 = vmax.f32 %v10656, 0.0
      %v10913 = vmax.f32 %v10657, 0.0
      %v10914 = vmax.f32 %v10658, 0.0
      %v10915 = vmax.f32 %v10659, 0.0
      %v10916 = vmax.f32 %v10660, 0.0
      %v10917 = vmax.f32 %v10661, 0.0
      %v10918 = vmax.f32 %v10662, 0.0
      %v10919 = vmax.f32 %v10663, 0.0
      %v10920 = vmax.f32 %v10664, 0.0
      %v10921 = vmax.f32 %v10665, 0.0
      %v10922 = vmax.f32 %v10666, 0.0
      %v10923 = vmax.f32 %v10667, 0.0
      %v10924 = vmax.f32 %v10668, 0.0
      %v10925 = vmax.f32 %v10669, 0.0
      %v10926 = vmax.f32 %v10670, 0.0
      %v10927 = vmax.f32 %v10671, 0.0
      %v10928 = vmax.f32 %v10672, 0.0
      %v10929 = vmax.f32 %v10673, 0.0
      %v10930 = vmax.f32 %v10674, 0.0
      %v10931 = vmax.f32 %v10675, 0.0
      %v10932 = vmax.f32 %v10676, 0.0
      %v10933 = vmax.f32 %v10677, 0.0
      %v10934 = vmax.f32 %v10678, 0.0
      %v10935 = vmax.f32 %v10679, 0.0
      %v10936 = vmax.f32 %v10680, 0.0
      %v10937 = vmax.f32 %v10681, 0.0
      %v10938 = vmax.f32 %v10682, 0.0
      %v10939 = vmax.f32 %v10683, 0.0
      %v10940 = vmax.f32 %v10684, 0.0
      %v10941 = vmax.f32 %v10685, 0.0
      %v10942 = vmax.f32 %v10686, 0.0
      %v10943 = vmax.f32 %v10687, 0.0
      %v10944 = vmax.f32 %v10688, 0.0
      %v10945 = vmax.f32 %v10689, 0.0
      %v10946 = vmax.f32 %v10690, 0.0
      %v10947 = vmax.f32 %v10691, 0.0
      %v10948 = vmax.f32 %v10692, 0.0
      %v10949 = vmax.f32 %v10693, 0.0
      %v10950 = vmax.f32 %v10694, 0.0
      %v10951 = vmax.f32 %v10695, 0.0
      %v10952 = vmax.f32 %v10696, 0.0
      %v10953 = vmax.f32 %v10697, 0.0
      %v10954 = vmax.f32 %v10698, 0.0
      %v10955 = vmax.f32 %v10699, 0.0
      %v10956 = vmax.f32 %v10700, 0.0
      %v10957 = vmax.f32 %v10701, 0.0
      %v10958 = vmax.f32 %v10702, 0.0
      %v10959 = vmax.f32 %v10703, 0.0
      %v10960 = vmax.f32 %v10704, 0.0
      %v10961 = vmax.f32 %v10705, 0.0
      %v10962 = vmax.f32 %v10706, 0.0
      %v10963 = vmax.f32 %v10707, 0.0
      %v10964 = vmax.f32 %v10708, 0.0
      %v10965 = vmax.f32 %v10709, 0.0
      %v10966 = vmax.f32 %v10710, 0.0
      %v10967 = vmax.f32 %v10711, 0.0
      %v10968 = vmax.f32 %v10712, 0.0
      %v10969 = vmax.f32 %v10713, 0.0
      %v10970 = vmax.f32 %v10714, 0.0
      %v10971 = vmax.f32 %v10715, 0.0
      %v10972 = vmax.f32 %v10716, 0.0
      %v10973 = vmax.f32 %v10717, 0.0
      %v10974 = vmax.f32 %v10718, 0.0
      %v10975 = vmax.f32 %v10719, 0.0
      %v10976 = vmax.f32 %v10720, 0.0
      %v10977 = vmax.f32 %v10721, 0.0
      %v10978 = vmax.f32 %v10722, 0.0
      %v10979 = vmax.f32 %v10723, 0.0
      %v10980 = vmax.f32 %v10724, 0.0
      %v10981 = vmax.f32 %v10725, 0.0
      %v10982 = vmax.f32 %v10726, 0.0
      %v10983 = vmax.f32 %v10727, 0.0
      %v10984 = vmax.f32 %v10728, 0.0
      %v10985 = vmax.f32 %v10729, 0.0
      %v10986 = vmax.f32 %v10730, 0.0
      %v10987 = vmax.f32 %v10731, 0.0
      %v10988 = vmax.f32 %v10732, 0.0
      %v10989 = vmax.f32 %v10733, 0.0
      %v10990 = vmax.f32 %v10734, 0.0
      %v10991 = vmax.f32 %v10735, 0.0
      %v10992 = vmax.f32 %v10736, 0.0
      %v10993 = vmax.f32 %v10737, 0.0
      %v10994 = vmax.f32 %v10738, 0.0
      %v10995 = vmax.f32 %v10739, 0.0
      %v10996 = vmax.f32 %v10740, 0.0
      %v10997 = vmax.f32 %v10741, 0.0
      %v10998 = vmax.f32 %v10742, 0.0
      %v10999 = vmax.f32 %v10743, 0.0
      %v11000 = vmax.f32 %v10744, 0.0
      %v11001 = vmax.f32 %v10745, 0.0
      %v11002 = vmax.f32 %v10746, 0.0
      %v11003 = vmax.f32 %v10747, 0.0
      %v11004 = vmax.f32 %v10748, 0.0
      %v11005 = vmax.f32 %v10749, 0.0
      %v11006 = vmax.f32 %v10750, 0.0
      %v11007 = vmax.f32 %v10751, 0.0
      %v11008 = vmax.f32 %v10752, 0.0
      %v11009 = vmax.f32 %v10753, 0.0
      %v11010 = vmax.f32 %v10754, 0.0
      %v11011 = vmax.f32 %v10755, 0.0
      %v11012 = vmax.f32 %v10756, 0.0
      %v11013 = vmax.f32 %v10757, 0.0
      %v11014 = vmax.f32 %v10758, 0.0
      %vm11015 = vcmask 523264
      %v11016 = vsel %vm11015, %v10759, -inf
      %v11017 = vsel %vm11015, %v10760, -inf
      %v11018 = vmax.f32 %v11016, %v11017
      %v11019 = vrot.slane %v11018, 4
      %v11020 = vmax.f32 %v11018, %v11019
      %v11021 = vrot.slane %v11020, 2
      %v11022 = vmax.f32 %v11020, %v11021
      %v11023 = vrot.slane %v11022, 1
      %v11024 = vmax.f32 %v11022, %v11023
      %v11025 = vsel %vm11015, %v10761, -inf
      %v11026 = vsel %vm11015, %v10762, -inf
      %v11027 = vmax.f32 %v11025, %v11026
      %v11028 = vrot.slane %v11027, 4
      %v11029 = vmax.f32 %v11027, %v11028
      %v11030 = vrot.slane %v11029, 2
      %v11031 = vmax.f32 %v11029, %v11030
      %v11032 = vrot.slane %v11031, 1
      %v11033 = vmax.f32 %v11031, %v11032
      %v11034 = vsel %vm11015, %v10763, -inf
      %v11035 = vsel %vm11015, %v10764, -inf
      %v11036 = vmax.f32 %v11034, %v11035
      %v11037 = vrot.slane %v11036, 4
      %v11038 = vmax.f32 %v11036, %v11037
      %v11039 = vrot.slane %v11038, 2
      %v11040 = vmax.f32 %v11038, %v11039
      %v11041 = vrot.slane %v11040, 1
      %v11042 = vmax.f32 %v11040, %v11041
      %v11043 = vsel %vm11015, %v10765, -inf
      %v11044 = vsel %vm11015, %v10766, -inf
      %v11045 = vmax.f32 %v11043, %v11044
      %v11046 = vrot.slane %v11045, 4
      %v11047 = vmax.f32 %v11045, %v11046
      %v11048 = vrot.slane %v11047, 2
      %v11049 = vmax.f32 %v11047, %v11048
      %v11050 = vrot.slane %v11049, 1
      %v11051 = vmax.f32 %v11049, %v11050
      %v11052 = vsel %vm11015, %v10767, -inf
      %v11053 = vsel %vm11015, %v10768, -inf
      %v11054 = vmax.f32 %v11052, %v11053
      %v11055 = vrot.slane %v11054, 4
      %v11056 = vmax.f32 %v11054, %v11055
      %v11057 = vrot.slane %v11056, 2
      %v11058 = vmax.f32 %v11056, %v11057
      %v11059 = vrot.slane %v11058, 1
      %v11060 = vmax.f32 %v11058, %v11059
      %v11061 = vsel %vm11015, %v10769, -inf
      %v11062 = vsel %vm11015, %v10770, -inf
      %v11063 = vmax.f32 %v11061, %v11062
      %v11064 = vrot.slane %v11063, 4
      %v11065 = vmax.f32 %v11063, %v11064
      %v11066 = vrot.slane %v11065, 2
      %v11067 = vmax.f32 %v11065, %v11066
      %v11068 = vrot.slane %v11067, 1
      %v11069 = vmax.f32 %v11067, %v11068
      %v11070 = vsel %vm11015, %v10771, -inf
      %v11071 = vsel %vm11015, %v10772, -inf
      %v11072 = vmax.f32 %v11070, %v11071
      %v11073 = vrot.slane %v11072, 4
      %v11074 = vmax.f32 %v11072, %v11073
      %v11075 = vrot.slane %v11074, 2
      %v11076 = vmax.f32 %v11074, %v11075
      %v11077 = vrot.slane %v11076, 1
      %v11078 = vmax.f32 %v11076, %v11077
      %v11079 = vsel %vm11015, %v10773, -inf
      %v11080 = vsel %vm11015, %v10774, -inf
      %v11081 = vmax.f32 %v11079, %v11080
      %v11082 = vrot.slane %v11081, 4
      %v11083 = vmax.f32 %v11081, %v11082
      %v11084 = vrot.slane %v11083, 2
      %v11085 = vmax.f32 %v11083, %v11084
      %v11086 = vrot.slane %v11085, 1
      %v11087 = vmax.f32 %v11085, %v11086
      %v11088 = vsel %vm11015, %v10775, -inf
      %v11089 = vsel %vm11015, %v10776, -inf
      %v11090 = vmax.f32 %v11088, %v11089
      %v11091 = vrot.slane %v11090, 4
      %v11092 = vmax.f32 %v11090, %v11091
      %v11093 = vrot.slane %v11092, 2
      %v11094 = vmax.f32 %v11092, %v11093
      %v11095 = vrot.slane %v11094, 1
      %v11096 = vmax.f32 %v11094, %v11095
      %v11097 = vsel %vm11015, %v10777, -inf
      %v11098 = vsel %vm11015, %v10778, -inf
      %v11099 = vmax.f32 %v11097, %v11098
      %v11100 = vrot.slane %v11099, 4
      %v11101 = vmax.f32 %v11099, %v11100
      %v11102 = vrot.slane %v11101, 2
      %v11103 = vmax.f32 %v11101, %v11102
      %v11104 = vrot.slane %v11103, 1
      %v11105 = vmax.f32 %v11103, %v11104
      %v11106 = vsel %vm11015, %v10779, -inf
      %v11107 = vsel %vm11015, %v10780, -inf
      %v11108 = vmax.f32 %v11106, %v11107
      %v11109 = vrot.slane %v11108, 4
      %v11110 = vmax.f32 %v11108, %v11109
      %v11111 = vrot.slane %v11110, 2
      %v11112 = vmax.f32 %v11110, %v11111
      %v11113 = vrot.slane %v11112, 1
      %v11114 = vmax.f32 %v11112, %v11113
      %v11115 = vsel %vm11015, %v10781, -inf
      %v11116 = vsel %vm11015, %v10782, -inf
      %v11117 = vmax.f32 %v11115, %v11116
      %v11118 = vrot.slane %v11117, 4
      %v11119 = vmax.f32 %v11117, %v11118
      %v11120 = vrot.slane %v11119, 2
      %v11121 = vmax.f32 %v11119, %v11120
      %v11122 = vrot.slane %v11121, 1
      %v11123 = vmax.f32 %v11121, %v11122
      %v11124 = vsel %vm11015, %v10783, -inf
      %v11125 = vsel %vm11015, %v10784, -inf
      %v11126 = vmax.f32 %v11124, %v11125
      %v11127 = vrot.slane %v11126, 4
      %v11128 = vmax.f32 %v11126, %v11127
      %v11129 = vrot.slane %v11128, 2
      %v11130 = vmax.f32 %v11128, %v11129
      %v11131 = vrot.slane %v11130, 1
      %v11132 = vmax.f32 %v11130, %v11131
      %v11133 = vsel %vm11015, %v10785, -inf
      %v11134 = vsel %vm11015, %v10786, -inf
      %v11135 = vmax.f32 %v11133, %v11134
      %v11136 = vrot.slane %v11135, 4
      %v11137 = vmax.f32 %v11135, %v11136
      %v11138 = vrot.slane %v11137, 2
      %v11139 = vmax.f32 %v11137, %v11138
      %v11140 = vrot.slane %v11139, 1
      %v11141 = vmax.f32 %v11139, %v11140
      %v11142 = vsel %vm11015, %v10787, -inf
      %v11143 = vsel %vm11015, %v10788, -inf
      %v11144 = vmax.f32 %v11142, %v11143
      %v11145 = vrot.slane %v11144, 4
      %v11146 = vmax.f32 %v11144, %v11145
      %v11147 = vrot.slane %v11146, 2
      %v11148 = vmax.f32 %v11146, %v11147
      %v11149 = vrot.slane %v11148, 1
      %v11150 = vmax.f32 %v11148, %v11149
      %v11151 = vsel %vm11015, %v10789, -inf
      %v11152 = vsel %vm11015, %v10790, -inf
      %v11153 = vmax.f32 %v11151, %v11152
      %v11154 = vrot.slane %v11153, 4
      %v11155 = vmax.f32 %v11153, %v11154
      %v11156 = vrot.slane %v11155, 2
      %v11157 = vmax.f32 %v11155, %v11156
      %v11158 = vrot.slane %v11157, 1
      %v11159 = vmax.f32 %v11157, %v11158
      %v11160 = vsel %vm11015, %v10791, -inf
      %v11161 = vsel %vm11015, %v10792, -inf
      %v11162 = vmax.f32 %v11160, %v11161
      %v11163 = vrot.slane %v11162, 4
      %v11164 = vmax.f32 %v11162, %v11163
      %v11165 = vrot.slane %v11164, 2
      %v11166 = vmax.f32 %v11164, %v11165
      %v11167 = vrot.slane %v11166, 1
      %v11168 = vmax.f32 %v11166, %v11167
      %v11169 = vsel %vm11015, %v10793, -inf
      %v11170 = vsel %vm11015, %v10794, -inf
      %v11171 = vmax.f32 %v11169, %v11170
      %v11172 = vrot.slane %v11171, 4
      %v11173 = vmax.f32 %v11171, %v11172
      %v11174 = vrot.slane %v11173, 2
      %v11175 = vmax.f32 %v11173, %v11174
      %v11176 = vrot.slane %v11175, 1
      %v11177 = vmax.f32 %v11175, %v11176
      %v11178 = vsel %vm11015, %v10795, -inf
      %v11179 = vsel %vm11015, %v10796, -inf
      %v11180 = vmax.f32 %v11178, %v11179
      %v11181 = vrot.slane %v11180, 4
      %v11182 = vmax.f32 %v11180, %v11181
      %v11183 = vrot.slane %v11182, 2
      %v11184 = vmax.f32 %v11182, %v11183
      %v11185 = vrot.slane %v11184, 1
      %v11186 = vmax.f32 %v11184, %v11185
      %v11187 = vsel %vm11015, %v10797, -inf
      %v11188 = vsel %vm11015, %v10798, -inf
      %v11189 = vmax.f32 %v11187, %v11188
      %v11190 = vrot.slane %v11189, 4
      %v11191 = vmax.f32 %v11189, %v11190
      %v11192 = vrot.slane %v11191, 2
      %v11193 = vmax.f32 %v11191, %v11192
      %v11194 = vrot.slane %v11193, 1
      %v11195 = vmax.f32 %v11193, %v11194
      %v11196 = vsel %vm11015, %v10799, -inf
      %v11197 = vsel %vm11015, %v10800, -inf
      %v11198 = vmax.f32 %v11196, %v11197
      %v11199 = vrot.slane %v11198, 4
      %v11200 = vmax.f32 %v11198, %v11199
      %v11201 = vrot.slane %v11200, 2
      %v11202 = vmax.f32 %v11200, %v11201
      %v11203 = vrot.slane %v11202, 1
      %v11204 = vmax.f32 %v11202, %v11203
      %v11205 = vsel %vm11015, %v10801, -inf
      %v11206 = vsel %vm11015, %v10802, -inf
      %v11207 = vmax.f32 %v11205, %v11206
      %v11208 = vrot.slane %v11207, 4
      %v11209 = vmax.f32 %v11207, %v11208
      %v11210 = vrot.slane %v11209, 2
      %v11211 = vmax.f32 %v11209, %v11210
      %v11212 = vrot.slane %v11211, 1
      %v11213 = vmax.f32 %v11211, %v11212
      %v11214 = vsel %vm11015, %v10803, -inf
      %v11215 = vsel %vm11015, %v10804, -inf
      %v11216 = vmax.f32 %v11214, %v11215
      %v11217 = vrot.slane %v11216, 4
      %v11218 = vmax.f32 %v11216, %v11217
      %v11219 = vrot.slane %v11218, 2
      %v11220 = vmax.f32 %v11218, %v11219
      %v11221 = vrot.slane %v11220, 1
      %v11222 = vmax.f32 %v11220, %v11221
      %v11223 = vsel %vm11015, %v10805, -inf
      %v11224 = vsel %vm11015, %v10806, -inf
      %v11225 = vmax.f32 %v11223, %v11224
      %v11226 = vrot.slane %v11225, 4
      %v11227 = vmax.f32 %v11225, %v11226
      %v11228 = vrot.slane %v11227, 2
      %v11229 = vmax.f32 %v11227, %v11228
      %v11230 = vrot.slane %v11229, 1
      %v11231 = vmax.f32 %v11229, %v11230
      %v11232 = vsel %vm11015, %v10807, -inf
      %v11233 = vsel %vm11015, %v10808, -inf
      %v11234 = vmax.f32 %v11232, %v11233
      %v11235 = vrot.slane %v11234, 4
      %v11236 = vmax.f32 %v11234, %v11235
      %v11237 = vrot.slane %v11236, 2
      %v11238 = vmax.f32 %v11236, %v11237
      %v11239 = vrot.slane %v11238, 1
      %v11240 = vmax.f32 %v11238, %v11239
      %v11241 = vsel %vm11015, %v10809, -inf
      %v11242 = vsel %vm11015, %v10810, -inf
      %v11243 = vmax.f32 %v11241, %v11242
      %v11244 = vrot.slane %v11243, 4
      %v11245 = vmax.f32 %v11243, %v11244
      %v11246 = vrot.slane %v11245, 2
      %v11247 = vmax.f32 %v11245, %v11246
      %v11248 = vrot.slane %v11247, 1
      %v11249 = vmax.f32 %v11247, %v11248
      %v11250 = vsel %vm11015, %v10811, -inf
      %v11251 = vsel %vm11015, %v10812, -inf
      %v11252 = vmax.f32 %v11250, %v11251
      %v11253 = vrot.slane %v11252, 4
      %v11254 = vmax.f32 %v11252, %v11253
      %v11255 = vrot.slane %v11254, 2
      %v11256 = vmax.f32 %v11254, %v11255
      %v11257 = vrot.slane %v11256, 1
      %v11258 = vmax.f32 %v11256, %v11257
      %v11259 = vsel %vm11015, %v10813, -inf
      %v11260 = vsel %vm11015, %v10814, -inf
      %v11261 = vmax.f32 %v11259, %v11260
      %v11262 = vrot.slane %v11261, 4
      %v11263 = vmax.f32 %v11261, %v11262
      %v11264 = vrot.slane %v11263, 2
      %v11265 = vmax.f32 %v11263, %v11264
      %v11266 = vrot.slane %v11265, 1
      %v11267 = vmax.f32 %v11265, %v11266
      %v11268 = vsel %vm11015, %v10815, -inf
      %v11269 = vsel %vm11015, %v10816, -inf
      %v11270 = vmax.f32 %v11268, %v11269
      %v11271 = vrot.slane %v11270, 4
      %v11272 = vmax.f32 %v11270, %v11271
      %v11273 = vrot.slane %v11272, 2
      %v11274 = vmax.f32 %v11272, %v11273
      %v11275 = vrot.slane %v11274, 1
      %v11276 = vmax.f32 %v11274, %v11275
      %v11277 = vsel %vm11015, %v10817, -inf
      %v11278 = vsel %vm11015, %v10818, -inf
      %v11279 = vmax.f32 %v11277, %v11278
      %v11280 = vrot.slane %v11279, 4
      %v11281 = vmax.f32 %v11279, %v11280
      %v11282 = vrot.slane %v11281, 2
      %v11283 = vmax.f32 %v11281, %v11282
      %v11284 = vrot.slane %v11283, 1
      %v11285 = vmax.f32 %v11283, %v11284
      %v11286 = vsel %vm11015, %v10819, -inf
      %v11287 = vsel %vm11015, %v10820, -inf
      %v11288 = vmax.f32 %v11286, %v11287
      %v11289 = vrot.slane %v11288, 4
      %v11290 = vmax.f32 %v11288, %v11289
      %v11291 = vrot.slane %v11290, 2
      %v11292 = vmax.f32 %v11290, %v11291
      %v11293 = vrot.slane %v11292, 1
      %v11294 = vmax.f32 %v11292, %v11293
      %v11295 = vsel %vm11015, %v10821, -inf
      %v11296 = vsel %vm11015, %v10822, -inf
      %v11297 = vmax.f32 %v11295, %v11296
      %v11298 = vrot.slane %v11297, 4
      %v11299 = vmax.f32 %v11297, %v11298
      %v11300 = vrot.slane %v11299, 2
      %v11301 = vmax.f32 %v11299, %v11300
      %v11302 = vrot.slane %v11301, 1
      %v11303 = vmax.f32 %v11301, %v11302
      %v11304 = vsel %vm11015, %v10823, -inf
      %v11305 = vsel %vm11015, %v10824, -inf
      %v11306 = vmax.f32 %v11304, %v11305
      %v11307 = vrot.slane %v11306, 4
      %v11308 = vmax.f32 %v11306, %v11307
      %v11309 = vrot.slane %v11308, 2
      %v11310 = vmax.f32 %v11308, %v11309
      %v11311 = vrot.slane %v11310, 1
      %v11312 = vmax.f32 %v11310, %v11311
      %v11313 = vsel %vm11015, %v10825, -inf
      %v11314 = vsel %vm11015, %v10826, -inf
      %v11315 = vmax.f32 %v11313, %v11314
      %v11316 = vrot.slane %v11315, 4
      %v11317 = vmax.f32 %v11315, %v11316
      %v11318 = vrot.slane %v11317, 2
      %v11319 = vmax.f32 %v11317, %v11318
      %v11320 = vrot.slane %v11319, 1
      %v11321 = vmax.f32 %v11319, %v11320
      %v11322 = vsel %vm11015, %v10827, -inf
      %v11323 = vsel %vm11015, %v10828, -inf
      %v11324 = vmax.f32 %v11322, %v11323
      %v11325 = vrot.slane %v11324, 4
      %v11326 = vmax.f32 %v11324, %v11325
      %v11327 = vrot.slane %v11326, 2
      %v11328 = vmax.f32 %v11326, %v11327
      %v11329 = vrot.slane %v11328, 1
      %v11330 = vmax.f32 %v11328, %v11329
      %v11331 = vsel %vm11015, %v10829, -inf
      %v11332 = vsel %vm11015, %v10830, -inf
      %v11333 = vmax.f32 %v11331, %v11332
      %v11334 = vrot.slane %v11333, 4
      %v11335 = vmax.f32 %v11333, %v11334
      %v11336 = vrot.slane %v11335, 2
      %v11337 = vmax.f32 %v11335, %v11336
      %v11338 = vrot.slane %v11337, 1
      %v11339 = vmax.f32 %v11337, %v11338
      %v11340 = vsel %vm11015, %v10831, -inf
      %v11341 = vsel %vm11015, %v10832, -inf
      %v11342 = vmax.f32 %v11340, %v11341
      %v11343 = vrot.slane %v11342, 4
      %v11344 = vmax.f32 %v11342, %v11343
      %v11345 = vrot.slane %v11344, 2
      %v11346 = vmax.f32 %v11344, %v11345
      %v11347 = vrot.slane %v11346, 1
      %v11348 = vmax.f32 %v11346, %v11347
      %v11349 = vsel %vm11015, %v10833, -inf
      %v11350 = vsel %vm11015, %v10834, -inf
      %v11351 = vmax.f32 %v11349, %v11350
      %v11352 = vrot.slane %v11351, 4
      %v11353 = vmax.f32 %v11351, %v11352
      %v11354 = vrot.slane %v11353, 2
      %v11355 = vmax.f32 %v11353, %v11354
      %v11356 = vrot.slane %v11355, 1
      %v11357 = vmax.f32 %v11355, %v11356
      %v11358 = vsel %vm11015, %v10835, -inf
      %v11359 = vsel %vm11015, %v10836, -inf
      %v11360 = vmax.f32 %v11358, %v11359
      %v11361 = vrot.slane %v11360, 4
      %v11362 = vmax.f32 %v11360, %v11361
      %v11363 = vrot.slane %v11362, 2
      %v11364 = vmax.f32 %v11362, %v11363
      %v11365 = vrot.slane %v11364, 1
      %v11366 = vmax.f32 %v11364, %v11365
      %v11367 = vsel %vm11015, %v10837, -inf
      %v11368 = vsel %vm11015, %v10838, -inf
      %v11369 = vmax.f32 %v11367, %v11368
      %v11370 = vrot.slane %v11369, 4
      %v11371 = vmax.f32 %v11369, %v11370
      %v11372 = vrot.slane %v11371, 2
      %v11373 = vmax.f32 %v11371, %v11372
      %v11374 = vrot.slane %v11373, 1
      %v11375 = vmax.f32 %v11373, %v11374
      %v11376 = vsel %vm11015, %v10839, -inf
      %v11377 = vsel %vm11015, %v10840, -inf
      %v11378 = vmax.f32 %v11376, %v11377
      %v11379 = vrot.slane %v11378, 4
      %v11380 = vmax.f32 %v11378, %v11379
      %v11381 = vrot.slane %v11380, 2
      %v11382 = vmax.f32 %v11380, %v11381
      %v11383 = vrot.slane %v11382, 1
      %v11384 = vmax.f32 %v11382, %v11383
      %v11385 = vsel %vm11015, %v10841, -inf
      %v11386 = vsel %vm11015, %v10842, -inf
      %v11387 = vmax.f32 %v11385, %v11386
      %v11388 = vrot.slane %v11387, 4
      %v11389 = vmax.f32 %v11387, %v11388
      %v11390 = vrot.slane %v11389, 2
      %v11391 = vmax.f32 %v11389, %v11390
      %v11392 = vrot.slane %v11391, 1
      %v11393 = vmax.f32 %v11391, %v11392
      %v11394 = vsel %vm11015, %v10843, -inf
      %v11395 = vsel %vm11015, %v10844, -inf
      %v11396 = vmax.f32 %v11394, %v11395
      %v11397 = vrot.slane %v11396, 4
      %v11398 = vmax.f32 %v11396, %v11397
      %v11399 = vrot.slane %v11398, 2
      %v11400 = vmax.f32 %v11398, %v11399
      %v11401 = vrot.slane %v11400, 1
      %v11402 = vmax.f32 %v11400, %v11401
      %v11403 = vsel %vm11015, %v10845, -inf
      %v11404 = vsel %vm11015, %v10846, -inf
      %v11405 = vmax.f32 %v11403, %v11404
      %v11406 = vrot.slane %v11405, 4
      %v11407 = vmax.f32 %v11405, %v11406
      %v11408 = vrot.slane %v11407, 2
      %v11409 = vmax.f32 %v11407, %v11408
      %v11410 = vrot.slane %v11409, 1
      %v11411 = vmax.f32 %v11409, %v11410
      %v11412 = vsel %vm11015, %v10847, -inf
      %v11413 = vsel %vm11015, %v10848, -inf
      %v11414 = vmax.f32 %v11412, %v11413
      %v11415 = vrot.slane %v11414, 4
      %v11416 = vmax.f32 %v11414, %v11415
      %v11417 = vrot.slane %v11416, 2
      %v11418 = vmax.f32 %v11416, %v11417
      %v11419 = vrot.slane %v11418, 1
      %v11420 = vmax.f32 %v11418, %v11419
      %v11421 = vsel %vm11015, %v10849, -inf
      %v11422 = vsel %vm11015, %v10850, -inf
      %v11423 = vmax.f32 %v11421, %v11422
      %v11424 = vrot.slane %v11423, 4
      %v11425 = vmax.f32 %v11423, %v11424
      %v11426 = vrot.slane %v11425, 2
      %v11427 = vmax.f32 %v11425, %v11426
      %v11428 = vrot.slane %v11427, 1
      %v11429 = vmax.f32 %v11427, %v11428
      %v11430 = vsel %vm11015, %v10851, -inf
      %v11431 = vsel %vm11015, %v10852, -inf
      %v11432 = vmax.f32 %v11430, %v11431
      %v11433 = vrot.slane %v11432, 4
      %v11434 = vmax.f32 %v11432, %v11433
      %v11435 = vrot.slane %v11434, 2
      %v11436 = vmax.f32 %v11434, %v11435
      %v11437 = vrot.slane %v11436, 1
      %v11438 = vmax.f32 %v11436, %v11437
      %v11439 = vsel %vm11015, %v10853, -inf
      %v11440 = vsel %vm11015, %v10854, -inf
      %v11441 = vmax.f32 %v11439, %v11440
      %v11442 = vrot.slane %v11441, 4
      %v11443 = vmax.f32 %v11441, %v11442
      %v11444 = vrot.slane %v11443, 2
      %v11445 = vmax.f32 %v11443, %v11444
      %v11446 = vrot.slane %v11445, 1
      %v11447 = vmax.f32 %v11445, %v11446
      %v11448 = vsel %vm11015, %v10855, -inf
      %v11449 = vsel %vm11015, %v10856, -inf
      %v11450 = vmax.f32 %v11448, %v11449
      %v11451 = vrot.slane %v11450, 4
      %v11452 = vmax.f32 %v11450, %v11451
      %v11453 = vrot.slane %v11452, 2
      %v11454 = vmax.f32 %v11452, %v11453
      %v11455 = vrot.slane %v11454, 1
      %v11456 = vmax.f32 %v11454, %v11455
      %v11457 = vsel %vm11015, %v10857, -inf
      %v11458 = vsel %vm11015, %v10858, -inf
      %v11459 = vmax.f32 %v11457, %v11458
      %v11460 = vrot.slane %v11459, 4
      %v11461 = vmax.f32 %v11459, %v11460
      %v11462 = vrot.slane %v11461, 2
      %v11463 = vmax.f32 %v11461, %v11462
      %v11464 = vrot.slane %v11463, 1
      %v11465 = vmax.f32 %v11463, %v11464
      %v11466 = vsel %vm11015, %v10859, -inf
      %v11467 = vsel %vm11015, %v10860, -inf
      %v11468 = vmax.f32 %v11466, %v11467
      %v11469 = vrot.slane %v11468, 4
      %v11470 = vmax.f32 %v11468, %v11469
      %v11471 = vrot.slane %v11470, 2
      %v11472 = vmax.f32 %v11470, %v11471
      %v11473 = vrot.slane %v11472, 1
      %v11474 = vmax.f32 %v11472, %v11473
      %v11475 = vsel %vm11015, %v10861, -inf
      %v11476 = vsel %vm11015, %v10862, -inf
      %v11477 = vmax.f32 %v11475, %v11476
      %v11478 = vrot.slane %v11477, 4
      %v11479 = vmax.f32 %v11477, %v11478
      %v11480 = vrot.slane %v11479, 2
      %v11481 = vmax.f32 %v11479, %v11480
      %v11482 = vrot.slane %v11481, 1
      %v11483 = vmax.f32 %v11481, %v11482
      %v11484 = vsel %vm11015, %v10863, -inf
      %v11485 = vsel %vm11015, %v10864, -inf
      %v11486 = vmax.f32 %v11484, %v11485
      %v11487 = vrot.slane %v11486, 4
      %v11488 = vmax.f32 %v11486, %v11487
      %v11489 = vrot.slane %v11488, 2
      %v11490 = vmax.f32 %v11488, %v11489
      %v11491 = vrot.slane %v11490, 1
      %v11492 = vmax.f32 %v11490, %v11491
      %v11493 = vsel %vm11015, %v10865, -inf
      %v11494 = vsel %vm11015, %v10866, -inf
      %v11495 = vmax.f32 %v11493, %v11494
      %v11496 = vrot.slane %v11495, 4
      %v11497 = vmax.f32 %v11495, %v11496
      %v11498 = vrot.slane %v11497, 2
      %v11499 = vmax.f32 %v11497, %v11498
      %v11500 = vrot.slane %v11499, 1
      %v11501 = vmax.f32 %v11499, %v11500
      %v11502 = vsel %vm11015, %v10867, -inf
      %v11503 = vsel %vm11015, %v10868, -inf
      %v11504 = vmax.f32 %v11502, %v11503
      %v11505 = vrot.slane %v11504, 4
      %v11506 = vmax.f32 %v11504, %v11505
      %v11507 = vrot.slane %v11506, 2
      %v11508 = vmax.f32 %v11506, %v11507
      %v11509 = vrot.slane %v11508, 1
      %v11510 = vmax.f32 %v11508, %v11509
      %v11511 = vsel %vm11015, %v10869, -inf
      %v11512 = vsel %vm11015, %v10870, -inf
      %v11513 = vmax.f32 %v11511, %v11512
      %v11514 = vrot.slane %v11513, 4
      %v11515 = vmax.f32 %v11513, %v11514
      %v11516 = vrot.slane %v11515, 2
      %v11517 = vmax.f32 %v11515, %v11516
      %v11518 = vrot.slane %v11517, 1
      %v11519 = vmax.f32 %v11517, %v11518
      %v11520 = vsel %vm11015, %v10871, -inf
      %v11521 = vsel %vm11015, %v10872, -inf
      %v11522 = vmax.f32 %v11520, %v11521
      %v11523 = vrot.slane %v11522, 4
      %v11524 = vmax.f32 %v11522, %v11523
      %v11525 = vrot.slane %v11524, 2
      %v11526 = vmax.f32 %v11524, %v11525
      %v11527 = vrot.slane %v11526, 1
      %v11528 = vmax.f32 %v11526, %v11527
      %v11529 = vsel %vm11015, %v10873, -inf
      %v11530 = vsel %vm11015, %v10874, -inf
      %v11531 = vmax.f32 %v11529, %v11530
      %v11532 = vrot.slane %v11531, 4
      %v11533 = vmax.f32 %v11531, %v11532
      %v11534 = vrot.slane %v11533, 2
      %v11535 = vmax.f32 %v11533, %v11534
      %v11536 = vrot.slane %v11535, 1
      %v11537 = vmax.f32 %v11535, %v11536
      %v11538 = vsel %vm11015, %v10875, -inf
      %v11539 = vsel %vm11015, %v10876, -inf
      %v11540 = vmax.f32 %v11538, %v11539
      %v11541 = vrot.slane %v11540, 4
      %v11542 = vmax.f32 %v11540, %v11541
      %v11543 = vrot.slane %v11542, 2
      %v11544 = vmax.f32 %v11542, %v11543
      %v11545 = vrot.slane %v11544, 1
      %v11546 = vmax.f32 %v11544, %v11545
      %v11547 = vsel %vm11015, %v10877, -inf
      %v11548 = vsel %vm11015, %v10878, -inf
      %v11549 = vmax.f32 %v11547, %v11548
      %v11550 = vrot.slane %v11549, 4
      %v11551 = vmax.f32 %v11549, %v11550
      %v11552 = vrot.slane %v11551, 2
      %v11553 = vmax.f32 %v11551, %v11552
      %v11554 = vrot.slane %v11553, 1
      %v11555 = vmax.f32 %v11553, %v11554
      %v11556 = vsel %vm11015, %v10879, -inf
      %v11557 = vsel %vm11015, %v10880, -inf
      %v11558 = vmax.f32 %v11556, %v11557
      %v11559 = vrot.slane %v11558, 4
      %v11560 = vmax.f32 %v11558, %v11559
      %v11561 = vrot.slane %v11560, 2
      %v11562 = vmax.f32 %v11560, %v11561
      %v11563 = vrot.slane %v11562, 1
      %v11564 = vmax.f32 %v11562, %v11563
      %v11565 = vsel %vm11015, %v10881, -inf
      %v11566 = vsel %vm11015, %v10882, -inf
      %v11567 = vmax.f32 %v11565, %v11566
      %v11568 = vrot.slane %v11567, 4
      %v11569 = vmax.f32 %v11567, %v11568
      %v11570 = vrot.slane %v11569, 2
      %v11571 = vmax.f32 %v11569, %v11570
      %v11572 = vrot.slane %v11571, 1
      %v11573 = vmax.f32 %v11571, %v11572
      %v11574 = vsel %vm11015, %v10883, -inf
      %v11575 = vsel %vm11015, %v10884, -inf
      %v11576 = vmax.f32 %v11574, %v11575
      %v11577 = vrot.slane %v11576, 4
      %v11578 = vmax.f32 %v11576, %v11577
      %v11579 = vrot.slane %v11578, 2
      %v11580 = vmax.f32 %v11578, %v11579
      %v11581 = vrot.slane %v11580, 1
      %v11582 = vmax.f32 %v11580, %v11581
      %v11583 = vsel %vm11015, %v10885, -inf
      %v11584 = vsel %vm11015, %v10886, -inf
      %v11585 = vmax.f32 %v11583, %v11584
      %v11586 = vrot.slane %v11585, 4
      %v11587 = vmax.f32 %v11585, %v11586
      %v11588 = vrot.slane %v11587, 2
      %v11589 = vmax.f32 %v11587, %v11588
      %v11590 = vrot.slane %v11589, 1
      %v11591 = vmax.f32 %v11589, %v11590
      %v11592 = vsel %vm11015, %v10887, -inf
      %v11593 = vsel %vm11015, %v10888, -inf
      %v11594 = vmax.f32 %v11592, %v11593
      %v11595 = vrot.slane %v11594, 4
      %v11596 = vmax.f32 %v11594, %v11595
      %v11597 = vrot.slane %v11596, 2
      %v11598 = vmax.f32 %v11596, %v11597
      %v11599 = vrot.slane %v11598, 1
      %v11600 = vmax.f32 %v11598, %v11599
      %v11601 = vsel %vm11015, %v10889, -inf
      %v11602 = vsel %vm11015, %v10890, -inf
      %v11603 = vmax.f32 %v11601, %v11602
      %v11604 = vrot.slane %v11603, 4
      %v11605 = vmax.f32 %v11603, %v11604
      %v11606 = vrot.slane %v11605, 2
      %v11607 = vmax.f32 %v11605, %v11606
      %v11608 = vrot.slane %v11607, 1
      %v11609 = vmax.f32 %v11607, %v11608
      %v11610 = vsel %vm11015, %v10891, -inf
      %v11611 = vsel %vm11015, %v10892, -inf
      %v11612 = vmax.f32 %v11610, %v11611
      %v11613 = vrot.slane %v11612, 4
      %v11614 = vmax.f32 %v11612, %v11613
      %v11615 = vrot.slane %v11614, 2
      %v11616 = vmax.f32 %v11614, %v11615
      %v11617 = vrot.slane %v11616, 1
      %v11618 = vmax.f32 %v11616, %v11617
      %v11619 = vsel %vm11015, %v10893, -inf
      %v11620 = vsel %vm11015, %v10894, -inf
      %v11621 = vmax.f32 %v11619, %v11620
      %v11622 = vrot.slane %v11621, 4
      %v11623 = vmax.f32 %v11621, %v11622
      %v11624 = vrot.slane %v11623, 2
      %v11625 = vmax.f32 %v11623, %v11624
      %v11626 = vrot.slane %v11625, 1
      %v11627 = vmax.f32 %v11625, %v11626
      %v11628 = vsel %vm11015, %v10895, -inf
      %v11629 = vsel %vm11015, %v10896, -inf
      %v11630 = vmax.f32 %v11628, %v11629
      %v11631 = vrot.slane %v11630, 4
      %v11632 = vmax.f32 %v11630, %v11631
      %v11633 = vrot.slane %v11632, 2
      %v11634 = vmax.f32 %v11632, %v11633
      %v11635 = vrot.slane %v11634, 1
      %v11636 = vmax.f32 %v11634, %v11635
      %v11637 = vsel %vm11015, %v10897, -inf
      %v11638 = vsel %vm11015, %v10898, -inf
      %v11639 = vmax.f32 %v11637, %v11638
      %v11640 = vrot.slane %v11639, 4
      %v11641 = vmax.f32 %v11639, %v11640
      %v11642 = vrot.slane %v11641, 2
      %v11643 = vmax.f32 %v11641, %v11642
      %v11644 = vrot.slane %v11643, 1
      %v11645 = vmax.f32 %v11643, %v11644
      %v11646 = vsel %vm11015, %v10899, -inf
      %v11647 = vsel %vm11015, %v10900, -inf
      %v11648 = vmax.f32 %v11646, %v11647
      %v11649 = vrot.slane %v11648, 4
      %v11650 = vmax.f32 %v11648, %v11649
      %v11651 = vrot.slane %v11650, 2
      %v11652 = vmax.f32 %v11650, %v11651
      %v11653 = vrot.slane %v11652, 1
      %v11654 = vmax.f32 %v11652, %v11653
      %v11655 = vsel %vm11015, %v10901, -inf
      %v11656 = vsel %vm11015, %v10902, -inf
      %v11657 = vmax.f32 %v11655, %v11656
      %v11658 = vrot.slane %v11657, 4
      %v11659 = vmax.f32 %v11657, %v11658
      %v11660 = vrot.slane %v11659, 2
      %v11661 = vmax.f32 %v11659, %v11660
      %v11662 = vrot.slane %v11661, 1
      %v11663 = vmax.f32 %v11661, %v11662
      %v11664 = vsel %vm11015, %v10903, -inf
      %v11665 = vsel %vm11015, %v10904, -inf
      %v11666 = vmax.f32 %v11664, %v11665
      %v11667 = vrot.slane %v11666, 4
      %v11668 = vmax.f32 %v11666, %v11667
      %v11669 = vrot.slane %v11668, 2
      %v11670 = vmax.f32 %v11668, %v11669
      %v11671 = vrot.slane %v11670, 1
      %v11672 = vmax.f32 %v11670, %v11671
      %v11673 = vsel %vm11015, %v10905, -inf
      %v11674 = vsel %vm11015, %v10906, -inf
      %v11675 = vmax.f32 %v11673, %v11674
      %v11676 = vrot.slane %v11675, 4
      %v11677 = vmax.f32 %v11675, %v11676
      %v11678 = vrot.slane %v11677, 2
      %v11679 = vmax.f32 %v11677, %v11678
      %v11680 = vrot.slane %v11679, 1
      %v11681 = vmax.f32 %v11679, %v11680
      %v11682 = vsel %vm11015, %v10907, -inf
      %v11683 = vsel %vm11015, %v10908, -inf
      %v11684 = vmax.f32 %v11682, %v11683
      %v11685 = vrot.slane %v11684, 4
      %v11686 = vmax.f32 %v11684, %v11685
      %v11687 = vrot.slane %v11686, 2
      %v11688 = vmax.f32 %v11686, %v11687
      %v11689 = vrot.slane %v11688, 1
      %v11690 = vmax.f32 %v11688, %v11689
      %v11691 = vsel %vm11015, %v10909, -inf
      %v11692 = vsel %vm11015, %v10910, -inf
      %v11693 = vmax.f32 %v11691, %v11692
      %v11694 = vrot.slane %v11693, 4
      %v11695 = vmax.f32 %v11693, %v11694
      %v11696 = vrot.slane %v11695, 2
      %v11697 = vmax.f32 %v11695, %v11696
      %v11698 = vrot.slane %v11697, 1
      %v11699 = vmax.f32 %v11697, %v11698
      %v11700 = vsel %vm11015, %v10911, -inf
      %v11701 = vsel %vm11015, %v10912, -inf
      %v11702 = vmax.f32 %v11700, %v11701
      %v11703 = vrot.slane %v11702, 4
      %v11704 = vmax.f32 %v11702, %v11703
      %v11705 = vrot.slane %v11704, 2
      %v11706 = vmax.f32 %v11704, %v11705
      %v11707 = vrot.slane %v11706, 1
      %v11708 = vmax.f32 %v11706, %v11707
      %v11709 = vsel %vm11015, %v10913, -inf
      %v11710 = vsel %vm11015, %v10914, -inf
      %v11711 = vmax.f32 %v11709, %v11710
      %v11712 = vrot.slane %v11711, 4
      %v11713 = vmax.f32 %v11711, %v11712
      %v11714 = vrot.slane %v11713, 2
      %v11715 = vmax.f32 %v11713, %v11714
      %v11716 = vrot.slane %v11715, 1
      %v11717 = vmax.f32 %v11715, %v11716
      %v11718 = vsel %vm11015, %v10915, -inf
      %v11719 = vsel %vm11015, %v10916, -inf
      %v11720 = vmax.f32 %v11718, %v11719
      %v11721 = vrot.slane %v11720, 4
      %v11722 = vmax.f32 %v11720, %v11721
      %v11723 = vrot.slane %v11722, 2
      %v11724 = vmax.f32 %v11722, %v11723
      %v11725 = vrot.slane %v11724, 1
      %v11726 = vmax.f32 %v11724, %v11725
      %v11727 = vsel %vm11015, %v10917, -inf
      %v11728 = vsel %vm11015, %v10918, -inf
      %v11729 = vmax.f32 %v11727, %v11728
      %v11730 = vrot.slane %v11729, 4
      %v11731 = vmax.f32 %v11729, %v11730
      %v11732 = vrot.slane %v11731, 2
      %v11733 = vmax.f32 %v11731, %v11732
      %v11734 = vrot.slane %v11733, 1
      %v11735 = vmax.f32 %v11733, %v11734
      %v11736 = vsel %vm11015, %v10919, -inf
      %v11737 = vsel %vm11015, %v10920, -inf
      %v11738 = vmax.f32 %v11736, %v11737
      %v11739 = vrot.slane %v11738, 4
      %v11740 = vmax.f32 %v11738, %v11739
      %v11741 = vrot.slane %v11740, 2
      %v11742 = vmax.f32 %v11740, %v11741
      %v11743 = vrot.slane %v11742, 1
      %v11744 = vmax.f32 %v11742, %v11743
      %v11745 = vsel %vm11015, %v10921, -inf
      %v11746 = vsel %vm11015, %v10922, -inf
      %v11747 = vmax.f32 %v11745, %v11746
      %v11748 = vrot.slane %v11747, 4
      %v11749 = vmax.f32 %v11747, %v11748
      %v11750 = vrot.slane %v11749, 2
      %v11751 = vmax.f32 %v11749, %v11750
      %v11752 = vrot.slane %v11751, 1
      %v11753 = vmax.f32 %v11751, %v11752
      %v11754 = vsel %vm11015, %v10923, -inf
      %v11755 = vsel %vm11015, %v10924, -inf
      %v11756 = vmax.f32 %v11754, %v11755
      %v11757 = vrot.slane %v11756, 4
      %v11758 = vmax.f32 %v11756, %v11757
      %v11759 = vrot.slane %v11758, 2
      %v11760 = vmax.f32 %v11758, %v11759
      %v11761 = vrot.slane %v11760, 1
      %v11762 = vmax.f32 %v11760, %v11761
      %v11763 = vsel %vm11015, %v10925, -inf
      %v11764 = vsel %vm11015, %v10926, -inf
      %v11765 = vmax.f32 %v11763, %v11764
      %v11766 = vrot.slane %v11765, 4
      %v11767 = vmax.f32 %v11765, %v11766
      %v11768 = vrot.slane %v11767, 2
      %v11769 = vmax.f32 %v11767, %v11768
      %v11770 = vrot.slane %v11769, 1
      %v11771 = vmax.f32 %v11769, %v11770
      %v11772 = vsel %vm11015, %v10927, -inf
      %v11773 = vsel %vm11015, %v10928, -inf
      %v11774 = vmax.f32 %v11772, %v11773
      %v11775 = vrot.slane %v11774, 4
      %v11776 = vmax.f32 %v11774, %v11775
      %v11777 = vrot.slane %v11776, 2
      %v11778 = vmax.f32 %v11776, %v11777
      %v11779 = vrot.slane %v11778, 1
      %v11780 = vmax.f32 %v11778, %v11779
      %v11781 = vsel %vm11015, %v10929, -inf
      %v11782 = vsel %vm11015, %v10930, -inf
      %v11783 = vmax.f32 %v11781, %v11782
      %v11784 = vrot.slane %v11783, 4
      %v11785 = vmax.f32 %v11783, %v11784
      %v11786 = vrot.slane %v11785, 2
      %v11787 = vmax.f32 %v11785, %v11786
      %v11788 = vrot.slane %v11787, 1
      %v11789 = vmax.f32 %v11787, %v11788
      %v11790 = vsel %vm11015, %v10931, -inf
      %v11791 = vsel %vm11015, %v10932, -inf
      %v11792 = vmax.f32 %v11790, %v11791
      %v11793 = vrot.slane %v11792, 4
      %v11794 = vmax.f32 %v11792, %v11793
      %v11795 = vrot.slane %v11794, 2
      %v11796 = vmax.f32 %v11794, %v11795
      %v11797 = vrot.slane %v11796, 1
      %v11798 = vmax.f32 %v11796, %v11797
      %v11799 = vsel %vm11015, %v10933, -inf
      %v11800 = vsel %vm11015, %v10934, -inf
      %v11801 = vmax.f32 %v11799, %v11800
      %v11802 = vrot.slane %v11801, 4
      %v11803 = vmax.f32 %v11801, %v11802
      %v11804 = vrot.slane %v11803, 2
      %v11805 = vmax.f32 %v11803, %v11804
      %v11806 = vrot.slane %v11805, 1
      %v11807 = vmax.f32 %v11805, %v11806
      %v11808 = vsel %vm11015, %v10935, -inf
      %v11809 = vsel %vm11015, %v10936, -inf
      %v11810 = vmax.f32 %v11808, %v11809
      %v11811 = vrot.slane %v11810, 4
      %v11812 = vmax.f32 %v11810, %v11811
      %v11813 = vrot.slane %v11812, 2
      %v11814 = vmax.f32 %v11812, %v11813
      %v11815 = vrot.slane %v11814, 1
      %v11816 = vmax.f32 %v11814, %v11815
      %v11817 = vsel %vm11015, %v10937, -inf
      %v11818 = vsel %vm11015, %v10938, -inf
      %v11819 = vmax.f32 %v11817, %v11818
      %v11820 = vrot.slane %v11819, 4
      %v11821 = vmax.f32 %v11819, %v11820
      %v11822 = vrot.slane %v11821, 2
      %v11823 = vmax.f32 %v11821, %v11822
      %v11824 = vrot.slane %v11823, 1
      %v11825 = vmax.f32 %v11823, %v11824
      %v11826 = vsel %vm11015, %v10939, -inf
      %v11827 = vsel %vm11015, %v10940, -inf
      %v11828 = vmax.f32 %v11826, %v11827
      %v11829 = vrot.slane %v11828, 4
      %v11830 = vmax.f32 %v11828, %v11829
      %v11831 = vrot.slane %v11830, 2
      %v11832 = vmax.f32 %v11830, %v11831
      %v11833 = vrot.slane %v11832, 1
      %v11834 = vmax.f32 %v11832, %v11833
      %v11835 = vsel %vm11015, %v10941, -inf
      %v11836 = vsel %vm11015, %v10942, -inf
      %v11837 = vmax.f32 %v11835, %v11836
      %v11838 = vrot.slane %v11837, 4
      %v11839 = vmax.f32 %v11837, %v11838
      %v11840 = vrot.slane %v11839, 2
      %v11841 = vmax.f32 %v11839, %v11840
      %v11842 = vrot.slane %v11841, 1
      %v11843 = vmax.f32 %v11841, %v11842
      %v11844 = vsel %vm11015, %v10943, -inf
      %v11845 = vsel %vm11015, %v10944, -inf
      %v11846 = vmax.f32 %v11844, %v11845
      %v11847 = vrot.slane %v11846, 4
      %v11848 = vmax.f32 %v11846, %v11847
      %v11849 = vrot.slane %v11848, 2
      %v11850 = vmax.f32 %v11848, %v11849
      %v11851 = vrot.slane %v11850, 1
      %v11852 = vmax.f32 %v11850, %v11851
      %v11853 = vsel %vm11015, %v10945, -inf
      %v11854 = vsel %vm11015, %v10946, -inf
      %v11855 = vmax.f32 %v11853, %v11854
      %v11856 = vrot.slane %v11855, 4
      %v11857 = vmax.f32 %v11855, %v11856
      %v11858 = vrot.slane %v11857, 2
      %v11859 = vmax.f32 %v11857, %v11858
      %v11860 = vrot.slane %v11859, 1
      %v11861 = vmax.f32 %v11859, %v11860
      %v11862 = vsel %vm11015, %v10947, -inf
      %v11863 = vsel %vm11015, %v10948, -inf
      %v11864 = vmax.f32 %v11862, %v11863
      %v11865 = vrot.slane %v11864, 4
      %v11866 = vmax.f32 %v11864, %v11865
      %v11867 = vrot.slane %v11866, 2
      %v11868 = vmax.f32 %v11866, %v11867
      %v11869 = vrot.slane %v11868, 1
      %v11870 = vmax.f32 %v11868, %v11869
      %v11871 = vsel %vm11015, %v10949, -inf
      %v11872 = vsel %vm11015, %v10950, -inf
      %v11873 = vmax.f32 %v11871, %v11872
      %v11874 = vrot.slane %v11873, 4
      %v11875 = vmax.f32 %v11873, %v11874
      %v11876 = vrot.slane %v11875, 2
      %v11877 = vmax.f32 %v11875, %v11876
      %v11878 = vrot.slane %v11877, 1
      %v11879 = vmax.f32 %v11877, %v11878
      %v11880 = vsel %vm11015, %v10951, -inf
      %v11881 = vsel %vm11015, %v10952, -inf
      %v11882 = vmax.f32 %v11880, %v11881
      %v11883 = vrot.slane %v11882, 4
      %v11884 = vmax.f32 %v11882, %v11883
      %v11885 = vrot.slane %v11884, 2
      %v11886 = vmax.f32 %v11884, %v11885
      %v11887 = vrot.slane %v11886, 1
      %v11888 = vmax.f32 %v11886, %v11887
      %v11889 = vsel %vm11015, %v10953, -inf
      %v11890 = vsel %vm11015, %v10954, -inf
      %v11891 = vmax.f32 %v11889, %v11890
      %v11892 = vrot.slane %v11891, 4
      %v11893 = vmax.f32 %v11891, %v11892
      %v11894 = vrot.slane %v11893, 2
      %v11895 = vmax.f32 %v11893, %v11894
      %v11896 = vrot.slane %v11895, 1
      %v11897 = vmax.f32 %v11895, %v11896
      %v11898 = vsel %vm11015, %v10955, -inf
      %v11899 = vsel %vm11015, %v10956, -inf
      %v11900 = vmax.f32 %v11898, %v11899
      %v11901 = vrot.slane %v11900, 4
      %v11902 = vmax.f32 %v11900, %v11901
      %v11903 = vrot.slane %v11902, 2
      %v11904 = vmax.f32 %v11902, %v11903
      %v11905 = vrot.slane %v11904, 1
      %v11906 = vmax.f32 %v11904, %v11905
      %v11907 = vsel %vm11015, %v10957, -inf
      %v11908 = vsel %vm11015, %v10958, -inf
      %v11909 = vmax.f32 %v11907, %v11908
      %v11910 = vrot.slane %v11909, 4
      %v11911 = vmax.f32 %v11909, %v11910
      %v11912 = vrot.slane %v11911, 2
      %v11913 = vmax.f32 %v11911, %v11912
      %v11914 = vrot.slane %v11913, 1
      %v11915 = vmax.f32 %v11913, %v11914
      %v11916 = vsel %vm11015, %v10959, -inf
      %v11917 = vsel %vm11015, %v10960, -inf
      %v11918 = vmax.f32 %v11916, %v11917
      %v11919 = vrot.slane %v11918, 4
      %v11920 = vmax.f32 %v11918, %v11919
      %v11921 = vrot.slane %v11920, 2
      %v11922 = vmax.f32 %v11920, %v11921
      %v11923 = vrot.slane %v11922, 1
      %v11924 = vmax.f32 %v11922, %v11923
      %v11925 = vsel %vm11015, %v10961, -inf
      %v11926 = vsel %vm11015, %v10962, -inf
      %v11927 = vmax.f32 %v11925, %v11926
      %v11928 = vrot.slane %v11927, 4
      %v11929 = vmax.f32 %v11927, %v11928
      %v11930 = vrot.slane %v11929, 2
      %v11931 = vmax.f32 %v11929, %v11930
      %v11932 = vrot.slane %v11931, 1
      %v11933 = vmax.f32 %v11931, %v11932
      %v11934 = vsel %vm11015, %v10963, -inf
      %v11935 = vsel %vm11015, %v10964, -inf
      %v11936 = vmax.f32 %v11934, %v11935
      %v11937 = vrot.slane %v11936, 4
      %v11938 = vmax.f32 %v11936, %v11937
      %v11939 = vrot.slane %v11938, 2
      %v11940 = vmax.f32 %v11938, %v11939
      %v11941 = vrot.slane %v11940, 1
      %v11942 = vmax.f32 %v11940, %v11941
      %v11943 = vsel %vm11015, %v10965, -inf
      %v11944 = vsel %vm11015, %v10966, -inf
      %v11945 = vmax.f32 %v11943, %v11944
      %v11946 = vrot.slane %v11945, 4
      %v11947 = vmax.f32 %v11945, %v11946
      %v11948 = vrot.slane %v11947, 2
      %v11949 = vmax.f32 %v11947, %v11948
      %v11950 = vrot.slane %v11949, 1
      %v11951 = vmax.f32 %v11949, %v11950
      %v11952 = vsel %vm11015, %v10967, -inf
      %v11953 = vsel %vm11015, %v10968, -inf
      %v11954 = vmax.f32 %v11952, %v11953
      %v11955 = vrot.slane %v11954, 4
      %v11956 = vmax.f32 %v11954, %v11955
      %v11957 = vrot.slane %v11956, 2
      %v11958 = vmax.f32 %v11956, %v11957
      %v11959 = vrot.slane %v11958, 1
      %v11960 = vmax.f32 %v11958, %v11959
      %v11961 = vsel %vm11015, %v10969, -inf
      %v11962 = vsel %vm11015, %v10970, -inf
      %v11963 = vmax.f32 %v11961, %v11962
      %v11964 = vrot.slane %v11963, 4
      %v11965 = vmax.f32 %v11963, %v11964
      %v11966 = vrot.slane %v11965, 2
      %v11967 = vmax.f32 %v11965, %v11966
      %v11968 = vrot.slane %v11967, 1
      %v11969 = vmax.f32 %v11967, %v11968
      %v11970 = vsel %vm11015, %v10971, -inf
      %v11971 = vsel %vm11015, %v10972, -inf
      %v11972 = vmax.f32 %v11970, %v11971
      %v11973 = vrot.slane %v11972, 4
      %v11974 = vmax.f32 %v11972, %v11973
      %v11975 = vrot.slane %v11974, 2
      %v11976 = vmax.f32 %v11974, %v11975
      %v11977 = vrot.slane %v11976, 1
      %v11978 = vmax.f32 %v11976, %v11977
      %v11979 = vsel %vm11015, %v10973, -inf
      %v11980 = vsel %vm11015, %v10974, -inf
      %v11981 = vmax.f32 %v11979, %v11980
      %v11982 = vrot.slane %v11981, 4
      %v11983 = vmax.f32 %v11981, %v11982
      %v11984 = vrot.slane %v11983, 2
      %v11985 = vmax.f32 %v11983, %v11984
      %v11986 = vrot.slane %v11985, 1
      %v11987 = vmax.f32 %v11985, %v11986
      %v11988 = vsel %vm11015, %v10975, -inf
      %v11989 = vsel %vm11015, %v10976, -inf
      %v11990 = vmax.f32 %v11988, %v11989
      %v11991 = vrot.slane %v11990, 4
      %v11992 = vmax.f32 %v11990, %v11991
      %v11993 = vrot.slane %v11992, 2
      %v11994 = vmax.f32 %v11992, %v11993
      %v11995 = vrot.slane %v11994, 1
      %v11996 = vmax.f32 %v11994, %v11995
      %v11997 = vsel %vm11015, %v10977, -inf
      %v11998 = vsel %vm11015, %v10978, -inf
      %v11999 = vmax.f32 %v11997, %v11998
      %v12000 = vrot.slane %v11999, 4
      %v12001 = vmax.f32 %v11999, %v12000
      %v12002 = vrot.slane %v12001, 2
      %v12003 = vmax.f32 %v12001, %v12002
      %v12004 = vrot.slane %v12003, 1
      %v12005 = vmax.f32 %v12003, %v12004
      %v12006 = vsel %vm11015, %v10979, -inf
      %v12007 = vsel %vm11015, %v10980, -inf
      %v12008 = vmax.f32 %v12006, %v12007
      %v12009 = vrot.slane %v12008, 4
      %v12010 = vmax.f32 %v12008, %v12009
      %v12011 = vrot.slane %v12010, 2
      %v12012 = vmax.f32 %v12010, %v12011
      %v12013 = vrot.slane %v12012, 1
      %v12014 = vmax.f32 %v12012, %v12013
      %v12015 = vsel %vm11015, %v10981, -inf
      %v12016 = vsel %vm11015, %v10982, -inf
      %v12017 = vmax.f32 %v12015, %v12016
      %v12018 = vrot.slane %v12017, 4
      %v12019 = vmax.f32 %v12017, %v12018
      %v12020 = vrot.slane %v12019, 2
      %v12021 = vmax.f32 %v12019, %v12020
      %v12022 = vrot.slane %v12021, 1
      %v12023 = vmax.f32 %v12021, %v12022
      %v12024 = vsel %vm11015, %v10983, -inf
      %v12025 = vsel %vm11015, %v10984, -inf
      %v12026 = vmax.f32 %v12024, %v12025
      %v12027 = vrot.slane %v12026, 4
      %v12028 = vmax.f32 %v12026, %v12027
      %v12029 = vrot.slane %v12028, 2
      %v12030 = vmax.f32 %v12028, %v12029
      %v12031 = vrot.slane %v12030, 1
      %v12032 = vmax.f32 %v12030, %v12031
      %v12033 = vsel %vm11015, %v10985, -inf
      %v12034 = vsel %vm11015, %v10986, -inf
      %v12035 = vmax.f32 %v12033, %v12034
      %v12036 = vrot.slane %v12035, 4
      %v12037 = vmax.f32 %v12035, %v12036
      %v12038 = vrot.slane %v12037, 2
      %v12039 = vmax.f32 %v12037, %v12038
      %v12040 = vrot.slane %v12039, 1
      %v12041 = vmax.f32 %v12039, %v12040
      %v12042 = vsel %vm11015, %v10987, -inf
      %v12043 = vsel %vm11015, %v10988, -inf
      %v12044 = vmax.f32 %v12042, %v12043
      %v12045 = vrot.slane %v12044, 4
      %v12046 = vmax.f32 %v12044, %v12045
      %v12047 = vrot.slane %v12046, 2
      %v12048 = vmax.f32 %v12046, %v12047
      %v12049 = vrot.slane %v12048, 1
      %v12050 = vmax.f32 %v12048, %v12049
      %v12051 = vsel %vm11015, %v10989, -inf
      %v12052 = vsel %vm11015, %v10990, -inf
      %v12053 = vmax.f32 %v12051, %v12052
      %v12054 = vrot.slane %v12053, 4
      %v12055 = vmax.f32 %v12053, %v12054
      %v12056 = vrot.slane %v12055, 2
      %v12057 = vmax.f32 %v12055, %v12056
      %v12058 = vrot.slane %v12057, 1
      %v12059 = vmax.f32 %v12057, %v12058
      %v12060 = vsel %vm11015, %v10991, -inf
      %v12061 = vsel %vm11015, %v10992, -inf
      %v12062 = vmax.f32 %v12060, %v12061
      %v12063 = vrot.slane %v12062, 4
      %v12064 = vmax.f32 %v12062, %v12063
      %v12065 = vrot.slane %v12064, 2
      %v12066 = vmax.f32 %v12064, %v12065
      %v12067 = vrot.slane %v12066, 1
      %v12068 = vmax.f32 %v12066, %v12067
      %v12069 = vsel %vm11015, %v10993, -inf
      %v12070 = vsel %vm11015, %v10994, -inf
      %v12071 = vmax.f32 %v12069, %v12070
      %v12072 = vrot.slane %v12071, 4
      %v12073 = vmax.f32 %v12071, %v12072
      %v12074 = vrot.slane %v12073, 2
      %v12075 = vmax.f32 %v12073, %v12074
      %v12076 = vrot.slane %v12075, 1
      %v12077 = vmax.f32 %v12075, %v12076
      %v12078 = vsel %vm11015, %v10995, -inf
      %v12079 = vsel %vm11015, %v10996, -inf
      %v12080 = vmax.f32 %v12078, %v12079
      %v12081 = vrot.slane %v12080, 4
      %v12082 = vmax.f32 %v12080, %v12081
      %v12083 = vrot.slane %v12082, 2
      %v12084 = vmax.f32 %v12082, %v12083
      %v12085 = vrot.slane %v12084, 1
      %v12086 = vmax.f32 %v12084, %v12085
      %v12087 = vsel %vm11015, %v10997, -inf
      %v12088 = vsel %vm11015, %v10998, -inf
      %v12089 = vmax.f32 %v12087, %v12088
      %v12090 = vrot.slane %v12089, 4
      %v12091 = vmax.f32 %v12089, %v12090
      %v12092 = vrot.slane %v12091, 2
      %v12093 = vmax.f32 %v12091, %v12092
      %v12094 = vrot.slane %v12093, 1
      %v12095 = vmax.f32 %v12093, %v12094
      %v12096 = vsel %vm11015, %v10999, -inf
      %v12097 = vsel %vm11015, %v11000, -inf
      %v12098 = vmax.f32 %v12096, %v12097
      %v12099 = vrot.slane %v12098, 4
      %v12100 = vmax.f32 %v12098, %v12099
      %v12101 = vrot.slane %v12100, 2
      %v12102 = vmax.f32 %v12100, %v12101
      %v12103 = vrot.slane %v12102, 1
      %v12104 = vmax.f32 %v12102, %v12103
      %v12105 = vsel %vm11015, %v11001, -inf
      %v12106 = vsel %vm11015, %v11002, -inf
      %v12107 = vmax.f32 %v12105, %v12106
      %v12108 = vrot.slane %v12107, 4
      %v12109 = vmax.f32 %v12107, %v12108
      %v12110 = vrot.slane %v12109, 2
      %v12111 = vmax.f32 %v12109, %v12110
      %v12112 = vrot.slane %v12111, 1
      %v12113 = vmax.f32 %v12111, %v12112
      %v12114 = vsel %vm11015, %v11003, -inf
      %v12115 = vsel %vm11015, %v11004, -inf
      %v12116 = vmax.f32 %v12114, %v12115
      %v12117 = vrot.slane %v12116, 4
      %v12118 = vmax.f32 %v12116, %v12117
      %v12119 = vrot.slane %v12118, 2
      %v12120 = vmax.f32 %v12118, %v12119
      %v12121 = vrot.slane %v12120, 1
      %v12122 = vmax.f32 %v12120, %v12121
      %v12123 = vsel %vm11015, %v11005, -inf
      %v12124 = vsel %vm11015, %v11006, -inf
      %v12125 = vmax.f32 %v12123, %v12124
      %v12126 = vrot.slane %v12125, 4
      %v12127 = vmax.f32 %v12125, %v12126
      %v12128 = vrot.slane %v12127, 2
      %v12129 = vmax.f32 %v12127, %v12128
      %v12130 = vrot.slane %v12129, 1
      %v12131 = vmax.f32 %v12129, %v12130
      %v12132 = vsel %vm11015, %v11007, -inf
      %v12133 = vsel %vm11015, %v11008, -inf
      %v12134 = vmax.f32 %v12132, %v12133
      %v12135 = vrot.slane %v12134, 4
      %v12136 = vmax.f32 %v12134, %v12135
      %v12137 = vrot.slane %v12136, 2
      %v12138 = vmax.f32 %v12136, %v12137
      %v12139 = vrot.slane %v12138, 1
      %v12140 = vmax.f32 %v12138, %v12139
      %v12141 = vsel %vm11015, %v11009, -inf
      %v12142 = vsel %vm11015, %v11010, -inf
      %v12143 = vmax.f32 %v12141, %v12142
      %v12144 = vrot.slane %v12143, 4
      %v12145 = vmax.f32 %v12143, %v12144
      %v12146 = vrot.slane %v12145, 2
      %v12147 = vmax.f32 %v12145, %v12146
      %v12148 = vrot.slane %v12147, 1
      %v12149 = vmax.f32 %v12147, %v12148
      %v12150 = vsel %vm11015, %v11011, -inf
      %v12151 = vsel %vm11015, %v11012, -inf
      %v12152 = vmax.f32 %v12150, %v12151
      %v12153 = vrot.slane %v12152, 4
      %v12154 = vmax.f32 %v12152, %v12153
      %v12155 = vrot.slane %v12154, 2
      %v12156 = vmax.f32 %v12154, %v12155
      %v12157 = vrot.slane %v12156, 1
      %v12158 = vmax.f32 %v12156, %v12157
      %v12159 = vsel %vm11015, %v11013, -inf
      %v12160 = vsel %vm11015, %v11014, -inf
      %v12161 = vmax.f32 %v12159, %v12160
      %v12162 = vrot.slane %v12161, 4
      %v12163 = vmax.f32 %v12161, %v12162
      %v12164 = vrot.slane %v12163, 2
      %v12165 = vmax.f32 %v12163, %v12164
      %v12166 = vrot.slane %v12165, 1
      %v12167 = vmax.f32 %v12165, %v12166
      %v12168 = vpack.c.bf16 %v11024, %v11024
      %v12169 = vpack.c.bf16 %v11033, %v11033
      %v12170 = vpack.c.bf16 %v11042, %v11042
      %v12171 = vpack.c.bf16 %v11051, %v11051
      %v12172 = vpack.c.bf16 %v11060, %v11060
      %v12173 = vpack.c.bf16 %v11069, %v11069
      %v12174 = vpack.c.bf16 %v11078, %v11078
      %v12175 = vpack.c.bf16 %v11087, %v11087
      %v12176 = vpack.c.bf16 %v11096, %v11096
      %v12177 = vpack.c.bf16 %v11105, %v11105
      %v12178 = vpack.c.bf16 %v11114, %v11114
      %v12179 = vpack.c.bf16 %v11123, %v11123
      %v12180 = vpack.c.bf16 %v11132, %v11132
      %v12181 = vpack.c.bf16 %v11141, %v11141
      %v12182 = vpack.c.bf16 %v11150, %v11150
      %v12183 = vpack.c.bf16 %v11159, %v11159
      %v12184 = vpack.c.bf16 %v11168, %v11168
      %v12185 = vpack.c.bf16 %v11177, %v11177
      %v12186 = vpack.c.bf16 %v11186, %v11186
      %v12187 = vpack.c.bf16 %v11195, %v11195
      %v12188 = vpack.c.bf16 %v11204, %v11204
      %v12189 = vpack.c.bf16 %v11213, %v11213
      %v12190 = vpack.c.bf16 %v11222, %v11222
      %v12191 = vpack.c.bf16 %v11231, %v11231
      %v12192 = vpack.c.bf16 %v11240, %v11240
      %v12193 = vpack.c.bf16 %v11249, %v11249
      %v12194 = vpack.c.bf16 %v11258, %v11258
      %v12195 = vpack.c.bf16 %v11267, %v11267
      %v12196 = vpack.c.bf16 %v11276, %v11276
      %v12197 = vpack.c.bf16 %v11285, %v11285
      %v12198 = vpack.c.bf16 %v11294, %v11294
      %v12199 = vpack.c.bf16 %v11303, %v11303
      %v12200 = vpack.c.bf16 %v11312, %v11312
      %v12201 = vpack.c.bf16 %v11321, %v11321
      %v12202 = vpack.c.bf16 %v11330, %v11330
      %v12203 = vpack.c.bf16 %v11339, %v11339
      %v12204 = vpack.c.bf16 %v11348, %v11348
      %v12205 = vpack.c.bf16 %v11357, %v11357
      %v12206 = vpack.c.bf16 %v11366, %v11366
      %v12207 = vpack.c.bf16 %v11375, %v11375
      %v12208 = vpack.c.bf16 %v11384, %v11384
      %v12209 = vpack.c.bf16 %v11393, %v11393
      %v12210 = vpack.c.bf16 %v11402, %v11402
      %v12211 = vpack.c.bf16 %v11411, %v11411
      %v12212 = vpack.c.bf16 %v11420, %v11420
      %v12213 = vpack.c.bf16 %v11429, %v11429
      %v12214 = vpack.c.bf16 %v11438, %v11438
      %v12215 = vpack.c.bf16 %v11447, %v11447
      %v12216 = vpack.c.bf16 %v11456, %v11456
      %v12217 = vpack.c.bf16 %v11465, %v11465
      %v12218 = vpack.c.bf16 %v11474, %v11474
      %v12219 = vpack.c.bf16 %v11483, %v11483
      %v12220 = vpack.c.bf16 %v11492, %v11492
      %v12221 = vpack.c.bf16 %v11501, %v11501
      %v12222 = vpack.c.bf16 %v11510, %v11510
      %v12223 = vpack.c.bf16 %v11519, %v11519
      %v12224 = vpack.c.bf16 %v11528, %v11528
      %v12225 = vpack.c.bf16 %v11537, %v11537
      %v12226 = vpack.c.bf16 %v11546, %v11546
      %v12227 = vpack.c.bf16 %v11555, %v11555
      %v12228 = vpack.c.bf16 %v11564, %v11564
      %v12229 = vpack.c.bf16 %v11573, %v11573
      %v12230 = vpack.c.bf16 %v11582, %v11582
      %v12231 = vpack.c.bf16 %v11591, %v11591
      %v12232 = vpack.c.bf16 %v11600, %v11600
      %v12233 = vpack.c.bf16 %v11609, %v11609
      %v12234 = vpack.c.bf16 %v11618, %v11618
      %v12235 = vpack.c.bf16 %v11627, %v11627
      %v12236 = vpack.c.bf16 %v11636, %v11636
      %v12237 = vpack.c.bf16 %v11645, %v11645
      %v12238 = vpack.c.bf16 %v11654, %v11654
      %v12239 = vpack.c.bf16 %v11663, %v11663
      %v12240 = vpack.c.bf16 %v11672, %v11672
      %v12241 = vpack.c.bf16 %v11681, %v11681
      %v12242 = vpack.c.bf16 %v11690, %v11690
      %v12243 = vpack.c.bf16 %v11699, %v11699
      %v12244 = vpack.c.bf16 %v11708, %v11708
      %v12245 = vpack.c.bf16 %v11717, %v11717
      %v12246 = vpack.c.bf16 %v11726, %v11726
      %v12247 = vpack.c.bf16 %v11735, %v11735
      %v12248 = vpack.c.bf16 %v11744, %v11744
      %v12249 = vpack.c.bf16 %v11753, %v11753
      %v12250 = vpack.c.bf16 %v11762, %v11762
      %v12251 = vpack.c.bf16 %v11771, %v11771
      %v12252 = vpack.c.bf16 %v11780, %v11780
      %v12253 = vpack.c.bf16 %v11789, %v11789
      %v12254 = vpack.c.bf16 %v11798, %v11798
      %v12255 = vpack.c.bf16 %v11807, %v11807
      %v12256 = vpack.c.bf16 %v11816, %v11816
      %v12257 = vpack.c.bf16 %v11825, %v11825
      %v12258 = vpack.c.bf16 %v11834, %v11834
      %v12259 = vpack.c.bf16 %v11843, %v11843
      %v12260 = vpack.c.bf16 %v11852, %v11852
      %v12261 = vpack.c.bf16 %v11861, %v11861
      %v12262 = vpack.c.bf16 %v11870, %v11870
      %v12263 = vpack.c.bf16 %v11879, %v11879
      %v12264 = vpack.c.bf16 %v11888, %v11888
      %v12265 = vpack.c.bf16 %v11897, %v11897
      %v12266 = vpack.c.bf16 %v11906, %v11906
      %v12267 = vpack.c.bf16 %v11915, %v11915
      %v12268 = vpack.c.bf16 %v11924, %v11924
      %v12269 = vpack.c.bf16 %v11933, %v11933
      %v12270 = vpack.c.bf16 %v11942, %v11942
      %v12271 = vpack.c.bf16 %v11951, %v11951
      %v12272 = vpack.c.bf16 %v11960, %v11960
      %v12273 = vpack.c.bf16 %v11969, %v11969
      %v12274 = vpack.c.bf16 %v11978, %v11978
      %v12275 = vpack.c.bf16 %v11987, %v11987
      %v12276 = vpack.c.bf16 %v11996, %v11996
      %v12277 = vpack.c.bf16 %v12005, %v12005
      %v12278 = vpack.c.bf16 %v12014, %v12014
      %v12279 = vpack.c.bf16 %v12023, %v12023
      %v12280 = vpack.c.bf16 %v12032, %v12032
      %v12281 = vpack.c.bf16 %v12041, %v12041
      %v12282 = vpack.c.bf16 %v12050, %v12050
      %v12283 = vpack.c.bf16 %v12059, %v12059
      %v12284 = vpack.c.bf16 %v12068, %v12068
      %v12285 = vpack.c.bf16 %v12077, %v12077
      %v12286 = vpack.c.bf16 %v12086, %v12086
      %v12287 = vpack.c.bf16 %v12095, %v12095
      %v12288 = vpack.c.bf16 %v12104, %v12104
      %v12289 = vpack.c.bf16 %v12113, %v12113
      %v12290 = vpack.c.bf16 %v12122, %v12122
      %v12291 = vpack.c.bf16 %v12131, %v12131
      %v12292 = vpack.c.bf16 %v12140, %v12140
      %v12293 = vpack.c.bf16 %v12149, %v12149
      %v12294 = vpack.c.bf16 %v12158, %v12158
      %v12295 = vpack.c.bf16 %v12167, %v12167
      %v12424 = vunpack.c.l.b16 %v12168
      %v12425 = vunpack.c.l.b16 %v12169
      %v12426 = vunpack.c.l.b16 %v12170
      %v12427 = vunpack.c.l.b16 %v12171
      %v12428 = vunpack.c.l.b16 %v12172
      %v12429 = vunpack.c.l.b16 %v12173
      %v12430 = vunpack.c.l.b16 %v12174
      %v12431 = vunpack.c.l.b16 %v12175
      %v12432 = vunpack.c.l.b16 %v12176
      %v12433 = vunpack.c.l.b16 %v12177
      %v12434 = vunpack.c.l.b16 %v12178
      %v12435 = vunpack.c.l.b16 %v12179
      %v12436 = vunpack.c.l.b16 %v12180
      %v12437 = vunpack.c.l.b16 %v12181
      %v12438 = vunpack.c.l.b16 %v12182
      %v12439 = vunpack.c.l.b16 %v12183
      %v12440 = vunpack.c.l.b16 %v12184
      %v12441 = vunpack.c.l.b16 %v12185
      %v12442 = vunpack.c.l.b16 %v12186
      %v12443 = vunpack.c.l.b16 %v12187
      %v12444 = vunpack.c.l.b16 %v12188
      %v12445 = vunpack.c.l.b16 %v12189
      %v12446 = vunpack.c.l.b16 %v12190
      %v12447 = vunpack.c.l.b16 %v12191
      %v12448 = vunpack.c.l.b16 %v12192
      %v12449 = vunpack.c.l.b16 %v12193
      %v12450 = vunpack.c.l.b16 %v12194
      %v12451 = vunpack.c.l.b16 %v12195
      %v12452 = vunpack.c.l.b16 %v12196
      %v12453 = vunpack.c.l.b16 %v12197
      %v12454 = vunpack.c.l.b16 %v12198
      %v12455 = vunpack.c.l.b16 %v12199
      %v12456 = vunpack.c.l.b16 %v12200
      %v12457 = vunpack.c.l.b16 %v12201
      %v12458 = vunpack.c.l.b16 %v12202
      %v12459 = vunpack.c.l.b16 %v12203
      %v12460 = vunpack.c.l.b16 %v12204
      %v12461 = vunpack.c.l.b16 %v12205
      %v12462 = vunpack.c.l.b16 %v12206
      %v12463 = vunpack.c.l.b16 %v12207
      %v12464 = vunpack.c.l.b16 %v12208
      %v12465 = vunpack.c.l.b16 %v12209
      %v12466 = vunpack.c.l.b16 %v12210
      %v12467 = vunpack.c.l.b16 %v12211
      %v12468 = vunpack.c.l.b16 %v12212
      %v12469 = vunpack.c.l.b16 %v12213
      %v12470 = vunpack.c.l.b16 %v12214
      %v12471 = vunpack.c.l.b16 %v12215
      %v12472 = vunpack.c.l.b16 %v12216
      %v12473 = vunpack.c.l.b16 %v12217
      %v12474 = vunpack.c.l.b16 %v12218
      %v12475 = vunpack.c.l.b16 %v12219
      %v12476 = vunpack.c.l.b16 %v12220
      %v12477 = vunpack.c.l.b16 %v12221
      %v12478 = vunpack.c.l.b16 %v12222
      %v12479 = vunpack.c.l.b16 %v12223
      %v12480 = vunpack.c.l.b16 %v12224
      %v12481 = vunpack.c.l.b16 %v12225
      %v12482 = vunpack.c.l.b16 %v12226
      %v12483 = vunpack.c.l.b16 %v12227
      %v12484 = vunpack.c.l.b16 %v12228
      %v12485 = vunpack.c.l.b16 %v12229
      %v12486 = vunpack.c.l.b16 %v12230
      %v12487 = vunpack.c.l.b16 %v12231
      %v12488 = vunpack.c.l.b16 %v12232
      %v12489 = vunpack.c.l.b16 %v12233
      %v12490 = vunpack.c.l.b16 %v12234
      %v12491 = vunpack.c.l.b16 %v12235
      %v12492 = vunpack.c.l.b16 %v12236
      %v12493 = vunpack.c.l.b16 %v12237
      %v12494 = vunpack.c.l.b16 %v12238
      %v12495 = vunpack.c.l.b16 %v12239
      %v12496 = vunpack.c.l.b16 %v12240
      %v12497 = vunpack.c.l.b16 %v12241
      %v12498 = vunpack.c.l.b16 %v12242
      %v12499 = vunpack.c.l.b16 %v12243
      %v12500 = vunpack.c.l.b16 %v12244
      %v12501 = vunpack.c.l.b16 %v12245
      %v12502 = vunpack.c.l.b16 %v12246
      %v12503 = vunpack.c.l.b16 %v12247
      %v12504 = vunpack.c.l.b16 %v12248
      %v12505 = vunpack.c.l.b16 %v12249
      %v12506 = vunpack.c.l.b16 %v12250
      %v12507 = vunpack.c.l.b16 %v12251
      %v12508 = vunpack.c.l.b16 %v12252
      %v12509 = vunpack.c.l.b16 %v12253
      %v12510 = vunpack.c.l.b16 %v12254
      %v12511 = vunpack.c.l.b16 %v12255
      %v12512 = vunpack.c.l.b16 %v12256
      %v12513 = vunpack.c.l.b16 %v12257
      %v12514 = vunpack.c.l.b16 %v12258
      %v12515 = vunpack.c.l.b16 %v12259
      %v12516 = vunpack.c.l.b16 %v12260
      %v12517 = vunpack.c.l.b16 %v12261
      %v12518 = vunpack.c.l.b16 %v12262
      %v12519 = vunpack.c.l.b16 %v12263
      %v12520 = vunpack.c.l.b16 %v12264
      %v12521 = vunpack.c.l.b16 %v12265
      %v12522 = vunpack.c.l.b16 %v12266
      %v12523 = vunpack.c.l.b16 %v12267
      %v12524 = vunpack.c.l.b16 %v12268
      %v12525 = vunpack.c.l.b16 %v12269
      %v12526 = vunpack.c.l.b16 %v12270
      %v12527 = vunpack.c.l.b16 %v12271
      %v12528 = vunpack.c.l.b16 %v12272
      %v12529 = vunpack.c.l.b16 %v12273
      %v12530 = vunpack.c.l.b16 %v12274
      %v12531 = vunpack.c.l.b16 %v12275
      %v12532 = vunpack.c.l.b16 %v12276
      %v12533 = vunpack.c.l.b16 %v12277
      %v12534 = vunpack.c.l.b16 %v12278
      %v12535 = vunpack.c.l.b16 %v12279
      %v12536 = vunpack.c.l.b16 %v12280
      %v12537 = vunpack.c.l.b16 %v12281
      %v12538 = vunpack.c.l.b16 %v12282
      %v12539 = vunpack.c.l.b16 %v12283
      %v12540 = vunpack.c.l.b16 %v12284
      %v12541 = vunpack.c.l.b16 %v12285
      %v12542 = vunpack.c.l.b16 %v12286
      %v12543 = vunpack.c.l.b16 %v12287
      %v12544 = vunpack.c.l.b16 %v12288
      %v12545 = vunpack.c.l.b16 %v12289
      %v12546 = vunpack.c.l.b16 %v12290
      %v12547 = vunpack.c.l.b16 %v12291
      %v12548 = vunpack.c.l.b16 %v12292
      %v12549 = vunpack.c.l.b16 %v12293
      %v12550 = vunpack.c.l.b16 %v12294
      %v12551 = vunpack.c.l.b16 %v12295
      %v12552 = vpack.c.b16 %v12424, %v12424
      %v12553 = vpack.c.b16 %v12425, %v12425
      %v12554 = vpack.c.b16 %v12426, %v12426
      %v12555 = vpack.c.b16 %v12427, %v12427
      %v12556 = vpack.c.b16 %v12428, %v12428
      %v12557 = vpack.c.b16 %v12429, %v12429
      %v12558 = vpack.c.b16 %v12430, %v12430
      %v12559 = vpack.c.b16 %v12431, %v12431
      %v12560 = vpack.c.b16 %v12432, %v12432
      %v12561 = vpack.c.b16 %v12433, %v12433
      %v12562 = vpack.c.b16 %v12434, %v12434
      %v12563 = vpack.c.b16 %v12435, %v12435
      %v12564 = vpack.c.b16 %v12436, %v12436
      %v12565 = vpack.c.b16 %v12437, %v12437
      %v12566 = vpack.c.b16 %v12438, %v12438
      %v12567 = vpack.c.b16 %v12439, %v12439
      %v12568 = vpack.c.b16 %v12440, %v12440
      %v12569 = vpack.c.b16 %v12441, %v12441
      %v12570 = vpack.c.b16 %v12442, %v12442
      %v12571 = vpack.c.b16 %v12443, %v12443
      %v12572 = vpack.c.b16 %v12444, %v12444
      %v12573 = vpack.c.b16 %v12445, %v12445
      %v12574 = vpack.c.b16 %v12446, %v12446
      %v12575 = vpack.c.b16 %v12447, %v12447
      %v12576 = vpack.c.b16 %v12448, %v12448
      %v12577 = vpack.c.b16 %v12449, %v12449
      %v12578 = vpack.c.b16 %v12450, %v12450
      %v12579 = vpack.c.b16 %v12451, %v12451
      %v12580 = vpack.c.b16 %v12452, %v12452
      %v12581 = vpack.c.b16 %v12453, %v12453
      %v12582 = vpack.c.b16 %v12454, %v12454
      %v12583 = vpack.c.b16 %v12455, %v12455
      %v12584 = vpack.c.b16 %v12456, %v12456
      %v12585 = vpack.c.b16 %v12457, %v12457
      %v12586 = vpack.c.b16 %v12458, %v12458
      %v12587 = vpack.c.b16 %v12459, %v12459
      %v12588 = vpack.c.b16 %v12460, %v12460
      %v12589 = vpack.c.b16 %v12461, %v12461
      %v12590 = vpack.c.b16 %v12462, %v12462
      %v12591 = vpack.c.b16 %v12463, %v12463
      %v12592 = vpack.c.b16 %v12464, %v12464
      %v12593 = vpack.c.b16 %v12465, %v12465
      %v12594 = vpack.c.b16 %v12466, %v12466
      %v12595 = vpack.c.b16 %v12467, %v12467
      %v12596 = vpack.c.b16 %v12468, %v12468
      %v12597 = vpack.c.b16 %v12469, %v12469
      %v12598 = vpack.c.b16 %v12470, %v12470
      %v12599 = vpack.c.b16 %v12471, %v12471
      %v12600 = vpack.c.b16 %v12472, %v12472
      %v12601 = vpack.c.b16 %v12473, %v12473
      %v12602 = vpack.c.b16 %v12474, %v12474
      %v12603 = vpack.c.b16 %v12475, %v12475
      %v12604 = vpack.c.b16 %v12476, %v12476
      %v12605 = vpack.c.b16 %v12477, %v12477
      %v12606 = vpack.c.b16 %v12478, %v12478
      %v12607 = vpack.c.b16 %v12479, %v12479
      %v12608 = vpack.c.b16 %v12480, %v12480
      %v12609 = vpack.c.b16 %v12481, %v12481
      %v12610 = vpack.c.b16 %v12482, %v12482
      %v12611 = vpack.c.b16 %v12483, %v12483
      %v12612 = vpack.c.b16 %v12484, %v12484
      %v12613 = vpack.c.b16 %v12485, %v12485
      %v12614 = vpack.c.b16 %v12486, %v12486
      %v12615 = vpack.c.b16 %v12487, %v12487
      %v12616 = vpack.c.b16 %v12488, %v12488
      %v12617 = vpack.c.b16 %v12489, %v12489
      %v12618 = vpack.c.b16 %v12490, %v12490
      %v12619 = vpack.c.b16 %v12491, %v12491
      %v12620 = vpack.c.b16 %v12492, %v12492
      %v12621 = vpack.c.b16 %v12493, %v12493
      %v12622 = vpack.c.b16 %v12494, %v12494
      %v12623 = vpack.c.b16 %v12495, %v12495
      %v12624 = vpack.c.b16 %v12496, %v12496
      %v12625 = vpack.c.b16 %v12497, %v12497
      %v12626 = vpack.c.b16 %v12498, %v12498
      %v12627 = vpack.c.b16 %v12499, %v12499
      %v12628 = vpack.c.b16 %v12500, %v12500
      %v12629 = vpack.c.b16 %v12501, %v12501
      %v12630 = vpack.c.b16 %v12502, %v12502
      %v12631 = vpack.c.b16 %v12503, %v12503
      %v12632 = vpack.c.b16 %v12504, %v12504
      %v12633 = vpack.c.b16 %v12505, %v12505
      %v12634 = vpack.c.b16 %v12506, %v12506
      %v12635 = vpack.c.b16 %v12507, %v12507
      %v12636 = vpack.c.b16 %v12508, %v12508
      %v12637 = vpack.c.b16 %v12509, %v12509
      %v12638 = vpack.c.b16 %v12510, %v12510
      %v12639 = vpack.c.b16 %v12511, %v12511
      %v12640 = vpack.c.b16 %v12512, %v12512
      %v12641 = vpack.c.b16 %v12513, %v12513
      %v12642 = vpack.c.b16 %v12514, %v12514
      %v12643 = vpack.c.b16 %v12515, %v12515
      %v12644 = vpack.c.b16 %v12516, %v12516
      %v12645 = vpack.c.b16 %v12517, %v12517
      %v12646 = vpack.c.b16 %v12518, %v12518
      %v12647 = vpack.c.b16 %v12519, %v12519
      %v12648 = vpack.c.b16 %v12520, %v12520
      %v12649 = vpack.c.b16 %v12521, %v12521
      %v12650 = vpack.c.b16 %v12522, %v12522
      %v12651 = vpack.c.b16 %v12523, %v12523
      %v12652 = vpack.c.b16 %v12524, %v12524
      %v12653 = vpack.c.b16 %v12525, %v12525
      %v12654 = vpack.c.b16 %v12526, %v12526
      %v12655 = vpack.c.b16 %v12527, %v12527
      %v12656 = vpack.c.b16 %v12528, %v12528
      %v12657 = vpack.c.b16 %v12529, %v12529
      %v12658 = vpack.c.b16 %v12530, %v12530
      %v12659 = vpack.c.b16 %v12531, %v12531
      %v12660 = vpack.c.b16 %v12532, %v12532
      %v12661 = vpack.c.b16 %v12533, %v12533
      %v12662 = vpack.c.b16 %v12534, %v12534
      %v12663 = vpack.c.b16 %v12535, %v12535
      %v12664 = vpack.c.b16 %v12536, %v12536
      %v12665 = vpack.c.b16 %v12537, %v12537
      %v12666 = vpack.c.b16 %v12538, %v12538
      %v12667 = vpack.c.b16 %v12539, %v12539
      %v12668 = vpack.c.b16 %v12540, %v12540
      %v12669 = vpack.c.b16 %v12541, %v12541
      %v12670 = vpack.c.b16 %v12542, %v12542
      %v12671 = vpack.c.b16 %v12543, %v12543
      %v12672 = vpack.c.b16 %v12544, %v12544
      %v12673 = vpack.c.b16 %v12545, %v12545
      %v12674 = vpack.c.b16 %v12546, %v12546
      %v12675 = vpack.c.b16 %v12547, %v12547
      %v12676 = vpack.c.b16 %v12548, %v12548
      %v12677 = vpack.c.b16 %v12549, %v12549
      %v12678 = vpack.c.b16 %v12550, %v12550
      %v12679 = vpack.c.b16 %v12551, %v12551
      %v12680 = vunpack.c.l.b16 %v12552
      %v12681 = vunpack.c.l.b16 %v12553
      %v12682 = vunpack.c.l.b16 %v12554
      %v12683 = vunpack.c.l.b16 %v12555
      %v12684 = vunpack.c.l.b16 %v12556
      %v12685 = vunpack.c.l.b16 %v12557
      %v12686 = vunpack.c.l.b16 %v12558
      %v12687 = vunpack.c.l.b16 %v12559
      %v12688 = vunpack.c.l.b16 %v12560
      %v12689 = vunpack.c.l.b16 %v12561
      %v12690 = vunpack.c.l.b16 %v12562
      %v12691 = vunpack.c.l.b16 %v12563
      %v12692 = vunpack.c.l.b16 %v12564
      %v12693 = vunpack.c.l.b16 %v12565
      %v12694 = vunpack.c.l.b16 %v12566
      %v12695 = vunpack.c.l.b16 %v12567
      %v12696 = vunpack.c.l.b16 %v12568
      %v12697 = vunpack.c.l.b16 %v12569
      %v12698 = vunpack.c.l.b16 %v12570
      %v12699 = vunpack.c.l.b16 %v12571
      %v12700 = vunpack.c.l.b16 %v12572
      %v12701 = vunpack.c.l.b16 %v12573
      %v12702 = vunpack.c.l.b16 %v12574
      %v12703 = vunpack.c.l.b16 %v12575
      %v12704 = vunpack.c.l.b16 %v12576
      %v12705 = vunpack.c.l.b16 %v12577
      %v12706 = vunpack.c.l.b16 %v12578
      %v12707 = vunpack.c.l.b16 %v12579
      %v12708 = vunpack.c.l.b16 %v12580
      %v12709 = vunpack.c.l.b16 %v12581
      %v12710 = vunpack.c.l.b16 %v12582
      %v12711 = vunpack.c.l.b16 %v12583
      %v12712 = vunpack.c.l.b16 %v12584
      %v12713 = vunpack.c.l.b16 %v12585
      %v12714 = vunpack.c.l.b16 %v12586
      %v12715 = vunpack.c.l.b16 %v12587
      %v12716 = vunpack.c.l.b16 %v12588
      %v12717 = vunpack.c.l.b16 %v12589
      %v12718 = vunpack.c.l.b16 %v12590
      %v12719 = vunpack.c.l.b16 %v12591
      %v12720 = vunpack.c.l.b16 %v12592
      %v12721 = vunpack.c.l.b16 %v12593
      %v12722 = vunpack.c.l.b16 %v12594
      %v12723 = vunpack.c.l.b16 %v12595
      %v12724 = vunpack.c.l.b16 %v12596
      %v12725 = vunpack.c.l.b16 %v12597
      %v12726 = vunpack.c.l.b16 %v12598
      %v12727 = vunpack.c.l.b16 %v12599
      %v12728 = vunpack.c.l.b16 %v12600
      %v12729 = vunpack.c.l.b16 %v12601
      %v12730 = vunpack.c.l.b16 %v12602
      %v12731 = vunpack.c.l.b16 %v12603
      %v12732 = vunpack.c.l.b16 %v12604
      %v12733 = vunpack.c.l.b16 %v12605
      %v12734 = vunpack.c.l.b16 %v12606
      %v12735 = vunpack.c.l.b16 %v12607
      %v12736 = vunpack.c.l.b16 %v12608
      %v12737 = vunpack.c.l.b16 %v12609
      %v12738 = vunpack.c.l.b16 %v12610
      %v12739 = vunpack.c.l.b16 %v12611
      %v12740 = vunpack.c.l.b16 %v12612
      %v12741 = vunpack.c.l.b16 %v12613
      %v12742 = vunpack.c.l.b16 %v12614
      %v12743 = vunpack.c.l.b16 %v12615
      %v12744 = vunpack.c.l.b16 %v12616
      %v12745 = vunpack.c.l.b16 %v12617
      %v12746 = vunpack.c.l.b16 %v12618
      %v12747 = vunpack.c.l.b16 %v12619
      %v12748 = vunpack.c.l.b16 %v12620
      %v12749 = vunpack.c.l.b16 %v12621
      %v12750 = vunpack.c.l.b16 %v12622
      %v12751 = vunpack.c.l.b16 %v12623
      %v12752 = vunpack.c.l.b16 %v12624
      %v12753 = vunpack.c.l.b16 %v12625
      %v12754 = vunpack.c.l.b16 %v12626
      %v12755 = vunpack.c.l.b16 %v12627
      %v12756 = vunpack.c.l.b16 %v12628
      %v12757 = vunpack.c.l.b16 %v12629
      %v12758 = vunpack.c.l.b16 %v12630
      %v12759 = vunpack.c.l.b16 %v12631
      %v12760 = vunpack.c.l.b16 %v12632
      %v12761 = vunpack.c.l.b16 %v12633
      %v12762 = vunpack.c.l.b16 %v12634
      %v12763 = vunpack.c.l.b16 %v12635
      %v12764 = vunpack.c.l.b16 %v12636
      %v12765 = vunpack.c.l.b16 %v12637
      %v12766 = vunpack.c.l.b16 %v12638
      %v12767 = vunpack.c.l.b16 %v12639
      %v12768 = vunpack.c.l.b16 %v12640
      %v12769 = vunpack.c.l.b16 %v12641
      %v12770 = vunpack.c.l.b16 %v12642
      %v12771 = vunpack.c.l.b16 %v12643
      %v12772 = vunpack.c.l.b16 %v12644
      %v12773 = vunpack.c.l.b16 %v12645
      %v12774 = vunpack.c.l.b16 %v12646
      %v12775 = vunpack.c.l.b16 %v12647
      %v12776 = vunpack.c.l.b16 %v12648
      %v12777 = vunpack.c.l.b16 %v12649
      %v12778 = vunpack.c.l.b16 %v12650
      %v12779 = vunpack.c.l.b16 %v12651
      %v12780 = vunpack.c.l.b16 %v12652
      %v12781 = vunpack.c.l.b16 %v12653
      %v12782 = vunpack.c.l.b16 %v12654
      %v12783 = vunpack.c.l.b16 %v12655
      %v12784 = vunpack.c.l.b16 %v12656
      %v12785 = vunpack.c.l.b16 %v12657
      %v12786 = vunpack.c.l.b16 %v12658
      %v12787 = vunpack.c.l.b16 %v12659
      %v12788 = vunpack.c.l.b16 %v12660
      %v12789 = vunpack.c.l.b16 %v12661
      %v12790 = vunpack.c.l.b16 %v12662
      %v12791 = vunpack.c.l.b16 %v12663
      %v12792 = vunpack.c.l.b16 %v12664
      %v12793 = vunpack.c.l.b16 %v12665
      %v12794 = vunpack.c.l.b16 %v12666
      %v12795 = vunpack.c.l.b16 %v12667
      %v12796 = vunpack.c.l.b16 %v12668
      %v12797 = vunpack.c.l.b16 %v12669
      %v12798 = vunpack.c.l.b16 %v12670
      %v12799 = vunpack.c.l.b16 %v12671
      %v12800 = vunpack.c.l.b16 %v12672
      %v12801 = vunpack.c.l.b16 %v12673
      %v12802 = vunpack.c.l.b16 %v12674
      %v12803 = vunpack.c.l.b16 %v12675
      %v12804 = vunpack.c.l.b16 %v12676
      %v12805 = vunpack.c.l.b16 %v12677
      %v12806 = vunpack.c.l.b16 %v12678
      %v12807 = vunpack.c.l.b16 %v12679
      %vm12808 = vcmask 1041409
      %v12809 = vsel %vm12808, %v12681, %v12680
      %vm12810 = vcmask 1042434
      %v12811 = vsel %vm12810, %v12682, %v12809
      %vm12812 = vcmask 1043459
      %v12813 = vsel %vm12812, %v12683, %v12811
      %vm12814 = vcmask 1044484
      %v12815 = vsel %vm12814, %v12684, %v12813
      %vm12816 = vcmask 1045509
      %v12817 = vsel %vm12816, %v12685, %v12815
      %vm12818 = vcmask 1046534
      %v12819 = vsel %vm12818, %v12686, %v12817
      %vm12820 = vcmask 1047559
      %v12821 = vsel %vm12820, %v12687, %v12819
      %v12822 = vsel %vm12808, %v12689, %v12688
      %v12823 = vsel %vm12810, %v12690, %v12822
      %v12824 = vsel %vm12812, %v12691, %v12823
      %v12825 = vsel %vm12814, %v12692, %v12824
      %v12826 = vsel %vm12816, %v12693, %v12825
      %v12827 = vsel %vm12818, %v12694, %v12826
      %v12828 = vsel %vm12820, %v12695, %v12827
      %v12829 = vsel %vm12808, %v12697, %v12696
      %v12830 = vsel %vm12810, %v12698, %v12829
      %v12831 = vsel %vm12812, %v12699, %v12830
      %v12832 = vsel %vm12814, %v12700, %v12831
      %v12833 = vsel %vm12816, %v12701, %v12832
      %v12834 = vsel %vm12818, %v12702, %v12833
      %v12835 = vsel %vm12820, %v12703, %v12834
      %v12836 = vsel %vm12808, %v12705, %v12704
      %v12837 = vsel %vm12810, %v12706, %v12836
      %v12838 = vsel %vm12812, %v12707, %v12837
      %v12839 = vsel %vm12814, %v12708, %v12838
      %v12840 = vsel %vm12816, %v12709, %v12839
      %v12841 = vsel %vm12818, %v12710, %v12840
      %v12842 = vsel %vm12820, %v12711, %v12841
      %v12843 = vsel %vm12808, %v12713, %v12712
      %v12844 = vsel %vm12810, %v12714, %v12843
      %v12845 = vsel %vm12812, %v12715, %v12844
      %v12846 = vsel %vm12814, %v12716, %v12845
      %v12847 = vsel %vm12816, %v12717, %v12846
      %v12848 = vsel %vm12818, %v12718, %v12847
      %v12849 = vsel %vm12820, %v12719, %v12848
      %v12850 = vsel %vm12808, %v12721, %v12720
      %v12851 = vsel %vm12810, %v12722, %v12850
      %v12852 = vsel %vm12812, %v12723, %v12851
      %v12853 = vsel %vm12814, %v12724, %v12852
      %v12854 = vsel %vm12816, %v12725, %v12853
      %v12855 = vsel %vm12818, %v12726, %v12854
      %v12856 = vsel %vm12820, %v12727, %v12855
      %v12857 = vsel %vm12808, %v12729, %v12728
      %v12858 = vsel %vm12810, %v12730, %v12857
      %v12859 = vsel %vm12812, %v12731, %v12858
      %v12860 = vsel %vm12814, %v12732, %v12859
      %v12861 = vsel %vm12816, %v12733, %v12860
      %v12862 = vsel %vm12818, %v12734, %v12861
      %v12863 = vsel %vm12820, %v12735, %v12862
      %v12864 = vsel %vm12808, %v12737, %v12736
      %v12865 = vsel %vm12810, %v12738, %v12864
      %v12866 = vsel %vm12812, %v12739, %v12865
      %v12867 = vsel %vm12814, %v12740, %v12866
      %v12868 = vsel %vm12816, %v12741, %v12867
      %v12869 = vsel %vm12818, %v12742, %v12868
      %v12870 = vsel %vm12820, %v12743, %v12869
      %v12871 = vsel %vm12808, %v12745, %v12744
      %v12872 = vsel %vm12810, %v12746, %v12871
      %v12873 = vsel %vm12812, %v12747, %v12872
      %v12874 = vsel %vm12814, %v12748, %v12873
      %v12875 = vsel %vm12816, %v12749, %v12874
      %v12876 = vsel %vm12818, %v12750, %v12875
      %v12877 = vsel %vm12820, %v12751, %v12876
      %v12878 = vsel %vm12808, %v12753, %v12752
      %v12879 = vsel %vm12810, %v12754, %v12878
      %v12880 = vsel %vm12812, %v12755, %v12879
      %v12881 = vsel %vm12814, %v12756, %v12880
      %v12882 = vsel %vm12816, %v12757, %v12881
      %v12883 = vsel %vm12818, %v12758, %v12882
      %v12884 = vsel %vm12820, %v12759, %v12883
      %v12885 = vsel %vm12808, %v12761, %v12760
      %v12886 = vsel %vm12810, %v12762, %v12885
      %v12887 = vsel %vm12812, %v12763, %v12886
      %v12888 = vsel %vm12814, %v12764, %v12887
      %v12889 = vsel %vm12816, %v12765, %v12888
      %v12890 = vsel %vm12818, %v12766, %v12889
      %v12891 = vsel %vm12820, %v12767, %v12890
      %v12892 = vsel %vm12808, %v12769, %v12768
      %v12893 = vsel %vm12810, %v12770, %v12892
      %v12894 = vsel %vm12812, %v12771, %v12893
      %v12895 = vsel %vm12814, %v12772, %v12894
      %v12896 = vsel %vm12816, %v12773, %v12895
      %v12897 = vsel %vm12818, %v12774, %v12896
      %v12898 = vsel %vm12820, %v12775, %v12897
      %v12899 = vsel %vm12808, %v12777, %v12776
      %v12900 = vsel %vm12810, %v12778, %v12899
      %v12901 = vsel %vm12812, %v12779, %v12900
      %v12902 = vsel %vm12814, %v12780, %v12901
      %v12903 = vsel %vm12816, %v12781, %v12902
      %v12904 = vsel %vm12818, %v12782, %v12903
      %v12905 = vsel %vm12820, %v12783, %v12904
      %v12906 = vsel %vm12808, %v12785, %v12784
      %v12907 = vsel %vm12810, %v12786, %v12906
      %v12908 = vsel %vm12812, %v12787, %v12907
      %v12909 = vsel %vm12814, %v12788, %v12908
      %v12910 = vsel %vm12816, %v12789, %v12909
      %v12911 = vsel %vm12818, %v12790, %v12910
      %v12912 = vsel %vm12820, %v12791, %v12911
      %v12913 = vsel %vm12808, %v12793, %v12792
      %v12914 = vsel %vm12810, %v12794, %v12913
      %v12915 = vsel %vm12812, %v12795, %v12914
      %v12916 = vsel %vm12814, %v12796, %v12915
      %v12917 = vsel %vm12816, %v12797, %v12916
      %v12918 = vsel %vm12818, %v12798, %v12917
      %v12919 = vsel %vm12820, %v12799, %v12918
      %v12920 = vsel %vm12808, %v12801, %v12800
      %v12921 = vsel %vm12810, %v12802, %v12920
      %v12922 = vsel %vm12812, %v12803, %v12921
      %v12923 = vsel %vm12814, %v12804, %v12922
      %v12924 = vsel %vm12816, %v12805, %v12923
      %v12925 = vsel %vm12818, %v12806, %v12924
      %v12926 = vsel %vm12820, %v12807, %v12925
      %v12927 = vpack.c.b16 %v12821, %v12821
      %v12928 = vpack.c.b16 %v12828, %v12828
      %v12929 = vpack.c.b16 %v12835, %v12835
      %v12930 = vpack.c.b16 %v12842, %v12842
      %v12931 = vpack.c.b16 %v12849, %v12849
      %v12932 = vpack.c.b16 %v12856, %v12856
      %v12933 = vpack.c.b16 %v12863, %v12863
      %v12934 = vpack.c.b16 %v12870, %v12870
      %v12935 = vpack.c.b16 %v12877, %v12877
      %v12936 = vpack.c.b16 %v12884, %v12884
      %v12937 = vpack.c.b16 %v12891, %v12891
      %v12938 = vpack.c.b16 %v12898, %v12898
      %v12939 = vpack.c.b16 %v12905, %v12905
      %v12940 = vpack.c.b16 %v12912, %v12912
      %v12941 = vpack.c.b16 %v12919, %v12919
      %v12942 = vpack.c.b16 %v12926, %v12926
      %vm12959 = vcmask 519168
      %12960 = vst.msk [vmem:[%s361] sm:$0xf] %vm12959, %v12927
      %12961 = vst.msk [vmem:[%s361 + $0x4] sm:$0xf] %vm12959, %v12928
      %12962 = vst.msk [vmem:[%s361 + $0x8] sm:$0xf] %vm12959, %v12929
      %12963 = vst.msk [vmem:[%s361 + $0xc] sm:$0xf] %vm12959, %v12930
      %12964 = vst.msk [vmem:[%s361 + $0x10] sm:$0xf] %vm12959, %v12931
      %12965 = vst.msk [vmem:[%s361 + $0x14] sm:$0xf] %vm12959, %v12932
      %12966 = vst.msk [vmem:[%s361 + $0x18] sm:$0xf] %vm12959, %v12933
      %12967 = vst.msk [vmem:[%s361 + $0x1c] sm:$0xf] %vm12959, %v12934
      %12968 = vst.msk [vmem:[%s361 + $0x20] sm:$0xf] %vm12959, %v12935
      %12969 = vst.msk [vmem:[%s361 + $0x24] sm:$0xf] %vm12959, %v12936
      %12970 = vst.msk [vmem:[%s361 + $0x28] sm:$0xf] %vm12959, %v12937
      %12971 = vst.msk [vmem:[%s361 + $0x2c] sm:$0xf] %vm12959, %v12938
      %12972 = vst.msk [vmem:[%s361 + $0x30] sm:$0xf] %vm12959, %v12939
      %12973 = vst.msk [vmem:[%s361 + $0x34] sm:$0xf] %vm12959, %v12940
      %12974 = vst.msk [vmem:[%s361 + $0x38] sm:$0xf] %vm12959, %v12941
      %12975 = vst.msk [vmem:[%s361 + $0x3c] sm:$0xf] %vm12959, %v12942
      %s12976 = smul.u32 16, %s21
      %p12977 = scmp.lt.s32.totalorder %s12976, 31
      %s12978 = scalar_select %p12977, %s12976, 31
      %s12979 = smul.addr %s12978, 4
      %s12980 = scalar_lea.vmem %s10, %s12979
      // Predicated region
      $region61: #{tpu_custom_call.1} parent=59 // pred_check
        %p12981 = pneg %p254
      $region62: #{tpu_custom_call.1} parent=59 // pred_check_branch
        %12983 = sbr.rel (%p12981) target = $region64
      $region63: #{tpu_custom_call.1} parent=59 // pred_region
        %s12984 = smul.u32 16, %s21
      $region64: #{tpu_custom_call.1} parent=59 // pred_fallthru
        _
    $region60: #{tpu_custom_call.1} parent=5 // pred_fallthru
      _
    %p12985 = scmp.le.s32.totalorder 2, %s16
    // Predicated region
    $region65: #{tpu_custom_call.1} parent=5 // pred_check
      %p12986 = pneg %p12985
    $region66: #{tpu_custom_call.1} parent=5 // pred_check_branch
      %12988 = sbr.rel (%p12986) target = $region68
    $region67: #{tpu_custom_call.1} parent=5 // pred_region
      %s12989 = ssub.s32 %s16, 2
      // Predicated region
      $region69: #{tpu_custom_call.1} parent=67 // pred_check
        %p12990 = pneg %p260
      $region70: #{tpu_custom_call.1} parent=67 // pred_check_branch
        %12992 = sbr.rel (%p12990) target = $region72
      $region71: #{tpu_custom_call.1} parent=67 // pred_region
        %s12993 = smul.u32 16, %s22
        %p12994 = scmp.lt.s32.totalorder %s12993, 31
        %s12995 = scalar_select %p12994, %s12993, 31
        %s12996 = smul.addr %s12995, 4
        %s12997 = scalar_lea.vmem %s10, %s12996
      $region72: #{tpu_custom_call.1} parent=67 // pred_fallthru
        _
    $region68: #{tpu_custom_call.1} parent=5 // pred_fallthru
      _
  $region6: #{tpu_custom_call.1} parent=0 // loop_footer
    %s20 = sadd.s32 1, %s16
  $region7: #{tpu_custom_call.1} parent=0 // loop_footer_branch
    %15 = sbr.rel target = $region3
  $region8: #{tpu_custom_call.1} parent=0 // loop_exit
    _

</llo_original>
